<compile_context>
chip_gen: v7x
topology: tpu7x:2x2x1
jax: 0.10.0
libtpu: 0.0.40
codegen_flags: <defaults>
</compile_context>

<pallas_src>
import functools
import math

import jax
import jax.numpy as jnp
from jax.experimental import pallas as pl
from jax.experimental.pallas import tpu as pltpu  # noqa: F401  (TPU backend)


# ----------------------------------------------------------------------------
# Pallas kernel 1: fused conv-as-matmul  y = relu(x @ W + b)
# ----------------------------------------------------------------------------
def _fused_linear_kernel(x_ref, w_ref, b_ref, o_ref, *, activation):
    y = jnp.dot(x_ref[...], w_ref[...], preferred_element_type=jnp.float32)
    y = y + b_ref[...]                                  # (1, N) broadcast over rows
    if activation == "relu":
        y = jnp.maximum(y, 0.0)
    o_ref[...] = y.astype(o_ref.dtype)


def fused_conv_matmul(x, w, b):
    """x: (M, K) f32, w: (K, N) f32, b: (1, N) f32 -> relu(x @ w + b), (M, N) f32."""
    M, K = x.shape
    Kw, N = w.shape
    assert K == Kw, (K, Kw)
    kernel = functools.partial(_fused_linear_kernel, activation="relu")
    return pl.pallas_call(
        kernel,
        out_shape=jax.ShapeDtypeStruct((M, N), jnp.float32),
        in_specs=[
            pl.BlockSpec((M, K), lambda: (0, 0)),
            pl.BlockSpec((K, N), lambda: (0, 0)),
            pl.BlockSpec((1, N), lambda: (0, 0)),
        ],
        out_specs=pl.BlockSpec((M, N), lambda: (0, 0)),
    )(x, w, b)


# ----------------------------------------------------------------------------
# Pallas kernel 2: dense + all three heads fused
#   h   = relu(x @ Wd + bd)                      (N, 100)
#   y   = h @ Wh + bh                            (N, 128)  lane-dense
#   cols 0..2  -> tanh (mu), 3..5 -> softplus (var), 6 -> identity (critic),
#   cols 7..127 are zero padding.
# ----------------------------------------------------------------------------
def _dense_heads_kernel(x_ref, wd_ref, bd_ref, wh_ref, bh_ref, o_ref):
    xb = x_ref[...].astype(wd_ref.dtype)                       # f32 -> bf16
    h = jnp.dot(xb, wd_ref[...], preferred_element_type=jnp.float32)
    h = jnp.maximum(h + bd_ref[...], 0.0)                      # relu, f32
    y = jnp.dot(h, wh_ref[...], preferred_element_type=jnp.float32) + bh_ref[...]

    col = jax.lax.broadcasted_iota(jnp.int32, y.shape, 1)
    tanh_y = jnp.tanh(y)
    # torch.nn.Softplus(beta=1, threshold=20) semantics
    sp_y = jnp.where(y > 20.0, y, jnp.log1p(jnp.exp(jnp.minimum(y, 20.0))))
    y = jnp.where(col < 3, tanh_y, jnp.where(col < 6, sp_y, y))
    o_ref[...] = y.astype(o_ref.dtype)


def dense_heads(x, wd, bd, wh, bh):
    M = x.shape[0]
    return pl.pallas_call(
        _dense_heads_kernel,
        out_shape=jax.ShapeDtypeStruct((M, 128), jnp.float32),
        in_specs=[
            pl.BlockSpec(x.shape, lambda: (0, 0)),
            pl.BlockSpec(wd.shape, lambda: (0, 0)),
            pl.BlockSpec(bd.shape, lambda: (0, 0)),
            pl.BlockSpec(wh.shape, lambda: (0, 0)),
            pl.BlockSpec(bh.shape, lambda: (0, 0)),
        ],
        out_specs=pl.BlockSpec((M, 128), lambda: (0, 0)),
    )(x, wd, bd, wh, bh)


# ----------------------------------------------------------------------------
# Deterministic parameter init (PyTorch-style uniform(-1/sqrt(fan_in), ...)),
# pre-laid-out for the kernels above.
# ----------------------------------------------------------------------------
def _uniform(key, shape, bound):
    return jax.random.uniform(key, shape, jnp.float32, -bound, bound)


def init_params(key):
    ks = jax.random.split(key, 12)

    b1 = 1.0 / math.sqrt(1 * 4 * 4)
    c1w = _uniform(ks[0], (20, 1, 4, 4), b1)          # torch conv1 weight layout
    c1b = _uniform(ks[1], (20,), b1)

    b2 = 1.0 / math.sqrt(20 * 4 * 4)
    c2w = _uniform(ks[2], (40, 20, 4, 4), b2)         # torch conv2 weight layout
    c2b = _uniform(ks[3], (40,), b2)

    bdns = 1.0 / math.sqrt(40 * 14 * 14)
    # torch dense weight viewed as (out=100, C=40, H=14, W=14)
    dw_t = _uniform(ks[4], (100, 40, 14, 14), bdns)
    db = _uniform(ks[5], (100,), bdns)

    bh = 1.0 / math.sqrt(100)
    mu_w = _uniform(ks[6], (100, 3), bh)
    mu_b = _uniform(ks[7], (3,), bh)
    var_w = _uniform(ks[8], (100, 3), bh)
    var_b = _uniform(ks[9], (3,), bh)
    cr_w = _uniform(ks[10], (100, 1), bh)
    cr_b = _uniform(ks[11], (1,), bh)

    params = {
        # conv weights flattened in PyTorch (c, kh, kw) order, transposed to (K, out)
        "w1": c1w.reshape(20, 16).T,                  # (16, 20)
        "b1": c1b.reshape(1, 20),
        "w2": c2w.reshape(40, 320).T,                 # (320, 40)
        "b2": c2b.reshape(1, 40),
        # dense weight permuted ONCE to the NHWC (h, w, c) flatten order that the
        # conv2 kernel output naturally has; stored bf16 (dominant HBM traffic).
        "wd": dw_t.transpose(2, 3, 1, 0).reshape(40 * 14 * 14, 100).astype(jnp.bfloat16),
        "bd": db.reshape(1, 100),
        # three heads packed into one lane-dense (100, 128) matrix:
        # cols [0:3]=mu, [3:6]=var, [6:7]=critic, [7:128]=zero pad.
        "wh": jnp.zeros((100, 128), jnp.float32)
        .at[:, 0:3].set(mu_w)
        .at[:, 3:6].set(var_w)
        .at[:, 6:7].set(cr_w),
        "bh": jnp.zeros((1, 128), jnp.float32)
        .at[0, 0:3].set(mu_b)
        .at[0, 3:6].set(var_b)
        .at[0, 6:7].set(cr_b),
    }
    return params


# ----------------------------------------------------------------------------
# Forward pass (matches Model.forward semantics)
# ----------------------------------------------------------------------------
@jax.jit
def model_forward(params, frame):
    # frame: (N, 1, 62, 62) NCHW f32
    N = frame.shape[0]

    # conv1 im2col (XLA glue on a ~15 KB input): cols1[(n,ho,wo), i*4+j]
    f = frame[:, 0]                                            # (N, 62, 62)
    taps1 = [f[:, i:i + 60:2, j:j + 60:2] for i in range(4) for j in range(4)]
    cols1 = jnp.stack(taps1, axis=-1).reshape(N * 900, 16)
    y1 = fused_conv_matmul(cols1, params["w1"], params["b1"])  # relu, (N*900, 20)
    x1 = y1.reshape(N, 30, 30, 20)                             # free reshape, NHWC

    # conv2 im2col: cols2[(n,ho,wo), c*16 + i*4 + j]
    taps2 = [x1[:, i:i + 28:2, j:j + 28:2, :] for i in range(4) for j in range(4)]
    cols2 = jnp.stack(taps2, axis=-1).reshape(N * 196, 20 * 16)
    y2 = fused_conv_matmul(cols2, params["w2"], params["b2"])  # relu, (N*196, 40)

    # free reshape to (N, 7840) in (h, w, c) order — matches permuted dense_w
    x2 = y2.reshape(N, 14 * 14 * 40)

    # fused dense + heads, single lane-dense (N, 128) output
    out = dense_heads(x2, params["wd"], params["bd"], params["wh"], params["bh"])
    mu = out[:, 0:3]
    var = out[:, 3:6]
    value = out[:, 6:7]
    return mu, var, value


if __name__ == "__main__":
    key = jax.random.PRNGKey(0)
    pkey, xkey = jax.random.split(key)
    params = init_params(pkey)

    # Input spatial size 62x62 is implied by dense in_features = 40*14*14
    # ((62-4)//2+1 = 30, (30-4)//2+1 = 14).
    batch = 2
    frame = jax.random.normal(xkey, (batch, 1, 62, 62), jnp.float32)

    mu, var, value = model_forward(params, frame)
    jax.block_until_ready((mu, var, value))

    assert mu.shape == (batch, 3) and var.shape == (batch, 3) and value.shape == (batch, 1)
    assert bool(jnp.all(var > 0.0))           # softplus output strictly positive
    assert bool(jnp.all(jnp.abs(mu) <= 1.0))  # tanh output bounded
    print("KERNEL_OK")
</pallas_src>

<mosaic_0001>
module attributes {stable_mosaic.version = 11 : i64} {
  func.func @_fused_linear_kernel(%arg0: memref<1800x16xf32, #tpu.memory_space<vmem>>, %arg1: memref<16x20xf32, #tpu.memory_space<vmem>>, %arg2: memref<1x20xf32, #tpu.memory_space<vmem>>, %arg3: memref<1800x20xf32, #tpu.memory_space<vmem>>) attributes {dimension_semantics = [], scalar_prefetch = 0 : i64, scratch_operands = 0 : i64, tpu.core_type = #tpu.core_type<tc>} {
    %c0 = arith.constant 0 : index
    %c0_0 = arith.constant 0 : index
    %0 = vector.load %arg0[%c0, %c0_0] : memref<1800x16xf32, #tpu.memory_space<vmem>>, vector<1800x16xf32>
    %c0_1 = arith.constant 0 : index
    %c0_2 = arith.constant 0 : index
    %1 = vector.load %arg1[%c0_1, %c0_2] : memref<16x20xf32, #tpu.memory_space<vmem>>, vector<16x20xf32>
    %cst = arith.constant dense<0.000000e+00> : vector<1800x20xf32>
    %2 = tpu.matmul %0, %1, %cst {dimension_numbers = #tpu.dot_dimension_numbers<[1], [0], [0], [1], [0, 0, 1, 1], [], []>} : vector<1800x16xf32>, vector<16x20xf32>, vector<1800x20xf32> -> vector<1800x20xf32>
    %c0_3 = arith.constant 0 : index
    %c0_4 = arith.constant 0 : index
    %3 = vector.load %arg2[%c0_3, %c0_4] : memref<1x20xf32, #tpu.memory_space<vmem>>, vector<1x20xf32>
    %4 = vector.broadcast %3 : vector<1x20xf32> to vector<1800x20xf32>
    %5 = arith.addf %2, %4 : vector<1800x20xf32>
    %cst_5 = arith.constant 0.000000e+00 : f32
    %6 = vector.broadcast %cst_5 : f32 to vector<1800x20xf32>
    %7 = arith.maximumf %5, %6 : vector<1800x20xf32>
    %c0_6 = arith.constant 0 : index
    %c0_7 = arith.constant 0 : index
    %8 = vector.load %arg3[%c0_6, %c0_7] : memref<1800x20xf32, #tpu.memory_space<vmem>>, vector<1800x20xf32>
    tpu.vector_store %arg3[%c0_6, %c0_7], %7 {strides = array<i32>} : memref<1800x20xf32, #tpu.memory_space<vmem>>, vector<1800x20xf32>,
    return
  }
}

module attributes {stable_mosaic.version = 11 : i64} {
  func.func @_fused_linear_kernel(%arg0: memref<392x320xf32, #tpu.memory_space<vmem>>, %arg1: memref<320x40xf32, #tpu.memory_space<vmem>>, %arg2: memref<1x40xf32, #tpu.memory_space<vmem>>, %arg3: memref<392x40xf32, #tpu.memory_space<vmem>>) attributes {dimension_semantics = [], scalar_prefetch = 0 : i64, scratch_operands = 0 : i64, tpu.core_type = #tpu.core_type<tc>} {
    %c0 = arith.constant 0 : index
    %c0_0 = arith.constant 0 : index
    %0 = vector.load %arg0[%c0, %c0_0] : memref<392x320xf32, #tpu.memory_space<vmem>>, vector<392x320xf32>
    %c0_1 = arith.constant 0 : index
    %c0_2 = arith.constant 0 : index
    %1 = vector.load %arg1[%c0_1, %c0_2] : memref<320x40xf32, #tpu.memory_space<vmem>>, vector<320x40xf32>
    %cst = arith.constant dense<0.000000e+00> : vector<392x40xf32>
    %2 = tpu.matmul %0, %1, %cst {dimension_numbers = #tpu.dot_dimension_numbers<[1], [0], [0], [1], [0, 0, 1, 1], [], []>} : vector<392x320xf32>, vector<320x40xf32>, vector<392x40xf32> -> vector<392x40xf32>
    %c0_3 = arith.constant 0 : index
    %c0_4 = arith.constant 0 : index
    %3 = vector.load %arg2[%c0_3, %c0_4] : memref<1x40xf32, #tpu.memory_space<vmem>>, vector<1x40xf32>
    %4 = vector.broadcast %3 : vector<1x40xf32> to vector<392x40xf32>
    %5 = arith.addf %2, %4 : vector<392x40xf32>
    %cst_5 = arith.constant 0.000000e+00 : f32
    %6 = vector.broadcast %cst_5 : f32 to vector<392x40xf32>
    %7 = arith.maximumf %5, %6 : vector<392x40xf32>
    %c0_6 = arith.constant 0 : index
    %c0_7 = arith.constant 0 : index
    %8 = vector.load %arg3[%c0_6, %c0_7] : memref<392x40xf32, #tpu.memory_space<vmem>>, vector<392x40xf32>
    tpu.vector_store %arg3[%c0_6, %c0_7], %7 {strides = array<i32>} : memref<392x40xf32, #tpu.memory_space<vmem>>, vector<392x40xf32>,
    return
  }
}

module attributes {stable_mosaic.version = 11 : i64} {
  func.func @_dense_heads_kernel(%arg0: memref<2x7840xf32, #tpu.memory_space<vmem>>, %arg1: memref<7840x100xbf16, #tpu.memory_space<vmem>>, %arg2: memref<1x100xf32, #tpu.memory_space<vmem>>, %arg3: memref<100x128xf32, #tpu.memory_space<vmem>>, %arg4: memref<1x128xf32, #tpu.memory_space<vmem>>, %arg5: memref<2x128xf32, #tpu.memory_space<vmem>>) attributes {dimension_semantics = [], scalar_prefetch = 0 : i64, scratch_operands = 0 : i64, tpu.core_type = #tpu.core_type<tc>} {
    %c0 = arith.constant 0 : index
    %c0_0 = arith.constant 0 : index
    %0 = vector.load %arg0[%c0, %c0_0] : memref<2x7840xf32, #tpu.memory_space<vmem>>, vector<2x7840xf32>
    %1 = arith.truncf %0 : vector<2x7840xf32> to vector<2x7840xbf16>
    %c0_1 = arith.constant 0 : index
    %c0_2 = arith.constant 0 : index
    %2 = vector.load %arg1[%c0_1, %c0_2] : memref<7840x100xbf16, #tpu.memory_space<vmem>>, vector<7840x100xbf16>
    %cst = arith.constant dense<0.000000e+00> : vector<2x100xf32>
    %3 = tpu.matmul %1, %2, %cst {dimension_numbers = #tpu.dot_dimension_numbers<[1], [0], [0], [1], [0, 0, 1, 1], [], []>} : vector<2x7840xbf16>, vector<7840x100xbf16>, vector<2x100xf32> -> vector<2x100xf32>
    %c0_3 = arith.constant 0 : index
    %c0_4 = arith.constant 0 : index
    %4 = vector.load %arg2[%c0_3, %c0_4] : memref<1x100xf32, #tpu.memory_space<vmem>>, vector<1x100xf32>
    %5 = vector.broadcast %4 : vector<1x100xf32> to vector<2x100xf32>
    %6 = arith.addf %3, %5 : vector<2x100xf32>
    %cst_5 = arith.constant 0.000000e+00 : f32
    %7 = vector.broadcast %cst_5 : f32 to vector<2x100xf32>
    %8 = arith.maximumf %6, %7 : vector<2x100xf32>
    %c0_6 = arith.constant 0 : index
    %c0_7 = arith.constant 0 : index
    %9 = vector.load %arg3[%c0_6, %c0_7] : memref<100x128xf32, #tpu.memory_space<vmem>>, vector<100x128xf32>
    %cst_8 = arith.constant dense<0.000000e+00> : vector<2x128xf32>
    %10 = tpu.matmul %8, %9, %cst_8 {dimension_numbers = #tpu.dot_dimension_numbers<[1], [0], [0], [1], [0, 0, 1, 1], [], []>} : vector<2x100xf32>, vector<100x128xf32>, vector<2x128xf32> -> vector<2x128xf32>
    %c0_9 = arith.constant 0 : index
    %c0_10 = arith.constant 0 : index
    %11 = vector.load %arg4[%c0_9, %c0_10] : memref<1x128xf32, #tpu.memory_space<vmem>>, vector<1x128xf32>
    %12 = vector.broadcast %11 : vector<1x128xf32> to vector<2x128xf32>
    %13 = arith.addf %10, %12 : vector<2x128xf32>
    %14 = tpu.iota {dimensions = array<i32: 1>} : vector<2x128xi32>
    %15 = math.tanh %13 : vector<2x128xf32>
    %cst_11 = arith.constant 2.000000e+01 : f32
    %16 = vector.broadcast %cst_11 : f32 to vector<2x128xf32>
    %17 = arith.cmpf ogt, %13, %16 : vector<2x128xf32>
    %cst_12 = arith.constant 2.000000e+01 : f32
    %18 = vector.broadcast %cst_12 : f32 to vector<2x128xf32>
    %19 = arith.minimumf %13, %18 : vector<2x128xf32>
    %20 = math.exp %19 : vector<2x128xf32>
    %21 = math.log1p %20 : vector<2x128xf32>
    %22 = arith.select %17, %13, %21 : vector<2x128xi1>, vector<2x128xf32>
    %c3_i32 = arith.constant 3 : i32
    %23 = vector.broadcast %c3_i32 : i32 to vector<2x128xi32>
    %24 = arith.cmpi slt, %14, %23 : vector<2x128xi32>
    %c6_i32 = arith.constant 6 : i32
    %25 = vector.broadcast %c6_i32 : i32 to vector<2x128xi32>
    %26 = arith.cmpi slt, %14, %25 : vector<2x128xi32>
    %27 = arith.select %26, %22, %13 : vector<2x128xi1>, vector<2x128xf32>
    %28 = arith.select %24, %15, %27 : vector<2x128xi1>, vector<2x128xf32>
    %c0_13 = arith.constant 0 : index
    %c0_14 = arith.constant 0 : index
    %29 = vector.load %arg5[%c0_13, %c0_14] : memref<2x128xf32, #tpu.memory_space<vmem>>, vector<2x128xf32>
    tpu.vector_store %arg5[%c0_13, %c0_14], %28 {strides = array<i32>} : memref<2x128xf32, #tpu.memory_space<vmem>>, vector<2x128xf32>,
    return
  }
}

</mosaic_0001>

<llo_original>
// kernel: model_forward.3
$region0: #{model_forward.3}
  #allocation0 [shape = 'u32[]', space=smem, size = 0x4, offset = 0x4, fixed_abs, tag = 'smem constant byte address 0x4 - core index']
  #allocation1 [shape = 'u32[144,128]{1,0:T(1,128)}', space=vmem, size = 0x12000, scoped, tag = 'internal scratch']
  %s0 = inlined_call_operand.vmem [shape: f32[1800,16], index: 0, kind: input, shape index: {}]
  %s1 = inlined_call_operand.hbm [shape: f32[16,20], index: 1, kind: input, shape index: {}]
  %s2 = inlined_call_operand.hbm [shape: f32[1,20], index: 2, kind: input, shape index: {}]
  %s3 = inlined_call_operand.vmem [shape: f32[1800,20], index: 3, kind: output, shape index: {}]
  %s4 = sld [smem:[#allocation0]]
  $region30: #{model_forward.3} parent=0
    _
  %s6 = ssub.s32 1, %s4
  %s7 = scalar_select 0, %s6, %s4
  $region1: #{model_forward.3} parent=0
    #allocation2 [shape = 'u8[8192]{0}', space=vmem, size = 0x2000, scoped, tag = 'input window, operand 1, single buffered']
    #allocation3 [shape = 's32[1]{0}', space=sflag, size = 0x4, scoped, tag = 'scoped memory for model_forward.3']
    #allocation4 [shape = 'u8[512]{0}', space=vmem, size = 0x400, scoped, tag = 'input window, operand 2, single buffered']
    #allocation5 [shape = 's32[1]{0}', space=sflag, size = 0x4, scoped, tag = 'scoped memory for model_forward.3']
    %8 = vsyncpa [#allocation3], 0
    %9 = vsyncpa [#allocation5], 0
    // Predicated region
    $region2: #{model_forward.3} parent=1 // pred_check
      _
    $region3: #{model_forward.3} parent=1 // pred_check_branch
      %11 = sbr.rel (0) target = $region5
    $region4: #{model_forward.3} parent=1 // pred_region
      _
    $region5: #{model_forward.3} parent=1 // pred_fallthru
      _
    // Predicated region
    $region6: #{model_forward.3} parent=1 // pred_check
      _
    $region7: #{model_forward.3} parent=1 // pred_check_branch
      %13 = sbr.rel (0) target = $region9
    $region8: #{model_forward.3} parent=1 // pred_region
      %s15 = ssub.s32 256, 256
      %16 = vsyncadd [#allocation3], %s15
      %s17 = sshll.u32 [#allocation2], 4
      %s18 = int_to_ptr.vmem [resolvable:$true] %s17
      %23 = dma.hbm_to_vmem [thread:$0]  %s1, 256, %s18, [#allocation3], 128, 128, 8
    $region9: #{model_forward.3} parent=1 // pred_fallthru
      _
    // Predicated region
    $region10: #{model_forward.3} parent=1 // pred_check
      _
    $region11: #{model_forward.3} parent=1 // pred_check_branch
      %25 = sbr.rel (0) target = $region13
    $region12: #{model_forward.3} parent=1 // pred_region
      %s27 = ssub.s32 16, 16
      %28 = vsyncadd [#allocation5], %s27
      %s30 = sshll.u32 [#allocation4], 4
      %s31 = int_to_ptr.vmem [resolvable:$true] %s30
      %33 = dma.hbm_to_vmem [thread:$0]  %s2, 16, %s31, [#allocation5]
    $region13: #{model_forward.3} parent=1 // pred_fallthru
      _
    // Predicated region
    $region14: #{model_forward.3} parent=1 // pred_check
      _
    $region15: #{model_forward.3} parent=1 // pred_check_branch
      %35 = sbr.rel (0) target = $region17
    $region16: #{model_forward.3} parent=1 // pred_region
      %36 = dma.done [#allocation3], 256
    $region17: #{model_forward.3} parent=1 // pred_fallthru
      _
    // Predicated region
    $region18: #{model_forward.3} parent=1 // pred_check
      _
    $region19: #{model_forward.3} parent=1 // pred_check_branch
      %38 = sbr.rel (0) target = $region21
    $region20: #{model_forward.3} parent=1 // pred_region
      %39 = dma.done [#allocation5], 16
    $region21: #{model_forward.3} parent=1 // pred_fallthru
      _
    %v40 = vld [vmem:[%s0] sm:$0xff]
    %v41 = vld [vmem:[%s0 + $0x8] sm:$0xff]
    %v42 = vld [vmem:[%s0 + $0x10] sm:$0xff]
    %v43 = vld [vmem:[%s0 + $0x18] sm:$0xff]
    %v44 = vld [vmem:[%s0 + $0x20] sm:$0xff]
    %v45 = vld [vmem:[%s0 + $0x28] sm:$0xff]
    %v46 = vld [vmem:[%s0 + $0x30] sm:$0xff]
    %v47 = vld [vmem:[%s0 + $0x38] sm:$0xff]
    %v48 = vld [vmem:[%s0 + $0x40] sm:$0xff]
    %v49 = vld [vmem:[%s0 + $0x48] sm:$0xff]
    %v50 = vld [vmem:[%s0 + $0x50] sm:$0xff]
    %v51 = vld [vmem:[%s0 + $0x58] sm:$0xff]
    %v52 = vld [vmem:[%s0 + $0x60] sm:$0xff]
    %v53 = vld [vmem:[%s0 + $0x68] sm:$0xff]
    %v54 = vld [vmem:[%s0 + $0x70] sm:$0xff]
    %v55 = vld [vmem:[%s0 + $0x78] sm:$0xff]
    %v56 = vld [vmem:[%s0 + $0x80] sm:$0xff]
    %v57 = vld [vmem:[%s0 + $0x88] sm:$0xff]
    %v58 = vld [vmem:[%s0 + $0x90] sm:$0xff]
    %v59 = vld [vmem:[%s0 + $0x98] sm:$0xff]
    %v60 = vld [vmem:[%s0 + $0xa0] sm:$0xff]
    %v61 = vld [vmem:[%s0 + $0xa8] sm:$0xff]
    %v62 = vld [vmem:[%s0 + $0xb0] sm:$0xff]
    %v63 = vld [vmem:[%s0 + $0xb8] sm:$0xff]
    %v64 = vld [vmem:[%s0 + $0xc0] sm:$0xff]
    %v65 = vld [vmem:[%s0 + $0xc8] sm:$0xff]
    %v66 = vld [vmem:[%s0 + $0xd0] sm:$0xff]
    %v67 = vld [vmem:[%s0 + $0xd8] sm:$0xff]
    %v68 = vld [vmem:[%s0 + $0xe0] sm:$0xff]
    %v69 = vld [vmem:[%s0 + $0xe8] sm:$0xff]
    %v70 = vld [vmem:[%s0 + $0xf0] sm:$0xff]
    %v71 = vld [vmem:[%s0 + $0xf8] sm:$0xff]
    %v72 = vld [vmem:[%s0 + $0x100] sm:$0xff]
    %v73 = vld [vmem:[%s0 + $0x108] sm:$0xff]
    %v74 = vld [vmem:[%s0 + $0x110] sm:$0xff]
    %v75 = vld [vmem:[%s0 + $0x118] sm:$0xff]
    %v76 = vld [vmem:[%s0 + $0x120] sm:$0xff]
    %v77 = vld [vmem:[%s0 + $0x128] sm:$0xff]
    %v78 = vld [vmem:[%s0 + $0x130] sm:$0xff]
    %v79 = vld [vmem:[%s0 + $0x138] sm:$0xff]
    %v80 = vld [vmem:[%s0 + $0x140] sm:$0xff]
    %v81 = vld [vmem:[%s0 + $0x148] sm:$0xff]
    %v82 = vld [vmem:[%s0 + $0x150] sm:$0xff]
    %v83 = vld [vmem:[%s0 + $0x158] sm:$0xff]
    %v84 = vld [vmem:[%s0 + $0x160] sm:$0xff]
    %v85 = vld [vmem:[%s0 + $0x168] sm:$0xff]
    %v86 = vld [vmem:[%s0 + $0x170] sm:$0xff]
    %v87 = vld [vmem:[%s0 + $0x178] sm:$0xff]
    %v88 = vld [vmem:[%s0 + $0x180] sm:$0xff]
    %v89 = vld [vmem:[%s0 + $0x188] sm:$0xff]
    %v90 = vld [vmem:[%s0 + $0x190] sm:$0xff]
    %v91 = vld [vmem:[%s0 + $0x198] sm:$0xff]
    %v92 = vld [vmem:[%s0 + $0x1a0] sm:$0xff]
    %v93 = vld [vmem:[%s0 + $0x1a8] sm:$0xff]
    %v94 = vld [vmem:[%s0 + $0x1b0] sm:$0xff]
    %v95 = vld [vmem:[%s0 + $0x1b8] sm:$0xff]
    %v96 = vld [vmem:[%s0 + $0x1c0] sm:$0xff]
    %v97 = vld [vmem:[%s0 + $0x1c8] sm:$0xff]
    %v98 = vld [vmem:[%s0 + $0x1d0] sm:$0xff]
    %v99 = vld [vmem:[%s0 + $0x1d8] sm:$0xff]
    %v100 = vld [vmem:[%s0 + $0x1e0] sm:$0xff]
    %v101 = vld [vmem:[%s0 + $0x1e8] sm:$0xff]
    %v102 = vld [vmem:[%s0 + $0x1f0] sm:$0xff]
    %v103 = vld [vmem:[%s0 + $0x1f8] sm:$0xff]
    %v104 = vld [vmem:[%s0 + $0x200] sm:$0xff]
    %v105 = vld [vmem:[%s0 + $0x208] sm:$0xff]
    %v106 = vld [vmem:[%s0 + $0x210] sm:$0xff]
    %v107 = vld [vmem:[%s0 + $0x218] sm:$0xff]
    %v108 = vld [vmem:[%s0 + $0x220] sm:$0xff]
    %v109 = vld [vmem:[%s0 + $0x228] sm:$0xff]
    %v110 = vld [vmem:[%s0 + $0x230] sm:$0xff]
    %v111 = vld [vmem:[%s0 + $0x238] sm:$0xff]
    %v112 = vld [vmem:[%s0 + $0x240] sm:$0xff]
    %v113 = vld [vmem:[%s0 + $0x248] sm:$0xff]
    %v114 = vld [vmem:[%s0 + $0x250] sm:$0xff]
    %v115 = vld [vmem:[%s0 + $0x258] sm:$0xff]
    %v116 = vld [vmem:[%s0 + $0x260] sm:$0xff]
    %v117 = vld [vmem:[%s0 + $0x268] sm:$0xff]
    %v118 = vld [vmem:[%s0 + $0x270] sm:$0xff]
    %v119 = vld [vmem:[%s0 + $0x278] sm:$0xff]
    %v120 = vld [vmem:[%s0 + $0x280] sm:$0xff]
    %v121 = vld [vmem:[%s0 + $0x288] sm:$0xff]
    %v122 = vld [vmem:[%s0 + $0x290] sm:$0xff]
    %v123 = vld [vmem:[%s0 + $0x298] sm:$0xff]
    %v124 = vld [vmem:[%s0 + $0x2a0] sm:$0xff]
    %v125 = vld [vmem:[%s0 + $0x2a8] sm:$0xff]
    %v126 = vld [vmem:[%s0 + $0x2b0] sm:$0xff]
    %v127 = vld [vmem:[%s0 + $0x2b8] sm:$0xff]
    %v128 = vld [vmem:[%s0 + $0x2c0] sm:$0xff]
    %v129 = vld [vmem:[%s0 + $0x2c8] sm:$0xff]
    %v130 = vld [vmem:[%s0 + $0x2d0] sm:$0xff]
    %v131 = vld [vmem:[%s0 + $0x2d8] sm:$0xff]
    %v132 = vld [vmem:[%s0 + $0x2e0] sm:$0xff]
    %v133 = vld [vmem:[%s0 + $0x2e8] sm:$0xff]
    %v134 = vld [vmem:[%s0 + $0x2f0] sm:$0xff]
    %v135 = vld [vmem:[%s0 + $0x2f8] sm:$0xff]
    %v136 = vld [vmem:[%s0 + $0x300] sm:$0xff]
    %v137 = vld [vmem:[%s0 + $0x308] sm:$0xff]
    %v138 = vld [vmem:[%s0 + $0x310] sm:$0xff]
    %v139 = vld [vmem:[%s0 + $0x318] sm:$0xff]
    %v140 = vld [vmem:[%s0 + $0x320] sm:$0xff]
    %v141 = vld [vmem:[%s0 + $0x328] sm:$0xff]
    %v142 = vld [vmem:[%s0 + $0x330] sm:$0xff]
    %v143 = vld [vmem:[%s0 + $0x338] sm:$0xff]
    %v144 = vld [vmem:[%s0 + $0x340] sm:$0xff]
    %v145 = vld [vmem:[%s0 + $0x348] sm:$0xff]
    %v146 = vld [vmem:[%s0 + $0x350] sm:$0xff]
    %v147 = vld [vmem:[%s0 + $0x358] sm:$0xff]
    %v148 = vld [vmem:[%s0 + $0x360] sm:$0xff]
    %v149 = vld [vmem:[%s0 + $0x368] sm:$0xff]
    %v150 = vld [vmem:[%s0 + $0x370] sm:$0xff]
    %v151 = vld [vmem:[%s0 + $0x378] sm:$0xff]
    %v152 = vld [vmem:[%s0 + $0x380] sm:$0xff]
    %v153 = vld [vmem:[%s0 + $0x388] sm:$0xff]
    %v154 = vld [vmem:[%s0 + $0x390] sm:$0xff]
    %v155 = vld [vmem:[%s0 + $0x398] sm:$0xff]
    %v156 = vld [vmem:[%s0 + $0x3a0] sm:$0xff]
    %v157 = vld [vmem:[%s0 + $0x3a8] sm:$0xff]
    %v158 = vld [vmem:[%s0 + $0x3b0] sm:$0xff]
    %v159 = vld [vmem:[%s0 + $0x3b8] sm:$0xff]
    %v160 = vld [vmem:[%s0 + $0x3c0] sm:$0xff]
    %v161 = vld [vmem:[%s0 + $0x3c8] sm:$0xff]
    %v162 = vld [vmem:[%s0 + $0x3d0] sm:$0xff]
    %v163 = vld [vmem:[%s0 + $0x3d8] sm:$0xff]
    %v164 = vld [vmem:[%s0 + $0x3e0] sm:$0xff]
    %v165 = vld [vmem:[%s0 + $0x3e8] sm:$0xff]
    %v166 = vld [vmem:[%s0 + $0x3f0] sm:$0xff]
    %v167 = vld [vmem:[%s0 + $0x3f8] sm:$0xff]
    %v168 = vld [vmem:[%s0 + $0x400] sm:$0xff]
    %v169 = vld [vmem:[%s0 + $0x408] sm:$0xff]
    %v170 = vld [vmem:[%s0 + $0x410] sm:$0xff]
    %v171 = vld [vmem:[%s0 + $0x418] sm:$0xff]
    %v172 = vld [vmem:[%s0 + $0x420] sm:$0xff]
    %v173 = vld [vmem:[%s0 + $0x428] sm:$0xff]
    %v174 = vld [vmem:[%s0 + $0x430] sm:$0xff]
    %v175 = vld [vmem:[%s0 + $0x438] sm:$0xff]
    %v176 = vld [vmem:[%s0 + $0x440] sm:$0xff]
    %v177 = vld [vmem:[%s0 + $0x448] sm:$0xff]
    %v178 = vld [vmem:[%s0 + $0x450] sm:$0xff]
    %v179 = vld [vmem:[%s0 + $0x458] sm:$0xff]
    %v180 = vld [vmem:[%s0 + $0x460] sm:$0xff]
    %v181 = vld [vmem:[%s0 + $0x468] sm:$0xff]
    %v182 = vld [vmem:[%s0 + $0x470] sm:$0xff]
    %v183 = vld [vmem:[%s0 + $0x478] sm:$0xff]
    %v184 = vld [vmem:[%s0 + $0x480] sm:$0xff]
    %v185 = vld [vmem:[%s0 + $0x488] sm:$0xff]
    %v186 = vld [vmem:[%s0 + $0x490] sm:$0xff]
    %v187 = vld [vmem:[%s0 + $0x498] sm:$0xff]
    %v188 = vld [vmem:[%s0 + $0x4a0] sm:$0xff]
    %v189 = vld [vmem:[%s0 + $0x4a8] sm:$0xff]
    %v190 = vld [vmem:[%s0 + $0x4b0] sm:$0xff]
    %v191 = vld [vmem:[%s0 + $0x4b8] sm:$0xff]
    %v192 = vld [vmem:[%s0 + $0x4c0] sm:$0xff]
    %v193 = vld [vmem:[%s0 + $0x4c8] sm:$0xff]
    %v194 = vld [vmem:[%s0 + $0x4d0] sm:$0xff]
    %v195 = vld [vmem:[%s0 + $0x4d8] sm:$0xff]
    %v196 = vld [vmem:[%s0 + $0x4e0] sm:$0xff]
    %v197 = vld [vmem:[%s0 + $0x4e8] sm:$0xff]
    %v198 = vld [vmem:[%s0 + $0x4f0] sm:$0xff]
    %v199 = vld [vmem:[%s0 + $0x4f8] sm:$0xff]
    %v200 = vld [vmem:[%s0 + $0x500] sm:$0xff]
    %v201 = vld [vmem:[%s0 + $0x508] sm:$0xff]
    %v202 = vld [vmem:[%s0 + $0x510] sm:$0xff]
    %v203 = vld [vmem:[%s0 + $0x518] sm:$0xff]
    %v204 = vld [vmem:[%s0 + $0x520] sm:$0xff]
    %v205 = vld [vmem:[%s0 + $0x528] sm:$0xff]
    %v206 = vld [vmem:[%s0 + $0x530] sm:$0xff]
    %v207 = vld [vmem:[%s0 + $0x538] sm:$0xff]
    %v208 = vld [vmem:[%s0 + $0x540] sm:$0xff]
    %v209 = vld [vmem:[%s0 + $0x548] sm:$0xff]
    %v210 = vld [vmem:[%s0 + $0x550] sm:$0xff]
    %v211 = vld [vmem:[%s0 + $0x558] sm:$0xff]
    %v212 = vld [vmem:[%s0 + $0x560] sm:$0xff]
    %v213 = vld [vmem:[%s0 + $0x568] sm:$0xff]
    %v214 = vld [vmem:[%s0 + $0x570] sm:$0xff]
    %v215 = vld [vmem:[%s0 + $0x578] sm:$0xff]
    %v216 = vld [vmem:[%s0 + $0x580] sm:$0xff]
    %v217 = vld [vmem:[%s0 + $0x588] sm:$0xff]
    %v218 = vld [vmem:[%s0 + $0x590] sm:$0xff]
    %v219 = vld [vmem:[%s0 + $0x598] sm:$0xff]
    %v220 = vld [vmem:[%s0 + $0x5a0] sm:$0xff]
    %v221 = vld [vmem:[%s0 + $0x5a8] sm:$0xff]
    %v222 = vld [vmem:[%s0 + $0x5b0] sm:$0xff]
    %v223 = vld [vmem:[%s0 + $0x5b8] sm:$0xff]
    %v224 = vld [vmem:[%s0 + $0x5c0] sm:$0xff]
    %v225 = vld [vmem:[%s0 + $0x5c8] sm:$0xff]
    %v226 = vld [vmem:[%s0 + $0x5d0] sm:$0xff]
    %v227 = vld [vmem:[%s0 + $0x5d8] sm:$0xff]
    %v228 = vld [vmem:[%s0 + $0x5e0] sm:$0xff]
    %v229 = vld [vmem:[%s0 + $0x5e8] sm:$0xff]
    %v230 = vld [vmem:[%s0 + $0x5f0] sm:$0xff]
    %v231 = vld [vmem:[%s0 + $0x5f8] sm:$0xff]
    %v232 = vld [vmem:[%s0 + $0x600] sm:$0xff]
    %v233 = vld [vmem:[%s0 + $0x608] sm:$0xff]
    %v234 = vld [vmem:[%s0 + $0x610] sm:$0xff]
    %v235 = vld [vmem:[%s0 + $0x618] sm:$0xff]
    %v236 = vld [vmem:[%s0 + $0x620] sm:$0xff]
    %v237 = vld [vmem:[%s0 + $0x628] sm:$0xff]
    %v238 = vld [vmem:[%s0 + $0x630] sm:$0xff]
    %v239 = vld [vmem:[%s0 + $0x638] sm:$0xff]
    %v240 = vld [vmem:[%s0 + $0x640] sm:$0xff]
    %v241 = vld [vmem:[%s0 + $0x648] sm:$0xff]
    %v242 = vld [vmem:[%s0 + $0x650] sm:$0xff]
    %v243 = vld [vmem:[%s0 + $0x658] sm:$0xff]
    %v244 = vld [vmem:[%s0 + $0x660] sm:$0xff]
    %v245 = vld [vmem:[%s0 + $0x668] sm:$0xff]
    %v246 = vld [vmem:[%s0 + $0x670] sm:$0xff]
    %v247 = vld [vmem:[%s0 + $0x678] sm:$0xff]
    %v248 = vld [vmem:[%s0 + $0x680] sm:$0xff]
    %v249 = vld [vmem:[%s0 + $0x688] sm:$0xff]
    %v250 = vld [vmem:[%s0 + $0x690] sm:$0xff]
    %v251 = vld [vmem:[%s0 + $0x698] sm:$0xff]
    %v252 = vld [vmem:[%s0 + $0x6a0] sm:$0xff]
    %v253 = vld [vmem:[%s0 + $0x6a8] sm:$0xff]
    %v254 = vld [vmem:[%s0 + $0x6b0] sm:$0xff]
    %v255 = vld [vmem:[%s0 + $0x6b8] sm:$0xff]
    %v256 = vld [vmem:[%s0 + $0x6c0] sm:$0xff]
    %v257 = vld [vmem:[%s0 + $0x6c8] sm:$0xff]
    %v258 = vld [vmem:[%s0 + $0x6d0] sm:$0xff]
    %v259 = vld [vmem:[%s0 + $0x6d8] sm:$0xff]
    %v260 = vld [vmem:[%s0 + $0x6e0] sm:$0xff]
    %v261 = vld [vmem:[%s0 + $0x6e8] sm:$0xff]
    %v262 = vld [vmem:[%s0 + $0x6f0] sm:$0xff]
    %v263 = vld [vmem:[%s0 + $0x6f8] sm:$0xff]
    %v264 = vld [vmem:[%s0 + $0x700] sm:$0xff]
    %v265 = vld [vmem:[#allocation2] sm:$0xff]
    %v266 = vld [vmem:[#allocation2 + $0x8] sm:$0xff]
    %v267 = vld [vmem:[#allocation4] sm:$0x1]
    %v269 = vlaneseq
    %v270 = vshrl.u32 %v269, 7
    %v271 = vsub.s32 0, %v270
    %v272 = vrot.slane %v267, %v271
    %vm274 = vcmask 130048
    %v276 = vsel %vm274, %v40, 0
    %v279 = vsel %vm274, %v41, 0
    %v282 = vsel %vm274, %v42, 0
    %v285 = vsel %vm274, %v43, 0
    %v288 = vsel %vm274, %v44, 0
    %v291 = vsel %vm274, %v45, 0
    %v294 = vsel %vm274, %v46, 0
    %v297 = vsel %vm274, %v47, 0
    %v300 = vsel %vm274, %v48, 0
    %v303 = vsel %vm274, %v49, 0
    %v306 = vsel %vm274, %v50, 0
    %v309 = vsel %vm274, %v51, 0
    %v312 = vsel %vm274, %v52, 0
    %v315 = vsel %vm274, %v53, 0
    %v318 = vsel %vm274, %v54, 0
    %v321 = vsel %vm274, %v55, 0
    %v324 = vsel %vm274, %v56, 0
    %v327 = vsel %vm274, %v57, 0
    %v330 = vsel %vm274, %v58, 0
    %v333 = vsel %vm274, %v59, 0
    %v336 = vsel %vm274, %v60, 0
    %v339 = vsel %vm274, %v61, 0
    %v342 = vsel %vm274, %v62, 0
    %v345 = vsel %vm274, %v63, 0
    %v348 = vsel %vm274, %v64, 0
    %v351 = vsel %vm274, %v65, 0
    %v354 = vsel %vm274, %v66, 0
    %v357 = vsel %vm274, %v67, 0
    %v360 = vsel %vm274, %v68, 0
    %v363 = vsel %vm274, %v69, 0
    %v366 = vsel %vm274, %v70, 0
    %v369 = vsel %vm274, %v71, 0
    %v372 = vsel %vm274, %v72, 0
    %v375 = vsel %vm274, %v73, 0
    %v378 = vsel %vm274, %v74, 0
    %v381 = vsel %vm274, %v75, 0
    %v384 = vsel %vm274, %v76, 0
    %v387 = vsel %vm274, %v77, 0
    %v390 = vsel %vm274, %v78, 0
    %v393 = vsel %vm274, %v79, 0
    %v396 = vsel %vm274, %v80, 0
    %v399 = vsel %vm274, %v81, 0
    %v402 = vsel %vm274, %v82, 0
    %v405 = vsel %vm274, %v83, 0
    %v408 = vsel %vm274, %v84, 0
    %v411 = vsel %vm274, %v85, 0
    %v414 = vsel %vm274, %v86, 0
    %v417 = vsel %vm274, %v87, 0
    %v420 = vsel %vm274, %v88, 0
    %v423 = vsel %vm274, %v89, 0
    %v426 = vsel %vm274, %v90, 0
    %v429 = vsel %vm274, %v91, 0
    %v432 = vsel %vm274, %v92, 0
    %v435 = vsel %vm274, %v93, 0
    %v438 = vsel %vm274, %v94, 0
    %v441 = vsel %vm274, %v95, 0
    %v444 = vsel %vm274, %v96, 0
    %v447 = vsel %vm274, %v97, 0
    %v450 = vsel %vm274, %v98, 0
    %v453 = vsel %vm274, %v99, 0
    %v456 = vsel %vm274, %v100, 0
    %v459 = vsel %vm274, %v101, 0
    %v462 = vsel %vm274, %v102, 0
    %v465 = vsel %vm274, %v103, 0
    %v468 = vsel %vm274, %v104, 0
    %v471 = vsel %vm274, %v105, 0
    %v474 = vsel %vm274, %v106, 0
    %v477 = vsel %vm274, %v107, 0
    %v480 = vsel %vm274, %v108, 0
    %v483 = vsel %vm274, %v109, 0
    %v486 = vsel %vm274, %v110, 0
    %v489 = vsel %vm274, %v111, 0
    %v492 = vsel %vm274, %v112, 0
    %v495 = vsel %vm274, %v113, 0
    %v498 = vsel %vm274, %v114, 0
    %v501 = vsel %vm274, %v115, 0
    %v504 = vsel %vm274, %v116, 0
    %v507 = vsel %vm274, %v117, 0
    %v510 = vsel %vm274, %v118, 0
    %v513 = vsel %vm274, %v119, 0
    %v516 = vsel %vm274, %v120, 0
    %v519 = vsel %vm274, %v121, 0
    %v522 = vsel %vm274, %v122, 0
    %v525 = vsel %vm274, %v123, 0
    %v528 = vsel %vm274, %v124, 0
    %v531 = vsel %vm274, %v125, 0
    %v534 = vsel %vm274, %v126, 0
    %v537 = vsel %vm274, %v127, 0
    %v540 = vsel %vm274, %v128, 0
    %v543 = vsel %vm274, %v129, 0
    %v546 = vsel %vm274, %v130, 0
    %v549 = vsel %vm274, %v131, 0
    %v552 = vsel %vm274, %v132, 0
    %v555 = vsel %vm274, %v133, 0
    %v558 = vsel %vm274, %v134, 0
    %v561 = vsel %vm274, %v135, 0
    %v564 = vsel %vm274, %v136, 0
    %v567 = vsel %vm274, %v137, 0
    %v570 = vsel %vm274, %v138, 0
    %v573 = vsel %vm274, %v139, 0
    %v576 = vsel %vm274, %v140, 0
    %v579 = vsel %vm274, %v141, 0
    %v582 = vsel %vm274, %v142, 0
    %v585 = vsel %vm274, %v143, 0
    %v588 = vsel %vm274, %v144, 0
    %v591 = vsel %vm274, %v145, 0
    %v594 = vsel %vm274, %v146, 0
    %v597 = vsel %vm274, %v147, 0
    %v600 = vsel %vm274, %v148, 0
    %v603 = vsel %vm274, %v149, 0
    %v606 = vsel %vm274, %v150, 0
    %v609 = vsel %vm274, %v151, 0
    %v612 = vsel %vm274, %v152, 0
    %v615 = vsel %vm274, %v153, 0
    %v618 = vsel %vm274, %v154, 0
    %v621 = vsel %vm274, %v155, 0
    %v624 = vsel %vm274, %v156, 0
    %v627 = vsel %vm274, %v157, 0
    %v630 = vsel %vm274, %v158, 0
    %v633 = vsel %vm274, %v159, 0
    %v636 = vsel %vm274, %v160, 0
    %v639 = vsel %vm274, %v161, 0
    %v642 = vsel %vm274, %v162, 0
    %v645 = vsel %vm274, %v163, 0
    %v648 = vsel %vm274, %v164, 0
    %v651 = vsel %vm274, %v165, 0
    %v654 = vsel %vm274, %v166, 0
    %v657 = vsel %vm274, %v167, 0
    %v660 = vsel %vm274, %v168, 0
    %v663 = vsel %vm274, %v169, 0
    %v666 = vsel %vm274, %v170, 0
    %v669 = vsel %vm274, %v171, 0
    %v672 = vsel %vm274, %v172, 0
    %v675 = vsel %vm274, %v173, 0
    %v678 = vsel %vm274, %v174, 0
    %v681 = vsel %vm274, %v175, 0
    %v684 = vsel %vm274, %v176, 0
    %v687 = vsel %vm274, %v177, 0
    %v690 = vsel %vm274, %v178, 0
    %v693 = vsel %vm274, %v179, 0
    %v696 = vsel %vm274, %v180, 0
    %v699 = vsel %vm274, %v181, 0
    %v702 = vsel %vm274, %v182, 0
    %v705 = vsel %vm274, %v183, 0
    %v708 = vsel %vm274, %v184, 0
    %v711 = vsel %vm274, %v185, 0
    %v714 = vsel %vm274, %v186, 0
    %v717 = vsel %vm274, %v187, 0
    %v720 = vsel %vm274, %v188, 0
    %v723 = vsel %vm274, %v189, 0
    %v726 = vsel %vm274, %v190, 0
    %v729 = vsel %vm274, %v191, 0
    %v732 = vsel %vm274, %v192, 0
    %v735 = vsel %vm274, %v193, 0
    %v738 = vsel %vm274, %v194, 0
    %v741 = vsel %vm274, %v195, 0
    %v744 = vsel %vm274, %v196, 0
    %v747 = vsel %vm274, %v197, 0
    %v750 = vsel %vm274, %v198, 0
    %v753 = vsel %vm274, %v199, 0
    %v756 = vsel %vm274, %v200, 0
    %v759 = vsel %vm274, %v201, 0
    %v762 = vsel %vm274, %v202, 0
    %v765 = vsel %vm274, %v203, 0
    %v768 = vsel %vm274, %v204, 0
    %v771 = vsel %vm274, %v205, 0
    %v774 = vsel %vm274, %v206, 0
    %v777 = vsel %vm274, %v207, 0
    %v780 = vsel %vm274, %v208, 0
    %v783 = vsel %vm274, %v209, 0
    %v786 = vsel %vm274, %v210, 0
    %v789 = vsel %vm274, %v211, 0
    %v792 = vsel %vm274, %v212, 0
    %v795 = vsel %vm274, %v213, 0
    %v798 = vsel %vm274, %v214, 0
    %v801 = vsel %vm274, %v215, 0
    %v804 = vsel %vm274, %v216, 0
    %v807 = vsel %vm274, %v217, 0
    %v810 = vsel %vm274, %v218, 0
    %v813 = vsel %vm274, %v219, 0
    %v816 = vsel %vm274, %v220, 0
    %v819 = vsel %vm274, %v221, 0
    %v822 = vsel %vm274, %v222, 0
    %v825 = vsel %vm274, %v223, 0
    %v828 = vsel %vm274, %v224, 0
    %v831 = vsel %vm274, %v225, 0
    %v834 = vsel %vm274, %v226, 0
    %v837 = vsel %vm274, %v227, 0
    %v840 = vsel %vm274, %v228, 0
    %v843 = vsel %vm274, %v229, 0
    %v846 = vsel %vm274, %v230, 0
    %v849 = vsel %vm274, %v231, 0
    %v852 = vsel %vm274, %v232, 0
    %v855 = vsel %vm274, %v233, 0
    %v858 = vsel %vm274, %v234, 0
    %v861 = vsel %vm274, %v235, 0
    %v864 = vsel %vm274, %v236, 0
    %v867 = vsel %vm274, %v237, 0
    %v870 = vsel %vm274, %v238, 0
    %v873 = vsel %vm274, %v239, 0
    %v876 = vsel %vm274, %v240, 0
    %v879 = vsel %vm274, %v241, 0
    %v882 = vsel %vm274, %v242, 0
    %v885 = vsel %vm274, %v243, 0
    %v888 = vsel %vm274, %v244, 0
    %v891 = vsel %vm274, %v245, 0
    %v894 = vsel %vm274, %v246, 0
    %v897 = vsel %vm274, %v247, 0
    %v900 = vsel %vm274, %v248, 0
    %v903 = vsel %vm274, %v249, 0
    %v906 = vsel %vm274, %v250, 0
    %v909 = vsel %vm274, %v251, 0
    %v912 = vsel %vm274, %v252, 0
    %v915 = vsel %vm274, %v253, 0
    %v918 = vsel %vm274, %v254, 0
    %v921 = vsel %vm274, %v255, 0
    %v924 = vsel %vm274, %v256, 0
    %v927 = vsel %vm274, %v257, 0
    %v930 = vsel %vm274, %v258, 0
    %v933 = vsel %vm274, %v259, 0
    %v936 = vsel %vm274, %v260, 0
    %v939 = vsel %vm274, %v261, 0
    %v942 = vsel %vm274, %v262, 0
    %v945 = vsel %vm274, %v263, 0
    %v948 = vsel %vm274, %v264, 0
    %950 = vmatprep.subr.mxu0 0.0
    %951 = vmatpush1.msra.mxu0 %v265
    %952 = vmatprep.subr.mxu0 0.0
    %953 = vmatpush1.msra.mxu0 %v266
    %954 = vmatprep.subr.mxu0 0.0
    %955 = vmatpush1.msra.mxu0 0.0
    %956 = vmatprep.subr.mxu0 0.0
    %957 = vmatpush1.msra.mxu0 0.0
    %958 = vmatprep.subr.mxu0 0.0
    %959 = vmatpush1.msra.mxu0 0.0
    %960 = vmatprep.subr.mxu0 0.0
    %961 = vmatpush1.msra.mxu0 0.0
    %962 = vmatprep.subr.mxu0 0.0
    %963 = vmatpush1.msra.mxu0 0.0
    %964 = vmatprep.subr.mxu0 0.0
    %965 = vmatpush1.msra.mxu0 0.0
    %966 = vmatprep.subr.mxu0 0.0
    %967 = vmatpush1.msra.mxu0 0.0
    %968 = vmatprep.subr.mxu0 0.0
    %969 = vmatpush1.msra.mxu0 0.0
    %970 = vmatprep.subr.mxu0 0.0
    %971 = vmatpush1.msra.mxu0 0.0
    %972 = vmatprep.subr.mxu0 0.0
    %973 = vmatpush1.msra.mxu0 0.0
    %974 = vmatprep.subr.mxu0 0.0
    %975 = vmatpush1.msra.mxu0 0.0
    %976 = vmatprep.subr.mxu0 0.0
    %977 = vmatpush1.msra.mxu0 0.0
    %978 = vmatprep.subr.mxu0 0.0
    %979 = vmatpush1.msra.mxu0 0.0
    %980 = vmatprep.subr.mxu0 0.0
    %981 = vmatpush1.msra.mxu0 0.0
    %982 = vmatprep.subr.mxu0 0.0
    %983 = vmatpush1.msra.mxu0 0.0
    %984 = vmatprep.subr.mxu0 0.0
    %985 = vmatpush1.msra.mxu0 0.0
    %986 = vmatprep.subr.mxu0 0.0
    %987 = vmatpush1.msra.mxu0 0.0
    %988 = vmatprep.subr.mxu0 0.0
    %989 = vmatpush1.msra.mxu0 0.0
    %990 = vmatprep.subr.mxu0 0.0
    %991 = vmatpush1.msra.mxu0 0.0
    %992 = vmatprep.subr.mxu0 0.0
    %993 = vmatpush1.msra.mxu0 0.0
    %994 = vmatprep.subr.mxu0 0.0
    %995 = vmatpush1.msra.mxu0 0.0
    %996 = vmatprep.subr.mxu0 0.0
    %997 = vmatpush1.msra.mxu0 0.0
    %998 = vmatprep.subr.mxu0 0.0
    %999 = vmatpush1.msra.mxu0 0.0
    %1000 = vmatprep.subr.mxu0 0.0
    %1001 = vmatpush1.msra.mxu0 0.0
    %1002 = vmatprep.subr.mxu0 0.0
    %1003 = vmatpush1.msra.mxu0 0.0
    %1004 = vmatprep.subr.mxu0 0.0
    %1005 = vmatpush1.msra.mxu0 0.0
    %1006 = vmatprep.subr.mxu0 0.0
    %1007 = vmatpush1.msra.mxu0 0.0
    %1008 = vmatprep.subr.mxu0 0.0
    %1009 = vmatpush1.msra.mxu0 0.0
    %1010 = vmatprep.subr.mxu0 0.0
    %1011 = vmatpush1.msra.mxu0 0.0
    %1012 = vmatprep.subr.mxu0 0.0
    %1013 = vmatpush1.msra.mxu0 0.0
    %1014 = vmatprep.mubr.f32.mxu0 0.0
    %1015 = vmatmul.mubr.f32.gmra.mrb[0].mxu0 %v276
    %v1016 = vpop.f32.mrb[0].mxu0
    %v1017 = vadd.f32 %v272, %v1016
    %v1018 = vpop.f32.mrb[0].mxu0
    %1019 = vmatprep.mubr.f32.mxu0 0.0
    %1020 = vmatmul.mubr.f32.gmra.mrb[0].mxu0 %v279
    %v1021 = vpop.f32.mrb[0].mxu0
    %v1022 = vadd.f32 %v272, %v1021
    %v1023 = vpop.f32.mrb[0].mxu0
    %1024 = vmatprep.mubr.f32.mxu0 0.0
    %1025 = vmatmul.mubr.f32.gmra.mrb[0].mxu0 %v282
    %v1026 = vpop.f32.mrb[0].mxu0
    %v1027 = vadd.f32 %v272, %v1026
    %v1028 = vpop.f32.mrb[0].mxu0
    %1029 = vmatprep.mubr.f32.mxu0 0.0
    %1030 = vmatmul.mubr.f32.gmra.mrb[0].mxu0 %v285
    %v1031 = vpop.f32.mrb[0].mxu0
    %v1032 = vadd.f32 %v272, %v1031
    %v1033 = vpop.f32.mrb[0].mxu0
    %1034 = vmatprep.mubr.f32.mxu0 0.0
    %1035 = vmatmul.mubr.f32.gmra.mrb[0].mxu0 %v288
    %v1036 = vpop.f32.mrb[0].mxu0
    %v1037 = vadd.f32 %v272, %v1036
    %v1038 = vpop.f32.mrb[0].mxu0
    %1039 = vmatprep.mubr.f32.mxu0 0.0
    %1040 = vmatmul.mubr.f32.gmra.mrb[0].mxu0 %v291
    %v1041 = vpop.f32.mrb[0].mxu0
    %v1042 = vadd.f32 %v272, %v1041
    %v1043 = vpop.f32.mrb[0].mxu0
    %1044 = vmatprep.mubr.f32.mxu0 0.0
    %1045 = vmatmul.mubr.f32.gmra.mrb[0].mxu0 %v294
    %v1046 = vpop.f32.mrb[0].mxu0
    %v1047 = vadd.f32 %v272, %v1046
    %v1048 = vpop.f32.mrb[0].mxu0
    %1049 = vmatprep.mubr.f32.mxu0 0.0
    %1050 = vmatmul.mubr.f32.gmra.mrb[0].mxu0 %v297
    %v1051 = vpop.f32.mrb[0].mxu0
    %v1052 = vadd.f32 %v272, %v1051
    %v1053 = vpop.f32.mrb[0].mxu0
    %1054 = vmatprep.mubr.f32.mxu0 0.0
    %1055 = vmatmul.mubr.f32.gmra.mrb[0].mxu0 %v300
    %v1056 = vpop.f32.mrb[0].mxu0
    %v1057 = vadd.f32 %v272, %v1056
    %v1058 = vpop.f32.mrb[0].mxu0
    %1059 = vmatprep.mubr.f32.mxu0 0.0
    %1060 = vmatmul.mubr.f32.gmra.mrb[0].mxu0 %v303
    %v1061 = vpop.f32.mrb[0].mxu0
    %v1062 = vadd.f32 %v272, %v1061
    %v1063 = vpop.f32.mrb[0].mxu0
    %1064 = vmatprep.mubr.f32.mxu0 0.0
    %1065 = vmatmul.mubr.f32.gmra.mrb[0].mxu0 %v306
    %v1066 = vpop.f32.mrb[0].mxu0
    %v1067 = vadd.f32 %v272, %v1066
    %v1068 = vpop.f32.mrb[0].mxu0
    %1069 = vmatprep.mubr.f32.mxu0 0.0
    %1070 = vmatmul.mubr.f32.gmra.mrb[0].mxu0 %v309
    %v1071 = vpop.f32.mrb[0].mxu0
    %v1072 = vadd.f32 %v272, %v1071
    %v1073 = vpop.f32.mrb[0].mxu0
    %1074 = vmatprep.mubr.f32.mxu0 0.0
    %1075 = vmatmul.mubr.f32.gmra.mrb[0].mxu0 %v312
    %v1076 = vpop.f32.mrb[0].mxu0
    %v1077 = vadd.f32 %v272, %v1076
    %v1078 = vpop.f32.mrb[0].mxu0
    %1079 = vmatprep.mubr.f32.mxu0 0.0
    %1080 = vmatmul.mubr.f32.gmra.mrb[0].mxu0 %v315
    %v1081 = vpop.f32.mrb[0].mxu0
    %v1082 = vadd.f32 %v272, %v1081
    %v1083 = vpop.f32.mrb[0].mxu0
    %1084 = vmatprep.mubr.f32.mxu0 0.0
    %1085 = vmatmul.mubr.f32.gmra.mrb[0].mxu0 %v318
    %v1086 = vpop.f32.mrb[0].mxu0
    %v1087 = vadd.f32 %v272, %v1086
    %v1088 = vpop.f32.mrb[0].mxu0
    %1089 = vmatprep.mubr.f32.mxu0 0.0
    %1090 = vmatmul.mubr.f32.gmra.mrb[0].mxu0 %v321
    %v1091 = vpop.f32.mrb[0].mxu0
    %v1092 = vadd.f32 %v272, %v1091
    %v1093 = vpop.f32.mrb[0].mxu0
    %1094 = vmatprep.mubr.f32.mxu0 0.0
    %1095 = vmatmul.mubr.f32.gmra.mrb[0].mxu0 %v324
    %v1096 = vpop.f32.mrb[0].mxu0
    %v1097 = vadd.f32 %v272, %v1096
    %v1098 = vpop.f32.mrb[0].mxu0
    %1099 = vmatprep.mubr.f32.mxu0 0.0
    %1100 = vmatmul.mubr.f32.gmra.mrb[0].mxu0 %v327
    %v1101 = vpop.f32.mrb[0].mxu0
    %v1102 = vadd.f32 %v272, %v1101
    %v1103 = vpop.f32.mrb[0].mxu0
    %1104 = vmatprep.mubr.f32.mxu0 0.0
    %1105 = vmatmul.mubr.f32.gmra.mrb[0].mxu0 %v330
    %v1106 = vpop.f32.mrb[0].mxu0
    %v1107 = vadd.f32 %v272, %v1106
    %v1108 = vpop.f32.mrb[0].mxu0
    %1109 = vmatprep.mubr.f32.mxu0 0.0
    %1110 = vmatmul.mubr.f32.gmra.mrb[0].mxu0 %v333
    %v1111 = vpop.f32.mrb[0].mxu0
    %v1112 = vadd.f32 %v272, %v1111
    %v1113 = vpop.f32.mrb[0].mxu0
    %1114 = vmatprep.mubr.f32.mxu0 0.0
    %1115 = vmatmul.mubr.f32.gmra.mrb[0].mxu0 %v336
    %v1116 = vpop.f32.mrb[0].mxu0
    %v1117 = vadd.f32 %v272, %v1116
    %v1118 = vpop.f32.mrb[0].mxu0
    %1119 = vmatprep.mubr.f32.mxu0 0.0
    %1120 = vmatmul.mubr.f32.gmra.mrb[0].mxu0 %v339
    %v1121 = vpop.f32.mrb[0].mxu0
    %v1122 = vadd.f32 %v272, %v1121
    %v1123 = vpop.f32.mrb[0].mxu0
    %1124 = vmatprep.mubr.f32.mxu0 0.0
    %1125 = vmatmul.mubr.f32.gmra.mrb[0].mxu0 %v342
    %v1126 = vpop.f32.mrb[0].mxu0
    %v1127 = vadd.f32 %v272, %v1126
    %v1128 = vpop.f32.mrb[0].mxu0
    %1129 = vmatprep.mubr.f32.mxu0 0.0
    %1130 = vmatmul.mubr.f32.gmra.mrb[0].mxu0 %v345
    %v1131 = vpop.f32.mrb[0].mxu0
    %v1132 = vadd.f32 %v272, %v1131
    %v1133 = vpop.f32.mrb[0].mxu0
    %1134 = vmatprep.mubr.f32.mxu0 0.0
    %1135 = vmatmul.mubr.f32.gmra.mrb[0].mxu0 %v348
    %v1136 = vpop.f32.mrb[0].mxu0
    %v1137 = vadd.f32 %v272, %v1136
    %v1138 = vpop.f32.mrb[0].mxu0
    %1139 = vmatprep.mubr.f32.mxu0 0.0
    %1140 = vmatmul.mubr.f32.gmra.mrb[0].mxu0 %v351
    %v1141 = vpop.f32.mrb[0].mxu0
    %v1142 = vadd.f32 %v272, %v1141
    %v1143 = vpop.f32.mrb[0].mxu0
    %1144 = vmatprep.mubr.f32.mxu0 0.0
    %1145 = vmatmul.mubr.f32.gmra.mrb[0].mxu0 %v354
    %v1146 = vpop.f32.mrb[0].mxu0
    %v1147 = vadd.f32 %v272, %v1146
    %v1148 = vpop.f32.mrb[0].mxu0
    %1149 = vmatprep.mubr.f32.mxu0 0.0
    %1150 = vmatmul.mubr.f32.gmra.mrb[0].mxu0 %v357
    %v1151 = vpop.f32.mrb[0].mxu0
    %v1152 = vadd.f32 %v272, %v1151
    %v1153 = vpop.f32.mrb[0].mxu0
    %1154 = vmatprep.mubr.f32.mxu0 0.0
    %1155 = vmatmul.mubr.f32.gmra.mrb[0].mxu0 %v360
    %v1156 = vpop.f32.mrb[0].mxu0
    %v1157 = vadd.f32 %v272, %v1156
    %v1158 = vpop.f32.mrb[0].mxu0
    %1159 = vmatprep.mubr.f32.mxu0 0.0
    %1160 = vmatmul.mubr.f32.gmra.mrb[0].mxu0 %v363
    %v1161 = vpop.f32.mrb[0].mxu0
    %v1162 = vadd.f32 %v272, %v1161
    %v1163 = vpop.f32.mrb[0].mxu0
    %1164 = vmatprep.mubr.f32.mxu0 0.0
    %1165 = vmatmul.mubr.f32.gmra.mrb[0].mxu0 %v366
    %v1166 = vpop.f32.mrb[0].mxu0
    %v1167 = vadd.f32 %v272, %v1166
    %v1168 = vpop.f32.mrb[0].mxu0
    %1169 = vmatprep.mubr.f32.mxu0 0.0
    %1170 = vmatmul.mubr.f32.gmra.mrb[0].mxu0 %v369
    %v1171 = vpop.f32.mrb[0].mxu0
    %v1172 = vadd.f32 %v272, %v1171
    %v1173 = vpop.f32.mrb[0].mxu0
    %1174 = vmatprep.mubr.f32.mxu0 0.0
    %1175 = vmatmul.mubr.f32.gmra.mrb[0].mxu0 %v372
    %v1176 = vpop.f32.mrb[0].mxu0
    %v1177 = vadd.f32 %v272, %v1176
    %v1178 = vpop.f32.mrb[0].mxu0
    %1179 = vmatprep.mubr.f32.mxu0 0.0
    %1180 = vmatmul.mubr.f32.gmra.mrb[0].mxu0 %v375
    %v1181 = vpop.f32.mrb[0].mxu0
    %v1182 = vadd.f32 %v272, %v1181
    %v1183 = vpop.f32.mrb[0].mxu0
    %1184 = vmatprep.mubr.f32.mxu0 0.0
    %1185 = vmatmul.mubr.f32.gmra.mrb[0].mxu0 %v378
    %v1186 = vpop.f32.mrb[0].mxu0
    %v1187 = vadd.f32 %v272, %v1186
    %v1188 = vpop.f32.mrb[0].mxu0
    %1189 = vmatprep.mubr.f32.mxu0 0.0
    %1190 = vmatmul.mubr.f32.gmra.mrb[0].mxu0 %v381
    %v1191 = vpop.f32.mrb[0].mxu0
    %v1192 = vadd.f32 %v272, %v1191
    %v1193 = vpop.f32.mrb[0].mxu0
    %1194 = vmatprep.mubr.f32.mxu0 0.0
    %1195 = vmatmul.mubr.f32.gmra.mrb[0].mxu0 %v384
    %v1196 = vpop.f32.mrb[0].mxu0
    %v1197 = vadd.f32 %v272, %v1196
    %v1198 = vpop.f32.mrb[0].mxu0
    %1199 = vmatprep.mubr.f32.mxu0 0.0
    %1200 = vmatmul.mubr.f32.gmra.mrb[0].mxu0 %v387
    %v1201 = vpop.f32.mrb[0].mxu0
    %v1202 = vadd.f32 %v272, %v1201
    %v1203 = vpop.f32.mrb[0].mxu0
    %1204 = vmatprep.mubr.f32.mxu0 0.0
    %1205 = vmatmul.mubr.f32.gmra.mrb[0].mxu0 %v390
    %v1206 = vpop.f32.mrb[0].mxu0
    %v1207 = vadd.f32 %v272, %v1206
    %v1208 = vpop.f32.mrb[0].mxu0
    %1209 = vmatprep.mubr.f32.mxu0 0.0
    %1210 = vmatmul.mubr.f32.gmra.mrb[0].mxu0 %v393
    %v1211 = vpop.f32.mrb[0].mxu0
    %v1212 = vadd.f32 %v272, %v1211
    %v1213 = vpop.f32.mrb[0].mxu0
    %1214 = vmatprep.mubr.f32.mxu0 0.0
    %1215 = vmatmul.mubr.f32.gmra.mrb[0].mxu0 %v396
    %v1216 = vpop.f32.mrb[0].mxu0
    %v1217 = vadd.f32 %v272, %v1216
    %v1218 = vpop.f32.mrb[0].mxu0
    %1219 = vmatprep.mubr.f32.mxu0 0.0
    %1220 = vmatmul.mubr.f32.gmra.mrb[0].mxu0 %v399
    %v1221 = vpop.f32.mrb[0].mxu0
    %v1222 = vadd.f32 %v272, %v1221
    %v1223 = vpop.f32.mrb[0].mxu0
    %1224 = vmatprep.mubr.f32.mxu0 0.0
    %1225 = vmatmul.mubr.f32.gmra.mrb[0].mxu0 %v402
    %v1226 = vpop.f32.mrb[0].mxu0
    %v1227 = vadd.f32 %v272, %v1226
    %v1228 = vpop.f32.mrb[0].mxu0
    %1229 = vmatprep.mubr.f32.mxu0 0.0
    %1230 = vmatmul.mubr.f32.gmra.mrb[0].mxu0 %v405
    %v1231 = vpop.f32.mrb[0].mxu0
    %v1232 = vadd.f32 %v272, %v1231
    %v1233 = vpop.f32.mrb[0].mxu0
    %1234 = vmatprep.mubr.f32.mxu0 0.0
    %1235 = vmatmul.mubr.f32.gmra.mrb[0].mxu0 %v408
    %v1236 = vpop.f32.mrb[0].mxu0
    %v1237 = vadd.f32 %v272, %v1236
    %v1238 = vpop.f32.mrb[0].mxu0
    %1239 = vmatprep.mubr.f32.mxu0 0.0
    %1240 = vmatmul.mubr.f32.gmra.mrb[0].mxu0 %v411
    %v1241 = vpop.f32.mrb[0].mxu0
    %v1242 = vadd.f32 %v272, %v1241
    %v1243 = vpop.f32.mrb[0].mxu0
    %1244 = vmatprep.mubr.f32.mxu0 0.0
    %1245 = vmatmul.mubr.f32.gmra.mrb[0].mxu0 %v414
    %v1246 = vpop.f32.mrb[0].mxu0
    %v1247 = vadd.f32 %v272, %v1246
    %v1248 = vpop.f32.mrb[0].mxu0
    %1249 = vmatprep.mubr.f32.mxu0 0.0
    %1250 = vmatmul.mubr.f32.gmra.mrb[0].mxu0 %v417
    %v1251 = vpop.f32.mrb[0].mxu0
    %v1252 = vadd.f32 %v272, %v1251
    %v1253 = vpop.f32.mrb[0].mxu0
    %1254 = vmatprep.mubr.f32.mxu0 0.0
    %1255 = vmatmul.mubr.f32.gmra.mrb[0].mxu0 %v420
    %v1256 = vpop.f32.mrb[0].mxu0
    %v1257 = vadd.f32 %v272, %v1256
    %v1258 = vpop.f32.mrb[0].mxu0
    %1259 = vmatprep.mubr.f32.mxu0 0.0
    %1260 = vmatmul.mubr.f32.gmra.mrb[0].mxu0 %v423
    %v1261 = vpop.f32.mrb[0].mxu0
    %v1262 = vadd.f32 %v272, %v1261
    %v1263 = vpop.f32.mrb[0].mxu0
    %1264 = vmatprep.mubr.f32.mxu0 0.0
    %1265 = vmatmul.mubr.f32.gmra.mrb[0].mxu0 %v426
    %v1266 = vpop.f32.mrb[0].mxu0
    %v1267 = vadd.f32 %v272, %v1266
    %v1268 = vpop.f32.mrb[0].mxu0
    %1269 = vmatprep.mubr.f32.mxu0 0.0
    %1270 = vmatmul.mubr.f32.gmra.mrb[0].mxu0 %v429
    %v1271 = vpop.f32.mrb[0].mxu0
    %v1272 = vadd.f32 %v272, %v1271
    %v1273 = vpop.f32.mrb[0].mxu0
    %1274 = vmatprep.mubr.f32.mxu0 0.0
    %1275 = vmatmul.mubr.f32.gmra.mrb[0].mxu0 %v432
    %v1276 = vpop.f32.mrb[0].mxu0
    %v1277 = vadd.f32 %v272, %v1276
    %v1278 = vpop.f32.mrb[0].mxu0
    %1279 = vmatprep.mubr.f32.mxu0 0.0
    %1280 = vmatmul.mubr.f32.gmra.mrb[0].mxu0 %v435
    %v1281 = vpop.f32.mrb[0].mxu0
    %v1282 = vadd.f32 %v272, %v1281
    %v1283 = vpop.f32.mrb[0].mxu0
    %1284 = vmatprep.mubr.f32.mxu0 0.0
    %1285 = vmatmul.mubr.f32.gmra.mrb[0].mxu0 %v438
    %v1286 = vpop.f32.mrb[0].mxu0
    %v1287 = vadd.f32 %v272, %v1286
    %v1288 = vpop.f32.mrb[0].mxu0
    %1289 = vmatprep.mubr.f32.mxu0 0.0
    %1290 = vmatmul.mubr.f32.gmra.mrb[0].mxu0 %v441
    %v1291 = vpop.f32.mrb[0].mxu0
    %v1292 = vadd.f32 %v272, %v1291
    %v1293 = vpop.f32.mrb[0].mxu0
    %1294 = vmatprep.mubr.f32.mxu0 0.0
    %1295 = vmatmul.mubr.f32.gmra.mrb[0].mxu0 %v444
    %v1296 = vpop.f32.mrb[0].mxu0
    %v1297 = vadd.f32 %v272, %v1296
    %v1298 = vpop.f32.mrb[0].mxu0
    %1299 = vmatprep.mubr.f32.mxu0 0.0
    %1300 = vmatmul.mubr.f32.gmra.mrb[0].mxu0 %v447
    %v1301 = vpop.f32.mrb[0].mxu0
    %v1302 = vadd.f32 %v272, %v1301
    %v1303 = vpop.f32.mrb[0].mxu0
    %1304 = vmatprep.mubr.f32.mxu0 0.0
    %1305 = vmatmul.mubr.f32.gmra.mrb[0].mxu0 %v450
    %v1306 = vpop.f32.mrb[0].mxu0
    %v1307 = vadd.f32 %v272, %v1306
    %v1308 = vpop.f32.mrb[0].mxu0
    %1309 = vmatprep.mubr.f32.mxu0 0.0
    %1310 = vmatmul.mubr.f32.gmra.mrb[0].mxu0 %v453
    %v1311 = vpop.f32.mrb[0].mxu0
    %v1312 = vadd.f32 %v272, %v1311
    %v1313 = vpop.f32.mrb[0].mxu0
    %1314 = vmatprep.mubr.f32.mxu0 0.0
    %1315 = vmatmul.mubr.f32.gmra.mrb[0].mxu0 %v456
    %v1316 = vpop.f32.mrb[0].mxu0
    %v1317 = vadd.f32 %v272, %v1316
    %v1318 = vpop.f32.mrb[0].mxu0
    %1319 = vmatprep.mubr.f32.mxu0 0.0
    %1320 = vmatmul.mubr.f32.gmra.mrb[0].mxu0 %v459
    %v1321 = vpop.f32.mrb[0].mxu0
    %v1322 = vadd.f32 %v272, %v1321
    %v1323 = vpop.f32.mrb[0].mxu0
    %1324 = vmatprep.mubr.f32.mxu0 0.0
    %1325 = vmatmul.mubr.f32.gmra.mrb[0].mxu0 %v462
    %v1326 = vpop.f32.mrb[0].mxu0
    %v1327 = vadd.f32 %v272, %v1326
    %v1328 = vpop.f32.mrb[0].mxu0
    %1329 = vmatprep.mubr.f32.mxu0 0.0
    %1330 = vmatmul.mubr.f32.gmra.mrb[0].mxu0 %v465
    %v1331 = vpop.f32.mrb[0].mxu0
    %v1332 = vadd.f32 %v272, %v1331
    %v1333 = vpop.f32.mrb[0].mxu0
    %1334 = vmatprep.mubr.f32.mxu0 0.0
    %1335 = vmatmul.mubr.f32.gmra.mrb[0].mxu0 %v468
    %v1336 = vpop.f32.mrb[0].mxu0
    %v1337 = vadd.f32 %v272, %v1336
    %v1338 = vpop.f32.mrb[0].mxu0
    %1339 = vmatprep.mubr.f32.mxu0 0.0
    %1340 = vmatmul.mubr.f32.gmra.mrb[0].mxu0 %v471
    %v1341 = vpop.f32.mrb[0].mxu0
    %v1342 = vadd.f32 %v272, %v1341
    %v1343 = vpop.f32.mrb[0].mxu0
    %1344 = vmatprep.mubr.f32.mxu0 0.0
    %1345 = vmatmul.mubr.f32.gmra.mrb[0].mxu0 %v474
    %v1346 = vpop.f32.mrb[0].mxu0
    %v1347 = vadd.f32 %v272, %v1346
    %v1348 = vpop.f32.mrb[0].mxu0
    %1349 = vmatprep.mubr.f32.mxu0 0.0
    %1350 = vmatmul.mubr.f32.gmra.mrb[0].mxu0 %v477
    %v1351 = vpop.f32.mrb[0].mxu0
    %v1352 = vadd.f32 %v272, %v1351
    %v1353 = vpop.f32.mrb[0].mxu0
    %1354 = vmatprep.mubr.f32.mxu0 0.0
    %1355 = vmatmul.mubr.f32.gmra.mrb[0].mxu0 %v480
    %v1356 = vpop.f32.mrb[0].mxu0
    %v1357 = vadd.f32 %v272, %v1356
    %v1358 = vpop.f32.mrb[0].mxu0
    %1359 = vmatprep.mubr.f32.mxu0 0.0
    %1360 = vmatmul.mubr.f32.gmra.mrb[0].mxu0 %v483
    %v1361 = vpop.f32.mrb[0].mxu0
    %v1362 = vadd.f32 %v272, %v1361
    %v1363 = vpop.f32.mrb[0].mxu0
    %1364 = vmatprep.mubr.f32.mxu0 0.0
    %1365 = vmatmul.mubr.f32.gmra.mrb[0].mxu0 %v486
    %v1366 = vpop.f32.mrb[0].mxu0
    %v1367 = vadd.f32 %v272, %v1366
    %v1368 = vpop.f32.mrb[0].mxu0
    %1369 = vmatprep.mubr.f32.mxu0 0.0
    %1370 = vmatmul.mubr.f32.gmra.mrb[0].mxu0 %v489
    %v1371 = vpop.f32.mrb[0].mxu0
    %v1372 = vadd.f32 %v272, %v1371
    %v1373 = vpop.f32.mrb[0].mxu0
    %1374 = vmatprep.mubr.f32.mxu0 0.0
    %1375 = vmatmul.mubr.f32.gmra.mrb[0].mxu0 %v492
    %v1376 = vpop.f32.mrb[0].mxu0
    %v1377 = vadd.f32 %v272, %v1376
    %v1378 = vpop.f32.mrb[0].mxu0
    %1379 = vmatprep.mubr.f32.mxu0 0.0
    %1380 = vmatmul.mubr.f32.gmra.mrb[0].mxu0 %v495
    %v1381 = vpop.f32.mrb[0].mxu0
    %v1382 = vadd.f32 %v272, %v1381
    %v1383 = vpop.f32.mrb[0].mxu0
    %1384 = vmatprep.mubr.f32.mxu0 0.0
    %1385 = vmatmul.mubr.f32.gmra.mrb[0].mxu0 %v498
    %v1386 = vpop.f32.mrb[0].mxu0
    %v1387 = vadd.f32 %v272, %v1386
    %v1388 = vpop.f32.mrb[0].mxu0
    %1389 = vmatprep.mubr.f32.mxu0 0.0
    %1390 = vmatmul.mubr.f32.gmra.mrb[0].mxu0 %v501
    %v1391 = vpop.f32.mrb[0].mxu0
    %v1392 = vadd.f32 %v272, %v1391
    %v1393 = vpop.f32.mrb[0].mxu0
    %1394 = vmatprep.mubr.f32.mxu0 0.0
    %1395 = vmatmul.mubr.f32.gmra.mrb[0].mxu0 %v504
    %v1396 = vpop.f32.mrb[0].mxu0
    %v1397 = vadd.f32 %v272, %v1396
    %v1398 = vpop.f32.mrb[0].mxu0
    %1399 = vmatprep.mubr.f32.mxu0 0.0
    %1400 = vmatmul.mubr.f32.gmra.mrb[0].mxu0 %v507
    %v1401 = vpop.f32.mrb[0].mxu0
    %v1402 = vadd.f32 %v272, %v1401
    %v1403 = vpop.f32.mrb[0].mxu0
    %1404 = vmatprep.mubr.f32.mxu0 0.0
    %1405 = vmatmul.mubr.f32.gmra.mrb[0].mxu0 %v510
    %v1406 = vpop.f32.mrb[0].mxu0
    %v1407 = vadd.f32 %v272, %v1406
    %v1408 = vpop.f32.mrb[0].mxu0
    %1409 = vmatprep.mubr.f32.mxu0 0.0
    %1410 = vmatmul.mubr.f32.gmra.mrb[0].mxu0 %v513
    %v1411 = vpop.f32.mrb[0].mxu0
    %v1412 = vadd.f32 %v272, %v1411
    %v1413 = vpop.f32.mrb[0].mxu0
    %1414 = vmatprep.mubr.f32.mxu0 0.0
    %1415 = vmatmul.mubr.f32.gmra.mrb[0].mxu0 %v516
    %v1416 = vpop.f32.mrb[0].mxu0
    %v1417 = vadd.f32 %v272, %v1416
    %v1418 = vpop.f32.mrb[0].mxu0
    %1419 = vmatprep.mubr.f32.mxu0 0.0
    %1420 = vmatmul.mubr.f32.gmra.mrb[0].mxu0 %v519
    %v1421 = vpop.f32.mrb[0].mxu0
    %v1422 = vadd.f32 %v272, %v1421
    %v1423 = vpop.f32.mrb[0].mxu0
    %1424 = vmatprep.mubr.f32.mxu0 0.0
    %1425 = vmatmul.mubr.f32.gmra.mrb[0].mxu0 %v522
    %v1426 = vpop.f32.mrb[0].mxu0
    %v1427 = vadd.f32 %v272, %v1426
    %v1428 = vpop.f32.mrb[0].mxu0
    %1429 = vmatprep.mubr.f32.mxu0 0.0
    %1430 = vmatmul.mubr.f32.gmra.mrb[0].mxu0 %v525
    %v1431 = vpop.f32.mrb[0].mxu0
    %v1432 = vadd.f32 %v272, %v1431
    %v1433 = vpop.f32.mrb[0].mxu0
    %1434 = vmatprep.mubr.f32.mxu0 0.0
    %1435 = vmatmul.mubr.f32.gmra.mrb[0].mxu0 %v528
    %v1436 = vpop.f32.mrb[0].mxu0
    %v1437 = vadd.f32 %v272, %v1436
    %v1438 = vpop.f32.mrb[0].mxu0
    %1439 = vmatprep.mubr.f32.mxu0 0.0
    %1440 = vmatmul.mubr.f32.gmra.mrb[0].mxu0 %v531
    %v1441 = vpop.f32.mrb[0].mxu0
    %v1442 = vadd.f32 %v272, %v1441
    %v1443 = vpop.f32.mrb[0].mxu0
    %1444 = vmatprep.mubr.f32.mxu0 0.0
    %1445 = vmatmul.mubr.f32.gmra.mrb[0].mxu0 %v534
    %v1446 = vpop.f32.mrb[0].mxu0
    %v1447 = vadd.f32 %v272, %v1446
    %v1448 = vpop.f32.mrb[0].mxu0
    %1449 = vmatprep.mubr.f32.mxu0 0.0
    %1450 = vmatmul.mubr.f32.gmra.mrb[0].mxu0 %v537
    %v1451 = vpop.f32.mrb[0].mxu0
    %v1452 = vadd.f32 %v272, %v1451
    %v1453 = vpop.f32.mrb[0].mxu0
    %1454 = vmatprep.mubr.f32.mxu0 0.0
    %1455 = vmatmul.mubr.f32.gmra.mrb[0].mxu0 %v540
    %v1456 = vpop.f32.mrb[0].mxu0
    %v1457 = vadd.f32 %v272, %v1456
    %v1458 = vpop.f32.mrb[0].mxu0
    %1459 = vmatprep.mubr.f32.mxu0 0.0
    %1460 = vmatmul.mubr.f32.gmra.mrb[0].mxu0 %v543
    %v1461 = vpop.f32.mrb[0].mxu0
    %v1462 = vadd.f32 %v272, %v1461
    %v1463 = vpop.f32.mrb[0].mxu0
    %1464 = vmatprep.mubr.f32.mxu0 0.0
    %1465 = vmatmul.mubr.f32.gmra.mrb[0].mxu0 %v546
    %v1466 = vpop.f32.mrb[0].mxu0
    %v1467 = vadd.f32 %v272, %v1466
    %v1468 = vpop.f32.mrb[0].mxu0
    %1469 = vmatprep.mubr.f32.mxu0 0.0
    %1470 = vmatmul.mubr.f32.gmra.mrb[0].mxu0 %v549
    %v1471 = vpop.f32.mrb[0].mxu0
    %v1472 = vadd.f32 %v272, %v1471
    %v1473 = vpop.f32.mrb[0].mxu0
    %1474 = vmatprep.mubr.f32.mxu0 0.0
    %1475 = vmatmul.mubr.f32.gmra.mrb[0].mxu0 %v552
    %v1476 = vpop.f32.mrb[0].mxu0
    %v1477 = vadd.f32 %v272, %v1476
    %v1478 = vpop.f32.mrb[0].mxu0
    %1479 = vmatprep.mubr.f32.mxu0 0.0
    %1480 = vmatmul.mubr.f32.gmra.mrb[0].mxu0 %v555
    %v1481 = vpop.f32.mrb[0].mxu0
    %v1482 = vadd.f32 %v272, %v1481
    %v1483 = vpop.f32.mrb[0].mxu0
    %1484 = vmatprep.mubr.f32.mxu0 0.0
    %1485 = vmatmul.mubr.f32.gmra.mrb[0].mxu0 %v558
    %v1486 = vpop.f32.mrb[0].mxu0
    %v1487 = vadd.f32 %v272, %v1486
    %v1488 = vpop.f32.mrb[0].mxu0
    %1489 = vmatprep.mubr.f32.mxu0 0.0
    %1490 = vmatmul.mubr.f32.gmra.mrb[0].mxu0 %v561
    %v1491 = vpop.f32.mrb[0].mxu0
    %v1492 = vadd.f32 %v272, %v1491
    %v1493 = vpop.f32.mrb[0].mxu0
    %1494 = vmatprep.mubr.f32.mxu0 0.0
    %1495 = vmatmul.mubr.f32.gmra.mrb[0].mxu0 %v564
    %v1496 = vpop.f32.mrb[0].mxu0
    %v1497 = vadd.f32 %v272, %v1496
    %v1498 = vpop.f32.mrb[0].mxu0
    %1499 = vmatprep.mubr.f32.mxu0 0.0
    %1500 = vmatmul.mubr.f32.gmra.mrb[0].mxu0 %v567
    %v1501 = vpop.f32.mrb[0].mxu0
    %v1502 = vadd.f32 %v272, %v1501
    %v1503 = vpop.f32.mrb[0].mxu0
    %1504 = vmatprep.mubr.f32.mxu0 0.0
    %1505 = vmatmul.mubr.f32.gmra.mrb[0].mxu0 %v570
    %v1506 = vpop.f32.mrb[0].mxu0
    %v1507 = vadd.f32 %v272, %v1506
    %v1508 = vpop.f32.mrb[0].mxu0
    %1509 = vmatprep.mubr.f32.mxu0 0.0
    %1510 = vmatmul.mubr.f32.gmra.mrb[0].mxu0 %v573
    %v1511 = vpop.f32.mrb[0].mxu0
    %v1512 = vadd.f32 %v272, %v1511
    %v1513 = vpop.f32.mrb[0].mxu0
    %1514 = vmatprep.mubr.f32.mxu0 0.0
    %1515 = vmatmul.mubr.f32.gmra.mrb[0].mxu0 %v576
    %v1516 = vpop.f32.mrb[0].mxu0
    %v1517 = vadd.f32 %v272, %v1516
    %v1518 = vpop.f32.mrb[0].mxu0
    %1519 = vmatprep.mubr.f32.mxu0 0.0
    %1520 = vmatmul.mubr.f32.gmra.mrb[0].mxu0 %v579
    %v1521 = vpop.f32.mrb[0].mxu0
    %v1522 = vadd.f32 %v272, %v1521
    %v1523 = vpop.f32.mrb[0].mxu0
    %1524 = vmatprep.mubr.f32.mxu0 0.0
    %1525 = vmatmul.mubr.f32.gmra.mrb[0].mxu0 %v582
    %v1526 = vpop.f32.mrb[0].mxu0
    %v1527 = vadd.f32 %v272, %v1526
    %v1528 = vpop.f32.mrb[0].mxu0
    %1529 = vmatprep.mubr.f32.mxu0 0.0
    %1530 = vmatmul.mubr.f32.gmra.mrb[0].mxu0 %v585
    %v1531 = vpop.f32.mrb[0].mxu0
    %v1532 = vadd.f32 %v272, %v1531
    %v1533 = vpop.f32.mrb[0].mxu0
    %1534 = vmatprep.mubr.f32.mxu0 0.0
    %1535 = vmatmul.mubr.f32.gmra.mrb[0].mxu0 %v588
    %v1536 = vpop.f32.mrb[0].mxu0
    %v1537 = vadd.f32 %v272, %v1536
    %v1538 = vpop.f32.mrb[0].mxu0
    %1539 = vmatprep.mubr.f32.mxu0 0.0
    %1540 = vmatmul.mubr.f32.gmra.mrb[0].mxu0 %v591
    %v1541 = vpop.f32.mrb[0].mxu0
    %v1542 = vadd.f32 %v272, %v1541
    %v1543 = vpop.f32.mrb[0].mxu0
    %1544 = vmatprep.mubr.f32.mxu0 0.0
    %1545 = vmatmul.mubr.f32.gmra.mrb[0].mxu0 %v594
    %v1546 = vpop.f32.mrb[0].mxu0
    %v1547 = vadd.f32 %v272, %v1546
    %v1548 = vpop.f32.mrb[0].mxu0
    %1549 = vmatprep.mubr.f32.mxu0 0.0
    %1550 = vmatmul.mubr.f32.gmra.mrb[0].mxu0 %v597
    %v1551 = vpop.f32.mrb[0].mxu0
    %v1552 = vadd.f32 %v272, %v1551
    %v1553 = vpop.f32.mrb[0].mxu0
    %1554 = vmatprep.mubr.f32.mxu0 0.0
    %1555 = vmatmul.mubr.f32.gmra.mrb[0].mxu0 %v600
    %v1556 = vpop.f32.mrb[0].mxu0
    %v1557 = vadd.f32 %v272, %v1556
    %v1558 = vpop.f32.mrb[0].mxu0
    %1559 = vmatprep.mubr.f32.mxu0 0.0
    %1560 = vmatmul.mubr.f32.gmra.mrb[0].mxu0 %v603
    %v1561 = vpop.f32.mrb[0].mxu0
    %v1562 = vadd.f32 %v272, %v1561
    %v1563 = vpop.f32.mrb[0].mxu0
    %1564 = vmatprep.mubr.f32.mxu0 0.0
    %1565 = vmatmul.mubr.f32.gmra.mrb[0].mxu0 %v606
    %v1566 = vpop.f32.mrb[0].mxu0
    %v1567 = vadd.f32 %v272, %v1566
    %v1568 = vpop.f32.mrb[0].mxu0
    %1569 = vmatprep.mubr.f32.mxu0 0.0
    %1570 = vmatmul.mubr.f32.gmra.mrb[0].mxu0 %v609
    %v1571 = vpop.f32.mrb[0].mxu0
    %v1572 = vadd.f32 %v272, %v1571
    %v1573 = vpop.f32.mrb[0].mxu0
    %1574 = vmatprep.mubr.f32.mxu0 0.0
    %1575 = vmatmul.mubr.f32.gmra.mrb[0].mxu0 %v612
    %v1576 = vpop.f32.mrb[0].mxu0
    %v1577 = vadd.f32 %v272, %v1576
    %v1578 = vpop.f32.mrb[0].mxu0
    %1579 = vmatprep.mubr.f32.mxu0 0.0
    %1580 = vmatmul.mubr.f32.gmra.mrb[0].mxu0 %v615
    %v1581 = vpop.f32.mrb[0].mxu0
    %v1582 = vadd.f32 %v272, %v1581
    %v1583 = vpop.f32.mrb[0].mxu0
    %1584 = vmatprep.mubr.f32.mxu0 0.0
    %1585 = vmatmul.mubr.f32.gmra.mrb[0].mxu0 %v618
    %v1586 = vpop.f32.mrb[0].mxu0
    %v1587 = vadd.f32 %v272, %v1586
    %v1588 = vpop.f32.mrb[0].mxu0
    %1589 = vmatprep.mubr.f32.mxu0 0.0
    %1590 = vmatmul.mubr.f32.gmra.mrb[0].mxu0 %v621
    %v1591 = vpop.f32.mrb[0].mxu0
    %v1592 = vadd.f32 %v272, %v1591
    %v1593 = vpop.f32.mrb[0].mxu0
    %1594 = vmatprep.mubr.f32.mxu0 0.0
    %1595 = vmatmul.mubr.f32.gmra.mrb[0].mxu0 %v624
    %v1596 = vpop.f32.mrb[0].mxu0
    %v1597 = vadd.f32 %v272, %v1596
    %v1598 = vpop.f32.mrb[0].mxu0
    %1599 = vmatprep.mubr.f32.mxu0 0.0
    %1600 = vmatmul.mubr.f32.gmra.mrb[0].mxu0 %v627
    %v1601 = vpop.f32.mrb[0].mxu0
    %v1602 = vadd.f32 %v272, %v1601
    %v1603 = vpop.f32.mrb[0].mxu0
    %1604 = vmatprep.mubr.f32.mxu0 0.0
    %1605 = vmatmul.mubr.f32.gmra.mrb[0].mxu0 %v630
    %v1606 = vpop.f32.mrb[0].mxu0
    %v1607 = vadd.f32 %v272, %v1606
    %v1608 = vpop.f32.mrb[0].mxu0
    %1609 = vmatprep.mubr.f32.mxu0 0.0
    %1610 = vmatmul.mubr.f32.gmra.mrb[0].mxu0 %v633
    %v1611 = vpop.f32.mrb[0].mxu0
    %v1612 = vadd.f32 %v272, %v1611
    %v1613 = vpop.f32.mrb[0].mxu0
    %1614 = vmatprep.mubr.f32.mxu0 0.0
    %1615 = vmatmul.mubr.f32.gmra.mrb[0].mxu0 %v636
    %v1616 = vpop.f32.mrb[0].mxu0
    %v1617 = vadd.f32 %v272, %v1616
    %v1618 = vpop.f32.mrb[0].mxu0
    %1619 = vmatprep.mubr.f32.mxu0 0.0
    %1620 = vmatmul.mubr.f32.gmra.mrb[0].mxu0 %v639
    %v1621 = vpop.f32.mrb[0].mxu0
    %v1622 = vadd.f32 %v272, %v1621
    %v1623 = vpop.f32.mrb[0].mxu0
    %1624 = vmatprep.mubr.f32.mxu0 0.0
    %1625 = vmatmul.mubr.f32.gmra.mrb[0].mxu0 %v642
    %v1626 = vpop.f32.mrb[0].mxu0
    %v1627 = vadd.f32 %v272, %v1626
    %v1628 = vpop.f32.mrb[0].mxu0
    %1629 = vmatprep.mubr.f32.mxu0 0.0
    %1630 = vmatmul.mubr.f32.gmra.mrb[0].mxu0 %v645
    %v1631 = vpop.f32.mrb[0].mxu0
    %v1632 = vadd.f32 %v272, %v1631
    %v1633 = vpop.f32.mrb[0].mxu0
    %1634 = vmatprep.mubr.f32.mxu0 0.0
    %1635 = vmatmul.mubr.f32.gmra.mrb[0].mxu0 %v648
    %v1636 = vpop.f32.mrb[0].mxu0
    %v1637 = vadd.f32 %v272, %v1636
    %v1638 = vpop.f32.mrb[0].mxu0
    %1639 = vmatprep.mubr.f32.mxu0 0.0
    %1640 = vmatmul.mubr.f32.gmra.mrb[0].mxu0 %v651
    %v1641 = vpop.f32.mrb[0].mxu0
    %v1642 = vadd.f32 %v272, %v1641
    %v1643 = vpop.f32.mrb[0].mxu0
    %1644 = vmatprep.mubr.f32.mxu0 0.0
    %1645 = vmatmul.mubr.f32.gmra.mrb[0].mxu0 %v654
    %v1646 = vpop.f32.mrb[0].mxu0
    %v1647 = vadd.f32 %v272, %v1646
    %v1648 = vpop.f32.mrb[0].mxu0
    %1649 = vmatprep.mubr.f32.mxu0 0.0
    %1650 = vmatmul.mubr.f32.gmra.mrb[0].mxu0 %v657
    %v1651 = vpop.f32.mrb[0].mxu0
    %v1652 = vadd.f32 %v272, %v1651
    %v1653 = vpop.f32.mrb[0].mxu0
    %1654 = vmatprep.mubr.f32.mxu0 0.0
    %1655 = vmatmul.mubr.f32.gmra.mrb[0].mxu0 %v660
    %v1656 = vpop.f32.mrb[0].mxu0
    %v1657 = vadd.f32 %v272, %v1656
    %v1658 = vpop.f32.mrb[0].mxu0
    %1659 = vmatprep.mubr.f32.mxu0 0.0
    %1660 = vmatmul.mubr.f32.gmra.mrb[0].mxu0 %v663
    %v1661 = vpop.f32.mrb[0].mxu0
    %v1662 = vadd.f32 %v272, %v1661
    %v1663 = vpop.f32.mrb[0].mxu0
    %1664 = vmatprep.mubr.f32.mxu0 0.0
    %1665 = vmatmul.mubr.f32.gmra.mrb[0].mxu0 %v666
    %v1666 = vpop.f32.mrb[0].mxu0
    %v1667 = vadd.f32 %v272, %v1666
    %v1668 = vpop.f32.mrb[0].mxu0
    %1669 = vmatprep.mubr.f32.mxu0 0.0
    %1670 = vmatmul.mubr.f32.gmra.mrb[0].mxu0 %v669
    %v1671 = vpop.f32.mrb[0].mxu0
    %v1672 = vadd.f32 %v272, %v1671
    %v1673 = vpop.f32.mrb[0].mxu0
    %1674 = vmatprep.mubr.f32.mxu0 0.0
    %1675 = vmatmul.mubr.f32.gmra.mrb[0].mxu0 %v672
    %v1676 = vpop.f32.mrb[0].mxu0
    %v1677 = vadd.f32 %v272, %v1676
    %v1678 = vpop.f32.mrb[0].mxu0
    %1679 = vmatprep.mubr.f32.mxu0 0.0
    %1680 = vmatmul.mubr.f32.gmra.mrb[0].mxu0 %v675
    %v1681 = vpop.f32.mrb[0].mxu0
    %v1682 = vadd.f32 %v272, %v1681
    %v1683 = vpop.f32.mrb[0].mxu0
    %1684 = vmatprep.mubr.f32.mxu0 0.0
    %1685 = vmatmul.mubr.f32.gmra.mrb[0].mxu0 %v678
    %v1686 = vpop.f32.mrb[0].mxu0
    %v1687 = vadd.f32 %v272, %v1686
    %v1688 = vpop.f32.mrb[0].mxu0
    %1689 = vmatprep.mubr.f32.mxu0 0.0
    %1690 = vmatmul.mubr.f32.gmra.mrb[0].mxu0 %v681
    %v1691 = vpop.f32.mrb[0].mxu0
    %v1692 = vadd.f32 %v272, %v1691
    %v1693 = vpop.f32.mrb[0].mxu0
    %1694 = vmatprep.mubr.f32.mxu0 0.0
    %1695 = vmatmul.mubr.f32.gmra.mrb[0].mxu0 %v684
    %v1696 = vpop.f32.mrb[0].mxu0
    %v1697 = vadd.f32 %v272, %v1696
    %v1698 = vpop.f32.mrb[0].mxu0
    %1699 = vmatprep.mubr.f32.mxu0 0.0
    %1700 = vmatmul.mubr.f32.gmra.mrb[0].mxu0 %v687
    %v1701 = vpop.f32.mrb[0].mxu0
    %v1702 = vadd.f32 %v272, %v1701
    %v1703 = vpop.f32.mrb[0].mxu0
    %1704 = vmatprep.mubr.f32.mxu0 0.0
    %1705 = vmatmul.mubr.f32.gmra.mrb[0].mxu0 %v690
    %v1706 = vpop.f32.mrb[0].mxu0
    %v1707 = vadd.f32 %v272, %v1706
    %v1708 = vpop.f32.mrb[0].mxu0
    %1709 = vmatprep.mubr.f32.mxu0 0.0
    %1710 = vmatmul.mubr.f32.gmra.mrb[0].mxu0 %v693
    %v1711 = vpop.f32.mrb[0].mxu0
    %v1712 = vadd.f32 %v272, %v1711
    %v1713 = vpop.f32.mrb[0].mxu0
    %1714 = vmatprep.mubr.f32.mxu0 0.0
    %1715 = vmatmul.mubr.f32.gmra.mrb[0].mxu0 %v696
    %v1716 = vpop.f32.mrb[0].mxu0
    %v1717 = vadd.f32 %v272, %v1716
    %v1718 = vpop.f32.mrb[0].mxu0
    %1719 = vmatprep.mubr.f32.mxu0 0.0
    %1720 = vmatmul.mubr.f32.gmra.mrb[0].mxu0 %v699
    %v1721 = vpop.f32.mrb[0].mxu0
    %v1722 = vadd.f32 %v272, %v1721
    %v1723 = vpop.f32.mrb[0].mxu0
    %1724 = vmatprep.mubr.f32.mxu0 0.0
    %1725 = vmatmul.mubr.f32.gmra.mrb[0].mxu0 %v702
    %v1726 = vpop.f32.mrb[0].mxu0
    %v1727 = vadd.f32 %v272, %v1726
    %v1728 = vpop.f32.mrb[0].mxu0
    %1729 = vmatprep.mubr.f32.mxu0 0.0
    %1730 = vmatmul.mubr.f32.gmra.mrb[0].mxu0 %v705
    %v1731 = vpop.f32.mrb[0].mxu0
    %v1732 = vadd.f32 %v272, %v1731
    %v1733 = vpop.f32.mrb[0].mxu0
    %1734 = vmatprep.mubr.f32.mxu0 0.0
    %1735 = vmatmul.mubr.f32.gmra.mrb[0].mxu0 %v708
    %v1736 = vpop.f32.mrb[0].mxu0
    %v1737 = vadd.f32 %v272, %v1736
    %v1738 = vpop.f32.mrb[0].mxu0
    %1739 = vmatprep.mubr.f32.mxu0 0.0
    %1740 = vmatmul.mubr.f32.gmra.mrb[0].mxu0 %v711
    %v1741 = vpop.f32.mrb[0].mxu0
    %v1742 = vadd.f32 %v272, %v1741
    %v1743 = vpop.f32.mrb[0].mxu0
    %1744 = vmatprep.mubr.f32.mxu0 0.0
    %1745 = vmatmul.mubr.f32.gmra.mrb[0].mxu0 %v714
    %v1746 = vpop.f32.mrb[0].mxu0
    %v1747 = vadd.f32 %v272, %v1746
    %v1748 = vpop.f32.mrb[0].mxu0
    %1749 = vmatprep.mubr.f32.mxu0 0.0
    %1750 = vmatmul.mubr.f32.gmra.mrb[0].mxu0 %v717
    %v1751 = vpop.f32.mrb[0].mxu0
    %v1752 = vadd.f32 %v272, %v1751
    %v1753 = vpop.f32.mrb[0].mxu0
    %1754 = vmatprep.mubr.f32.mxu0 0.0
    %1755 = vmatmul.mubr.f32.gmra.mrb[0].mxu0 %v720
    %v1756 = vpop.f32.mrb[0].mxu0
    %v1757 = vadd.f32 %v272, %v1756
    %v1758 = vpop.f32.mrb[0].mxu0
    %1759 = vmatprep.mubr.f32.mxu0 0.0
    %1760 = vmatmul.mubr.f32.gmra.mrb[0].mxu0 %v723
    %v1761 = vpop.f32.mrb[0].mxu0
    %v1762 = vadd.f32 %v272, %v1761
    %v1763 = vpop.f32.mrb[0].mxu0
    %1764 = vmatprep.mubr.f32.mxu0 0.0
    %1765 = vmatmul.mubr.f32.gmra.mrb[0].mxu0 %v726
    %v1766 = vpop.f32.mrb[0].mxu0
    %v1767 = vadd.f32 %v272, %v1766
    %v1768 = vpop.f32.mrb[0].mxu0
    %1769 = vmatprep.mubr.f32.mxu0 0.0
    %1770 = vmatmul.mubr.f32.gmra.mrb[0].mxu0 %v729
    %v1771 = vpop.f32.mrb[0].mxu0
    %v1772 = vadd.f32 %v272, %v1771
    %v1773 = vpop.f32.mrb[0].mxu0
    %1774 = vmatprep.mubr.f32.mxu0 0.0
    %1775 = vmatmul.mubr.f32.gmra.mrb[0].mxu0 %v732
    %v1776 = vpop.f32.mrb[0].mxu0
    %v1777 = vadd.f32 %v272, %v1776
    %v1778 = vpop.f32.mrb[0].mxu0
    %1779 = vmatprep.mubr.f32.mxu0 0.0
    %1780 = vmatmul.mubr.f32.gmra.mrb[0].mxu0 %v735
    %v1781 = vpop.f32.mrb[0].mxu0
    %v1782 = vadd.f32 %v272, %v1781
    %v1783 = vpop.f32.mrb[0].mxu0
    %1784 = vmatprep.mubr.f32.mxu0 0.0
    %1785 = vmatmul.mubr.f32.gmra.mrb[0].mxu0 %v738
    %v1786 = vpop.f32.mrb[0].mxu0
    %v1787 = vadd.f32 %v272, %v1786
    %v1788 = vpop.f32.mrb[0].mxu0
    %1789 = vmatprep.mubr.f32.mxu0 0.0
    %1790 = vmatmul.mubr.f32.gmra.mrb[0].mxu0 %v741
    %v1791 = vpop.f32.mrb[0].mxu0
    %v1792 = vadd.f32 %v272, %v1791
    %v1793 = vpop.f32.mrb[0].mxu0
    %1794 = vmatprep.mubr.f32.mxu0 0.0
    %1795 = vmatmul.mubr.f32.gmra.mrb[0].mxu0 %v744
    %v1796 = vpop.f32.mrb[0].mxu0
    %v1797 = vadd.f32 %v272, %v1796
    %v1798 = vpop.f32.mrb[0].mxu0
    %1799 = vmatprep.mubr.f32.mxu0 0.0
    %1800 = vmatmul.mubr.f32.gmra.mrb[0].mxu0 %v747
    %v1801 = vpop.f32.mrb[0].mxu0
    %v1802 = vadd.f32 %v272, %v1801
    %v1803 = vpop.f32.mrb[0].mxu0
    %1804 = vmatprep.mubr.f32.mxu0 0.0
    %1805 = vmatmul.mubr.f32.gmra.mrb[0].mxu0 %v750
    %v1806 = vpop.f32.mrb[0].mxu0
    %v1807 = vadd.f32 %v272, %v1806
    %v1808 = vpop.f32.mrb[0].mxu0
    %1809 = vmatprep.mubr.f32.mxu0 0.0
    %1810 = vmatmul.mubr.f32.gmra.mrb[0].mxu0 %v753
    %v1811 = vpop.f32.mrb[0].mxu0
    %v1812 = vadd.f32 %v272, %v1811
    %v1813 = vpop.f32.mrb[0].mxu0
    %1814 = vmatprep.mubr.f32.mxu0 0.0
    %1815 = vmatmul.mubr.f32.gmra.mrb[0].mxu0 %v756
    %v1816 = vpop.f32.mrb[0].mxu0
    %v1817 = vadd.f32 %v272, %v1816
    %v1818 = vpop.f32.mrb[0].mxu0
    %1819 = vmatprep.mubr.f32.mxu0 0.0
    %1820 = vmatmul.mubr.f32.gmra.mrb[0].mxu0 %v759
    %v1821 = vpop.f32.mrb[0].mxu0
    %v1822 = vadd.f32 %v272, %v1821
    %v1823 = vpop.f32.mrb[0].mxu0
    %1824 = vmatprep.mubr.f32.mxu0 0.0
    %1825 = vmatmul.mubr.f32.gmra.mrb[0].mxu0 %v762
    %v1826 = vpop.f32.mrb[0].mxu0
    %v1827 = vadd.f32 %v272, %v1826
    %v1828 = vpop.f32.mrb[0].mxu0
    %1829 = vmatprep.mubr.f32.mxu0 0.0
    %1830 = vmatmul.mubr.f32.gmra.mrb[0].mxu0 %v765
    %v1831 = vpop.f32.mrb[0].mxu0
    %v1832 = vadd.f32 %v272, %v1831
    %v1833 = vpop.f32.mrb[0].mxu0
    %1834 = vmatprep.mubr.f32.mxu0 0.0
    %1835 = vmatmul.mubr.f32.gmra.mrb[0].mxu0 %v768
    %v1836 = vpop.f32.mrb[0].mxu0
    %v1837 = vadd.f32 %v272, %v1836
    %v1838 = vpop.f32.mrb[0].mxu0
    %1839 = vmatprep.mubr.f32.mxu0 0.0
    %1840 = vmatmul.mubr.f32.gmra.mrb[0].mxu0 %v771
    %v1841 = vpop.f32.mrb[0].mxu0
    %v1842 = vadd.f32 %v272, %v1841
    %v1843 = vpop.f32.mrb[0].mxu0
    %1844 = vmatprep.mubr.f32.mxu0 0.0
    %1845 = vmatmul.mubr.f32.gmra.mrb[0].mxu0 %v774
    %v1846 = vpop.f32.mrb[0].mxu0
    %v1847 = vadd.f32 %v272, %v1846
    %v1848 = vpop.f32.mrb[0].mxu0
    %1849 = vmatprep.mubr.f32.mxu0 0.0
    %1850 = vmatmul.mubr.f32.gmra.mrb[0].mxu0 %v777
    %v1851 = vpop.f32.mrb[0].mxu0
    %v1852 = vadd.f32 %v272, %v1851
    %v1853 = vpop.f32.mrb[0].mxu0
    %1854 = vmatprep.mubr.f32.mxu0 0.0
    %1855 = vmatmul.mubr.f32.gmra.mrb[0].mxu0 %v780
    %v1856 = vpop.f32.mrb[0].mxu0
    %v1857 = vadd.f32 %v272, %v1856
    %v1858 = vpop.f32.mrb[0].mxu0
    %1859 = vmatprep.mubr.f32.mxu0 0.0
    %1860 = vmatmul.mubr.f32.gmra.mrb[0].mxu0 %v783
    %v1861 = vpop.f32.mrb[0].mxu0
    %v1862 = vadd.f32 %v272, %v1861
    %v1863 = vpop.f32.mrb[0].mxu0
    %1864 = vmatprep.mubr.f32.mxu0 0.0
    %1865 = vmatmul.mubr.f32.gmra.mrb[0].mxu0 %v786
    %v1866 = vpop.f32.mrb[0].mxu0
    %v1867 = vadd.f32 %v272, %v1866
    %v1868 = vpop.f32.mrb[0].mxu0
    %1869 = vmatprep.mubr.f32.mxu0 0.0
    %1870 = vmatmul.mubr.f32.gmra.mrb[0].mxu0 %v789
    %v1871 = vpop.f32.mrb[0].mxu0
    %v1872 = vadd.f32 %v272, %v1871
    %v1873 = vpop.f32.mrb[0].mxu0
    %1874 = vmatprep.mubr.f32.mxu0 0.0
    %1875 = vmatmul.mubr.f32.gmra.mrb[0].mxu0 %v792
    %v1876 = vpop.f32.mrb[0].mxu0
    %v1877 = vadd.f32 %v272, %v1876
    %v1878 = vpop.f32.mrb[0].mxu0
    %1879 = vmatprep.mubr.f32.mxu0 0.0
    %1880 = vmatmul.mubr.f32.gmra.mrb[0].mxu0 %v795
    %v1881 = vpop.f32.mrb[0].mxu0
    %v1882 = vadd.f32 %v272, %v1881
    %v1883 = vpop.f32.mrb[0].mxu0
    %1884 = vmatprep.mubr.f32.mxu0 0.0
    %1885 = vmatmul.mubr.f32.gmra.mrb[0].mxu0 %v798
    %v1886 = vpop.f32.mrb[0].mxu0
    %v1887 = vadd.f32 %v272, %v1886
    %v1888 = vpop.f32.mrb[0].mxu0
    %1889 = vmatprep.mubr.f32.mxu0 0.0
    %1890 = vmatmul.mubr.f32.gmra.mrb[0].mxu0 %v801
    %v1891 = vpop.f32.mrb[0].mxu0
    %v1892 = vadd.f32 %v272, %v1891
    %v1893 = vpop.f32.mrb[0].mxu0
    %1894 = vmatprep.mubr.f32.mxu0 0.0
    %1895 = vmatmul.mubr.f32.gmra.mrb[0].mxu0 %v804
    %v1896 = vpop.f32.mrb[0].mxu0
    %v1897 = vadd.f32 %v272, %v1896
    %v1898 = vpop.f32.mrb[0].mxu0
    %1899 = vmatprep.mubr.f32.mxu0 0.0
    %1900 = vmatmul.mubr.f32.gmra.mrb[0].mxu0 %v807
    %v1901 = vpop.f32.mrb[0].mxu0
    %v1902 = vadd.f32 %v272, %v1901
    %v1903 = vpop.f32.mrb[0].mxu0
    %1904 = vmatprep.mubr.f32.mxu0 0.0
    %1905 = vmatmul.mubr.f32.gmra.mrb[0].mxu0 %v810
    %v1906 = vpop.f32.mrb[0].mxu0
    %v1907 = vadd.f32 %v272, %v1906
    %v1908 = vpop.f32.mrb[0].mxu0
    %1909 = vmatprep.mubr.f32.mxu0 0.0
    %1910 = vmatmul.mubr.f32.gmra.mrb[0].mxu0 %v813
    %v1911 = vpop.f32.mrb[0].mxu0
    %v1912 = vadd.f32 %v272, %v1911
    %v1913 = vpop.f32.mrb[0].mxu0
    %1914 = vmatprep.mubr.f32.mxu0 0.0
    %1915 = vmatmul.mubr.f32.gmra.mrb[0].mxu0 %v816
    %v1916 = vpop.f32.mrb[0].mxu0
    %v1917 = vadd.f32 %v272, %v1916
    %v1918 = vpop.f32.mrb[0].mxu0
    %1919 = vmatprep.mubr.f32.mxu0 0.0
    %1920 = vmatmul.mubr.f32.gmra.mrb[0].mxu0 %v819
    %v1921 = vpop.f32.mrb[0].mxu0
    %v1922 = vadd.f32 %v272, %v1921
    %v1923 = vpop.f32.mrb[0].mxu0
    %1924 = vmatprep.mubr.f32.mxu0 0.0
    %1925 = vmatmul.mubr.f32.gmra.mrb[0].mxu0 %v822
    %v1926 = vpop.f32.mrb[0].mxu0
    %v1927 = vadd.f32 %v272, %v1926
    %v1928 = vpop.f32.mrb[0].mxu0
    %1929 = vmatprep.mubr.f32.mxu0 0.0
    %1930 = vmatmul.mubr.f32.gmra.mrb[0].mxu0 %v825
    %v1931 = vpop.f32.mrb[0].mxu0
    %v1932 = vadd.f32 %v272, %v1931
    %v1933 = vpop.f32.mrb[0].mxu0
    %1934 = vmatprep.mubr.f32.mxu0 0.0
    %1935 = vmatmul.mubr.f32.gmra.mrb[0].mxu0 %v828
    %v1936 = vpop.f32.mrb[0].mxu0
    %v1937 = vadd.f32 %v272, %v1936
    %v1938 = vpop.f32.mrb[0].mxu0
    %1939 = vmatprep.mubr.f32.mxu0 0.0
    %1940 = vmatmul.mubr.f32.gmra.mrb[0].mxu0 %v831
    %v1941 = vpop.f32.mrb[0].mxu0
    %v1942 = vadd.f32 %v272, %v1941
    %v1943 = vpop.f32.mrb[0].mxu0
    %1944 = vmatprep.mubr.f32.mxu0 0.0
    %1945 = vmatmul.mubr.f32.gmra.mrb[0].mxu0 %v834
    %v1946 = vpop.f32.mrb[0].mxu0
    %v1947 = vadd.f32 %v272, %v1946
    %v1948 = vpop.f32.mrb[0].mxu0
    %1949 = vmatprep.mubr.f32.mxu0 0.0
    %1950 = vmatmul.mubr.f32.gmra.mrb[0].mxu0 %v837
    %v1951 = vpop.f32.mrb[0].mxu0
    %v1952 = vadd.f32 %v272, %v1951
    %v1953 = vpop.f32.mrb[0].mxu0
    %1954 = vmatprep.mubr.f32.mxu0 0.0
    %1955 = vmatmul.mubr.f32.gmra.mrb[0].mxu0 %v840
    %v1956 = vpop.f32.mrb[0].mxu0
    %v1957 = vadd.f32 %v272, %v1956
    %v1958 = vpop.f32.mrb[0].mxu0
    %1959 = vmatprep.mubr.f32.mxu0 0.0
    %1960 = vmatmul.mubr.f32.gmra.mrb[0].mxu0 %v843
    %v1961 = vpop.f32.mrb[0].mxu0
    %v1962 = vadd.f32 %v272, %v1961
    %v1963 = vpop.f32.mrb[0].mxu0
    %1964 = vmatprep.mubr.f32.mxu0 0.0
    %1965 = vmatmul.mubr.f32.gmra.mrb[0].mxu0 %v846
    %v1966 = vpop.f32.mrb[0].mxu0
    %v1967 = vadd.f32 %v272, %v1966
    %v1968 = vpop.f32.mrb[0].mxu0
    %1969 = vmatprep.mubr.f32.mxu0 0.0
    %1970 = vmatmul.mubr.f32.gmra.mrb[0].mxu0 %v849
    %v1971 = vpop.f32.mrb[0].mxu0
    %v1972 = vadd.f32 %v272, %v1971
    %v1973 = vpop.f32.mrb[0].mxu0
    %1974 = vmatprep.mubr.f32.mxu0 0.0
    %1975 = vmatmul.mubr.f32.gmra.mrb[0].mxu0 %v852
    %v1976 = vpop.f32.mrb[0].mxu0
    %v1977 = vadd.f32 %v272, %v1976
    %v1978 = vpop.f32.mrb[0].mxu0
    %1979 = vmatprep.mubr.f32.mxu0 0.0
    %1980 = vmatmul.mubr.f32.gmra.mrb[0].mxu0 %v855
    %v1981 = vpop.f32.mrb[0].mxu0
    %v1982 = vadd.f32 %v272, %v1981
    %v1983 = vpop.f32.mrb[0].mxu0
    %1984 = vmatprep.mubr.f32.mxu0 0.0
    %1985 = vmatmul.mubr.f32.gmra.mrb[0].mxu0 %v858
    %v1986 = vpop.f32.mrb[0].mxu0
    %v1987 = vadd.f32 %v272, %v1986
    %v1988 = vpop.f32.mrb[0].mxu0
    %1989 = vmatprep.mubr.f32.mxu0 0.0
    %1990 = vmatmul.mubr.f32.gmra.mrb[0].mxu0 %v861
    %v1991 = vpop.f32.mrb[0].mxu0
    %v1992 = vadd.f32 %v272, %v1991
    %v1993 = vpop.f32.mrb[0].mxu0
    %1994 = vmatprep.mubr.f32.mxu0 0.0
    %1995 = vmatmul.mubr.f32.gmra.mrb[0].mxu0 %v864
    %v1996 = vpop.f32.mrb[0].mxu0
    %v1997 = vadd.f32 %v272, %v1996
    %v1998 = vpop.f32.mrb[0].mxu0
    %1999 = vmatprep.mubr.f32.mxu0 0.0
    %2000 = vmatmul.mubr.f32.gmra.mrb[0].mxu0 %v867
    %v2001 = vpop.f32.mrb[0].mxu0
    %v2002 = vadd.f32 %v272, %v2001
    %v2003 = vpop.f32.mrb[0].mxu0
    %2004 = vmatprep.mubr.f32.mxu0 0.0
    %2005 = vmatmul.mubr.f32.gmra.mrb[0].mxu0 %v870
    %v2006 = vpop.f32.mrb[0].mxu0
    %v2007 = vadd.f32 %v272, %v2006
    %v2008 = vpop.f32.mrb[0].mxu0
    %2009 = vmatprep.mubr.f32.mxu0 0.0
    %2010 = vmatmul.mubr.f32.gmra.mrb[0].mxu0 %v873
    %v2011 = vpop.f32.mrb[0].mxu0
    %v2012 = vadd.f32 %v272, %v2011
    %v2013 = vpop.f32.mrb[0].mxu0
    %2014 = vmatprep.mubr.f32.mxu0 0.0
    %2015 = vmatmul.mubr.f32.gmra.mrb[0].mxu0 %v876
    %v2016 = vpop.f32.mrb[0].mxu0
    %v2017 = vadd.f32 %v272, %v2016
    %v2018 = vpop.f32.mrb[0].mxu0
    %2019 = vmatprep.mubr.f32.mxu0 0.0
    %2020 = vmatmul.mubr.f32.gmra.mrb[0].mxu0 %v879
    %v2021 = vpop.f32.mrb[0].mxu0
    %v2022 = vadd.f32 %v272, %v2021
    %v2023 = vpop.f32.mrb[0].mxu0
    %2024 = vmatprep.mubr.f32.mxu0 0.0
    %2025 = vmatmul.mubr.f32.gmra.mrb[0].mxu0 %v882
    %v2026 = vpop.f32.mrb[0].mxu0
    %v2027 = vadd.f32 %v272, %v2026
    %v2028 = vpop.f32.mrb[0].mxu0
    %2029 = vmatprep.mubr.f32.mxu0 0.0
    %2030 = vmatmul.mubr.f32.gmra.mrb[0].mxu0 %v885
    %v2031 = vpop.f32.mrb[0].mxu0
    %v2032 = vadd.f32 %v272, %v2031
    %v2033 = vpop.f32.mrb[0].mxu0
    %2034 = vmatprep.mubr.f32.mxu0 0.0
    %2035 = vmatmul.mubr.f32.gmra.mrb[0].mxu0 %v888
    %v2036 = vpop.f32.mrb[0].mxu0
    %v2037 = vadd.f32 %v272, %v2036
    %v2038 = vpop.f32.mrb[0].mxu0
    %2039 = vmatprep.mubr.f32.mxu0 0.0
    %2040 = vmatmul.mubr.f32.gmra.mrb[0].mxu0 %v891
    %v2041 = vpop.f32.mrb[0].mxu0
    %v2042 = vadd.f32 %v272, %v2041
    %v2043 = vpop.f32.mrb[0].mxu0
    %2044 = vmatprep.mubr.f32.mxu0 0.0
    %2045 = vmatmul.mubr.f32.gmra.mrb[0].mxu0 %v894
    %v2046 = vpop.f32.mrb[0].mxu0
    %v2047 = vadd.f32 %v272, %v2046
    %v2048 = vpop.f32.mrb[0].mxu0
    %2049 = vmatprep.mubr.f32.mxu0 0.0
    %2050 = vmatmul.mubr.f32.gmra.mrb[0].mxu0 %v897
    %v2051 = vpop.f32.mrb[0].mxu0
    %v2052 = vadd.f32 %v272, %v2051
    %v2053 = vpop.f32.mrb[0].mxu0
    %2054 = vmatprep.mubr.f32.mxu0 0.0
    %2055 = vmatmul.mubr.f32.gmra.mrb[0].mxu0 %v900
    %v2056 = vpop.f32.mrb[0].mxu0
    %v2057 = vadd.f32 %v272, %v2056
    %v2058 = vpop.f32.mrb[0].mxu0
    %2059 = vmatprep.mubr.f32.mxu0 0.0
    %2060 = vmatmul.mubr.f32.gmra.mrb[0].mxu0 %v903
    %v2061 = vpop.f32.mrb[0].mxu0
    %v2062 = vadd.f32 %v272, %v2061
    %v2063 = vpop.f32.mrb[0].mxu0
    %2064 = vmatprep.mubr.f32.mxu0 0.0
    %2065 = vmatmul.mubr.f32.gmra.mrb[0].mxu0 %v906
    %v2066 = vpop.f32.mrb[0].mxu0
    %v2067 = vadd.f32 %v272, %v2066
    %v2068 = vpop.f32.mrb[0].mxu0
    %2069 = vmatprep.mubr.f32.mxu0 0.0
    %2070 = vmatmul.mubr.f32.gmra.mrb[0].mxu0 %v909
    %v2071 = vpop.f32.mrb[0].mxu0
    %v2072 = vadd.f32 %v272, %v2071
    %v2073 = vpop.f32.mrb[0].mxu0
    %2074 = vmatprep.mubr.f32.mxu0 0.0
    %2075 = vmatmul.mubr.f32.gmra.mrb[0].mxu0 %v912
    %v2076 = vpop.f32.mrb[0].mxu0
    %v2077 = vadd.f32 %v272, %v2076
    %v2078 = vpop.f32.mrb[0].mxu0
    %2079 = vmatprep.mubr.f32.mxu0 0.0
    %2080 = vmatmul.mubr.f32.gmra.mrb[0].mxu0 %v915
    %v2081 = vpop.f32.mrb[0].mxu0
    %v2082 = vadd.f32 %v272, %v2081
    %v2083 = vpop.f32.mrb[0].mxu0
    %2084 = vmatprep.mubr.f32.mxu0 0.0
    %2085 = vmatmul.mubr.f32.gmra.mrb[0].mxu0 %v918
    %v2086 = vpop.f32.mrb[0].mxu0
    %v2087 = vadd.f32 %v272, %v2086
    %v2088 = vpop.f32.mrb[0].mxu0
    %2089 = vmatprep.mubr.f32.mxu0 0.0
    %2090 = vmatmul.mubr.f32.gmra.mrb[0].mxu0 %v921
    %v2091 = vpop.f32.mrb[0].mxu0
    %v2092 = vadd.f32 %v272, %v2091
    %v2093 = vpop.f32.mrb[0].mxu0
    %2094 = vmatprep.mubr.f32.mxu0 0.0
    %2095 = vmatmul.mubr.f32.gmra.mrb[0].mxu0 %v924
    %v2096 = vpop.f32.mrb[0].mxu0
    %v2097 = vadd.f32 %v272, %v2096
    %v2098 = vpop.f32.mrb[0].mxu0
    %2099 = vmatprep.mubr.f32.mxu0 0.0
    %2100 = vmatmul.mubr.f32.gmra.mrb[0].mxu0 %v927
    %v2101 = vpop.f32.mrb[0].mxu0
    %v2102 = vadd.f32 %v272, %v2101
    %v2103 = vpop.f32.mrb[0].mxu0
    %2104 = vmatprep.mubr.f32.mxu0 0.0
    %2105 = vmatmul.mubr.f32.gmra.mrb[0].mxu0 %v930
    %v2106 = vpop.f32.mrb[0].mxu0
    %v2107 = vadd.f32 %v272, %v2106
    %v2108 = vpop.f32.mrb[0].mxu0
    %2109 = vmatprep.mubr.f32.mxu0 0.0
    %2110 = vmatmul.mubr.f32.gmra.mrb[0].mxu0 %v933
    %v2111 = vpop.f32.mrb[0].mxu0
    %v2112 = vadd.f32 %v272, %v2111
    %v2113 = vpop.f32.mrb[0].mxu0
    %2114 = vmatprep.mubr.f32.mxu0 0.0
    %2115 = vmatmul.mubr.f32.gmra.mrb[0].mxu0 %v936
    %v2116 = vpop.f32.mrb[0].mxu0
    %v2117 = vadd.f32 %v272, %v2116
    %v2118 = vpop.f32.mrb[0].mxu0
    %2119 = vmatprep.mubr.f32.mxu0 0.0
    %2120 = vmatmul.mubr.f32.gmra.mrb[0].mxu0 %v939
    %v2121 = vpop.f32.mrb[0].mxu0
    %v2122 = vadd.f32 %v272, %v2121
    %v2123 = vpop.f32.mrb[0].mxu0
    %2124 = vmatprep.mubr.f32.mxu0 0.0
    %2125 = vmatmul.mubr.f32.gmra.mrb[0].mxu0 %v942
    %v2126 = vpop.f32.mrb[0].mxu0
    %v2127 = vadd.f32 %v272, %v2126
    %v2128 = vpop.f32.mrb[0].mxu0
    %2129 = vmatprep.mubr.f32.mxu0 0.0
    %2130 = vmatmul.mubr.f32.gmra.mrb[0].mxu0 %v945
    %v2131 = vpop.f32.mrb[0].mxu0
    %v2132 = vadd.f32 %v272, %v2131
    %v2133 = vpop.f32.mrb[0].mxu0
    %2134 = vmatprep.mubr.f32.mxu0 0.0
    %2135 = vmatmul.mubr.f32.gmra.mrb[0].mxu0 %v948
    %v2136 = vpop.f32.mrb[0].mxu0
    %v2137 = vadd.f32 %v272, %v2136
    %v2138 = vpop.f32.mrb[0].mxu0
    %2139 = vdwg.mxu0
    %v2140 = vmax.f32 %v1017, 0.0
    %v2141 = vmax.f32 %v1022, 0.0
    %v2142 = vmax.f32 %v1027, 0.0
    %v2143 = vmax.f32 %v1032, 0.0
    %v2144 = vmax.f32 %v1037, 0.0
    %v2145 = vmax.f32 %v1042, 0.0
    %v2146 = vmax.f32 %v1047, 0.0
    %v2147 = vmax.f32 %v1052, 0.0
    %v2148 = vmax.f32 %v1057, 0.0
    %v2149 = vmax.f32 %v1062, 0.0
    %v2150 = vmax.f32 %v1067, 0.0
    %v2151 = vmax.f32 %v1072, 0.0
    %v2152 = vmax.f32 %v1077, 0.0
    %v2153 = vmax.f32 %v1082, 0.0
    %v2154 = vmax.f32 %v1087, 0.0
    %v2155 = vmax.f32 %v1092, 0.0
    %v2156 = vmax.f32 %v1097, 0.0
    %v2157 = vmax.f32 %v1102, 0.0
    %v2158 = vmax.f32 %v1107, 0.0
    %v2159 = vmax.f32 %v1112, 0.0
    %v2160 = vmax.f32 %v1117, 0.0
    %v2161 = vmax.f32 %v1122, 0.0
    %v2162 = vmax.f32 %v1127, 0.0
    %v2163 = vmax.f32 %v1132, 0.0
    %v2164 = vmax.f32 %v1137, 0.0
    %v2165 = vmax.f32 %v1142, 0.0
    %v2166 = vmax.f32 %v1147, 0.0
    %v2167 = vmax.f32 %v1152, 0.0
    %v2168 = vmax.f32 %v1157, 0.0
    %v2169 = vmax.f32 %v1162, 0.0
    %v2170 = vmax.f32 %v1167, 0.0
    %v2171 = vmax.f32 %v1172, 0.0
    %v2172 = vmax.f32 %v1177, 0.0
    %v2173 = vmax.f32 %v1182, 0.0
    %v2174 = vmax.f32 %v1187, 0.0
    %v2175 = vmax.f32 %v1192, 0.0
    %v2176 = vmax.f32 %v1197, 0.0
    %v2177 = vmax.f32 %v1202, 0.0
    %v2178 = vmax.f32 %v1207, 0.0
    %v2179 = vmax.f32 %v1212, 0.0
    %v2180 = vmax.f32 %v1217, 0.0
    %v2181 = vmax.f32 %v1222, 0.0
    %v2182 = vmax.f32 %v1227, 0.0
    %v2183 = vmax.f32 %v1232, 0.0
    %v2184 = vmax.f32 %v1237, 0.0
    %v2185 = vmax.f32 %v1242, 0.0
    %v2186 = vmax.f32 %v1247, 0.0
    %v2187 = vmax.f32 %v1252, 0.0
    %v2188 = vmax.f32 %v1257, 0.0
    %v2189 = vmax.f32 %v1262, 0.0
    %v2190 = vmax.f32 %v1267, 0.0
    %v2191 = vmax.f32 %v1272, 0.0
    %v2192 = vmax.f32 %v1277, 0.0
    %v2193 = vmax.f32 %v1282, 0.0
    %v2194 = vmax.f32 %v1287, 0.0
    %v2195 = vmax.f32 %v1292, 0.0
    %v2196 = vmax.f32 %v1297, 0.0
    %v2197 = vmax.f32 %v1302, 0.0
    %v2198 = vmax.f32 %v1307, 0.0
    %v2199 = vmax.f32 %v1312, 0.0
    %v2200 = vmax.f32 %v1317, 0.0
    %v2201 = vmax.f32 %v1322, 0.0
    %v2202 = vmax.f32 %v1327, 0.0
    %v2203 = vmax.f32 %v1332, 0.0
    %v2204 = vmax.f32 %v1337, 0.0
    %v2205 = vmax.f32 %v1342, 0.0
    %v2206 = vmax.f32 %v1347, 0.0
    %v2207 = vmax.f32 %v1352, 0.0
    %v2208 = vmax.f32 %v1357, 0.0
    %v2209 = vmax.f32 %v1362, 0.0
    %v2210 = vmax.f32 %v1367, 0.0
    %v2211 = vmax.f32 %v1372, 0.0
    %v2212 = vmax.f32 %v1377, 0.0
    %v2213 = vmax.f32 %v1382, 0.0
    %v2214 = vmax.f32 %v1387, 0.0
    %v2215 = vmax.f32 %v1392, 0.0
    %v2216 = vmax.f32 %v1397, 0.0
    %v2217 = vmax.f32 %v1402, 0.0
    %v2218 = vmax.f32 %v1407, 0.0
    %v2219 = vmax.f32 %v1412, 0.0
    %v2220 = vmax.f32 %v1417, 0.0
    %v2221 = vmax.f32 %v1422, 0.0
    %v2222 = vmax.f32 %v1427, 0.0
    %v2223 = vmax.f32 %v1432, 0.0
    %v2224 = vmax.f32 %v1437, 0.0
    %v2225 = vmax.f32 %v1442, 0.0
    %v2226 = vmax.f32 %v1447, 0.0
    %v2227 = vmax.f32 %v1452, 0.0
    %v2228 = vmax.f32 %v1457, 0.0
    %v2229 = vmax.f32 %v1462, 0.0
    %v2230 = vmax.f32 %v1467, 0.0
    %v2231 = vmax.f32 %v1472, 0.0
    %v2232 = vmax.f32 %v1477, 0.0
    %v2233 = vmax.f32 %v1482, 0.0
    %v2234 = vmax.f32 %v1487, 0.0
    %v2235 = vmax.f32 %v1492, 0.0
    %v2236 = vmax.f32 %v1497, 0.0
    %v2237 = vmax.f32 %v1502, 0.0
    %v2238 = vmax.f32 %v1507, 0.0
    %v2239 = vmax.f32 %v1512, 0.0
    %v2240 = vmax.f32 %v1517, 0.0
    %v2241 = vmax.f32 %v1522, 0.0
    %v2242 = vmax.f32 %v1527, 0.0
    %v2243 = vmax.f32 %v1532, 0.0
    %v2244 = vmax.f32 %v1537, 0.0
    %v2245 = vmax.f32 %v1542, 0.0
    %v2246 = vmax.f32 %v1547, 0.0
    %v2247 = vmax.f32 %v1552, 0.0
    %v2248 = vmax.f32 %v1557, 0.0
    %v2249 = vmax.f32 %v1562, 0.0
    %v2250 = vmax.f32 %v1567, 0.0
    %v2251 = vmax.f32 %v1572, 0.0
    %v2252 = vmax.f32 %v1577, 0.0
    %v2253 = vmax.f32 %v1582, 0.0
    %v2254 = vmax.f32 %v1587, 0.0
    %v2255 = vmax.f32 %v1592, 0.0
    %v2256 = vmax.f32 %v1597, 0.0
    %v2257 = vmax.f32 %v1602, 0.0
    %v2258 = vmax.f32 %v1607, 0.0
    %v2259 = vmax.f32 %v1612, 0.0
    %v2260 = vmax.f32 %v1617, 0.0
    %v2261 = vmax.f32 %v1622, 0.0
    %v2262 = vmax.f32 %v1627, 0.0
    %v2263 = vmax.f32 %v1632, 0.0
    %v2264 = vmax.f32 %v1637, 0.0
    %v2265 = vmax.f32 %v1642, 0.0
    %v2266 = vmax.f32 %v1647, 0.0
    %v2267 = vmax.f32 %v1652, 0.0
    %v2268 = vmax.f32 %v1657, 0.0
    %v2269 = vmax.f32 %v1662, 0.0
    %v2270 = vmax.f32 %v1667, 0.0
    %v2271 = vmax.f32 %v1672, 0.0
    %v2272 = vmax.f32 %v1677, 0.0
    %v2273 = vmax.f32 %v1682, 0.0
    %v2274 = vmax.f32 %v1687, 0.0
    %v2275 = vmax.f32 %v1692, 0.0
    %v2276 = vmax.f32 %v1697, 0.0
    %v2277 = vmax.f32 %v1702, 0.0
    %v2278 = vmax.f32 %v1707, 0.0
    %v2279 = vmax.f32 %v1712, 0.0
    %v2280 = vmax.f32 %v1717, 0.0
    %v2281 = vmax.f32 %v1722, 0.0
    %v2282 = vmax.f32 %v1727, 0.0
    %v2283 = vmax.f32 %v1732, 0.0
    %v2284 = vmax.f32 %v1737, 0.0
    %v2285 = vmax.f32 %v1742, 0.0
    %v2286 = vmax.f32 %v1747, 0.0
    %v2287 = vmax.f32 %v1752, 0.0
    %v2288 = vmax.f32 %v1757, 0.0
    %v2289 = vmax.f32 %v1762, 0.0
    %v2290 = vmax.f32 %v1767, 0.0
    %v2291 = vmax.f32 %v1772, 0.0
    %v2292 = vmax.f32 %v1777, 0.0
    %v2293 = vmax.f32 %v1782, 0.0
    %v2294 = vmax.f32 %v1787, 0.0
    %v2295 = vmax.f32 %v1792, 0.0
    %v2296 = vmax.f32 %v1797, 0.0
    %v2297 = vmax.f32 %v1802, 0.0
    %v2298 = vmax.f32 %v1807, 0.0
    %v2299 = vmax.f32 %v1812, 0.0
    %v2300 = vmax.f32 %v1817, 0.0
    %v2301 = vmax.f32 %v1822, 0.0
    %v2302 = vmax.f32 %v1827, 0.0
    %v2303 = vmax.f32 %v1832, 0.0
    %v2304 = vmax.f32 %v1837, 0.0
    %v2305 = vmax.f32 %v1842, 0.0
    %v2306 = vmax.f32 %v1847, 0.0
    %v2307 = vmax.f32 %v1852, 0.0
    %v2308 = vmax.f32 %v1857, 0.0
    %v2309 = vmax.f32 %v1862, 0.0
    %v2310 = vmax.f32 %v1867, 0.0
    %v2311 = vmax.f32 %v1872, 0.0
    %v2312 = vmax.f32 %v1877, 0.0
    %v2313 = vmax.f32 %v1882, 0.0
    %v2314 = vmax.f32 %v1887, 0.0
    %v2315 = vmax.f32 %v1892, 0.0
    %v2316 = vmax.f32 %v1897, 0.0
    %v2317 = vmax.f32 %v1902, 0.0
    %v2318 = vmax.f32 %v1907, 0.0
    %v2319 = vmax.f32 %v1912, 0.0
    %v2320 = vmax.f32 %v1917, 0.0
    %v2321 = vmax.f32 %v1922, 0.0
    %v2322 = vmax.f32 %v1927, 0.0
    %v2323 = vmax.f32 %v1932, 0.0
    %v2324 = vmax.f32 %v1937, 0.0
    %v2325 = vmax.f32 %v1942, 0.0
    %v2326 = vmax.f32 %v1947, 0.0
    %v2327 = vmax.f32 %v1952, 0.0
    %v2328 = vmax.f32 %v1957, 0.0
    %v2329 = vmax.f32 %v1962, 0.0
    %v2330 = vmax.f32 %v1967, 0.0
    %v2331 = vmax.f32 %v1972, 0.0
    %v2332 = vmax.f32 %v1977, 0.0
    %v2333 = vmax.f32 %v1982, 0.0
    %v2334 = vmax.f32 %v1987, 0.0
    %v2335 = vmax.f32 %v1992, 0.0
    %v2336 = vmax.f32 %v1997, 0.0
    %v2337 = vmax.f32 %v2002, 0.0
    %v2338 = vmax.f32 %v2007, 0.0
    %v2339 = vmax.f32 %v2012, 0.0
    %v2340 = vmax.f32 %v2017, 0.0
    %v2341 = vmax.f32 %v2022, 0.0
    %v2342 = vmax.f32 %v2027, 0.0
    %v2343 = vmax.f32 %v2032, 0.0
    %v2344 = vmax.f32 %v2037, 0.0
    %v2345 = vmax.f32 %v2042, 0.0
    %v2346 = vmax.f32 %v2047, 0.0
    %v2347 = vmax.f32 %v2052, 0.0
    %v2348 = vmax.f32 %v2057, 0.0
    %v2349 = vmax.f32 %v2062, 0.0
    %v2350 = vmax.f32 %v2067, 0.0
    %v2351 = vmax.f32 %v2072, 0.0
    %v2352 = vmax.f32 %v2077, 0.0
    %v2353 = vmax.f32 %v2082, 0.0
    %v2354 = vmax.f32 %v2087, 0.0
    %v2355 = vmax.f32 %v2092, 0.0
    %v2356 = vmax.f32 %v2097, 0.0
    %v2357 = vmax.f32 %v2102, 0.0
    %v2358 = vmax.f32 %v2107, 0.0
    %v2359 = vmax.f32 %v2112, 0.0
    %v2360 = vmax.f32 %v2117, 0.0
    %v2361 = vmax.f32 %v2122, 0.0
    %v2362 = vmax.f32 %v2127, 0.0
    %v2363 = vmax.f32 %v2132, 0.0
    %v2364 = vmax.f32 %v2137, 0.0
    %vm2365 = vcmask 162816
    %2366 = vst.msk [vmem:[%s3] sm:$0xff] %vm2365, %v2140
    %2367 = vst.msk [vmem:[%s3 + $0x8] sm:$0xff] %vm2365, %v2141
    %2368 = vst.msk [vmem:[%s3 + $0x10] sm:$0xff] %vm2365, %v2142
    %2369 = vst.msk [vmem:[%s3 + $0x18] sm:$0xff] %vm2365, %v2143
    %2370 = vst.msk [vmem:[%s3 + $0x20] sm:$0xff] %vm2365, %v2144
    %2371 = vst.msk [vmem:[%s3 + $0x28] sm:$0xff] %vm2365, %v2145
    %2372 = vst.msk [vmem:[%s3 + $0x30] sm:$0xff] %vm2365, %v2146
    %2373 = vst.msk [vmem:[%s3 + $0x38] sm:$0xff] %vm2365, %v2147
    %2374 = vst.msk [vmem:[%s3 + $0x40] sm:$0xff] %vm2365, %v2148
    %2375 = vst.msk [vmem:[%s3 + $0x48] sm:$0xff] %vm2365, %v2149
    %2376 = vst.msk [vmem:[%s3 + $0x50] sm:$0xff] %vm2365, %v2150
    %2377 = vst.msk [vmem:[%s3 + $0x58] sm:$0xff] %vm2365, %v2151
    %2378 = vst.msk [vmem:[%s3 + $0x60] sm:$0xff] %vm2365, %v2152
    %2379 = vst.msk [vmem:[%s3 + $0x68] sm:$0xff] %vm2365, %v2153
    %2380 = vst.msk [vmem:[%s3 + $0x70] sm:$0xff] %vm2365, %v2154
    %2381 = vst.msk [vmem:[%s3 + $0x78] sm:$0xff] %vm2365, %v2155
    %2382 = vst.msk [vmem:[%s3 + $0x80] sm:$0xff] %vm2365, %v2156
    %2383 = vst.msk [vmem:[%s3 + $0x88] sm:$0xff] %vm2365, %v2157
    %2384 = vst.msk [vmem:[%s3 + $0x90] sm:$0xff] %vm2365, %v2158
    %2385 = vst.msk [vmem:[%s3 + $0x98] sm:$0xff] %vm2365, %v2159
    %2386 = vst.msk [vmem:[%s3 + $0xa0] sm:$0xff] %vm2365, %v2160
    %2387 = vst.msk [vmem:[%s3 + $0xa8] sm:$0xff] %vm2365, %v2161
    %2388 = vst.msk [vmem:[%s3 + $0xb0] sm:$0xff] %vm2365, %v2162
    %2389 = vst.msk [vmem:[%s3 + $0xb8] sm:$0xff] %vm2365, %v2163
    %2390 = vst.msk [vmem:[%s3 + $0xc0] sm:$0xff] %vm2365, %v2164
    %2391 = vst.msk [vmem:[%s3 + $0xc8] sm:$0xff] %vm2365, %v2165
    %2392 = vst.msk [vmem:[%s3 + $0xd0] sm:$0xff] %vm2365, %v2166
    %2393 = vst.msk [vmem:[%s3 + $0xd8] sm:$0xff] %vm2365, %v2167
    %2394 = vst.msk [vmem:[%s3 + $0xe0] sm:$0xff] %vm2365, %v2168
    %2395 = vst.msk [vmem:[%s3 + $0xe8] sm:$0xff] %vm2365, %v2169
    %2396 = vst.msk [vmem:[%s3 + $0xf0] sm:$0xff] %vm2365, %v2170
    %2397 = vst.msk [vmem:[%s3 + $0xf8] sm:$0xff] %vm2365, %v2171
    %2398 = vst.msk [vmem:[%s3 + $0x100] sm:$0xff] %vm2365, %v2172
    %2399 = vst.msk [vmem:[%s3 + $0x108] sm:$0xff] %vm2365, %v2173
    %2400 = vst.msk [vmem:[%s3 + $0x110] sm:$0xff] %vm2365, %v2174
    %2401 = vst.msk [vmem:[%s3 + $0x118] sm:$0xff] %vm2365, %v2175
    %2402 = vst.msk [vmem:[%s3 + $0x120] sm:$0xff] %vm2365, %v2176
    %2403 = vst.msk [vmem:[%s3 + $0x128] sm:$0xff] %vm2365, %v2177
    %2404 = vst.msk [vmem:[%s3 + $0x130] sm:$0xff] %vm2365, %v2178
    %2405 = vst.msk [vmem:[%s3 + $0x138] sm:$0xff] %vm2365, %v2179
    %2406 = vst.msk [vmem:[%s3 + $0x140] sm:$0xff] %vm2365, %v2180
    %2407 = vst.msk [vmem:[%s3 + $0x148] sm:$0xff] %vm2365, %v2181
    %2408 = vst.msk [vmem:[%s3 + $0x150] sm:$0xff] %vm2365, %v2182
    %2409 = vst.msk [vmem:[%s3 + $0x158] sm:$0xff] %vm2365, %v2183
    %2410 = vst.msk [vmem:[%s3 + $0x160] sm:$0xff] %vm2365, %v2184
    %2411 = vst.msk [vmem:[%s3 + $0x168] sm:$0xff] %vm2365, %v2185
    %2412 = vst.msk [vmem:[%s3 + $0x170] sm:$0xff] %vm2365, %v2186
    %2413 = vst.msk [vmem:[%s3 + $0x178] sm:$0xff] %vm2365, %v2187
    %2414 = vst.msk [vmem:[%s3 + $0x180] sm:$0xff] %vm2365, %v2188
    %2415 = vst.msk [vmem:[%s3 + $0x188] sm:$0xff] %vm2365, %v2189
    %2416 = vst.msk [vmem:[%s3 + $0x190] sm:$0xff] %vm2365, %v2190
    %2417 = vst.msk [vmem:[%s3 + $0x198] sm:$0xff] %vm2365, %v2191
    %2418 = vst.msk [vmem:[%s3 + $0x1a0] sm:$0xff] %vm2365, %v2192
    %2419 = vst.msk [vmem:[%s3 + $0x1a8] sm:$0xff] %vm2365, %v2193
    %2420 = vst.msk [vmem:[%s3 + $0x1b0] sm:$0xff] %vm2365, %v2194
    %2421 = vst.msk [vmem:[%s3 + $0x1b8] sm:$0xff] %vm2365, %v2195
    %2422 = vst.msk [vmem:[%s3 + $0x1c0] sm:$0xff] %vm2365, %v2196
    %2423 = vst.msk [vmem:[%s3 + $0x1c8] sm:$0xff] %vm2365, %v2197
    %2424 = vst.msk [vmem:[%s3 + $0x1d0] sm:$0xff] %vm2365, %v2198
    %2425 = vst.msk [vmem:[%s3 + $0x1d8] sm:$0xff] %vm2365, %v2199
    %2426 = vst.msk [vmem:[%s3 + $0x1e0] sm:$0xff] %vm2365, %v2200
    %2427 = vst.msk [vmem:[%s3 + $0x1e8] sm:$0xff] %vm2365, %v2201
    %2428 = vst.msk [vmem:[%s3 + $0x1f0] sm:$0xff] %vm2365, %v2202
    %2429 = vst.msk [vmem:[%s3 + $0x1f8] sm:$0xff] %vm2365, %v2203
    %2430 = vst.msk [vmem:[%s3 + $0x200] sm:$0xff] %vm2365, %v2204
    %2431 = vst.msk [vmem:[%s3 + $0x208] sm:$0xff] %vm2365, %v2205
    %2432 = vst.msk [vmem:[%s3 + $0x210] sm:$0xff] %vm2365, %v2206
    %2433 = vst.msk [vmem:[%s3 + $0x218] sm:$0xff] %vm2365, %v2207
    %2434 = vst.msk [vmem:[%s3 + $0x220] sm:$0xff] %vm2365, %v2208
    %2435 = vst.msk [vmem:[%s3 + $0x228] sm:$0xff] %vm2365, %v2209
    %2436 = vst.msk [vmem:[%s3 + $0x230] sm:$0xff] %vm2365, %v2210
    %2437 = vst.msk [vmem:[%s3 + $0x238] sm:$0xff] %vm2365, %v2211
    %2438 = vst.msk [vmem:[%s3 + $0x240] sm:$0xff] %vm2365, %v2212
    %2439 = vst.msk [vmem:[%s3 + $0x248] sm:$0xff] %vm2365, %v2213
    %2440 = vst.msk [vmem:[%s3 + $0x250] sm:$0xff] %vm2365, %v2214
    %2441 = vst.msk [vmem:[%s3 + $0x258] sm:$0xff] %vm2365, %v2215
    %2442 = vst.msk [vmem:[%s3 + $0x260] sm:$0xff] %vm2365, %v2216
    %2443 = vst.msk [vmem:[%s3 + $0x268] sm:$0xff] %vm2365, %v2217
    %2444 = vst.msk [vmem:[%s3 + $0x270] sm:$0xff] %vm2365, %v2218
    %2445 = vst.msk [vmem:[%s3 + $0x278] sm:$0xff] %vm2365, %v2219
    %2446 = vst.msk [vmem:[%s3 + $0x280] sm:$0xff] %vm2365, %v2220
    %2447 = vst.msk [vmem:[%s3 + $0x288] sm:$0xff] %vm2365, %v2221
    %2448 = vst.msk [vmem:[%s3 + $0x290] sm:$0xff] %vm2365, %v2222
    %2449 = vst.msk [vmem:[%s3 + $0x298] sm:$0xff] %vm2365, %v2223
    %2450 = vst.msk [vmem:[%s3 + $0x2a0] sm:$0xff] %vm2365, %v2224
    %2451 = vst.msk [vmem:[%s3 + $0x2a8] sm:$0xff] %vm2365, %v2225
    %2452 = vst.msk [vmem:[%s3 + $0x2b0] sm:$0xff] %vm2365, %v2226
    %2453 = vst.msk [vmem:[%s3 + $0x2b8] sm:$0xff] %vm2365, %v2227
    %2454 = vst.msk [vmem:[%s3 + $0x2c0] sm:$0xff] %vm2365, %v2228
    %2455 = vst.msk [vmem:[%s3 + $0x2c8] sm:$0xff] %vm2365, %v2229
    %2456 = vst.msk [vmem:[%s3 + $0x2d0] sm:$0xff] %vm2365, %v2230
    %2457 = vst.msk [vmem:[%s3 + $0x2d8] sm:$0xff] %vm2365, %v2231
    %2458 = vst.msk [vmem:[%s3 + $0x2e0] sm:$0xff] %vm2365, %v2232
    %2459 = vst.msk [vmem:[%s3 + $0x2e8] sm:$0xff] %vm2365, %v2233
    %2460 = vst.msk [vmem:[%s3 + $0x2f0] sm:$0xff] %vm2365, %v2234
    %2461 = vst.msk [vmem:[%s3 + $0x2f8] sm:$0xff] %vm2365, %v2235
    %2462 = vst.msk [vmem:[%s3 + $0x300] sm:$0xff] %vm2365, %v2236
    %2463 = vst.msk [vmem:[%s3 + $0x308] sm:$0xff] %vm2365, %v2237
    %2464 = vst.msk [vmem:[%s3 + $0x310] sm:$0xff] %vm2365, %v2238
    %2465 = vst.msk [vmem:[%s3 + $0x318] sm:$0xff] %vm2365, %v2239
    %2466 = vst.msk [vmem:[%s3 + $0x320] sm:$0xff] %vm2365, %v2240
    %2467 = vst.msk [vmem:[%s3 + $0x328] sm:$0xff] %vm2365, %v2241
    %2468 = vst.msk [vmem:[%s3 + $0x330] sm:$0xff] %vm2365, %v2242
    %2469 = vst.msk [vmem:[%s3 + $0x338] sm:$0xff] %vm2365, %v2243
    %2470 = vst.msk [vmem:[%s3 + $0x340] sm:$0xff] %vm2365, %v2244
    %2471 = vst.msk [vmem:[%s3 + $0x348] sm:$0xff] %vm2365, %v2245
    %2472 = vst.msk [vmem:[%s3 + $0x350] sm:$0xff] %vm2365, %v2246
    %2473 = vst.msk [vmem:[%s3 + $0x358] sm:$0xff] %vm2365, %v2247
    %2474 = vst.msk [vmem:[%s3 + $0x360] sm:$0xff] %vm2365, %v2248
    %2475 = vst.msk [vmem:[%s3 + $0x368] sm:$0xff] %vm2365, %v2249
    %2476 = vst.msk [vmem:[%s3 + $0x370] sm:$0xff] %vm2365, %v2250
    %2477 = vst.msk [vmem:[%s3 + $0x378] sm:$0xff] %vm2365, %v2251
    %2478 = vst.msk [vmem:[%s3 + $0x380] sm:$0xff] %vm2365, %v2252
    %2479 = vst.msk [vmem:[%s3 + $0x388] sm:$0xff] %vm2365, %v2253
    %2480 = vst.msk [vmem:[%s3 + $0x390] sm:$0xff] %vm2365, %v2254
    %2481 = vst.msk [vmem:[%s3 + $0x398] sm:$0xff] %vm2365, %v2255
    %2482 = vst.msk [vmem:[%s3 + $0x3a0] sm:$0xff] %vm2365, %v2256
    %2483 = vst.msk [vmem:[%s3 + $0x3a8] sm:$0xff] %vm2365, %v2257
    %2484 = vst.msk [vmem:[%s3 + $0x3b0] sm:$0xff] %vm2365, %v2258
    %2485 = vst.msk [vmem:[%s3 + $0x3b8] sm:$0xff] %vm2365, %v2259
    %2486 = vst.msk [vmem:[%s3 + $0x3c0] sm:$0xff] %vm2365, %v2260
    %2487 = vst.msk [vmem:[%s3 + $0x3c8] sm:$0xff] %vm2365, %v2261
    %2488 = vst.msk [vmem:[%s3 + $0x3d0] sm:$0xff] %vm2365, %v2262
    %2489 = vst.msk [vmem:[%s3 + $0x3d8] sm:$0xff] %vm2365, %v2263
    %2490 = vst.msk [vmem:[%s3 + $0x3e0] sm:$0xff] %vm2365, %v2264
    %2491 = vst.msk [vmem:[%s3 + $0x3e8] sm:$0xff] %vm2365, %v2265
    %2492 = vst.msk [vmem:[%s3 + $0x3f0] sm:$0xff] %vm2365, %v2266
    %2493 = vst.msk [vmem:[%s3 + $0x3f8] sm:$0xff] %vm2365, %v2267
    %2494 = vst.msk [vmem:[%s3 + $0x400] sm:$0xff] %vm2365, %v2268
    %2495 = vst.msk [vmem:[%s3 + $0x408] sm:$0xff] %vm2365, %v2269
    %2496 = vst.msk [vmem:[%s3 + $0x410] sm:$0xff] %vm2365, %v2270
    %2497 = vst.msk [vmem:[%s3 + $0x418] sm:$0xff] %vm2365, %v2271
    %2498 = vst.msk [vmem:[%s3 + $0x420] sm:$0xff] %vm2365, %v2272
    %2499 = vst.msk [vmem:[%s3 + $0x428] sm:$0xff] %vm2365, %v2273
    %2500 = vst.msk [vmem:[%s3 + $0x430] sm:$0xff] %vm2365, %v2274
    %2501 = vst.msk [vmem:[%s3 + $0x438] sm:$0xff] %vm2365, %v2275
    %2502 = vst.msk [vmem:[%s3 + $0x440] sm:$0xff] %vm2365, %v2276
    %2503 = vst.msk [vmem:[%s3 + $0x448] sm:$0xff] %vm2365, %v2277
    %2504 = vst.msk [vmem:[%s3 + $0x450] sm:$0xff] %vm2365, %v2278
    %2505 = vst.msk [vmem:[%s3 + $0x458] sm:$0xff] %vm2365, %v2279
    %2506 = vst.msk [vmem:[%s3 + $0x460] sm:$0xff] %vm2365, %v2280
    %2507 = vst.msk [vmem:[%s3 + $0x468] sm:$0xff] %vm2365, %v2281
    %2508 = vst.msk [vmem:[%s3 + $0x470] sm:$0xff] %vm2365, %v2282
    %2509 = vst.msk [vmem:[%s3 + $0x478] sm:$0xff] %vm2365, %v2283
    %2510 = vst.msk [vmem:[%s3 + $0x480] sm:$0xff] %vm2365, %v2284
    %2511 = vst.msk [vmem:[%s3 + $0x488] sm:$0xff] %vm2365, %v2285
    %2512 = vst.msk [vmem:[%s3 + $0x490] sm:$0xff] %vm2365, %v2286
    %2513 = vst.msk [vmem:[%s3 + $0x498] sm:$0xff] %vm2365, %v2287
    %2514 = vst.msk [vmem:[%s3 + $0x4a0] sm:$0xff] %vm2365, %v2288
    %2515 = vst.msk [vmem:[%s3 + $0x4a8] sm:$0xff] %vm2365, %v2289
    %2516 = vst.msk [vmem:[%s3 + $0x4b0] sm:$0xff] %vm2365, %v2290
    %2517 = vst.msk [vmem:[%s3 + $0x4b8] sm:$0xff] %vm2365, %v2291
    %2518 = vst.msk [vmem:[%s3 + $0x4c0] sm:$0xff] %vm2365, %v2292
    %2519 = vst.msk [vmem:[%s3 + $0x4c8] sm:$0xff] %vm2365, %v2293
    %2520 = vst.msk [vmem:[%s3 + $0x4d0] sm:$0xff] %vm2365, %v2294
    %2521 = vst.msk [vmem:[%s3 + $0x4d8] sm:$0xff] %vm2365, %v2295
    %2522 = vst.msk [vmem:[%s3 + $0x4e0] sm:$0xff] %vm2365, %v2296
    %2523 = vst.msk [vmem:[%s3 + $0x4e8] sm:$0xff] %vm2365, %v2297
    %2524 = vst.msk [vmem:[%s3 + $0x4f0] sm:$0xff] %vm2365, %v2298
    %2525 = vst.msk [vmem:[%s3 + $0x4f8] sm:$0xff] %vm2365, %v2299
    %2526 = vst.msk [vmem:[%s3 + $0x500] sm:$0xff] %vm2365, %v2300
    %2527 = vst.msk [vmem:[%s3 + $0x508] sm:$0xff] %vm2365, %v2301
    %2528 = vst.msk [vmem:[%s3 + $0x510] sm:$0xff] %vm2365, %v2302
    %2529 = vst.msk [vmem:[%s3 + $0x518] sm:$0xff] %vm2365, %v2303
    %2530 = vst.msk [vmem:[%s3 + $0x520] sm:$0xff] %vm2365, %v2304
    %2531 = vst.msk [vmem:[%s3 + $0x528] sm:$0xff] %vm2365, %v2305
    %2532 = vst.msk [vmem:[%s3 + $0x530] sm:$0xff] %vm2365, %v2306
    %2533 = vst.msk [vmem:[%s3 + $0x538] sm:$0xff] %vm2365, %v2307
    %2534 = vst.msk [vmem:[%s3 + $0x540] sm:$0xff] %vm2365, %v2308
    %2535 = vst.msk [vmem:[%s3 + $0x548] sm:$0xff] %vm2365, %v2309
    %2536 = vst.msk [vmem:[%s3 + $0x550] sm:$0xff] %vm2365, %v2310
    %2537 = vst.msk [vmem:[%s3 + $0x558] sm:$0xff] %vm2365, %v2311
    %2538 = vst.msk [vmem:[%s3 + $0x560] sm:$0xff] %vm2365, %v2312
    %2539 = vst.msk [vmem:[%s3 + $0x568] sm:$0xff] %vm2365, %v2313
    %2540 = vst.msk [vmem:[%s3 + $0x570] sm:$0xff] %vm2365, %v2314
    %2541 = vst.msk [vmem:[%s3 + $0x578] sm:$0xff] %vm2365, %v2315
    %2542 = vst.msk [vmem:[%s3 + $0x580] sm:$0xff] %vm2365, %v2316
    %2543 = vst.msk [vmem:[%s3 + $0x588] sm:$0xff] %vm2365, %v2317
    %2544 = vst.msk [vmem:[%s3 + $0x590] sm:$0xff] %vm2365, %v2318
    %2545 = vst.msk [vmem:[%s3 + $0x598] sm:$0xff] %vm2365, %v2319
    %2546 = vst.msk [vmem:[%s3 + $0x5a0] sm:$0xff] %vm2365, %v2320
    %2547 = vst.msk [vmem:[%s3 + $0x5a8] sm:$0xff] %vm2365, %v2321
    %2548 = vst.msk [vmem:[%s3 + $0x5b0] sm:$0xff] %vm2365, %v2322
    %2549 = vst.msk [vmem:[%s3 + $0x5b8] sm:$0xff] %vm2365, %v2323
    %2550 = vst.msk [vmem:[%s3 + $0x5c0] sm:$0xff] %vm2365, %v2324
    %2551 = vst.msk [vmem:[%s3 + $0x5c8] sm:$0xff] %vm2365, %v2325
    %2552 = vst.msk [vmem:[%s3 + $0x5d0] sm:$0xff] %vm2365, %v2326
    %2553 = vst.msk [vmem:[%s3 + $0x5d8] sm:$0xff] %vm2365, %v2327
    %2554 = vst.msk [vmem:[%s3 + $0x5e0] sm:$0xff] %vm2365, %v2328
    %2555 = vst.msk [vmem:[%s3 + $0x5e8] sm:$0xff] %vm2365, %v2329
    %2556 = vst.msk [vmem:[%s3 + $0x5f0] sm:$0xff] %vm2365, %v2330
    %2557 = vst.msk [vmem:[%s3 + $0x5f8] sm:$0xff] %vm2365, %v2331
    %2558 = vst.msk [vmem:[%s3 + $0x600] sm:$0xff] %vm2365, %v2332
    %2559 = vst.msk [vmem:[%s3 + $0x608] sm:$0xff] %vm2365, %v2333
    %2560 = vst.msk [vmem:[%s3 + $0x610] sm:$0xff] %vm2365, %v2334
    %2561 = vst.msk [vmem:[%s3 + $0x618] sm:$0xff] %vm2365, %v2335
    %2562 = vst.msk [vmem:[%s3 + $0x620] sm:$0xff] %vm2365, %v2336
    %2563 = vst.msk [vmem:[%s3 + $0x628] sm:$0xff] %vm2365, %v2337
    %2564 = vst.msk [vmem:[%s3 + $0x630] sm:$0xff] %vm2365, %v2338
    %2565 = vst.msk [vmem:[%s3 + $0x638] sm:$0xff] %vm2365, %v2339
    %2566 = vst.msk [vmem:[%s3 + $0x640] sm:$0xff] %vm2365, %v2340
    %2567 = vst.msk [vmem:[%s3 + $0x648] sm:$0xff] %vm2365, %v2341
    %2568 = vst.msk [vmem:[%s3 + $0x650] sm:$0xff] %vm2365, %v2342
    %2569 = vst.msk [vmem:[%s3 + $0x658] sm:$0xff] %vm2365, %v2343
    %2570 = vst.msk [vmem:[%s3 + $0x660] sm:$0xff] %vm2365, %v2344
    %2571 = vst.msk [vmem:[%s3 + $0x668] sm:$0xff] %vm2365, %v2345
    %2572 = vst.msk [vmem:[%s3 + $0x670] sm:$0xff] %vm2365, %v2346
    %2573 = vst.msk [vmem:[%s3 + $0x678] sm:$0xff] %vm2365, %v2347
    %2574 = vst.msk [vmem:[%s3 + $0x680] sm:$0xff] %vm2365, %v2348
    %2575 = vst.msk [vmem:[%s3 + $0x688] sm:$0xff] %vm2365, %v2349
    %2576 = vst.msk [vmem:[%s3 + $0x690] sm:$0xff] %vm2365, %v2350
    %2577 = vst.msk [vmem:[%s3 + $0x698] sm:$0xff] %vm2365, %v2351
    %2578 = vst.msk [vmem:[%s3 + $0x6a0] sm:$0xff] %vm2365, %v2352
    %2579 = vst.msk [vmem:[%s3 + $0x6a8] sm:$0xff] %vm2365, %v2353
    %2580 = vst.msk [vmem:[%s3 + $0x6b0] sm:$0xff] %vm2365, %v2354
    %2581 = vst.msk [vmem:[%s3 + $0x6b8] sm:$0xff] %vm2365, %v2355
    %2582 = vst.msk [vmem:[%s3 + $0x6c0] sm:$0xff] %vm2365, %v2356
    %2583 = vst.msk [vmem:[%s3 + $0x6c8] sm:$0xff] %vm2365, %v2357
    %2584 = vst.msk [vmem:[%s3 + $0x6d0] sm:$0xff] %vm2365, %v2358
    %2585 = vst.msk [vmem:[%s3 + $0x6d8] sm:$0xff] %vm2365, %v2359
    %2586 = vst.msk [vmem:[%s3 + $0x6e0] sm:$0xff] %vm2365, %v2360
    %2587 = vst.msk [vmem:[%s3 + $0x6e8] sm:$0xff] %vm2365, %v2361
    %2588 = vst.msk [vmem:[%s3 + $0x6f0] sm:$0xff] %vm2365, %v2362
    %2589 = vst.msk [vmem:[%s3 + $0x6f8] sm:$0xff] %vm2365, %v2363
    %2590 = vst.msk [vmem:[%s3 + $0x700] sm:$0xff] %vm2365, %v2364
    // Predicated region
    $region22: #{model_forward.3} parent=1 // pred_check
      _
    $region23: #{model_forward.3} parent=1 // pred_check_branch
      %2592 = sbr.rel (0) target = $region25
    $region24: #{model_forward.3} parent=1 // pred_region
      _
    $region25: #{model_forward.3} parent=1 // pred_fallthru
      _
    // Predicated region
    $region26: #{model_forward.3} parent=1 // pred_check
      _
    $region27: #{model_forward.3} parent=1 // pred_check_branch
      %2594 = sbr.rel (0) target = $region29
    $region28: #{model_forward.3} parent=1 // pred_region
      _
    $region29: #{model_forward.3} parent=1 // pred_fallthru
      _
    %2595 = vsyncpa [#allocation3], 1
    %2596 = vsyncpa [#allocation5], 1

// kernel: model_forward.4
$region0: #{model_forward.4}
  #allocation0 [shape = 'u32[]', space=smem, size = 0x4, offset = 0x4, fixed_abs, tag = 'smem constant byte address 0x4 - core index']
  #allocation1 [shape = 'u32[144,128]{1,0:T(1,128)}', space=vmem, size = 0x12000, scoped, tag = 'internal scratch']
  %s0 = inlined_call_operand.vmem [shape: f32[392,320], index: 0, kind: input, shape index: {}]
  %s1 = inlined_call_operand.vmem [shape: f32[320,40], index: 1, kind: input, shape index: {}]
  %s2 = inlined_call_operand.vmem [shape: f32[1,40], index: 2, kind: input, shape index: {}]
  %s3 = inlined_call_operand.vmem [shape: f32[392,40], index: 3, kind: output, shape index: {}]
  %s4 = sld [smem:[#allocation0]]
  $region22: #{model_forward.4} parent=0
    _
  %s6 = ssub.s32 1, %s4
  %s7 = scalar_select 0, %s6, %s4
  // Predicated region
  $region2: #{model_forward.4} parent=0 // pred_check
    _
  $region3: #{model_forward.4} parent=0 // pred_check_branch
    %9 = sbr.rel (0) target = $region5
  $region4: #{model_forward.4} parent=0 // pred_region
    _
  $region5: #{model_forward.4} parent=0 // pred_fallthru
    _
  // Predicated region
  $region6: #{model_forward.4} parent=0 // pred_check
    _
  $region7: #{model_forward.4} parent=0 // pred_check_branch
    %11 = sbr.rel (0) target = $region9
  $region8: #{model_forward.4} parent=0 // pred_region
    _
  $region9: #{model_forward.4} parent=0 // pred_fallthru
    _
  // Predicated region
  $region10: #{model_forward.4} parent=0 // pred_check
    _
  $region11: #{model_forward.4} parent=0 // pred_check_branch
    %13 = sbr.rel (0) target = $region13
  $region12: #{model_forward.4} parent=0 // pred_region
    _
  $region13: #{model_forward.4} parent=0 // pred_fallthru
    _
  %v14 = vld [vmem:[%s0] sm:$0xff]
  %v15 = vld [vmem:[%s0 + $0x8] sm:$0xff]
  %v16 = vld [vmem:[%s0 + $0x10] sm:$0xff]
  %v17 = vld [vmem:[%s0 + $0x18] sm:$0xff]
  %v18 = vld [vmem:[%s0 + $0x20] sm:$0xff]
  %v19 = vld [vmem:[%s0 + $0x28] sm:$0xff]
  %v20 = vld [vmem:[%s0 + $0x30] sm:$0xff]
  %v21 = vld [vmem:[%s0 + $0x38] sm:$0xff]
  %v22 = vld [vmem:[%s0 + $0x40] sm:$0xff]
  %v23 = vld [vmem:[%s0 + $0x48] sm:$0xff]
  %v24 = vld [vmem:[%s0 + $0x50] sm:$0xff]
  %v25 = vld [vmem:[%s0 + $0x58] sm:$0xff]
  %v26 = vld [vmem:[%s0 + $0x60] sm:$0xff]
  %v27 = vld [vmem:[%s0 + $0x68] sm:$0xff]
  %v28 = vld [vmem:[%s0 + $0x70] sm:$0xff]
  %v29 = vld [vmem:[%s0 + $0x78] sm:$0xff]
  %v30 = vld [vmem:[%s0 + $0x80] sm:$0xff]
  %v31 = vld [vmem:[%s0 + $0x88] sm:$0xff]
  %v32 = vld [vmem:[%s0 + $0x90] sm:$0xff]
  %v33 = vld [vmem:[%s0 + $0x98] sm:$0xff]
  %v34 = vld [vmem:[%s0 + $0xa0] sm:$0xff]
  %v35 = vld [vmem:[%s0 + $0xa8] sm:$0xff]
  %v36 = vld [vmem:[%s0 + $0xb0] sm:$0xff]
  %v37 = vld [vmem:[%s0 + $0xb8] sm:$0xff]
  %v38 = vld [vmem:[%s0 + $0xc0] sm:$0xff]
  %v39 = vld [vmem:[%s0 + $0xc8] sm:$0xff]
  %v40 = vld [vmem:[%s0 + $0xd0] sm:$0xff]
  %v41 = vld [vmem:[%s0 + $0xd8] sm:$0xff]
  %v42 = vld [vmem:[%s0 + $0xe0] sm:$0xff]
  %v43 = vld [vmem:[%s0 + $0xe8] sm:$0xff]
  %v44 = vld [vmem:[%s0 + $0xf0] sm:$0xff]
  %v45 = vld [vmem:[%s0 + $0xf8] sm:$0xff]
  %v46 = vld [vmem:[%s0 + $0x100] sm:$0xff]
  %v47 = vld [vmem:[%s0 + $0x108] sm:$0xff]
  %v48 = vld [vmem:[%s0 + $0x110] sm:$0xff]
  %v49 = vld [vmem:[%s0 + $0x118] sm:$0xff]
  %v50 = vld [vmem:[%s0 + $0x120] sm:$0xff]
  %v51 = vld [vmem:[%s0 + $0x128] sm:$0xff]
  %v52 = vld [vmem:[%s0 + $0x130] sm:$0xff]
  %v53 = vld [vmem:[%s0 + $0x138] sm:$0xff]
  %v54 = vld [vmem:[%s0 + $0x140] sm:$0xff]
  %v55 = vld [vmem:[%s0 + $0x148] sm:$0xff]
  %v56 = vld [vmem:[%s0 + $0x150] sm:$0xff]
  %v57 = vld [vmem:[%s0 + $0x158] sm:$0xff]
  %v58 = vld [vmem:[%s0 + $0x160] sm:$0xff]
  %v59 = vld [vmem:[%s0 + $0x168] sm:$0xff]
  %v60 = vld [vmem:[%s0 + $0x170] sm:$0xff]
  %v61 = vld [vmem:[%s0 + $0x178] sm:$0xff]
  %v62 = vld [vmem:[%s0 + $0x180] sm:$0xff]
  %v63 = vld [vmem:[%s0 + $0x188] sm:$0xff]
  %v64 = vld [vmem:[%s0 + $0x190] sm:$0xff]
  %v65 = vld [vmem:[%s0 + $0x198] sm:$0xff]
  %v66 = vld [vmem:[%s0 + $0x1a0] sm:$0xff]
  %v67 = vld [vmem:[%s0 + $0x1a8] sm:$0xff]
  %v68 = vld [vmem:[%s0 + $0x1b0] sm:$0xff]
  %v69 = vld [vmem:[%s0 + $0x1b8] sm:$0xff]
  %v70 = vld [vmem:[%s0 + $0x1c0] sm:$0xff]
  %v71 = vld [vmem:[%s0 + $0x1c8] sm:$0xff]
  %v72 = vld [vmem:[%s0 + $0x1d0] sm:$0xff]
  %v73 = vld [vmem:[%s0 + $0x1d8] sm:$0xff]
  %v74 = vld [vmem:[%s0 + $0x1e0] sm:$0xff]
  %v75 = vld [vmem:[%s0 + $0x1e8] sm:$0xff]
  %v76 = vld [vmem:[%s0 + $0x1f0] sm:$0xff]
  %v77 = vld [vmem:[%s0 + $0x1f8] sm:$0xff]
  %v78 = vld [vmem:[%s0 + $0x200] sm:$0xff]
  %v79 = vld [vmem:[%s0 + $0x208] sm:$0xff]
  %v80 = vld [vmem:[%s0 + $0x210] sm:$0xff]
  %v81 = vld [vmem:[%s0 + $0x218] sm:$0xff]
  %v82 = vld [vmem:[%s0 + $0x220] sm:$0xff]
  %v83 = vld [vmem:[%s0 + $0x228] sm:$0xff]
  %v84 = vld [vmem:[%s0 + $0x230] sm:$0xff]
  %v85 = vld [vmem:[%s0 + $0x238] sm:$0xff]
  %v86 = vld [vmem:[%s0 + $0x240] sm:$0xff]
  %v87 = vld [vmem:[%s0 + $0x248] sm:$0xff]
  %v88 = vld [vmem:[%s0 + $0x250] sm:$0xff]
  %v89 = vld [vmem:[%s0 + $0x258] sm:$0xff]
  %v90 = vld [vmem:[%s0 + $0x260] sm:$0xff]
  %v91 = vld [vmem:[%s0 + $0x268] sm:$0xff]
  %v92 = vld [vmem:[%s0 + $0x270] sm:$0xff]
  %v93 = vld [vmem:[%s0 + $0x278] sm:$0xff]
  %v94 = vld [vmem:[%s0 + $0x280] sm:$0xff]
  %v95 = vld [vmem:[%s0 + $0x288] sm:$0xff]
  %v96 = vld [vmem:[%s0 + $0x290] sm:$0xff]
  %v97 = vld [vmem:[%s0 + $0x298] sm:$0xff]
  %v98 = vld [vmem:[%s0 + $0x2a0] sm:$0xff]
  %v99 = vld [vmem:[%s0 + $0x2a8] sm:$0xff]
  %v100 = vld [vmem:[%s0 + $0x2b0] sm:$0xff]
  %v101 = vld [vmem:[%s0 + $0x2b8] sm:$0xff]
  %v102 = vld [vmem:[%s0 + $0x2c0] sm:$0xff]
  %v103 = vld [vmem:[%s0 + $0x2c8] sm:$0xff]
  %v104 = vld [vmem:[%s0 + $0x2d0] sm:$0xff]
  %v105 = vld [vmem:[%s0 + $0x2d8] sm:$0xff]
  %v106 = vld [vmem:[%s0 + $0x2e0] sm:$0xff]
  %v107 = vld [vmem:[%s0 + $0x2e8] sm:$0xff]
  %v108 = vld [vmem:[%s0 + $0x2f0] sm:$0xff]
  %v109 = vld [vmem:[%s0 + $0x2f8] sm:$0xff]
  %v110 = vld [vmem:[%s0 + $0x300] sm:$0xff]
  %v111 = vld [vmem:[%s0 + $0x308] sm:$0xff]
  %v112 = vld [vmem:[%s0 + $0x310] sm:$0xff]
  %v113 = vld [vmem:[%s0 + $0x318] sm:$0xff]
  %v114 = vld [vmem:[%s0 + $0x320] sm:$0xff]
  %v115 = vld [vmem:[%s0 + $0x328] sm:$0xff]
  %v116 = vld [vmem:[%s0 + $0x330] sm:$0xff]
  %v117 = vld [vmem:[%s0 + $0x338] sm:$0xff]
  %v118 = vld [vmem:[%s0 + $0x340] sm:$0xff]
  %v119 = vld [vmem:[%s0 + $0x348] sm:$0xff]
  %v120 = vld [vmem:[%s0 + $0x350] sm:$0xff]
  %v121 = vld [vmem:[%s0 + $0x358] sm:$0xff]
  %v122 = vld [vmem:[%s0 + $0x360] sm:$0xff]
  %v123 = vld [vmem:[%s0 + $0x368] sm:$0xff]
  %v124 = vld [vmem:[%s0 + $0x370] sm:$0xff]
  %v125 = vld [vmem:[%s0 + $0x378] sm:$0xff]
  %v126 = vld [vmem:[%s0 + $0x380] sm:$0xff]
  %v127 = vld [vmem:[%s0 + $0x388] sm:$0xff]
  %v128 = vld [vmem:[%s0 + $0x390] sm:$0xff]
  %v129 = vld [vmem:[%s0 + $0x398] sm:$0xff]
  %v130 = vld [vmem:[%s0 + $0x3a0] sm:$0xff]
  %v131 = vld [vmem:[%s0 + $0x3a8] sm:$0xff]
  %v132 = vld [vmem:[%s0 + $0x3b0] sm:$0xff]
  %v133 = vld [vmem:[%s0 + $0x3b8] sm:$0xff]
  %v134 = vld [vmem:[%s0 + $0x3c0] sm:$0xff]
  %v135 = vld [vmem:[%s0 + $0x3c8] sm:$0xff]
  %v136 = vld [vmem:[%s0 + $0x3d0] sm:$0xff]
  %v137 = vld [vmem:[%s0 + $0x3d8] sm:$0xff]
  %v138 = vld [vmem:[%s0 + $0x3e0] sm:$0xff]
  %v139 = vld [vmem:[%s0 + $0x3e8] sm:$0xff]
  %v140 = vld [vmem:[%s0 + $0x3f0] sm:$0xff]
  %v141 = vld [vmem:[%s0 + $0x3f8] sm:$0xff]
  %v142 = vld [vmem:[%s0 + $0x400] sm:$0xff]
  %v143 = vld [vmem:[%s0 + $0x408] sm:$0xff]
  %v144 = vld [vmem:[%s0 + $0x410] sm:$0xff]
  %v145 = vld [vmem:[%s0 + $0x418] sm:$0xff]
  %v146 = vld [vmem:[%s0 + $0x420] sm:$0xff]
  %v147 = vld [vmem:[%s0 + $0x428] sm:$0xff]
  %v148 = vld [vmem:[%s0 + $0x430] sm:$0xff]
  %v149 = vld [vmem:[%s0 + $0x438] sm:$0xff]
  %v150 = vld [vmem:[%s0 + $0x440] sm:$0xff]
  %v151 = vld [vmem:[%s0 + $0x448] sm:$0xff]
  %v152 = vld [vmem:[%s0 + $0x450] sm:$0xff]
  %v153 = vld [vmem:[%s0 + $0x458] sm:$0xff]
  %v154 = vld [vmem:[%s0 + $0x460] sm:$0xff]
  %v155 = vld [vmem:[%s0 + $0x468] sm:$0xff]
  %v156 = vld [vmem:[%s0 + $0x470] sm:$0xff]
  %v157 = vld [vmem:[%s0 + $0x478] sm:$0xff]
  %v158 = vld [vmem:[%s0 + $0x480] sm:$0xff]
  %v159 = vld [vmem:[%s0 + $0x488] sm:$0xff]
  %v160 = vld [vmem:[%s0 + $0x490] sm:$0xff]
  %v161 = vld [vmem:[%s1] sm:$0xff]
  %v162 = vld [vmem:[%s1 + $0x8] sm:$0xff]
  %v163 = vld [vmem:[%s1 + $0x10] sm:$0xff]
  %v164 = vld [vmem:[%s1 + $0x18] sm:$0xff]
  %v165 = vld [vmem:[%s1 + $0x20] sm:$0xff]
  %v166 = vld [vmem:[%s1 + $0x28] sm:$0xff]
  %v167 = vld [vmem:[%s1 + $0x30] sm:$0xff]
  %v168 = vld [vmem:[%s1 + $0x38] sm:$0xff]
  %v169 = vld [vmem:[%s1 + $0x40] sm:$0xff]
  %v170 = vld [vmem:[%s1 + $0x48] sm:$0xff]
  %v171 = vld [vmem:[%s1 + $0x50] sm:$0xff]
  %v172 = vld [vmem:[%s1 + $0x58] sm:$0xff]
  %v173 = vld [vmem:[%s1 + $0x60] sm:$0xff]
  %v174 = vld [vmem:[%s1 + $0x68] sm:$0xff]
  %v175 = vld [vmem:[%s1 + $0x70] sm:$0xff]
  %v176 = vld [vmem:[%s1 + $0x78] sm:$0xff]
  %v177 = vld [vmem:[%s1 + $0x80] sm:$0xff]
  %v178 = vld [vmem:[%s1 + $0x88] sm:$0xff]
  %v179 = vld [vmem:[%s1 + $0x90] sm:$0xff]
  %v180 = vld [vmem:[%s1 + $0x98] sm:$0xff]
  %v181 = vld [vmem:[%s1 + $0xa0] sm:$0xff]
  %v182 = vld [vmem:[%s1 + $0xa8] sm:$0xff]
  %v183 = vld [vmem:[%s1 + $0xb0] sm:$0xff]
  %v184 = vld [vmem:[%s1 + $0xb8] sm:$0xff]
  %v185 = vld [vmem:[%s1 + $0xc0] sm:$0xff]
  %v186 = vld [vmem:[%s1 + $0xc8] sm:$0xff]
  %v187 = vld [vmem:[%s1 + $0xd0] sm:$0xff]
  %v188 = vld [vmem:[%s1 + $0xd8] sm:$0xff]
  %v189 = vld [vmem:[%s1 + $0xe0] sm:$0xff]
  %v190 = vld [vmem:[%s1 + $0xe8] sm:$0xff]
  %v191 = vld [vmem:[%s1 + $0xf0] sm:$0xff]
  %v192 = vld [vmem:[%s1 + $0xf8] sm:$0xff]
  %v193 = vld [vmem:[%s1 + $0x100] sm:$0xff]
  %v194 = vld [vmem:[%s1 + $0x108] sm:$0xff]
  %v195 = vld [vmem:[%s1 + $0x110] sm:$0xff]
  %v196 = vld [vmem:[%s1 + $0x118] sm:$0xff]
  %v197 = vld [vmem:[%s1 + $0x120] sm:$0xff]
  %v198 = vld [vmem:[%s1 + $0x128] sm:$0xff]
  %v199 = vld [vmem:[%s1 + $0x130] sm:$0xff]
  %v200 = vld [vmem:[%s1 + $0x138] sm:$0xff]
  %v201 = vld [vmem:[%s2] sm:$0x1]
  %v203 = vlaneseq
  %v204 = vshrl.u32 %v203, 7
  %v205 = vsub.s32 0, %v204
  %v206 = vrot.slane %v201, %v205
  %vm208 = vcmask 523264
  %v210 = vsel %vm208, %v16, 0
  %v213 = vsel %vm208, %v19, 0
  %v216 = vsel %vm208, %v22, 0
  %v219 = vsel %vm208, %v25, 0
  %v222 = vsel %vm208, %v28, 0
  %v225 = vsel %vm208, %v31, 0
  %v228 = vsel %vm208, %v34, 0
  %v231 = vsel %vm208, %v37, 0
  %v234 = vsel %vm208, %v40, 0
  %v237 = vsel %vm208, %v43, 0
  %v240 = vsel %vm208, %v46, 0
  %v243 = vsel %vm208, %v49, 0
  %v246 = vsel %vm208, %v52, 0
  %v249 = vsel %vm208, %v55, 0
  %v252 = vsel %vm208, %v58, 0
  %v255 = vsel %vm208, %v61, 0
  %v258 = vsel %vm208, %v64, 0
  %v261 = vsel %vm208, %v67, 0
  %v264 = vsel %vm208, %v70, 0
  %v267 = vsel %vm208, %v73, 0
  %v270 = vsel %vm208, %v76, 0
  %v273 = vsel %vm208, %v79, 0
  %v276 = vsel %vm208, %v82, 0
  %v279 = vsel %vm208, %v85, 0
  %v282 = vsel %vm208, %v88, 0
  %v285 = vsel %vm208, %v91, 0
  %v288 = vsel %vm208, %v94, 0
  %v291 = vsel %vm208, %v97, 0
  %v294 = vsel %vm208, %v100, 0
  %v297 = vsel %vm208, %v103, 0
  %v300 = vsel %vm208, %v106, 0
  %v303 = vsel %vm208, %v109, 0
  %v306 = vsel %vm208, %v112, 0
  %v309 = vsel %vm208, %v115, 0
  %v312 = vsel %vm208, %v118, 0
  %v315 = vsel %vm208, %v121, 0
  %v318 = vsel %vm208, %v124, 0
  %v321 = vsel %vm208, %v127, 0
  %v324 = vsel %vm208, %v130, 0
  %v327 = vsel %vm208, %v133, 0
  %v330 = vsel %vm208, %v136, 0
  %v333 = vsel %vm208, %v139, 0
  %v336 = vsel %vm208, %v142, 0
  %v339 = vsel %vm208, %v145, 0
  %v342 = vsel %vm208, %v148, 0
  %v345 = vsel %vm208, %v151, 0
  %v348 = vsel %vm208, %v154, 0
  %v351 = vsel %vm208, %v157, 0
  %v354 = vsel %vm208, %v160, 0
  %356 = vmatprep.subr.mxu0 0.0
  %357 = vmatpush1.msra.mxu0 %v161
  %358 = vmatprep.subr.mxu0 0.0
  %359 = vmatpush1.msra.mxu0 %v162
  %360 = vmatprep.subr.mxu0 0.0
  %361 = vmatpush1.msra.mxu0 %v163
  %362 = vmatprep.subr.mxu0 0.0
  %363 = vmatpush1.msra.mxu0 %v164
  %364 = vmatprep.subr.mxu0 0.0
  %365 = vmatpush1.msra.mxu0 %v165
  %366 = vmatprep.subr.mxu0 0.0
  %367 = vmatpush1.msra.mxu0 %v166
  %368 = vmatprep.subr.mxu0 0.0
  %369 = vmatpush1.msra.mxu0 %v167
  %370 = vmatprep.subr.mxu0 0.0
  %371 = vmatpush1.msra.mxu0 %v168
  %372 = vmatprep.subr.mxu0 0.0
  %373 = vmatpush1.msra.mxu0 %v169
  %374 = vmatprep.subr.mxu0 0.0
  %375 = vmatpush1.msra.mxu0 %v170
  %376 = vmatprep.subr.mxu0 0.0
  %377 = vmatpush1.msra.mxu0 %v171
  %378 = vmatprep.subr.mxu0 0.0
  %379 = vmatpush1.msra.mxu0 %v172
  %380 = vmatprep.subr.mxu0 0.0
  %381 = vmatpush1.msra.mxu0 %v173
  %382 = vmatprep.subr.mxu0 0.0
  %383 = vmatpush1.msra.mxu0 %v174
  %384 = vmatprep.subr.mxu0 0.0
  %385 = vmatpush1.msra.mxu0 %v175
  %386 = vmatprep.subr.mxu0 0.0
  %387 = vmatpush1.msra.mxu0 %v176
  %388 = vmatprep.subr.mxu0 0.0
  %389 = vmatpush1.msra.mxu0 %v177
  %390 = vmatprep.subr.mxu0 0.0
  %391 = vmatpush1.msra.mxu0 %v178
  %392 = vmatprep.subr.mxu0 0.0
  %393 = vmatpush1.msra.mxu0 %v179
  %394 = vmatprep.subr.mxu0 0.0
  %395 = vmatpush1.msra.mxu0 %v180
  %396 = vmatprep.subr.mxu0 0.0
  %397 = vmatpush1.msra.mxu0 %v181
  %398 = vmatprep.subr.mxu0 0.0
  %399 = vmatpush1.msra.mxu0 %v182
  %400 = vmatprep.subr.mxu0 0.0
  %401 = vmatpush1.msra.mxu0 %v183
  %402 = vmatprep.subr.mxu0 0.0
  %403 = vmatpush1.msra.mxu0 %v184
  %404 = vmatprep.subr.mxu0 0.0
  %405 = vmatpush1.msra.mxu0 %v185
  %406 = vmatprep.subr.mxu0 0.0
  %407 = vmatpush1.msra.mxu0 %v186
  %408 = vmatprep.subr.mxu0 0.0
  %409 = vmatpush1.msra.mxu0 %v187
  %410 = vmatprep.subr.mxu0 0.0
  %411 = vmatpush1.msra.mxu0 %v188
  %412 = vmatprep.subr.mxu0 0.0
  %413 = vmatpush1.msra.mxu0 %v189
  %414 = vmatprep.subr.mxu0 0.0
  %415 = vmatpush1.msra.mxu0 %v190
  %416 = vmatprep.subr.mxu0 0.0
  %417 = vmatpush1.msra.mxu0 %v191
  %418 = vmatprep.subr.mxu0 0.0
  %419 = vmatpush1.msra.mxu0 %v192
  %420 = vmatprep.mubr.f32.mxu0 %v15
  %421 = vmatmul.mubr.f32.gmra.mrb[0].mxu0 %v14
  %v422 = vpop.f32.mrb[0].mxu0
  %v423 = vadd.f32 %v206, %v422
  %v424 = vpop.f32.mrb[0].mxu0
  %425 = vmatprep.mubr.f32.mxu0 %v18
  %426 = vmatmul.mubr.f32.gmra.mrb[0].mxu0 %v17
  %v427 = vpop.f32.mrb[0].mxu0
  %v428 = vadd.f32 %v206, %v427
  %v429 = vpop.f32.mrb[0].mxu0
  %430 = vmatprep.mubr.f32.mxu0 %v21
  %431 = vmatmul.mubr.f32.gmra.mrb[0].mxu0 %v20
  %v432 = vpop.f32.mrb[0].mxu0
  %v433 = vadd.f32 %v206, %v432
  %v434 = vpop.f32.mrb[0].mxu0
  %435 = vmatprep.mubr.f32.mxu0 %v24
  %436 = vmatmul.mubr.f32.gmra.mrb[0].mxu0 %v23
  %v437 = vpop.f32.mrb[0].mxu0
  %v438 = vadd.f32 %v206, %v437
  %v439 = vpop.f32.mrb[0].mxu0
  %440 = vmatprep.mubr.f32.mxu0 %v27
  %441 = vmatmul.mubr.f32.gmra.mrb[0].mxu0 %v26
  %v442 = vpop.f32.mrb[0].mxu0
  %v443 = vadd.f32 %v206, %v442
  %v444 = vpop.f32.mrb[0].mxu0
  %445 = vmatprep.mubr.f32.mxu0 %v30
  %446 = vmatmul.mubr.f32.gmra.mrb[0].mxu0 %v29
  %v447 = vpop.f32.mrb[0].mxu0
  %v448 = vadd.f32 %v206, %v447
  %v449 = vpop.f32.mrb[0].mxu0
  %450 = vmatprep.mubr.f32.mxu0 %v33
  %451 = vmatmul.mubr.f32.gmra.mrb[0].mxu0 %v32
  %v452 = vpop.f32.mrb[0].mxu0
  %v453 = vadd.f32 %v206, %v452
  %v454 = vpop.f32.mrb[0].mxu0
  %455 = vmatprep.mubr.f32.mxu0 %v36
  %456 = vmatmul.mubr.f32.gmra.mrb[0].mxu0 %v35
  %v457 = vpop.f32.mrb[0].mxu0
  %v458 = vadd.f32 %v206, %v457
  %v459 = vpop.f32.mrb[0].mxu0
  %460 = vmatprep.mubr.f32.mxu0 %v39
  %461 = vmatmul.mubr.f32.gmra.mrb[0].mxu0 %v38
  %v462 = vpop.f32.mrb[0].mxu0
  %v463 = vadd.f32 %v206, %v462
  %v464 = vpop.f32.mrb[0].mxu0
  %465 = vmatprep.mubr.f32.mxu0 %v42
  %466 = vmatmul.mubr.f32.gmra.mrb[0].mxu0 %v41
  %v467 = vpop.f32.mrb[0].mxu0
  %v468 = vadd.f32 %v206, %v467
  %v469 = vpop.f32.mrb[0].mxu0
  %470 = vmatprep.mubr.f32.mxu0 %v45
  %471 = vmatmul.mubr.f32.gmra.mrb[0].mxu0 %v44
  %v472 = vpop.f32.mrb[0].mxu0
  %v473 = vadd.f32 %v206, %v472
  %v474 = vpop.f32.mrb[0].mxu0
  %475 = vmatprep.mubr.f32.mxu0 %v48
  %476 = vmatmul.mubr.f32.gmra.mrb[0].mxu0 %v47
  %v477 = vpop.f32.mrb[0].mxu0
  %v478 = vadd.f32 %v206, %v477
  %v479 = vpop.f32.mrb[0].mxu0
  %480 = vmatprep.mubr.f32.mxu0 %v51
  %481 = vmatmul.mubr.f32.gmra.mrb[0].mxu0 %v50
  %v482 = vpop.f32.mrb[0].mxu0
  %v483 = vadd.f32 %v206, %v482
  %v484 = vpop.f32.mrb[0].mxu0
  %485 = vmatprep.mubr.f32.mxu0 %v54
  %486 = vmatmul.mubr.f32.gmra.mrb[0].mxu0 %v53
  %v487 = vpop.f32.mrb[0].mxu0
  %v488 = vadd.f32 %v206, %v487
  %v489 = vpop.f32.mrb[0].mxu0
  %490 = vmatprep.mubr.f32.mxu0 %v57
  %491 = vmatmul.mubr.f32.gmra.mrb[0].mxu0 %v56
  %v492 = vpop.f32.mrb[0].mxu0
  %v493 = vadd.f32 %v206, %v492
  %v494 = vpop.f32.mrb[0].mxu0
  %495 = vmatprep.mubr.f32.mxu0 %v60
  %496 = vmatmul.mubr.f32.gmra.mrb[0].mxu0 %v59
  %v497 = vpop.f32.mrb[0].mxu0
  %v498 = vadd.f32 %v206, %v497
  %v499 = vpop.f32.mrb[0].mxu0
  %500 = vmatprep.mubr.f32.mxu0 %v63
  %501 = vmatmul.mubr.f32.gmra.mrb[0].mxu0 %v62
  %v502 = vpop.f32.mrb[0].mxu0
  %v503 = vadd.f32 %v206, %v502
  %v504 = vpop.f32.mrb[0].mxu0
  %505 = vmatprep.mubr.f32.mxu0 %v66
  %506 = vmatmul.mubr.f32.gmra.mrb[0].mxu0 %v65
  %v507 = vpop.f32.mrb[0].mxu0
  %v508 = vadd.f32 %v206, %v507
  %v509 = vpop.f32.mrb[0].mxu0
  %510 = vmatprep.mubr.f32.mxu0 %v69
  %511 = vmatmul.mubr.f32.gmra.mrb[0].mxu0 %v68
  %v512 = vpop.f32.mrb[0].mxu0
  %v513 = vadd.f32 %v206, %v512
  %v514 = vpop.f32.mrb[0].mxu0
  %515 = vmatprep.mubr.f32.mxu0 %v72
  %516 = vmatmul.mubr.f32.gmra.mrb[0].mxu0 %v71
  %v517 = vpop.f32.mrb[0].mxu0
  %v518 = vadd.f32 %v206, %v517
  %v519 = vpop.f32.mrb[0].mxu0
  %520 = vmatprep.mubr.f32.mxu0 %v75
  %521 = vmatmul.mubr.f32.gmra.mrb[0].mxu0 %v74
  %v522 = vpop.f32.mrb[0].mxu0
  %v523 = vadd.f32 %v206, %v522
  %v524 = vpop.f32.mrb[0].mxu0
  %525 = vmatprep.mubr.f32.mxu0 %v78
  %526 = vmatmul.mubr.f32.gmra.mrb[0].mxu0 %v77
  %v527 = vpop.f32.mrb[0].mxu0
  %v528 = vadd.f32 %v206, %v527
  %v529 = vpop.f32.mrb[0].mxu0
  %530 = vmatprep.mubr.f32.mxu0 %v81
  %531 = vmatmul.mubr.f32.gmra.mrb[0].mxu0 %v80
  %v532 = vpop.f32.mrb[0].mxu0
  %v533 = vadd.f32 %v206, %v532
  %v534 = vpop.f32.mrb[0].mxu0
  %535 = vmatprep.mubr.f32.mxu0 %v84
  %536 = vmatmul.mubr.f32.gmra.mrb[0].mxu0 %v83
  %v537 = vpop.f32.mrb[0].mxu0
  %v538 = vadd.f32 %v206, %v537
  %v539 = vpop.f32.mrb[0].mxu0
  %540 = vmatprep.mubr.f32.mxu0 %v87
  %541 = vmatmul.mubr.f32.gmra.mrb[0].mxu0 %v86
  %v542 = vpop.f32.mrb[0].mxu0
  %v543 = vadd.f32 %v206, %v542
  %v544 = vpop.f32.mrb[0].mxu0
  %545 = vmatprep.mubr.f32.mxu0 %v90
  %546 = vmatmul.mubr.f32.gmra.mrb[0].mxu0 %v89
  %v547 = vpop.f32.mrb[0].mxu0
  %v548 = vadd.f32 %v206, %v547
  %v549 = vpop.f32.mrb[0].mxu0
  %550 = vmatprep.mubr.f32.mxu0 %v93
  %551 = vmatmul.mubr.f32.gmra.mrb[0].mxu0 %v92
  %v552 = vpop.f32.mrb[0].mxu0
  %v553 = vadd.f32 %v206, %v552
  %v554 = vpop.f32.mrb[0].mxu0
  %555 = vmatprep.mubr.f32.mxu0 %v96
  %556 = vmatmul.mubr.f32.gmra.mrb[0].mxu0 %v95
  %v557 = vpop.f32.mrb[0].mxu0
  %v558 = vadd.f32 %v206, %v557
  %v559 = vpop.f32.mrb[0].mxu0
  %560 = vmatprep.mubr.f32.mxu0 %v99
  %561 = vmatmul.mubr.f32.gmra.mrb[0].mxu0 %v98
  %v562 = vpop.f32.mrb[0].mxu0
  %v563 = vadd.f32 %v206, %v562
  %v564 = vpop.f32.mrb[0].mxu0
  %565 = vmatprep.mubr.f32.mxu0 %v102
  %566 = vmatmul.mubr.f32.gmra.mrb[0].mxu0 %v101
  %v567 = vpop.f32.mrb[0].mxu0
  %v568 = vadd.f32 %v206, %v567
  %v569 = vpop.f32.mrb[0].mxu0
  %570 = vmatprep.mubr.f32.mxu0 %v105
  %571 = vmatmul.mubr.f32.gmra.mrb[0].mxu0 %v104
  %v572 = vpop.f32.mrb[0].mxu0
  %v573 = vadd.f32 %v206, %v572
  %v574 = vpop.f32.mrb[0].mxu0
  %575 = vmatprep.mubr.f32.mxu0 %v108
  %576 = vmatmul.mubr.f32.gmra.mrb[0].mxu0 %v107
  %v577 = vpop.f32.mrb[0].mxu0
  %v578 = vadd.f32 %v206, %v577
  %v579 = vpop.f32.mrb[0].mxu0
  %580 = vmatprep.mubr.f32.mxu0 %v111
  %581 = vmatmul.mubr.f32.gmra.mrb[0].mxu0 %v110
  %v582 = vpop.f32.mrb[0].mxu0
  %v583 = vadd.f32 %v206, %v582
  %v584 = vpop.f32.mrb[0].mxu0
  %585 = vmatprep.mubr.f32.mxu0 %v114
  %586 = vmatmul.mubr.f32.gmra.mrb[0].mxu0 %v113
  %v587 = vpop.f32.mrb[0].mxu0
  %v588 = vadd.f32 %v206, %v587
  %v589 = vpop.f32.mrb[0].mxu0
  %590 = vmatprep.mubr.f32.mxu0 %v117
  %591 = vmatmul.mubr.f32.gmra.mrb[0].mxu0 %v116
  %v592 = vpop.f32.mrb[0].mxu0
  %v593 = vadd.f32 %v206, %v592
  %v594 = vpop.f32.mrb[0].mxu0
  %595 = vmatprep.mubr.f32.mxu0 %v120
  %596 = vmatmul.mubr.f32.gmra.mrb[0].mxu0 %v119
  %v597 = vpop.f32.mrb[0].mxu0
  %v598 = vadd.f32 %v206, %v597
  %v599 = vpop.f32.mrb[0].mxu0
  %600 = vmatprep.mubr.f32.mxu0 %v123
  %601 = vmatmul.mubr.f32.gmra.mrb[0].mxu0 %v122
  %v602 = vpop.f32.mrb[0].mxu0
  %v603 = vadd.f32 %v206, %v602
  %v604 = vpop.f32.mrb[0].mxu0
  %605 = vmatprep.mubr.f32.mxu0 %v126
  %606 = vmatmul.mubr.f32.gmra.mrb[0].mxu0 %v125
  %v607 = vpop.f32.mrb[0].mxu0
  %v608 = vadd.f32 %v206, %v607
  %v609 = vpop.f32.mrb[0].mxu0
  %610 = vmatprep.mubr.f32.mxu0 %v129
  %611 = vmatmul.mubr.f32.gmra.mrb[0].mxu0 %v128
  %v612 = vpop.f32.mrb[0].mxu0
  %v613 = vadd.f32 %v206, %v612
  %v614 = vpop.f32.mrb[0].mxu0
  %615 = vmatprep.mubr.f32.mxu0 %v132
  %616 = vmatmul.mubr.f32.gmra.mrb[0].mxu0 %v131
  %v617 = vpop.f32.mrb[0].mxu0
  %v618 = vadd.f32 %v206, %v617
  %v619 = vpop.f32.mrb[0].mxu0
  %620 = vmatprep.mubr.f32.mxu0 %v135
  %621 = vmatmul.mubr.f32.gmra.mrb[0].mxu0 %v134
  %v622 = vpop.f32.mrb[0].mxu0
  %v623 = vadd.f32 %v206, %v622
  %v624 = vpop.f32.mrb[0].mxu0
  %625 = vmatprep.mubr.f32.mxu0 %v138
  %626 = vmatmul.mubr.f32.gmra.mrb[0].mxu0 %v137
  %v627 = vpop.f32.mrb[0].mxu0
  %v628 = vadd.f32 %v206, %v627
  %v629 = vpop.f32.mrb[0].mxu0
  %630 = vmatprep.mubr.f32.mxu0 %v141
  %631 = vmatmul.mubr.f32.gmra.mrb[0].mxu0 %v140
  %v632 = vpop.f32.mrb[0].mxu0
  %v633 = vadd.f32 %v206, %v632
  %v634 = vpop.f32.mrb[0].mxu0
  %635 = vmatprep.mubr.f32.mxu0 %v144
  %636 = vmatmul.mubr.f32.gmra.mrb[0].mxu0 %v143
  %v637 = vpop.f32.mrb[0].mxu0
  %v638 = vadd.f32 %v206, %v637
  %v639 = vpop.f32.mrb[0].mxu0
  %640 = vmatprep.mubr.f32.mxu0 %v147
  %641 = vmatmul.mubr.f32.gmra.mrb[0].mxu0 %v146
  %v642 = vpop.f32.mrb[0].mxu0
  %v643 = vadd.f32 %v206, %v642
  %v644 = vpop.f32.mrb[0].mxu0
  %645 = vmatprep.mubr.f32.mxu0 %v150
  %646 = vmatmul.mubr.f32.gmra.mrb[0].mxu0 %v149
  %v647 = vpop.f32.mrb[0].mxu0
  %v648 = vadd.f32 %v206, %v647
  %v649 = vpop.f32.mrb[0].mxu0
  %650 = vmatprep.mubr.f32.mxu0 %v153
  %651 = vmatmul.mubr.f32.gmra.mrb[0].mxu0 %v152
  %v652 = vpop.f32.mrb[0].mxu0
  %v653 = vadd.f32 %v206, %v652
  %v654 = vpop.f32.mrb[0].mxu0
  %655 = vmatprep.mubr.f32.mxu0 %v156
  %656 = vmatmul.mubr.f32.gmra.mrb[0].mxu0 %v155
  %v657 = vpop.f32.mrb[0].mxu0
  %v658 = vadd.f32 %v206, %v657
  %v659 = vpop.f32.mrb[0].mxu0
  %660 = vmatprep.mubr.f32.mxu0 %v159
  %661 = vmatmul.mubr.f32.gmra.mrb[0].mxu0 %v158
  %v662 = vpop.f32.mrb[0].mxu0
  %v663 = vadd.f32 %v206, %v662
  %v664 = vpop.f32.mrb[0].mxu0
  %665 = vdwg.mxu0
  %666 = vmatprep.subr.mxu0 0.0
  %667 = vmatpush1.msra.mxu0 %v193
  %668 = vmatprep.subr.mxu0 0.0
  %669 = vmatpush1.msra.mxu0 %v194
  %670 = vmatprep.subr.mxu0 0.0
  %671 = vmatpush1.msra.mxu0 %v195
  %672 = vmatprep.subr.mxu0 0.0
  %673 = vmatpush1.msra.mxu0 %v196
  %674 = vmatprep.subr.mxu0 0.0
  %675 = vmatpush1.msra.mxu0 %v197
  %676 = vmatprep.subr.mxu0 0.0
  %677 = vmatpush1.msra.mxu0 %v198
  %678 = vmatprep.subr.mxu0 0.0
  %679 = vmatpush1.msra.mxu0 %v199
  %680 = vmatprep.subr.mxu0 0.0
  %681 = vmatpush1.msra.mxu0 %v200
  %682 = vmatprep.subr.mxu0 0.0
  %683 = vmatpush1.msra.mxu0 0.0
  %684 = vmatprep.subr.mxu0 0.0
  %685 = vmatpush1.msra.mxu0 0.0
  %686 = vmatprep.subr.mxu0 0.0
  %687 = vmatpush1.msra.mxu0 0.0
  %688 = vmatprep.subr.mxu0 0.0
  %689 = vmatpush1.msra.mxu0 0.0
  %690 = vmatprep.subr.mxu0 0.0
  %691 = vmatpush1.msra.mxu0 0.0
  %692 = vmatprep.subr.mxu0 0.0
  %693 = vmatpush1.msra.mxu0 0.0
  %694 = vmatprep.subr.mxu0 0.0
  %695 = vmatpush1.msra.mxu0 0.0
  %696 = vmatprep.subr.mxu0 0.0
  %697 = vmatpush1.msra.mxu0 0.0
  %698 = vmatprep.subr.mxu0 0.0
  %699 = vmatpush1.msra.mxu0 0.0
  %700 = vmatprep.subr.mxu0 0.0
  %701 = vmatpush1.msra.mxu0 0.0
  %702 = vmatprep.subr.mxu0 0.0
  %703 = vmatpush1.msra.mxu0 0.0
  %704 = vmatprep.subr.mxu0 0.0
  %705 = vmatpush1.msra.mxu0 0.0
  %706 = vmatprep.subr.mxu0 0.0
  %707 = vmatpush1.msra.mxu0 0.0
  %708 = vmatprep.subr.mxu0 0.0
  %709 = vmatpush1.msra.mxu0 0.0
  %710 = vmatprep.subr.mxu0 0.0
  %711 = vmatpush1.msra.mxu0 0.0
  %712 = vmatprep.subr.mxu0 0.0
  %713 = vmatpush1.msra.mxu0 0.0
  %714 = vmatprep.subr.mxu0 0.0
  %715 = vmatpush1.msra.mxu0 0.0
  %716 = vmatprep.subr.mxu0 0.0
  %717 = vmatpush1.msra.mxu0 0.0
  %718 = vmatprep.subr.mxu0 0.0
  %719 = vmatpush1.msra.mxu0 0.0
  %720 = vmatprep.subr.mxu0 0.0
  %721 = vmatpush1.msra.mxu0 0.0
  %722 = vmatprep.subr.mxu0 0.0
  %723 = vmatpush1.msra.mxu0 0.0
  %724 = vmatprep.subr.mxu0 0.0
  %725 = vmatpush1.msra.mxu0 0.0
  %726 = vmatprep.subr.mxu0 0.0
  %727 = vmatpush1.msra.mxu0 0.0
  %728 = vmatprep.subr.mxu0 0.0
  %729 = vmatpush1.msra.mxu0 0.0
  %730 = vmatprep.mubr.f32.mxu0 0.0
  %731 = vmatmul.mubr.f32.gmra.mrb[0].mxu0 %v210
  %v732 = vpop.f32.mrb[0].mxu0
  %v733 = vadd.f32 %v423, %v732
  %v734 = vpop.f32.mrb[0].mxu0
  %735 = vmatprep.mubr.f32.mxu0 0.0
  %736 = vmatmul.mubr.f32.gmra.mrb[0].mxu0 %v213
  %v737 = vpop.f32.mrb[0].mxu0
  %v738 = vadd.f32 %v428, %v737
  %v739 = vpop.f32.mrb[0].mxu0
  %740 = vmatprep.mubr.f32.mxu0 0.0
  %741 = vmatmul.mubr.f32.gmra.mrb[0].mxu0 %v216
  %v742 = vpop.f32.mrb[0].mxu0
  %v743 = vadd.f32 %v433, %v742
  %v744 = vpop.f32.mrb[0].mxu0
  %745 = vmatprep.mubr.f32.mxu0 0.0
  %746 = vmatmul.mubr.f32.gmra.mrb[0].mxu0 %v219
  %v747 = vpop.f32.mrb[0].mxu0
  %v748 = vadd.f32 %v438, %v747
  %v749 = vpop.f32.mrb[0].mxu0
  %750 = vmatprep.mubr.f32.mxu0 0.0
  %751 = vmatmul.mubr.f32.gmra.mrb[0].mxu0 %v222
  %v752 = vpop.f32.mrb[0].mxu0
  %v753 = vadd.f32 %v443, %v752
  %v754 = vpop.f32.mrb[0].mxu0
  %755 = vmatprep.mubr.f32.mxu0 0.0
  %756 = vmatmul.mubr.f32.gmra.mrb[0].mxu0 %v225
  %v757 = vpop.f32.mrb[0].mxu0
  %v758 = vadd.f32 %v448, %v757
  %v759 = vpop.f32.mrb[0].mxu0
  %760 = vmatprep.mubr.f32.mxu0 0.0
  %761 = vmatmul.mubr.f32.gmra.mrb[0].mxu0 %v228
  %v762 = vpop.f32.mrb[0].mxu0
  %v763 = vadd.f32 %v453, %v762
  %v764 = vpop.f32.mrb[0].mxu0
  %765 = vmatprep.mubr.f32.mxu0 0.0
  %766 = vmatmul.mubr.f32.gmra.mrb[0].mxu0 %v231
  %v767 = vpop.f32.mrb[0].mxu0
  %v768 = vadd.f32 %v458, %v767
  %v769 = vpop.f32.mrb[0].mxu0
  %770 = vmatprep.mubr.f32.mxu0 0.0
  %771 = vmatmul.mubr.f32.gmra.mrb[0].mxu0 %v234
  %v772 = vpop.f32.mrb[0].mxu0
  %v773 = vadd.f32 %v463, %v772
  %v774 = vpop.f32.mrb[0].mxu0
  %775 = vmatprep.mubr.f32.mxu0 0.0
  %776 = vmatmul.mubr.f32.gmra.mrb[0].mxu0 %v237
  %v777 = vpop.f32.mrb[0].mxu0
  %v778 = vadd.f32 %v468, %v777
  %v779 = vpop.f32.mrb[0].mxu0
  %780 = vmatprep.mubr.f32.mxu0 0.0
  %781 = vmatmul.mubr.f32.gmra.mrb[0].mxu0 %v240
  %v782 = vpop.f32.mrb[0].mxu0
  %v783 = vadd.f32 %v473, %v782
  %v784 = vpop.f32.mrb[0].mxu0
  %785 = vmatprep.mubr.f32.mxu0 0.0
  %786 = vmatmul.mubr.f32.gmra.mrb[0].mxu0 %v243
  %v787 = vpop.f32.mrb[0].mxu0
  %v788 = vadd.f32 %v478, %v787
  %v789 = vpop.f32.mrb[0].mxu0
  %790 = vmatprep.mubr.f32.mxu0 0.0
  %791 = vmatmul.mubr.f32.gmra.mrb[0].mxu0 %v246
  %v792 = vpop.f32.mrb[0].mxu0
  %v793 = vadd.f32 %v483, %v792
  %v794 = vpop.f32.mrb[0].mxu0
  %795 = vmatprep.mubr.f32.mxu0 0.0
  %796 = vmatmul.mubr.f32.gmra.mrb[0].mxu0 %v249
  %v797 = vpop.f32.mrb[0].mxu0
  %v798 = vadd.f32 %v488, %v797
  %v799 = vpop.f32.mrb[0].mxu0
  %800 = vmatprep.mubr.f32.mxu0 0.0
  %801 = vmatmul.mubr.f32.gmra.mrb[0].mxu0 %v252
  %v802 = vpop.f32.mrb[0].mxu0
  %v803 = vadd.f32 %v493, %v802
  %v804 = vpop.f32.mrb[0].mxu0
  %805 = vmatprep.mubr.f32.mxu0 0.0
  %806 = vmatmul.mubr.f32.gmra.mrb[0].mxu0 %v255
  %v807 = vpop.f32.mrb[0].mxu0
  %v808 = vadd.f32 %v498, %v807
  %v809 = vpop.f32.mrb[0].mxu0
  %810 = vmatprep.mubr.f32.mxu0 0.0
  %811 = vmatmul.mubr.f32.gmra.mrb[0].mxu0 %v258
  %v812 = vpop.f32.mrb[0].mxu0
  %v813 = vadd.f32 %v503, %v812
  %v814 = vpop.f32.mrb[0].mxu0
  %815 = vmatprep.mubr.f32.mxu0 0.0
  %816 = vmatmul.mubr.f32.gmra.mrb[0].mxu0 %v261
  %v817 = vpop.f32.mrb[0].mxu0
  %v818 = vadd.f32 %v508, %v817
  %v819 = vpop.f32.mrb[0].mxu0
  %820 = vmatprep.mubr.f32.mxu0 0.0
  %821 = vmatmul.mubr.f32.gmra.mrb[0].mxu0 %v264
  %v822 = vpop.f32.mrb[0].mxu0
  %v823 = vadd.f32 %v513, %v822
  %v824 = vpop.f32.mrb[0].mxu0
  %825 = vmatprep.mubr.f32.mxu0 0.0
  %826 = vmatmul.mubr.f32.gmra.mrb[0].mxu0 %v267
  %v827 = vpop.f32.mrb[0].mxu0
  %v828 = vadd.f32 %v518, %v827
  %v829 = vpop.f32.mrb[0].mxu0
  %830 = vmatprep.mubr.f32.mxu0 0.0
  %831 = vmatmul.mubr.f32.gmra.mrb[0].mxu0 %v270
  %v832 = vpop.f32.mrb[0].mxu0
  %v833 = vadd.f32 %v523, %v832
  %v834 = vpop.f32.mrb[0].mxu0
  %835 = vmatprep.mubr.f32.mxu0 0.0
  %836 = vmatmul.mubr.f32.gmra.mrb[0].mxu0 %v273
  %v837 = vpop.f32.mrb[0].mxu0
  %v838 = vadd.f32 %v528, %v837
  %v839 = vpop.f32.mrb[0].mxu0
  %840 = vmatprep.mubr.f32.mxu0 0.0
  %841 = vmatmul.mubr.f32.gmra.mrb[0].mxu0 %v276
  %v842 = vpop.f32.mrb[0].mxu0
  %v843 = vadd.f32 %v533, %v842
  %v844 = vpop.f32.mrb[0].mxu0
  %845 = vmatprep.mubr.f32.mxu0 0.0
  %846 = vmatmul.mubr.f32.gmra.mrb[0].mxu0 %v279
  %v847 = vpop.f32.mrb[0].mxu0
  %v848 = vadd.f32 %v538, %v847
  %v849 = vpop.f32.mrb[0].mxu0
  %850 = vmatprep.mubr.f32.mxu0 0.0
  %851 = vmatmul.mubr.f32.gmra.mrb[0].mxu0 %v282
  %v852 = vpop.f32.mrb[0].mxu0
  %v853 = vadd.f32 %v543, %v852
  %v854 = vpop.f32.mrb[0].mxu0
  %855 = vmatprep.mubr.f32.mxu0 0.0
  %856 = vmatmul.mubr.f32.gmra.mrb[0].mxu0 %v285
  %v857 = vpop.f32.mrb[0].mxu0
  %v858 = vadd.f32 %v548, %v857
  %v859 = vpop.f32.mrb[0].mxu0
  %860 = vmatprep.mubr.f32.mxu0 0.0
  %861 = vmatmul.mubr.f32.gmra.mrb[0].mxu0 %v288
  %v862 = vpop.f32.mrb[0].mxu0
  %v863 = vadd.f32 %v553, %v862
  %v864 = vpop.f32.mrb[0].mxu0
  %865 = vmatprep.mubr.f32.mxu0 0.0
  %866 = vmatmul.mubr.f32.gmra.mrb[0].mxu0 %v291
  %v867 = vpop.f32.mrb[0].mxu0
  %v868 = vadd.f32 %v558, %v867
  %v869 = vpop.f32.mrb[0].mxu0
  %870 = vmatprep.mubr.f32.mxu0 0.0
  %871 = vmatmul.mubr.f32.gmra.mrb[0].mxu0 %v294
  %v872 = vpop.f32.mrb[0].mxu0
  %v873 = vadd.f32 %v563, %v872
  %v874 = vpop.f32.mrb[0].mxu0
  %875 = vmatprep.mubr.f32.mxu0 0.0
  %876 = vmatmul.mubr.f32.gmra.mrb[0].mxu0 %v297
  %v877 = vpop.f32.mrb[0].mxu0
  %v878 = vadd.f32 %v568, %v877
  %v879 = vpop.f32.mrb[0].mxu0
  %880 = vmatprep.mubr.f32.mxu0 0.0
  %881 = vmatmul.mubr.f32.gmra.mrb[0].mxu0 %v300
  %v882 = vpop.f32.mrb[0].mxu0
  %v883 = vadd.f32 %v573, %v882
  %v884 = vpop.f32.mrb[0].mxu0
  %885 = vmatprep.mubr.f32.mxu0 0.0
  %886 = vmatmul.mubr.f32.gmra.mrb[0].mxu0 %v303
  %v887 = vpop.f32.mrb[0].mxu0
  %v888 = vadd.f32 %v578, %v887
  %v889 = vpop.f32.mrb[0].mxu0
  %890 = vmatprep.mubr.f32.mxu0 0.0
  %891 = vmatmul.mubr.f32.gmra.mrb[0].mxu0 %v306
  %v892 = vpop.f32.mrb[0].mxu0
  %v893 = vadd.f32 %v583, %v892
  %v894 = vpop.f32.mrb[0].mxu0
  %895 = vmatprep.mubr.f32.mxu0 0.0
  %896 = vmatmul.mubr.f32.gmra.mrb[0].mxu0 %v309
  %v897 = vpop.f32.mrb[0].mxu0
  %v898 = vadd.f32 %v588, %v897
  %v899 = vpop.f32.mrb[0].mxu0
  %900 = vmatprep.mubr.f32.mxu0 0.0
  %901 = vmatmul.mubr.f32.gmra.mrb[0].mxu0 %v312
  %v902 = vpop.f32.mrb[0].mxu0
  %v903 = vadd.f32 %v593, %v902
  %v904 = vpop.f32.mrb[0].mxu0
  %905 = vmatprep.mubr.f32.mxu0 0.0
  %906 = vmatmul.mubr.f32.gmra.mrb[0].mxu0 %v315
  %v907 = vpop.f32.mrb[0].mxu0
  %v908 = vadd.f32 %v598, %v907
  %v909 = vpop.f32.mrb[0].mxu0
  %910 = vmatprep.mubr.f32.mxu0 0.0
  %911 = vmatmul.mubr.f32.gmra.mrb[0].mxu0 %v318
  %v912 = vpop.f32.mrb[0].mxu0
  %v913 = vadd.f32 %v603, %v912
  %v914 = vpop.f32.mrb[0].mxu0
  %915 = vmatprep.mubr.f32.mxu0 0.0
  %916 = vmatmul.mubr.f32.gmra.mrb[0].mxu0 %v321
  %v917 = vpop.f32.mrb[0].mxu0
  %v918 = vadd.f32 %v608, %v917
  %v919 = vpop.f32.mrb[0].mxu0
  %920 = vmatprep.mubr.f32.mxu0 0.0
  %921 = vmatmul.mubr.f32.gmra.mrb[0].mxu0 %v324
  %v922 = vpop.f32.mrb[0].mxu0
  %v923 = vadd.f32 %v613, %v922
  %v924 = vpop.f32.mrb[0].mxu0
  %925 = vmatprep.mubr.f32.mxu0 0.0
  %926 = vmatmul.mubr.f32.gmra.mrb[0].mxu0 %v327
  %v927 = vpop.f32.mrb[0].mxu0
  %v928 = vadd.f32 %v618, %v927
  %v929 = vpop.f32.mrb[0].mxu0
  %930 = vmatprep.mubr.f32.mxu0 0.0
  %931 = vmatmul.mubr.f32.gmra.mrb[0].mxu0 %v330
  %v932 = vpop.f32.mrb[0].mxu0
  %v933 = vadd.f32 %v623, %v932
  %v934 = vpop.f32.mrb[0].mxu0
  %935 = vmatprep.mubr.f32.mxu0 0.0
  %936 = vmatmul.mubr.f32.gmra.mrb[0].mxu0 %v333
  %v937 = vpop.f32.mrb[0].mxu0
  %v938 = vadd.f32 %v628, %v937
  %v939 = vpop.f32.mrb[0].mxu0
  %940 = vmatprep.mubr.f32.mxu0 0.0
  %941 = vmatmul.mubr.f32.gmra.mrb[0].mxu0 %v336
  %v942 = vpop.f32.mrb[0].mxu0
  %v943 = vadd.f32 %v633, %v942
  %v944 = vpop.f32.mrb[0].mxu0
  %945 = vmatprep.mubr.f32.mxu0 0.0
  %946 = vmatmul.mubr.f32.gmra.mrb[0].mxu0 %v339
  %v947 = vpop.f32.mrb[0].mxu0
  %v948 = vadd.f32 %v638, %v947
  %v949 = vpop.f32.mrb[0].mxu0
  %950 = vmatprep.mubr.f32.mxu0 0.0
  %951 = vmatmul.mubr.f32.gmra.mrb[0].mxu0 %v342
  %v952 = vpop.f32.mrb[0].mxu0
  %v953 = vadd.f32 %v643, %v952
  %v954 = vpop.f32.mrb[0].mxu0
  %955 = vmatprep.mubr.f32.mxu0 0.0
  %956 = vmatmul.mubr.f32.gmra.mrb[0].mxu0 %v345
  %v957 = vpop.f32.mrb[0].mxu0
  %v958 = vadd.f32 %v648, %v957
  %v959 = vpop.f32.mrb[0].mxu0
  %960 = vmatprep.mubr.f32.mxu0 0.0
  %961 = vmatmul.mubr.f32.gmra.mrb[0].mxu0 %v348
  %v962 = vpop.f32.mrb[0].mxu0
  %v963 = vadd.f32 %v653, %v962
  %v964 = vpop.f32.mrb[0].mxu0
  %965 = vmatprep.mubr.f32.mxu0 0.0
  %966 = vmatmul.mubr.f32.gmra.mrb[0].mxu0 %v351
  %v967 = vpop.f32.mrb[0].mxu0
  %v968 = vadd.f32 %v658, %v967
  %v969 = vpop.f32.mrb[0].mxu0
  %970 = vmatprep.mubr.f32.mxu0 0.0
  %971 = vmatmul.mubr.f32.gmra.mrb[0].mxu0 %v354
  %v972 = vpop.f32.mrb[0].mxu0
  %v973 = vadd.f32 %v663, %v972
  %v974 = vpop.f32.mrb[0].mxu0
  %975 = vdwg.mxu0
  %v976 = vmax.f32 %v733, 0.0
  %v977 = vmax.f32 %v738, 0.0
  %v978 = vmax.f32 %v743, 0.0
  %v979 = vmax.f32 %v748, 0.0
  %v980 = vmax.f32 %v753, 0.0
  %v981 = vmax.f32 %v758, 0.0
  %v982 = vmax.f32 %v763, 0.0
  %v983 = vmax.f32 %v768, 0.0
  %v984 = vmax.f32 %v773, 0.0
  %v985 = vmax.f32 %v778, 0.0
  %v986 = vmax.f32 %v783, 0.0
  %v987 = vmax.f32 %v788, 0.0
  %v988 = vmax.f32 %v793, 0.0
  %v989 = vmax.f32 %v798, 0.0
  %v990 = vmax.f32 %v803, 0.0
  %v991 = vmax.f32 %v808, 0.0
  %v992 = vmax.f32 %v813, 0.0
  %v993 = vmax.f32 %v818, 0.0
  %v994 = vmax.f32 %v823, 0.0
  %v995 = vmax.f32 %v828, 0.0
  %v996 = vmax.f32 %v833, 0.0
  %v997 = vmax.f32 %v838, 0.0
  %v998 = vmax.f32 %v843, 0.0
  %v999 = vmax.f32 %v848, 0.0
  %v1000 = vmax.f32 %v853, 0.0
  %v1001 = vmax.f32 %v858, 0.0
  %v1002 = vmax.f32 %v863, 0.0
  %v1003 = vmax.f32 %v868, 0.0
  %v1004 = vmax.f32 %v873, 0.0
  %v1005 = vmax.f32 %v878, 0.0
  %v1006 = vmax.f32 %v883, 0.0
  %v1007 = vmax.f32 %v888, 0.0
  %v1008 = vmax.f32 %v893, 0.0
  %v1009 = vmax.f32 %v898, 0.0
  %v1010 = vmax.f32 %v903, 0.0
  %v1011 = vmax.f32 %v908, 0.0
  %v1012 = vmax.f32 %v913, 0.0
  %v1013 = vmax.f32 %v918, 0.0
  %v1014 = vmax.f32 %v923, 0.0
  %v1015 = vmax.f32 %v928, 0.0
  %v1016 = vmax.f32 %v933, 0.0
  %v1017 = vmax.f32 %v938, 0.0
  %v1018 = vmax.f32 %v943, 0.0
  %v1019 = vmax.f32 %v948, 0.0
  %v1020 = vmax.f32 %v953, 0.0
  %v1021 = vmax.f32 %v958, 0.0
  %v1022 = vmax.f32 %v963, 0.0
  %v1023 = vmax.f32 %v968, 0.0
  %v1024 = vmax.f32 %v973, 0.0
  %vm1025 = vcmask 326656
  %1026 = vst.msk [vmem:[%s3] sm:$0xff] %vm1025, %v976
  %1027 = vst.msk [vmem:[%s3 + $0x8] sm:$0xff] %vm1025, %v977
  %1028 = vst.msk [vmem:[%s3 + $0x10] sm:$0xff] %vm1025, %v978
  %1029 = vst.msk [vmem:[%s3 + $0x18] sm:$0xff] %vm1025, %v979
  %1030 = vst.msk [vmem:[%s3 + $0x20] sm:$0xff] %vm1025, %v980
  %1031 = vst.msk [vmem:[%s3 + $0x28] sm:$0xff] %vm1025, %v981
  %1032 = vst.msk [vmem:[%s3 + $0x30] sm:$0xff] %vm1025, %v982
  %1033 = vst.msk [vmem:[%s3 + $0x38] sm:$0xff] %vm1025, %v983
  %1034 = vst.msk [vmem:[%s3 + $0x40] sm:$0xff] %vm1025, %v984
  %1035 = vst.msk [vmem:[%s3 + $0x48] sm:$0xff] %vm1025, %v985
  %1036 = vst.msk [vmem:[%s3 + $0x50] sm:$0xff] %vm1025, %v986
  %1037 = vst.msk [vmem:[%s3 + $0x58] sm:$0xff] %vm1025, %v987
  %1038 = vst.msk [vmem:[%s3 + $0x60] sm:$0xff] %vm1025, %v988
  %1039 = vst.msk [vmem:[%s3 + $0x68] sm:$0xff] %vm1025, %v989
  %1040 = vst.msk [vmem:[%s3 + $0x70] sm:$0xff] %vm1025, %v990
  %1041 = vst.msk [vmem:[%s3 + $0x78] sm:$0xff] %vm1025, %v991
  %1042 = vst.msk [vmem:[%s3 + $0x80] sm:$0xff] %vm1025, %v992
  %1043 = vst.msk [vmem:[%s3 + $0x88] sm:$0xff] %vm1025, %v993
  %1044 = vst.msk [vmem:[%s3 + $0x90] sm:$0xff] %vm1025, %v994
  %1045 = vst.msk [vmem:[%s3 + $0x98] sm:$0xff] %vm1025, %v995
  %1046 = vst.msk [vmem:[%s3 + $0xa0] sm:$0xff] %vm1025, %v996
  %1047 = vst.msk [vmem:[%s3 + $0xa8] sm:$0xff] %vm1025, %v997
  %1048 = vst.msk [vmem:[%s3 + $0xb0] sm:$0xff] %vm1025, %v998
  %1049 = vst.msk [vmem:[%s3 + $0xb8] sm:$0xff] %vm1025, %v999
  %1050 = vst.msk [vmem:[%s3 + $0xc0] sm:$0xff] %vm1025, %v1000
  %1051 = vst.msk [vmem:[%s3 + $0xc8] sm:$0xff] %vm1025, %v1001
  %1052 = vst.msk [vmem:[%s3 + $0xd0] sm:$0xff] %vm1025, %v1002
  %1053 = vst.msk [vmem:[%s3 + $0xd8] sm:$0xff] %vm1025, %v1003
  %1054 = vst.msk [vmem:[%s3 + $0xe0] sm:$0xff] %vm1025, %v1004
  %1055 = vst.msk [vmem:[%s3 + $0xe8] sm:$0xff] %vm1025, %v1005
  %1056 = vst.msk [vmem:[%s3 + $0xf0] sm:$0xff] %vm1025, %v1006
  %1057 = vst.msk [vmem:[%s3 + $0xf8] sm:$0xff] %vm1025, %v1007
  %1058 = vst.msk [vmem:[%s3 + $0x100] sm:$0xff] %vm1025, %v1008
  %1059 = vst.msk [vmem:[%s3 + $0x108] sm:$0xff] %vm1025, %v1009
  %1060 = vst.msk [vmem:[%s3 + $0x110] sm:$0xff] %vm1025, %v1010
  %1061 = vst.msk [vmem:[%s3 + $0x118] sm:$0xff] %vm1025, %v1011
  %1062 = vst.msk [vmem:[%s3 + $0x120] sm:$0xff] %vm1025, %v1012
  %1063 = vst.msk [vmem:[%s3 + $0x128] sm:$0xff] %vm1025, %v1013
  %1064 = vst.msk [vmem:[%s3 + $0x130] sm:$0xff] %vm1025, %v1014
  %1065 = vst.msk [vmem:[%s3 + $0x138] sm:$0xff] %vm1025, %v1015
  %1066 = vst.msk [vmem:[%s3 + $0x140] sm:$0xff] %vm1025, %v1016
  %1067 = vst.msk [vmem:[%s3 + $0x148] sm:$0xff] %vm1025, %v1017
  %1068 = vst.msk [vmem:[%s3 + $0x150] sm:$0xff] %vm1025, %v1018
  %1069 = vst.msk [vmem:[%s3 + $0x158] sm:$0xff] %vm1025, %v1019
  %1070 = vst.msk [vmem:[%s3 + $0x160] sm:$0xff] %vm1025, %v1020
  %1071 = vst.msk [vmem:[%s3 + $0x168] sm:$0xff] %vm1025, %v1021
  %1072 = vst.msk [vmem:[%s3 + $0x170] sm:$0xff] %vm1025, %v1022
  %1073 = vst.msk [vmem:[%s3 + $0x178] sm:$0xff] %vm1025, %v1023
  %1074 = vst.msk [vmem:[%s3 + $0x180] sm:$0xff] %vm1025, %v1024
  // Predicated region
  $region14: #{model_forward.4} parent=0 // pred_check
    _
  $region15: #{model_forward.4} parent=0 // pred_check_branch
    %1076 = sbr.rel (0) target = $region17
  $region16: #{model_forward.4} parent=0 // pred_region
    _
  $region17: #{model_forward.4} parent=0 // pred_fallthru
    _
  // Predicated region
  $region18: #{model_forward.4} parent=0 // pred_check
    _
  $region19: #{model_forward.4} parent=0 // pred_check_branch
    %1078 = sbr.rel (0) target = $region21
  $region20: #{model_forward.4} parent=0 // pred_region
    _
  $region21: #{model_forward.4} parent=0 // pred_fallthru
    _

// kernel: model_forward.5
$region0: #{model_forward.5}
  #allocation0 [shape = 'u32[]', space=smem, size = 0x4, offset = 0x4, fixed_abs, tag = 'smem constant byte address 0x4 - core index']
  #allocation1 [shape = 'u32[144,128]{1,0:T(1,128)}', space=vmem, size = 0x12000, scoped, tag = 'internal scratch']
  %s0 = inlined_call_operand.vmem [shape: f32[2,7840], index: 0, kind: input, shape index: {}]
  %s1 = inlined_call_operand.vmem [shape: bf16[7840,100], index: 1, kind: input, shape index: {}]
  %s2 = inlined_call_operand.vmem [shape: f32[1,100], index: 2, kind: input, shape index: {}]
  %s3 = inlined_call_operand.vmem [shape: f32[100,128], index: 3, kind: input, shape index: {}]
  %s4 = inlined_call_operand.vmem [shape: f32[1,128], index: 4, kind: input, shape index: {}]
  %s5 = inlined_call_operand.vmem [shape: f32[2,128], index: 5, kind: output, shape index: {}]
  %s6 = sld [smem:[#allocation0]]
  $region30: #{model_forward.5} parent=0
    _
  %s8 = ssub.s32 1, %s6
  %s9 = scalar_select 0, %s8, %s6
  // Predicated region
  $region2: #{model_forward.5} parent=0 // pred_check
    _
  $region3: #{model_forward.5} parent=0 // pred_check_branch
    %11 = sbr.rel (0) target = $region5
  $region4: #{model_forward.5} parent=0 // pred_region
    _
  $region5: #{model_forward.5} parent=0 // pred_fallthru
    _
  // Predicated region
  $region6: #{model_forward.5} parent=0 // pred_check
    _
  $region7: #{model_forward.5} parent=0 // pred_check_branch
    %13 = sbr.rel (0) target = $region9
  $region8: #{model_forward.5} parent=0 // pred_region
    _
  $region9: #{model_forward.5} parent=0 // pred_fallthru
    _
  // Predicated region
  $region10: #{model_forward.5} parent=0 // pred_check
    _
  $region11: #{model_forward.5} parent=0 // pred_check_branch
    %15 = sbr.rel (0) target = $region13
  $region12: #{model_forward.5} parent=0 // pred_region
    _
  $region13: #{model_forward.5} parent=0 // pred_fallthru
    _
  // Predicated region
  $region14: #{model_forward.5} parent=0 // pred_check
    _
  $region15: #{model_forward.5} parent=0 // pred_check_branch
    %17 = sbr.rel (0) target = $region17
  $region16: #{model_forward.5} parent=0 // pred_region
    _
  $region17: #{model_forward.5} parent=0 // pred_fallthru
    _
  // Predicated region
  $region18: #{model_forward.5} parent=0 // pred_check
    _
  $region19: #{model_forward.5} parent=0 // pred_check_branch
    %19 = sbr.rel (0) target = $region21
  $region20: #{model_forward.5} parent=0 // pred_region
    _
  $region21: #{model_forward.5} parent=0 // pred_fallthru
    _
  %v21 = vld [vmem:[%s0] sm:$0xff]
  %v22 = vld [vmem:[%s0 + $0x8] sm:$0xff]
  %v23 = vld [vmem:[%s0 + $0x10] sm:$0xff]
  %v24 = vld [vmem:[%s0 + $0x18] sm:$0xff]
  %v25 = vld [vmem:[%s0 + $0x20] sm:$0xff]
  %v26 = vld [vmem:[%s0 + $0x28] sm:$0xff]
  %v27 = vld [vmem:[%s0 + $0x30] sm:$0xff]
  %v28 = vld [vmem:[%s0 + $0x38] sm:$0xff]
  %v29 = vld [vmem:[%s0 + $0x40] sm:$0xff]
  %v30 = vld [vmem:[%s0 + $0x48] sm:$0xff]
  %v31 = vld [vmem:[%s0 + $0x50] sm:$0xff]
  %v32 = vld [vmem:[%s0 + $0x58] sm:$0xff]
  %v33 = vld [vmem:[%s0 + $0x60] sm:$0xff]
  %v34 = vld [vmem:[%s0 + $0x68] sm:$0xff]
  %v35 = vld [vmem:[%s0 + $0x70] sm:$0xff]
  %v36 = vld [vmem:[%s0 + $0x78] sm:$0xf]
  %v53 = vcombine.high %v21, %v21
  %v55 = vunpack.c.l.s4 1983009808
  %v56 = vunpack.c.0.s8 %v55
  %v57 = vlaneseq
  %v58 = vshrl.u32 %v57, 7
  %v59 = vsub.s32 %v56, %v58
  %v60 = vrot.slane %v21, %v59
  %v62 = vunpack.c.l.s4 1983009808
  %v63 = vunpack.c.0.s8 %v62
  %v64 = vlaneseq
  %v65 = vshrl.u32 %v64, 7
  %v66 = vsub.s32 %v63, %v65
  %v67 = vrot.slane %v53, %v66
  %v68 = vcombine.high %v60, %v60
  %v69 = vcombine.high %v67, %v67
  %v70 = vcombine.high %v22, %v22
  %v72 = vunpack.c.l.s4 1983009808
  %v73 = vunpack.c.0.s8 %v72
  %v74 = vlaneseq
  %v75 = vshrl.u32 %v74, 7
  %v76 = vsub.s32 %v73, %v75
  %v77 = vrot.slane %v22, %v76
  %v79 = vunpack.c.l.s4 1983009808
  %v80 = vunpack.c.0.s8 %v79
  %v81 = vlaneseq
  %v82 = vshrl.u32 %v81, 7
  %v83 = vsub.s32 %v80, %v82
  %v84 = vrot.slane %v70, %v83
  %v85 = vcombine.high %v77, %v77
  %v86 = vcombine.high %v84, %v84
  %v87 = vcombine.high %v23, %v23
  %v89 = vunpack.c.l.s4 1983009808
  %v90 = vunpack.c.0.s8 %v89
  %v91 = vlaneseq
  %v92 = vshrl.u32 %v91, 7
  %v93 = vsub.s32 %v90, %v92
  %v94 = vrot.slane %v23, %v93
  %v96 = vunpack.c.l.s4 1983009808
  %v97 = vunpack.c.0.s8 %v96
  %v98 = vlaneseq
  %v99 = vshrl.u32 %v98, 7
  %v100 = vsub.s32 %v97, %v99
  %v101 = vrot.slane %v87, %v100
  %v102 = vcombine.high %v94, %v94
  %v103 = vcombine.high %v101, %v101
  %v104 = vcombine.high %v24, %v24
  %v106 = vunpack.c.l.s4 1983009808
  %v107 = vunpack.c.0.s8 %v106
  %v108 = vlaneseq
  %v109 = vshrl.u32 %v108, 7
  %v110 = vsub.s32 %v107, %v109
  %v111 = vrot.slane %v24, %v110
  %v113 = vunpack.c.l.s4 1983009808
  %v114 = vunpack.c.0.s8 %v113
  %v115 = vlaneseq
  %v116 = vshrl.u32 %v115, 7
  %v117 = vsub.s32 %v114, %v116
  %v118 = vrot.slane %v104, %v117
  %v119 = vcombine.high %v111, %v111
  %v120 = vcombine.high %v118, %v118
  %v121 = vcombine.high %v25, %v25
  %v123 = vunpack.c.l.s4 1983009808
  %v124 = vunpack.c.0.s8 %v123
  %v125 = vlaneseq
  %v126 = vshrl.u32 %v125, 7
  %v127 = vsub.s32 %v124, %v126
  %v128 = vrot.slane %v25, %v127
  %v130 = vunpack.c.l.s4 1983009808
  %v131 = vunpack.c.0.s8 %v130
  %v132 = vlaneseq
  %v133 = vshrl.u32 %v132, 7
  %v134 = vsub.s32 %v131, %v133
  %v135 = vrot.slane %v121, %v134
  %v136 = vcombine.high %v128, %v128
  %v137 = vcombine.high %v135, %v135
  %v138 = vcombine.high %v26, %v26
  %v140 = vunpack.c.l.s4 1983009808
  %v141 = vunpack.c.0.s8 %v140
  %v142 = vlaneseq
  %v143 = vshrl.u32 %v142, 7
  %v144 = vsub.s32 %v141, %v143
  %v145 = vrot.slane %v26, %v144
  %v147 = vunpack.c.l.s4 1983009808
  %v148 = vunpack.c.0.s8 %v147
  %v149 = vlaneseq
  %v150 = vshrl.u32 %v149, 7
  %v151 = vsub.s32 %v148, %v150
  %v152 = vrot.slane %v138, %v151
  %v153 = vcombine.high %v145, %v145
  %v154 = vcombine.high %v152, %v152
  %v155 = vcombine.high %v27, %v27
  %v157 = vunpack.c.l.s4 1983009808
  %v158 = vunpack.c.0.s8 %v157
  %v159 = vlaneseq
  %v160 = vshrl.u32 %v159, 7
  %v161 = vsub.s32 %v158, %v160
  %v162 = vrot.slane %v27, %v161
  %v164 = vunpack.c.l.s4 1983009808
  %v165 = vunpack.c.0.s8 %v164
  %v166 = vlaneseq
  %v167 = vshrl.u32 %v166, 7
  %v168 = vsub.s32 %v165, %v167
  %v169 = vrot.slane %v155, %v168
  %v170 = vcombine.high %v162, %v162
  %v171 = vcombine.high %v169, %v169
  %v172 = vcombine.high %v28, %v28
  %v174 = vunpack.c.l.s4 1983009808
  %v175 = vunpack.c.0.s8 %v174
  %v176 = vlaneseq
  %v177 = vshrl.u32 %v176, 7
  %v178 = vsub.s32 %v175, %v177
  %v179 = vrot.slane %v28, %v178
  %v181 = vunpack.c.l.s4 1983009808
  %v182 = vunpack.c.0.s8 %v181
  %v183 = vlaneseq
  %v184 = vshrl.u32 %v183, 7
  %v185 = vsub.s32 %v182, %v184
  %v186 = vrot.slane %v172, %v185
  %v187 = vcombine.high %v179, %v179
  %v188 = vcombine.high %v186, %v186
  %v189 = vcombine.high %v29, %v29
  %v191 = vunpack.c.l.s4 1983009808
  %v192 = vunpack.c.0.s8 %v191
  %v193 = vlaneseq
  %v194 = vshrl.u32 %v193, 7
  %v195 = vsub.s32 %v192, %v194
  %v196 = vrot.slane %v29, %v195
  %v198 = vunpack.c.l.s4 1983009808
  %v199 = vunpack.c.0.s8 %v198
  %v200 = vlaneseq
  %v201 = vshrl.u32 %v200, 7
  %v202 = vsub.s32 %v199, %v201
  %v203 = vrot.slane %v189, %v202
  %v204 = vcombine.high %v196, %v196
  %v205 = vcombine.high %v203, %v203
  %v206 = vcombine.high %v30, %v30
  %v208 = vunpack.c.l.s4 1983009808
  %v209 = vunpack.c.0.s8 %v208
  %v210 = vlaneseq
  %v211 = vshrl.u32 %v210, 7
  %v212 = vsub.s32 %v209, %v211
  %v213 = vrot.slane %v30, %v212
  %v215 = vunpack.c.l.s4 1983009808
  %v216 = vunpack.c.0.s8 %v215
  %v217 = vlaneseq
  %v218 = vshrl.u32 %v217, 7
  %v219 = vsub.s32 %v216, %v218
  %v220 = vrot.slane %v206, %v219
  %v221 = vcombine.high %v213, %v213
  %v222 = vcombine.high %v220, %v220
  %v223 = vcombine.high %v31, %v31
  %v225 = vunpack.c.l.s4 1983009808
  %v226 = vunpack.c.0.s8 %v225
  %v227 = vlaneseq
  %v228 = vshrl.u32 %v227, 7
  %v229 = vsub.s32 %v226, %v228
  %v230 = vrot.slane %v31, %v229
  %v232 = vunpack.c.l.s4 1983009808
  %v233 = vunpack.c.0.s8 %v232
  %v234 = vlaneseq
  %v235 = vshrl.u32 %v234, 7
  %v236 = vsub.s32 %v233, %v235
  %v237 = vrot.slane %v223, %v236
  %v238 = vcombine.high %v230, %v230
  %v239 = vcombine.high %v237, %v237
  %v240 = vcombine.high %v32, %v32
  %v242 = vunpack.c.l.s4 1983009808
  %v243 = vunpack.c.0.s8 %v242
  %v244 = vlaneseq
  %v245 = vshrl.u32 %v244, 7
  %v246 = vsub.s32 %v243, %v245
  %v247 = vrot.slane %v32, %v246
  %v249 = vunpack.c.l.s4 1983009808
  %v250 = vunpack.c.0.s8 %v249
  %v251 = vlaneseq
  %v252 = vshrl.u32 %v251, 7
  %v253 = vsub.s32 %v250, %v252
  %v254 = vrot.slane %v240, %v253
  %v255 = vcombine.high %v247, %v247
  %v256 = vcombine.high %v254, %v254
  %v257 = vcombine.high %v33, %v33
  %v259 = vunpack.c.l.s4 1983009808
  %v260 = vunpack.c.0.s8 %v259
  %v261 = vlaneseq
  %v262 = vshrl.u32 %v261, 7
  %v263 = vsub.s32 %v260, %v262
  %v264 = vrot.slane %v33, %v263
  %v266 = vunpack.c.l.s4 1983009808
  %v267 = vunpack.c.0.s8 %v266
  %v268 = vlaneseq
  %v269 = vshrl.u32 %v268, 7
  %v270 = vsub.s32 %v267, %v269
  %v271 = vrot.slane %v257, %v270
  %v272 = vcombine.high %v264, %v264
  %v273 = vcombine.high %v271, %v271
  %v274 = vcombine.high %v34, %v34
  %v276 = vunpack.c.l.s4 1983009808
  %v277 = vunpack.c.0.s8 %v276
  %v278 = vlaneseq
  %v279 = vshrl.u32 %v278, 7
  %v280 = vsub.s32 %v277, %v279
  %v281 = vrot.slane %v34, %v280
  %v283 = vunpack.c.l.s4 1983009808
  %v284 = vunpack.c.0.s8 %v283
  %v285 = vlaneseq
  %v286 = vshrl.u32 %v285, 7
  %v287 = vsub.s32 %v284, %v286
  %v288 = vrot.slane %v274, %v287
  %v289 = vcombine.high %v281, %v281
  %v290 = vcombine.high %v288, %v288
  %v291 = vcombine.high %v35, %v35
  %v293 = vunpack.c.l.s4 1983009808
  %v294 = vunpack.c.0.s8 %v293
  %v295 = vlaneseq
  %v296 = vshrl.u32 %v295, 7
  %v297 = vsub.s32 %v294, %v296
  %v298 = vrot.slane %v35, %v297
  %v300 = vunpack.c.l.s4 1983009808
  %v301 = vunpack.c.0.s8 %v300
  %v302 = vlaneseq
  %v303 = vshrl.u32 %v302, 7
  %v304 = vsub.s32 %v301, %v303
  %v305 = vrot.slane %v291, %v304
  %v306 = vcombine.high %v298, %v298
  %v307 = vcombine.high %v305, %v305
  %v309 = vunpack.c.l.s4 1983009808
  %v310 = vunpack.c.0.s8 %v309
  %v311 = vlaneseq
  %v312 = vshrl.u32 %v311, 7
  %v313 = vsub.s32 %v310, %v312
  %v314 = vrot.slane %v36, %v313
  %v315 = vcombine.high %v314, %v314
  %v378 = vpack.c.bf16 %v60, %v60
  %v379 = vpack.c.bf16 %v68, %v68
  %v380 = vpack.c.bf16 %v67, %v67
  %v381 = vpack.c.bf16 %v69, %v69
  %v382 = vpack.c.bf16 %v77, %v77
  %v383 = vpack.c.bf16 %v85, %v85
  %v384 = vpack.c.bf16 %v84, %v84
  %v385 = vpack.c.bf16 %v86, %v86
  %v386 = vpack.c.bf16 %v94, %v94
  %v387 = vpack.c.bf16 %v102, %v102
  %v388 = vpack.c.bf16 %v101, %v101
  %v389 = vpack.c.bf16 %v103, %v103
  %v390 = vpack.c.bf16 %v111, %v111
  %v391 = vpack.c.bf16 %v119, %v119
  %v392 = vpack.c.bf16 %v118, %v118
  %v393 = vpack.c.bf16 %v120, %v120
  %v394 = vpack.c.bf16 %v128, %v128
  %v395 = vpack.c.bf16 %v136, %v136
  %v396 = vpack.c.bf16 %v135, %v135
  %v397 = vpack.c.bf16 %v137, %v137
  %v398 = vpack.c.bf16 %v145, %v145
  %v399 = vpack.c.bf16 %v153, %v153
  %v400 = vpack.c.bf16 %v152, %v152
  %v401 = vpack.c.bf16 %v154, %v154
  %v402 = vpack.c.bf16 %v162, %v162
  %v403 = vpack.c.bf16 %v170, %v170
  %v404 = vpack.c.bf16 %v169, %v169
  %v405 = vpack.c.bf16 %v171, %v171
  %v406 = vpack.c.bf16 %v179, %v179
  %v407 = vpack.c.bf16 %v187, %v187
  %v408 = vpack.c.bf16 %v186, %v186
  %v409 = vpack.c.bf16 %v188, %v188
  %v410 = vpack.c.bf16 %v196, %v196
  %v411 = vpack.c.bf16 %v204, %v204
  %v412 = vpack.c.bf16 %v203, %v203
  %v413 = vpack.c.bf16 %v205, %v205
  %v414 = vpack.c.bf16 %v213, %v213
  %v415 = vpack.c.bf16 %v221, %v221
  %v416 = vpack.c.bf16 %v220, %v220
  %v417 = vpack.c.bf16 %v222, %v222
  %v418 = vpack.c.bf16 %v230, %v230
  %v419 = vpack.c.bf16 %v238, %v238
  %v420 = vpack.c.bf16 %v237, %v237
  %v421 = vpack.c.bf16 %v239, %v239
  %v422 = vpack.c.bf16 %v247, %v247
  %v423 = vpack.c.bf16 %v255, %v255
  %v424 = vpack.c.bf16 %v254, %v254
  %v425 = vpack.c.bf16 %v256, %v256
  %v426 = vpack.c.bf16 %v264, %v264
  %v427 = vpack.c.bf16 %v272, %v272
  %v428 = vpack.c.bf16 %v271, %v271
  %v429 = vpack.c.bf16 %v273, %v273
  %v430 = vpack.c.bf16 %v281, %v281
  %v431 = vpack.c.bf16 %v289, %v289
  %v432 = vpack.c.bf16 %v288, %v288
  %v433 = vpack.c.bf16 %v290, %v290
  %v434 = vpack.c.bf16 %v298, %v298
  %v435 = vpack.c.bf16 %v306, %v306
  %v436 = vpack.c.bf16 %v305, %v305
  %v437 = vpack.c.bf16 %v307, %v307
  %v438 = vpack.c.bf16 %v314, %v314
  %v439 = vpack.c.bf16 %v315, %v315
  %v440 = vld [vmem:[%s1] sm:$0xf]
  %v441 = vld [vmem:[%s1 + $0x4] sm:$0xf]
  %v442 = vld [vmem:[%s1 + $0x8] sm:$0xf]
  %v443 = vld [vmem:[%s1 + $0xc] sm:$0xf]
  %v444 = vld [vmem:[%s1 + $0x10] sm:$0xf]
  %v445 = vld [vmem:[%s1 + $0x14] sm:$0xf]
  %v446 = vld [vmem:[%s1 + $0x18] sm:$0xf]
  %v447 = vld [vmem:[%s1 + $0x1c] sm:$0xf]
  %v448 = vld [vmem:[%s1 + $0x20] sm:$0xf]
  %v449 = vld [vmem:[%s1 + $0x24] sm:$0xf]
  %v450 = vld [vmem:[%s1 + $0x28] sm:$0xf]
  %v451 = vld [vmem:[%s1 + $0x2c] sm:$0xf]
  %v452 = vld [vmem:[%s1 + $0x30] sm:$0xf]
  %v453 = vld [vmem:[%s1 + $0x34] sm:$0xf]
  %v454 = vld [vmem:[%s1 + $0x38] sm:$0xf]
  %v455 = vld [vmem:[%s1 + $0x3c] sm:$0xf]
  %v456 = vld [vmem:[%s1 + $0x40] sm:$0xf]
  %v457 = vld [vmem:[%s1 + $0x44] sm:$0xf]
  %v458 = vld [vmem:[%s1 + $0x48] sm:$0xf]
  %v459 = vld [vmem:[%s1 + $0x4c] sm:$0xf]
  %v460 = vld [vmem:[%s1 + $0x50] sm:$0xf]
  %v461 = vld [vmem:[%s1 + $0x54] sm:$0xf]
  %v462 = vld [vmem:[%s1 + $0x58] sm:$0xf]
  %v463 = vld [vmem:[%s1 + $0x5c] sm:$0xf]
  %v464 = vld [vmem:[%s1 + $0x60] sm:$0xf]
  %v465 = vld [vmem:[%s1 + $0x64] sm:$0xf]
  %v466 = vld [vmem:[%s1 + $0x68] sm:$0xf]
  %v467 = vld [vmem:[%s1 + $0x6c] sm:$0xf]
  %v468 = vld [vmem:[%s1 + $0x70] sm:$0xf]
  %v469 = vld [vmem:[%s1 + $0x74] sm:$0xf]
  %v470 = vld [vmem:[%s1 + $0x78] sm:$0xf]
  %v471 = vld [vmem:[%s1 + $0x7c] sm:$0xf]
  %v472 = vld [vmem:[%s1 + $0x80] sm:$0xf]
  %v473 = vld [vmem:[%s1 + $0x84] sm:$0xf]
  %v474 = vld [vmem:[%s1 + $0x88] sm:$0xf]
  %v475 = vld [vmem:[%s1 + $0x8c] sm:$0xf]
  %v476 = vld [vmem:[%s1 + $0x90] sm:$0xf]
  %v477 = vld [vmem:[%s1 + $0x94] sm:$0xf]
  %v478 = vld [vmem:[%s1 + $0x98] sm:$0xf]
  %v479 = vld [vmem:[%s1 + $0x9c] sm:$0xf]
  %v480 = vld [vmem:[%s1 + $0xa0] sm:$0xf]
  %v481 = vld [vmem:[%s1 + $0xa4] sm:$0xf]
  %v482 = vld [vmem:[%s1 + $0xa8] sm:$0xf]
  %v483 = vld [vmem:[%s1 + $0xac] sm:$0xf]
  %v484 = vld [vmem:[%s1 + $0xb0] sm:$0xf]
  %v485 = vld [vmem:[%s1 + $0xb4] sm:$0xf]
  %v486 = vld [vmem:[%s1 + $0xb8] sm:$0xf]
  %v487 = vld [vmem:[%s1 + $0xbc] sm:$0xf]
  %v488 = vld [vmem:[%s1 + $0xc0] sm:$0xf]
  %v489 = vld [vmem:[%s1 + $0xc4] sm:$0xf]
  %v490 = vld [vmem:[%s1 + $0xc8] sm:$0xf]
  %v491 = vld [vmem:[%s1 + $0xcc] sm:$0xf]
  %v492 = vld [vmem:[%s1 + $0xd0] sm:$0xf]
  %v493 = vld [vmem:[%s1 + $0xd4] sm:$0xf]
  %v494 = vld [vmem:[%s1 + $0xd8] sm:$0xf]
  %v495 = vld [vmem:[%s1 + $0xdc] sm:$0xf]
  %v496 = vld [vmem:[%s1 + $0xe0] sm:$0xf]
  %v497 = vld [vmem:[%s1 + $0xe4] sm:$0xf]
  %v498 = vld [vmem:[%s1 + $0xe8] sm:$0xf]
  %v499 = vld [vmem:[%s1 + $0xec] sm:$0xf]
  %v500 = vld [vmem:[%s1 + $0xf0] sm:$0xf]
  %v501 = vld [vmem:[%s1 + $0xf4] sm:$0xf]
  %v502 = vld [vmem:[%s1 + $0xf8] sm:$0xf]
  %v503 = vld [vmem:[%s1 + $0xfc] sm:$0xf]
  %v504 = vld [vmem:[%s1 + $0x100] sm:$0xf]
  %v505 = vld [vmem:[%s1 + $0x104] sm:$0xf]
  %v506 = vld [vmem:[%s1 + $0x108] sm:$0xf]
  %v507 = vld [vmem:[%s1 + $0x10c] sm:$0xf]
  %v508 = vld [vmem:[%s1 + $0x110] sm:$0xf]
  %v509 = vld [vmem:[%s1 + $0x114] sm:$0xf]
  %v510 = vld [vmem:[%s1 + $0x118] sm:$0xf]
  %v511 = vld [vmem:[%s1 + $0x11c] sm:$0xf]
  %v512 = vld [vmem:[%s1 + $0x120] sm:$0xf]
  %v513 = vld [vmem:[%s1 + $0x124] sm:$0xf]
  %v514 = vld [vmem:[%s1 + $0x128] sm:$0xf]
  %v515 = vld [vmem:[%s1 + $0x12c] sm:$0xf]
  %v516 = vld [vmem:[%s1 + $0x130] sm:$0xf]
  %v517 = vld [vmem:[%s1 + $0x134] sm:$0xf]
  %v518 = vld [vmem:[%s1 + $0x138] sm:$0xf]
  %v519 = vld [vmem:[%s1 + $0x13c] sm:$0xf]
  %v520 = vld [vmem:[%s1 + $0x140] sm:$0xf]
  %v521 = vld [vmem:[%s1 + $0x144] sm:$0xf]
  %v522 = vld [vmem:[%s1 + $0x148] sm:$0xf]
  %v523 = vld [vmem:[%s1 + $0x14c] sm:$0xf]
  %v524 = vld [vmem:[%s1 + $0x150] sm:$0xf]
  %v525 = vld [vmem:[%s1 + $0x154] sm:$0xf]
  %v526 = vld [vmem:[%s1 + $0x158] sm:$0xf]
  %v527 = vld [vmem:[%s1 + $0x15c] sm:$0xf]
  %v528 = vld [vmem:[%s1 + $0x160] sm:$0xf]
  %v529 = vld [vmem:[%s1 + $0x164] sm:$0xf]
  %v530 = vld [vmem:[%s1 + $0x168] sm:$0xf]
  %v531 = vld [vmem:[%s1 + $0x16c] sm:$0xf]
  %v532 = vld [vmem:[%s1 + $0x170] sm:$0xf]
  %v533 = vld [vmem:[%s1 + $0x174] sm:$0xf]
  %v534 = vld [vmem:[%s1 + $0x178] sm:$0xf]
  %v535 = vld [vmem:[%s1 + $0x17c] sm:$0xf]
  %v536 = vld [vmem:[%s1 + $0x180] sm:$0xf]
  %v537 = vld [vmem:[%s1 + $0x184] sm:$0xf]
  %v538 = vld [vmem:[%s1 + $0x188] sm:$0xf]
  %v539 = vld [vmem:[%s1 + $0x18c] sm:$0xf]
  %v540 = vld [vmem:[%s1 + $0x190] sm:$0xf]
  %v541 = vld [vmem:[%s1 + $0x194] sm:$0xf]
  %v542 = vld [vmem:[%s1 + $0x198] sm:$0xf]
  %v543 = vld [vmem:[%s1 + $0x19c] sm:$0xf]
  %v544 = vld [vmem:[%s1 + $0x1a0] sm:$0xf]
  %v545 = vld [vmem:[%s1 + $0x1a4] sm:$0xf]
  %v546 = vld [vmem:[%s1 + $0x1a8] sm:$0xf]
  %v547 = vld [vmem:[%s1 + $0x1ac] sm:$0xf]
  %v548 = vld [vmem:[%s1 + $0x1b0] sm:$0xf]
  %v549 = vld [vmem:[%s1 + $0x1b4] sm:$0xf]
  %v550 = vld [vmem:[%s1 + $0x1b8] sm:$0xf]
  %v551 = vld [vmem:[%s1 + $0x1bc] sm:$0xf]
  %v552 = vld [vmem:[%s1 + $0x1c0] sm:$0xf]
  %v553 = vld [vmem:[%s1 + $0x1c4] sm:$0xf]
  %v554 = vld [vmem:[%s1 + $0x1c8] sm:$0xf]
  %v555 = vld [vmem:[%s1 + $0x1cc] sm:$0xf]
  %v556 = vld [vmem:[%s1 + $0x1d0] sm:$0xf]
  %v557 = vld [vmem:[%s1 + $0x1d4] sm:$0xf]
  %v558 = vld [vmem:[%s1 + $0x1d8] sm:$0xf]
  %v559 = vld [vmem:[%s1 + $0x1dc] sm:$0xf]
  %v560 = vld [vmem:[%s1 + $0x1e0] sm:$0xf]
  %v561 = vld [vmem:[%s1 + $0x1e4] sm:$0xf]
  %v562 = vld [vmem:[%s1 + $0x1e8] sm:$0xf]
  %v563 = vld [vmem:[%s1 + $0x1ec] sm:$0xf]
  %v564 = vld [vmem:[%s1 + $0x1f0] sm:$0xf]
  %v565 = vld [vmem:[%s1 + $0x1f4] sm:$0xf]
  %v566 = vld [vmem:[%s1 + $0x1f8] sm:$0xf]
  %v567 = vld [vmem:[%s1 + $0x1fc] sm:$0xf]
  %v568 = vld [vmem:[%s1 + $0x200] sm:$0xf]
  %v569 = vld [vmem:[%s1 + $0x204] sm:$0xf]
  %v570 = vld [vmem:[%s1 + $0x208] sm:$0xf]
  %v571 = vld [vmem:[%s1 + $0x20c] sm:$0xf]
  %v572 = vld [vmem:[%s1 + $0x210] sm:$0xf]
  %v573 = vld [vmem:[%s1 + $0x214] sm:$0xf]
  %v574 = vld [vmem:[%s1 + $0x218] sm:$0xf]
  %v575 = vld [vmem:[%s1 + $0x21c] sm:$0xf]
  %v576 = vld [vmem:[%s1 + $0x220] sm:$0xf]
  %v577 = vld [vmem:[%s1 + $0x224] sm:$0xf]
  %v578 = vld [vmem:[%s1 + $0x228] sm:$0xf]
  %v579 = vld [vmem:[%s1 + $0x22c] sm:$0xf]
  %v580 = vld [vmem:[%s1 + $0x230] sm:$0xf]
  %v581 = vld [vmem:[%s1 + $0x234] sm:$0xf]
  %v582 = vld [vmem:[%s1 + $0x238] sm:$0xf]
  %v583 = vld [vmem:[%s1 + $0x23c] sm:$0xf]
  %v584 = vld [vmem:[%s1 + $0x240] sm:$0xf]
  %v585 = vld [vmem:[%s1 + $0x244] sm:$0xf]
  %v586 = vld [vmem:[%s1 + $0x248] sm:$0xf]
  %v587 = vld [vmem:[%s1 + $0x24c] sm:$0xf]
  %v588 = vld [vmem:[%s1 + $0x250] sm:$0xf]
  %v589 = vld [vmem:[%s1 + $0x254] sm:$0xf]
  %v590 = vld [vmem:[%s1 + $0x258] sm:$0xf]
  %v591 = vld [vmem:[%s1 + $0x25c] sm:$0xf]
  %v592 = vld [vmem:[%s1 + $0x260] sm:$0xf]
  %v593 = vld [vmem:[%s1 + $0x264] sm:$0xf]
  %v594 = vld [vmem:[%s1 + $0x268] sm:$0xf]
  %v595 = vld [vmem:[%s1 + $0x26c] sm:$0xf]
  %v596 = vld [vmem:[%s1 + $0x270] sm:$0xf]
  %v597 = vld [vmem:[%s1 + $0x274] sm:$0xf]
  %v598 = vld [vmem:[%s1 + $0x278] sm:$0xf]
  %v599 = vld [vmem:[%s1 + $0x27c] sm:$0xf]
  %v600 = vld [vmem:[%s1 + $0x280] sm:$0xf]
  %v601 = vld [vmem:[%s1 + $0x284] sm:$0xf]
  %v602 = vld [vmem:[%s1 + $0x288] sm:$0xf]
  %v603 = vld [vmem:[%s1 + $0x28c] sm:$0xf]
  %v604 = vld [vmem:[%s1 + $0x290] sm:$0xf]
  %v605 = vld [vmem:[%s1 + $0x294] sm:$0xf]
  %v606 = vld [vmem:[%s1 + $0x298] sm:$0xf]
  %v607 = vld [vmem:[%s1 + $0x29c] sm:$0xf]
  %v608 = vld [vmem:[%s1 + $0x2a0] sm:$0xf]
  %v609 = vld [vmem:[%s1 + $0x2a4] sm:$0xf]
  %v610 = vld [vmem:[%s1 + $0x2a8] sm:$0xf]
  %v611 = vld [vmem:[%s1 + $0x2ac] sm:$0xf]
  %v612 = vld [vmem:[%s1 + $0x2b0] sm:$0xf]
  %v613 = vld [vmem:[%s1 + $0x2b4] sm:$0xf]
  %v614 = vld [vmem:[%s1 + $0x2b8] sm:$0xf]
  %v615 = vld [vmem:[%s1 + $0x2bc] sm:$0xf]
  %v616 = vld [vmem:[%s1 + $0x2c0] sm:$0xf]
  %v617 = vld [vmem:[%s1 + $0x2c4] sm:$0xf]
  %v618 = vld [vmem:[%s1 + $0x2c8] sm:$0xf]
  %v619 = vld [vmem:[%s1 + $0x2cc] sm:$0xf]
  %v620 = vld [vmem:[%s1 + $0x2d0] sm:$0xf]
  %v621 = vld [vmem:[%s1 + $0x2d4] sm:$0xf]
  %v622 = vld [vmem:[%s1 + $0x2d8] sm:$0xf]
  %v623 = vld [vmem:[%s1 + $0x2dc] sm:$0xf]
  %v624 = vld [vmem:[%s1 + $0x2e0] sm:$0xf]
  %v625 = vld [vmem:[%s1 + $0x2e4] sm:$0xf]
  %v626 = vld [vmem:[%s1 + $0x2e8] sm:$0xf]
  %v627 = vld [vmem:[%s1 + $0x2ec] sm:$0xf]
  %v628 = vld [vmem:[%s1 + $0x2f0] sm:$0xf]
  %v629 = vld [vmem:[%s1 + $0x2f4] sm:$0xf]
  %v630 = vld [vmem:[%s1 + $0x2f8] sm:$0xf]
  %v631 = vld [vmem:[%s1 + $0x2fc] sm:$0xf]
  %v632 = vld [vmem:[%s1 + $0x300] sm:$0xf]
  %v633 = vld [vmem:[%s1 + $0x304] sm:$0xf]
  %v634 = vld [vmem:[%s1 + $0x308] sm:$0xf]
  %v635 = vld [vmem:[%s1 + $0x30c] sm:$0xf]
  %v636 = vld [vmem:[%s1 + $0x310] sm:$0xf]
  %v637 = vld [vmem:[%s1 + $0x314] sm:$0xf]
  %v638 = vld [vmem:[%s1 + $0x318] sm:$0xf]
  %v639 = vld [vmem:[%s1 + $0x31c] sm:$0xf]
  %v640 = vld [vmem:[%s1 + $0x320] sm:$0xf]
  %v641 = vld [vmem:[%s1 + $0x324] sm:$0xf]
  %v642 = vld [vmem:[%s1 + $0x328] sm:$0xf]
  %v643 = vld [vmem:[%s1 + $0x32c] sm:$0xf]
  %v644 = vld [vmem:[%s1 + $0x330] sm:$0xf]
  %v645 = vld [vmem:[%s1 + $0x334] sm:$0xf]
  %v646 = vld [vmem:[%s1 + $0x338] sm:$0xf]
  %v647 = vld [vmem:[%s1 + $0x33c] sm:$0xf]
  %v648 = vld [vmem:[%s1 + $0x340] sm:$0xf]
  %v649 = vld [vmem:[%s1 + $0x344] sm:$0xf]
  %v650 = vld [vmem:[%s1 + $0x348] sm:$0xf]
  %v651 = vld [vmem:[%s1 + $0x34c] sm:$0xf]
  %v652 = vld [vmem:[%s1 + $0x350] sm:$0xf]
  %v653 = vld [vmem:[%s1 + $0x354] sm:$0xf]
  %v654 = vld [vmem:[%s1 + $0x358] sm:$0xf]
  %v655 = vld [vmem:[%s1 + $0x35c] sm:$0xf]
  %v656 = vld [vmem:[%s1 + $0x360] sm:$0xf]
  %v657 = vld [vmem:[%s1 + $0x364] sm:$0xf]
  %v658 = vld [vmem:[%s1 + $0x368] sm:$0xf]
  %v659 = vld [vmem:[%s1 + $0x36c] sm:$0xf]
  %v660 = vld [vmem:[%s1 + $0x370] sm:$0xf]
  %v661 = vld [vmem:[%s1 + $0x374] sm:$0xf]
  %v662 = vld [vmem:[%s1 + $0x378] sm:$0xf]
  %v663 = vld [vmem:[%s1 + $0x37c] sm:$0xf]
  %v664 = vld [vmem:[%s1 + $0x380] sm:$0xf]
  %v665 = vld [vmem:[%s1 + $0x384] sm:$0xf]
  %v666 = vld [vmem:[%s1 + $0x388] sm:$0xf]
  %v667 = vld [vmem:[%s1 + $0x38c] sm:$0xf]
  %v668 = vld [vmem:[%s1 + $0x390] sm:$0xf]
  %v669 = vld [vmem:[%s1 + $0x394] sm:$0xf]
  %v670 = vld [vmem:[%s1 + $0x398] sm:$0xf]
  %v671 = vld [vmem:[%s1 + $0x39c] sm:$0xf]
  %v672 = vld [vmem:[%s1 + $0x3a0] sm:$0xf]
  %v673 = vld [vmem:[%s1 + $0x3a4] sm:$0xf]
  %v674 = vld [vmem:[%s1 + $0x3a8] sm:$0xf]
  %v675 = vld [vmem:[%s1 + $0x3ac] sm:$0xf]
  %v676 = vld [vmem:[%s1 + $0x3b0] sm:$0xf]
  %v677 = vld [vmem:[%s1 + $0x3b4] sm:$0xf]
  %v678 = vld [vmem:[%s1 + $0x3b8] sm:$0xf]
  %v679 = vld [vmem:[%s1 + $0x3bc] sm:$0xf]
  %v680 = vld [vmem:[%s1 + $0x3c0] sm:$0xf]
  %v681 = vld [vmem:[%s1 + $0x3c4] sm:$0xf]
  %v682 = vld [vmem:[%s1 + $0x3c8] sm:$0xf]
  %v683 = vld [vmem:[%s1 + $0x3cc] sm:$0xf]
  %v684 = vld [vmem:[%s1 + $0x3d0] sm:$0xf]
  %v685 = vld [vmem:[%s1 + $0x3d4] sm:$0xf]
  %v686 = vld [vmem:[%s1 + $0x3d8] sm:$0xf]
  %v687 = vld [vmem:[%s1 + $0x3dc] sm:$0xf]
  %v688 = vld [vmem:[%s1 + $0x3e0] sm:$0xf]
  %v689 = vld [vmem:[%s1 + $0x3e4] sm:$0xf]
  %v690 = vld [vmem:[%s1 + $0x3e8] sm:$0xf]
  %v691 = vld [vmem:[%s1 + $0x3ec] sm:$0xf]
  %v692 = vld [vmem:[%s1 + $0x3f0] sm:$0xf]
  %v693 = vld [vmem:[%s1 + $0x3f4] sm:$0xf]
  %v694 = vld [vmem:[%s1 + $0x3f8] sm:$0xf]
  %v695 = vld [vmem:[%s1 + $0x3fc] sm:$0xf]
  %v696 = vld [vmem:[%s1 + $0x400] sm:$0xf]
  %v697 = vld [vmem:[%s1 + $0x404] sm:$0xf]
  %v698 = vld [vmem:[%s1 + $0x408] sm:$0xf]
  %v699 = vld [vmem:[%s1 + $0x40c] sm:$0xf]
  %v700 = vld [vmem:[%s1 + $0x410] sm:$0xf]
  %v701 = vld [vmem:[%s1 + $0x414] sm:$0xf]
  %v702 = vld [vmem:[%s1 + $0x418] sm:$0xf]
  %v703 = vld [vmem:[%s1 + $0x41c] sm:$0xf]
  %v704 = vld [vmem:[%s1 + $0x420] sm:$0xf]
  %v705 = vld [vmem:[%s1 + $0x424] sm:$0xf]
  %v706 = vld [vmem:[%s1 + $0x428] sm:$0xf]
  %v707 = vld [vmem:[%s1 + $0x42c] sm:$0xf]
  %v708 = vld [vmem:[%s1 + $0x430] sm:$0xf]
  %v709 = vld [vmem:[%s1 + $0x434] sm:$0xf]
  %v710 = vld [vmem:[%s1 + $0x438] sm:$0xf]
  %v711 = vld [vmem:[%s1 + $0x43c] sm:$0xf]
  %v712 = vld [vmem:[%s1 + $0x440] sm:$0xf]
  %v713 = vld [vmem:[%s1 + $0x444] sm:$0xf]
  %v714 = vld [vmem:[%s1 + $0x448] sm:$0xf]
  %v715 = vld [vmem:[%s1 + $0x44c] sm:$0xf]
  %v716 = vld [vmem:[%s1 + $0x450] sm:$0xf]
  %v717 = vld [vmem:[%s1 + $0x454] sm:$0xf]
  %v718 = vld [vmem:[%s1 + $0x458] sm:$0xf]
  %v719 = vld [vmem:[%s1 + $0x45c] sm:$0xf]
  %v720 = vld [vmem:[%s1 + $0x460] sm:$0xf]
  %v721 = vld [vmem:[%s1 + $0x464] sm:$0xf]
  %v722 = vld [vmem:[%s1 + $0x468] sm:$0xf]
  %v723 = vld [vmem:[%s1 + $0x46c] sm:$0xf]
  %v724 = vld [vmem:[%s1 + $0x470] sm:$0xf]
  %v725 = vld [vmem:[%s1 + $0x474] sm:$0xf]
  %v726 = vld [vmem:[%s1 + $0x478] sm:$0xf]
  %v727 = vld [vmem:[%s1 + $0x47c] sm:$0xf]
  %v728 = vld [vmem:[%s1 + $0x480] sm:$0xf]
  %v729 = vld [vmem:[%s1 + $0x484] sm:$0xf]
  %v730 = vld [vmem:[%s1 + $0x488] sm:$0xf]
  %v731 = vld [vmem:[%s1 + $0x48c] sm:$0xf]
  %v732 = vld [vmem:[%s1 + $0x490] sm:$0xf]
  %v733 = vld [vmem:[%s1 + $0x494] sm:$0xf]
  %v734 = vld [vmem:[%s1 + $0x498] sm:$0xf]
  %v735 = vld [vmem:[%s1 + $0x49c] sm:$0xf]
  %v736 = vld [vmem:[%s1 + $0x4a0] sm:$0xf]
  %v737 = vld [vmem:[%s1 + $0x4a4] sm:$0xf]
  %v738 = vld [vmem:[%s1 + $0x4a8] sm:$0xf]
  %v739 = vld [vmem:[%s1 + $0x4ac] sm:$0xf]
  %v740 = vld [vmem:[%s1 + $0x4b0] sm:$0xf]
  %v741 = vld [vmem:[%s1 + $0x4b4] sm:$0xf]
  %v742 = vld [vmem:[%s1 + $0x4b8] sm:$0xf]
  %v743 = vld [vmem:[%s1 + $0x4bc] sm:$0xf]
  %v744 = vld [vmem:[%s1 + $0x4c0] sm:$0xf]
  %v745 = vld [vmem:[%s1 + $0x4c4] sm:$0xf]
  %v746 = vld [vmem:[%s1 + $0x4c8] sm:$0xf]
  %v747 = vld [vmem:[%s1 + $0x4cc] sm:$0xf]
  %v748 = vld [vmem:[%s1 + $0x4d0] sm:$0xf]
  %v749 = vld [vmem:[%s1 + $0x4d4] sm:$0xf]
  %v750 = vld [vmem:[%s1 + $0x4d8] sm:$0xf]
  %v751 = vld [vmem:[%s1 + $0x4dc] sm:$0xf]
  %v752 = vld [vmem:[%s1 + $0x4e0] sm:$0xf]
  %v753 = vld [vmem:[%s1 + $0x4e4] sm:$0xf]
  %v754 = vld [vmem:[%s1 + $0x4e8] sm:$0xf]
  %v755 = vld [vmem:[%s1 + $0x4ec] sm:$0xf]
  %v756 = vld [vmem:[%s1 + $0x4f0] sm:$0xf]
  %v757 = vld [vmem:[%s1 + $0x4f4] sm:$0xf]
  %v758 = vld [vmem:[%s1 + $0x4f8] sm:$0xf]
  %v759 = vld [vmem:[%s1 + $0x4fc] sm:$0xf]
  %v760 = vld [vmem:[%s1 + $0x500] sm:$0xf]
  %v761 = vld [vmem:[%s1 + $0x504] sm:$0xf]
  %v762 = vld [vmem:[%s1 + $0x508] sm:$0xf]
  %v763 = vld [vmem:[%s1 + $0x50c] sm:$0xf]
  %v764 = vld [vmem:[%s1 + $0x510] sm:$0xf]
  %v765 = vld [vmem:[%s1 + $0x514] sm:$0xf]
  %v766 = vld [vmem:[%s1 + $0x518] sm:$0xf]
  %v767 = vld [vmem:[%s1 + $0x51c] sm:$0xf]
  %v768 = vld [vmem:[%s1 + $0x520] sm:$0xf]
  %v769 = vld [vmem:[%s1 + $0x524] sm:$0xf]
  %v770 = vld [vmem:[%s1 + $0x528] sm:$0xf]
  %v771 = vld [vmem:[%s1 + $0x52c] sm:$0xf]
  %v772 = vld [vmem:[%s1 + $0x530] sm:$0xf]
  %v773 = vld [vmem:[%s1 + $0x534] sm:$0xf]
  %v774 = vld [vmem:[%s1 + $0x538] sm:$0xf]
  %v775 = vld [vmem:[%s1 + $0x53c] sm:$0xf]
  %v776 = vld [vmem:[%s1 + $0x540] sm:$0xf]
  %v777 = vld [vmem:[%s1 + $0x544] sm:$0xf]
  %v778 = vld [vmem:[%s1 + $0x548] sm:$0xf]
  %v779 = vld [vmem:[%s1 + $0x54c] sm:$0xf]
  %v780 = vld [vmem:[%s1 + $0x550] sm:$0xf]
  %v781 = vld [vmem:[%s1 + $0x554] sm:$0xf]
  %v782 = vld [vmem:[%s1 + $0x558] sm:$0xf]
  %v783 = vld [vmem:[%s1 + $0x55c] sm:$0xf]
  %v784 = vld [vmem:[%s1 + $0x560] sm:$0xf]
  %v785 = vld [vmem:[%s1 + $0x564] sm:$0xf]
  %v786 = vld [vmem:[%s1 + $0x568] sm:$0xf]
  %v787 = vld [vmem:[%s1 + $0x56c] sm:$0xf]
  %v788 = vld [vmem:[%s1 + $0x570] sm:$0xf]
  %v789 = vld [vmem:[%s1 + $0x574] sm:$0xf]
  %v790 = vld [vmem:[%s1 + $0x578] sm:$0xf]
  %v791 = vld [vmem:[%s1 + $0x57c] sm:$0xf]
  %v792 = vld [vmem:[%s1 + $0x580] sm:$0xf]
  %v793 = vld [vmem:[%s1 + $0x584] sm:$0xf]
  %v794 = vld [vmem:[%s1 + $0x588] sm:$0xf]
  %v795 = vld [vmem:[%s1 + $0x58c] sm:$0xf]
  %v796 = vld [vmem:[%s1 + $0x590] sm:$0xf]
  %v797 = vld [vmem:[%s1 + $0x594] sm:$0xf]
  %v798 = vld [vmem:[%s1 + $0x598] sm:$0xf]
  %v799 = vld [vmem:[%s1 + $0x59c] sm:$0xf]
  %v800 = vld [vmem:[%s1 + $0x5a0] sm:$0xf]
  %v801 = vld [vmem:[%s1 + $0x5a4] sm:$0xf]
  %v802 = vld [vmem:[%s1 + $0x5a8] sm:$0xf]
  %v803 = vld [vmem:[%s1 + $0x5ac] sm:$0xf]
  %v804 = vld [vmem:[%s1 + $0x5b0] sm:$0xf]
  %v805 = vld [vmem:[%s1 + $0x5b4] sm:$0xf]
  %v806 = vld [vmem:[%s1 + $0x5b8] sm:$0xf]
  %v807 = vld [vmem:[%s1 + $0x5bc] sm:$0xf]
  %v808 = vld [vmem:[%s1 + $0x5c0] sm:$0xf]
  %v809 = vld [vmem:[%s1 + $0x5c4] sm:$0xf]
  %v810 = vld [vmem:[%s1 + $0x5c8] sm:$0xf]
  %v811 = vld [vmem:[%s1 + $0x5cc] sm:$0xf]
  %v812 = vld [vmem:[%s1 + $0x5d0] sm:$0xf]
  %v813 = vld [vmem:[%s1 + $0x5d4] sm:$0xf]
  %v814 = vld [vmem:[%s1 + $0x5d8] sm:$0xf]
  %v815 = vld [vmem:[%s1 + $0x5dc] sm:$0xf]
  %v816 = vld [vmem:[%s1 + $0x5e0] sm:$0xf]
  %v817 = vld [vmem:[%s1 + $0x5e4] sm:$0xf]
  %v818 = vld [vmem:[%s1 + $0x5e8] sm:$0xf]
  %v819 = vld [vmem:[%s1 + $0x5ec] sm:$0xf]
  %v820 = vld [vmem:[%s1 + $0x5f0] sm:$0xf]
  %v821 = vld [vmem:[%s1 + $0x5f4] sm:$0xf]
  %v822 = vld [vmem:[%s1 + $0x5f8] sm:$0xf]
  %v823 = vld [vmem:[%s1 + $0x5fc] sm:$0xf]
  %v824 = vld [vmem:[%s1 + $0x600] sm:$0xf]
  %v825 = vld [vmem:[%s1 + $0x604] sm:$0xf]
  %v826 = vld [vmem:[%s1 + $0x608] sm:$0xf]
  %v827 = vld [vmem:[%s1 + $0x60c] sm:$0xf]
  %v828 = vld [vmem:[%s1 + $0x610] sm:$0xf]
  %v829 = vld [vmem:[%s1 + $0x614] sm:$0xf]
  %v830 = vld [vmem:[%s1 + $0x618] sm:$0xf]
  %v831 = vld [vmem:[%s1 + $0x61c] sm:$0xf]
  %v832 = vld [vmem:[%s1 + $0x620] sm:$0xf]
  %v833 = vld [vmem:[%s1 + $0x624] sm:$0xf]
  %v834 = vld [vmem:[%s1 + $0x628] sm:$0xf]
  %v835 = vld [vmem:[%s1 + $0x62c] sm:$0xf]
  %v836 = vld [vmem:[%s1 + $0x630] sm:$0xf]
  %v837 = vld [vmem:[%s1 + $0x634] sm:$0xf]
  %v838 = vld [vmem:[%s1 + $0x638] sm:$0xf]
  %v839 = vld [vmem:[%s1 + $0x63c] sm:$0xf]
  %v840 = vld [vmem:[%s1 + $0x640] sm:$0xf]
  %v841 = vld [vmem:[%s1 + $0x644] sm:$0xf]
  %v842 = vld [vmem:[%s1 + $0x648] sm:$0xf]
  %v843 = vld [vmem:[%s1 + $0x64c] sm:$0xf]
  %v844 = vld [vmem:[%s1 + $0x650] sm:$0xf]
  %v845 = vld [vmem:[%s1 + $0x654] sm:$0xf]
  %v846 = vld [vmem:[%s1 + $0x658] sm:$0xf]
  %v847 = vld [vmem:[%s1 + $0x65c] sm:$0xf]
  %v848 = vld [vmem:[%s1 + $0x660] sm:$0xf]
  %v849 = vld [vmem:[%s1 + $0x664] sm:$0xf]
  %v850 = vld [vmem:[%s1 + $0x668] sm:$0xf]
  %v851 = vld [vmem:[%s1 + $0x66c] sm:$0xf]
  %v852 = vld [vmem:[%s1 + $0x670] sm:$0xf]
  %v853 = vld [vmem:[%s1 + $0x674] sm:$0xf]
  %v854 = vld [vmem:[%s1 + $0x678] sm:$0xf]
  %v855 = vld [vmem:[%s1 + $0x67c] sm:$0xf]
  %v856 = vld [vmem:[%s1 + $0x680] sm:$0xf]
  %v857 = vld [vmem:[%s1 + $0x684] sm:$0xf]
  %v858 = vld [vmem:[%s1 + $0x688] sm:$0xf]
  %v859 = vld [vmem:[%s1 + $0x68c] sm:$0xf]
  %v860 = vld [vmem:[%s1 + $0x690] sm:$0xf]
  %v861 = vld [vmem:[%s1 + $0x694] sm:$0xf]
  %v862 = vld [vmem:[%s1 + $0x698] sm:$0xf]
  %v863 = vld [vmem:[%s1 + $0x69c] sm:$0xf]
  %v864 = vld [vmem:[%s1 + $0x6a0] sm:$0xf]
  %v865 = vld [vmem:[%s1 + $0x6a4] sm:$0xf]
  %v866 = vld [vmem:[%s1 + $0x6a8] sm:$0xf]
  %v867 = vld [vmem:[%s1 + $0x6ac] sm:$0xf]
  %v868 = vld [vmem:[%s1 + $0x6b0] sm:$0xf]
  %v869 = vld [vmem:[%s1 + $0x6b4] sm:$0xf]
  %v870 = vld [vmem:[%s1 + $0x6b8] sm:$0xf]
  %v871 = vld [vmem:[%s1 + $0x6bc] sm:$0xf]
  %v872 = vld [vmem:[%s1 + $0x6c0] sm:$0xf]
  %v873 = vld [vmem:[%s1 + $0x6c4] sm:$0xf]
  %v874 = vld [vmem:[%s1 + $0x6c8] sm:$0xf]
  %v875 = vld [vmem:[%s1 + $0x6cc] sm:$0xf]
  %v876 = vld [vmem:[%s1 + $0x6d0] sm:$0xf]
  %v877 = vld [vmem:[%s1 + $0x6d4] sm:$0xf]
  %v878 = vld [vmem:[%s1 + $0x6d8] sm:$0xf]
  %v879 = vld [vmem:[%s1 + $0x6dc] sm:$0xf]
  %v880 = vld [vmem:[%s1 + $0x6e0] sm:$0xf]
  %v881 = vld [vmem:[%s1 + $0x6e4] sm:$0xf]
  %v882 = vld [vmem:[%s1 + $0x6e8] sm:$0xf]
  %v883 = vld [vmem:[%s1 + $0x6ec] sm:$0xf]
  %v884 = vld [vmem:[%s1 + $0x6f0] sm:$0xf]
  %v885 = vld [vmem:[%s1 + $0x6f4] sm:$0xf]
  %v886 = vld [vmem:[%s1 + $0x6f8] sm:$0xf]
  %v887 = vld [vmem:[%s1 + $0x6fc] sm:$0xf]
  %v888 = vld [vmem:[%s1 + $0x700] sm:$0xf]
  %v889 = vld [vmem:[%s1 + $0x704] sm:$0xf]
  %v890 = vld [vmem:[%s1 + $0x708] sm:$0xf]
  %v891 = vld [vmem:[%s1 + $0x70c] sm:$0xf]
  %v892 = vld [vmem:[%s1 + $0x710] sm:$0xf]
  %v893 = vld [vmem:[%s1 + $0x714] sm:$0xf]
  %v894 = vld [vmem:[%s1 + $0x718] sm:$0xf]
  %v895 = vld [vmem:[%s1 + $0x71c] sm:$0xf]
  %v896 = vld [vmem:[%s1 + $0x720] sm:$0xf]
  %v897 = vld [vmem:[%s1 + $0x724] sm:$0xf]
  %v898 = vld [vmem:[%s1 + $0x728] sm:$0xf]
  %v899 = vld [vmem:[%s1 + $0x72c] sm:$0xf]
  %v900 = vld [vmem:[%s1 + $0x730] sm:$0xf]
  %v901 = vld [vmem:[%s1 + $0x734] sm:$0xf]
  %v902 = vld [vmem:[%s1 + $0x738] sm:$0xf]
  %v903 = vld [vmem:[%s1 + $0x73c] sm:$0xf]
  %v904 = vld [vmem:[%s1 + $0x740] sm:$0xf]
  %v905 = vld [vmem:[%s1 + $0x744] sm:$0xf]
  %v906 = vld [vmem:[%s1 + $0x748] sm:$0xf]
  %v907 = vld [vmem:[%s1 + $0x74c] sm:$0xf]
  %v908 = vld [vmem:[%s1 + $0x750] sm:$0xf]
  %v909 = vld [vmem:[%s1 + $0x754] sm:$0xf]
  %v910 = vld [vmem:[%s1 + $0x758] sm:$0xf]
  %v911 = vld [vmem:[%s1 + $0x75c] sm:$0xf]
  %v912 = vld [vmem:[%s1 + $0x760] sm:$0xf]
  %v913 = vld [vmem:[%s1 + $0x764] sm:$0xf]
  %v914 = vld [vmem:[%s1 + $0x768] sm:$0xf]
  %v915 = vld [vmem:[%s1 + $0x76c] sm:$0xf]
  %v916 = vld [vmem:[%s1 + $0x770] sm:$0xf]
  %v917 = vld [vmem:[%s1 + $0x774] sm:$0xf]
  %v918 = vld [vmem:[%s1 + $0x778] sm:$0xf]
  %v919 = vld [vmem:[%s1 + $0x77c] sm:$0xf]
  %v920 = vld [vmem:[%s1 + $0x780] sm:$0xf]
  %v921 = vld [vmem:[%s1 + $0x784] sm:$0xf]
  %v922 = vld [vmem:[%s1 + $0x788] sm:$0xf]
  %v923 = vld [vmem:[%s1 + $0x78c] sm:$0xf]
  %v924 = vld [vmem:[%s1 + $0x790] sm:$0xf]
  %v925 = vld [vmem:[%s1 + $0x794] sm:$0xf]
  %v926 = vld [vmem:[%s1 + $0x798] sm:$0xf]
  %v927 = vld [vmem:[%s1 + $0x79c] sm:$0xf]
  %v928 = vld [vmem:[%s1 + $0x7a0] sm:$0xf]
  %v929 = vld [vmem:[%s1 + $0x7a4] sm:$0xf]
  %v930 = vld [vmem:[%s1 + $0x7a8] sm:$0xf]
  %v931 = vld [vmem:[%s1 + $0x7ac] sm:$0xf]
  %v932 = vld [vmem:[%s1 + $0x7b0] sm:$0xf]
  %v933 = vld [vmem:[%s1 + $0x7b4] sm:$0xf]
  %v934 = vld [vmem:[%s1 + $0x7b8] sm:$0xf]
  %v935 = vld [vmem:[%s1 + $0x7bc] sm:$0xf]
  %v936 = vld [vmem:[%s1 + $0x7c0] sm:$0xf]
  %v937 = vld [vmem:[%s1 + $0x7c4] sm:$0xf]
  %v938 = vld [vmem:[%s1 + $0x7c8] sm:$0xf]
  %v939 = vld [vmem:[%s1 + $0x7cc] sm:$0xf]
  %v940 = vld [vmem:[%s1 + $0x7d0] sm:$0xf]
  %v941 = vld [vmem:[%s1 + $0x7d4] sm:$0xf]
  %v942 = vld [vmem:[%s1 + $0x7d8] sm:$0xf]
  %v943 = vld [vmem:[%s1 + $0x7dc] sm:$0xf]
  %v944 = vld [vmem:[%s1 + $0x7e0] sm:$0xf]
  %v945 = vld [vmem:[%s1 + $0x7e4] sm:$0xf]
  %v946 = vld [vmem:[%s1 + $0x7e8] sm:$0xf]
  %v947 = vld [vmem:[%s1 + $0x7ec] sm:$0xf]
  %v948 = vld [vmem:[%s1 + $0x7f0] sm:$0xf]
  %v949 = vld [vmem:[%s1 + $0x7f4] sm:$0xf]
  %v950 = vld [vmem:[%s1 + $0x7f8] sm:$0xf]
  %v951 = vld [vmem:[%s1 + $0x7fc] sm:$0xf]
  %v952 = vld [vmem:[%s1 + $0x800] sm:$0xf]
  %v953 = vld [vmem:[%s1 + $0x804] sm:$0xf]
  %v954 = vld [vmem:[%s1 + $0x808] sm:$0xf]
  %v955 = vld [vmem:[%s1 + $0x80c] sm:$0xf]
  %v956 = vld [vmem:[%s1 + $0x810] sm:$0xf]
  %v957 = vld [vmem:[%s1 + $0x814] sm:$0xf]
  %v958 = vld [vmem:[%s1 + $0x818] sm:$0xf]
  %v959 = vld [vmem:[%s1 + $0x81c] sm:$0xf]
  %v960 = vld [vmem:[%s1 + $0x820] sm:$0xf]
  %v961 = vld [vmem:[%s1 + $0x824] sm:$0xf]
  %v962 = vld [vmem:[%s1 + $0x828] sm:$0xf]
  %v963 = vld [vmem:[%s1 + $0x82c] sm:$0xf]
  %v964 = vld [vmem:[%s1 + $0x830] sm:$0xf]
  %v965 = vld [vmem:[%s1 + $0x834] sm:$0xf]
  %v966 = vld [vmem:[%s1 + $0x838] sm:$0xf]
  %v967 = vld [vmem:[%s1 + $0x83c] sm:$0xf]
  %v968 = vld [vmem:[%s1 + $0x840] sm:$0xf]
  %v969 = vld [vmem:[%s1 + $0x844] sm:$0xf]
  %v970 = vld [vmem:[%s1 + $0x848] sm:$0xf]
  %v971 = vld [vmem:[%s1 + $0x84c] sm:$0xf]
  %v972 = vld [vmem:[%s1 + $0x850] sm:$0xf]
  %v973 = vld [vmem:[%s1 + $0x854] sm:$0xf]
  %v974 = vld [vmem:[%s1 + $0x858] sm:$0xf]
  %v975 = vld [vmem:[%s1 + $0x85c] sm:$0xf]
  %v976 = vld [vmem:[%s1 + $0x860] sm:$0xf]
  %v977 = vld [vmem:[%s1 + $0x864] sm:$0xf]
  %v978 = vld [vmem:[%s1 + $0x868] sm:$0xf]
  %v979 = vld [vmem:[%s1 + $0x86c] sm:$0xf]
  %v980 = vld [vmem:[%s1 + $0x870] sm:$0xf]
  %v981 = vld [vmem:[%s1 + $0x874] sm:$0xf]
  %v982 = vld [vmem:[%s1 + $0x878] sm:$0xf]
  %v983 = vld [vmem:[%s1 + $0x87c] sm:$0xf]
  %v984 = vld [vmem:[%s1 + $0x880] sm:$0xf]
  %v985 = vld [vmem:[%s1 + $0x884] sm:$0xf]
  %v986 = vld [vmem:[%s1 + $0x888] sm:$0xf]
  %v987 = vld [vmem:[%s1 + $0x88c] sm:$0xf]
  %v988 = vld [vmem:[%s1 + $0x890] sm:$0xf]
  %v989 = vld [vmem:[%s1 + $0x894] sm:$0xf]
  %v990 = vld [vmem:[%s1 + $0x898] sm:$0xf]
  %v991 = vld [vmem:[%s1 + $0x89c] sm:$0xf]
  %v992 = vld [vmem:[%s1 + $0x8a0] sm:$0xf]
  %v993 = vld [vmem:[%s1 + $0x8a4] sm:$0xf]
  %v994 = vld [vmem:[%s1 + $0x8a8] sm:$0xf]
  %v995 = vld [vmem:[%s1 + $0x8ac] sm:$0xf]
  %v996 = vld [vmem:[%s1 + $0x8b0] sm:$0xf]
  %v997 = vld [vmem:[%s1 + $0x8b4] sm:$0xf]
  %v998 = vld [vmem:[%s1 + $0x8b8] sm:$0xf]
  %v999 = vld [vmem:[%s1 + $0x8bc] sm:$0xf]
  %v1000 = vld [vmem:[%s1 + $0x8c0] sm:$0xf]
  %v1001 = vld [vmem:[%s1 + $0x8c4] sm:$0xf]
  %v1002 = vld [vmem:[%s1 + $0x8c8] sm:$0xf]
  %v1003 = vld [vmem:[%s1 + $0x8cc] sm:$0xf]
  %v1004 = vld [vmem:[%s1 + $0x8d0] sm:$0xf]
  %v1005 = vld [vmem:[%s1 + $0x8d4] sm:$0xf]
  %v1006 = vld [vmem:[%s1 + $0x8d8] sm:$0xf]
  %v1007 = vld [vmem:[%s1 + $0x8dc] sm:$0xf]
  %v1008 = vld [vmem:[%s1 + $0x8e0] sm:$0xf]
  %v1009 = vld [vmem:[%s1 + $0x8e4] sm:$0xf]
  %v1010 = vld [vmem:[%s1 + $0x8e8] sm:$0xf]
  %v1011 = vld [vmem:[%s1 + $0x8ec] sm:$0xf]
  %v1012 = vld [vmem:[%s1 + $0x8f0] sm:$0xf]
  %v1013 = vld [vmem:[%s1 + $0x8f4] sm:$0xf]
  %v1014 = vld [vmem:[%s1 + $0x8f8] sm:$0xf]
  %v1015 = vld [vmem:[%s1 + $0x8fc] sm:$0xf]
  %v1016 = vld [vmem:[%s1 + $0x900] sm:$0xf]
  %v1017 = vld [vmem:[%s1 + $0x904] sm:$0xf]
  %v1018 = vld [vmem:[%s1 + $0x908] sm:$0xf]
  %v1019 = vld [vmem:[%s1 + $0x90c] sm:$0xf]
  %v1020 = vld [vmem:[%s1 + $0x910] sm:$0xf]
  %v1021 = vld [vmem:[%s1 + $0x914] sm:$0xf]
  %v1022 = vld [vmem:[%s1 + $0x918] sm:$0xf]
  %v1023 = vld [vmem:[%s1 + $0x91c] sm:$0xf]
  %v1024 = vld [vmem:[%s1 + $0x920] sm:$0xf]
  %v1025 = vld [vmem:[%s1 + $0x924] sm:$0xf]
  %v1026 = vld [vmem:[%s1 + $0x928] sm:$0xf]
  %v1027 = vld [vmem:[%s1 + $0x92c] sm:$0xf]
  %v1028 = vld [vmem:[%s1 + $0x930] sm:$0xf]
  %v1029 = vld [vmem:[%s1 + $0x934] sm:$0xf]
  %v1030 = vld [vmem:[%s1 + $0x938] sm:$0xf]
  %v1031 = vld [vmem:[%s1 + $0x93c] sm:$0xf]
  %v1032 = vld [vmem:[%s1 + $0x940] sm:$0xf]
  %v1033 = vld [vmem:[%s1 + $0x944] sm:$0xf]
  %v1034 = vld [vmem:[%s1 + $0x948] sm:$0xf]
  %v1035 = vld [vmem:[%s1 + $0x94c] sm:$0xf]
  %v1036 = vld [vmem:[%s1 + $0x950] sm:$0xf]
  %v1037 = vld [vmem:[%s1 + $0x954] sm:$0xf]
  %v1038 = vld [vmem:[%s1 + $0x958] sm:$0xf]
  %v1039 = vld [vmem:[%s1 + $0x95c] sm:$0xf]
  %v1040 = vld [vmem:[%s1 + $0x960] sm:$0xf]
  %v1041 = vld [vmem:[%s1 + $0x964] sm:$0xf]
  %v1042 = vld [vmem:[%s1 + $0x968] sm:$0xf]
  %v1043 = vld [vmem:[%s1 + $0x96c] sm:$0xf]
  %v1044 = vld [vmem:[%s1 + $0x970] sm:$0xf]
  %v1045 = vld [vmem:[%s1 + $0x974] sm:$0xf]
  %v1046 = vld [vmem:[%s1 + $0x978] sm:$0xf]
  %v1047 = vld [vmem:[%s1 + $0x97c] sm:$0xf]
  %v1048 = vld [vmem:[%s1 + $0x980] sm:$0xf]
  %v1049 = vld [vmem:[%s1 + $0x984] sm:$0xf]
  %v1050 = vld [vmem:[%s1 + $0x988] sm:$0xf]
  %v1051 = vld [vmem:[%s1 + $0x98c] sm:$0xf]
  %v1052 = vld [vmem:[%s1 + $0x990] sm:$0xf]
  %v1053 = vld [vmem:[%s1 + $0x994] sm:$0xf]
  %v1054 = vld [vmem:[%s1 + $0x998] sm:$0xf]
  %v1055 = vld [vmem:[%s1 + $0x99c] sm:$0xf]
  %v1056 = vld [vmem:[%s1 + $0x9a0] sm:$0xf]
  %v1057 = vld [vmem:[%s1 + $0x9a4] sm:$0xf]
  %v1058 = vld [vmem:[%s1 + $0x9a8] sm:$0xf]
  %v1059 = vld [vmem:[%s1 + $0x9ac] sm:$0xf]
  %v1060 = vld [vmem:[%s1 + $0x9b0] sm:$0xf]
  %v1061 = vld [vmem:[%s1 + $0x9b4] sm:$0xf]
  %v1062 = vld [vmem:[%s1 + $0x9b8] sm:$0xf]
  %v1063 = vld [vmem:[%s1 + $0x9bc] sm:$0xf]
  %v1064 = vld [vmem:[%s1 + $0x9c0] sm:$0xf]
  %v1065 = vld [vmem:[%s1 + $0x9c4] sm:$0xf]
  %v1066 = vld [vmem:[%s1 + $0x9c8] sm:$0xf]
  %v1067 = vld [vmem:[%s1 + $0x9cc] sm:$0xf]
  %v1068 = vld [vmem:[%s1 + $0x9d0] sm:$0xf]
  %v1069 = vld [vmem:[%s1 + $0x9d4] sm:$0xf]
  %v1070 = vld [vmem:[%s1 + $0x9d8] sm:$0xf]
  %v1071 = vld [vmem:[%s1 + $0x9dc] sm:$0xf]
  %v1072 = vld [vmem:[%s1 + $0x9e0] sm:$0xf]
  %v1073 = vld [vmem:[%s1 + $0x9e4] sm:$0xf]
  %v1074 = vld [vmem:[%s1 + $0x9e8] sm:$0xf]
  %v1075 = vld [vmem:[%s1 + $0x9ec] sm:$0xf]
  %v1076 = vld [vmem:[%s1 + $0x9f0] sm:$0xf]
  %v1077 = vld [vmem:[%s1 + $0x9f4] sm:$0xf]
  %v1078 = vld [vmem:[%s1 + $0x9f8] sm:$0xf]
  %v1079 = vld [vmem:[%s1 + $0x9fc] sm:$0xf]
  %v1080 = vld [vmem:[%s1 + $0xa00] sm:$0xf]
  %v1081 = vld [vmem:[%s1 + $0xa04] sm:$0xf]
  %v1082 = vld [vmem:[%s1 + $0xa08] sm:$0xf]
  %v1083 = vld [vmem:[%s1 + $0xa0c] sm:$0xf]
  %v1084 = vld [vmem:[%s1 + $0xa10] sm:$0xf]
  %v1085 = vld [vmem:[%s1 + $0xa14] sm:$0xf]
  %v1086 = vld [vmem:[%s1 + $0xa18] sm:$0xf]
  %v1087 = vld [vmem:[%s1 + $0xa1c] sm:$0xf]
  %v1088 = vld [vmem:[%s1 + $0xa20] sm:$0xf]
  %v1089 = vld [vmem:[%s1 + $0xa24] sm:$0xf]
  %v1090 = vld [vmem:[%s1 + $0xa28] sm:$0xf]
  %v1091 = vld [vmem:[%s1 + $0xa2c] sm:$0xf]
  %v1092 = vld [vmem:[%s1 + $0xa30] sm:$0xf]
  %v1093 = vld [vmem:[%s1 + $0xa34] sm:$0xf]
  %v1094 = vld [vmem:[%s1 + $0xa38] sm:$0xf]
  %v1095 = vld [vmem:[%s1 + $0xa3c] sm:$0xf]
  %v1096 = vld [vmem:[%s1 + $0xa40] sm:$0xf]
  %v1097 = vld [vmem:[%s1 + $0xa44] sm:$0xf]
  %v1098 = vld [vmem:[%s1 + $0xa48] sm:$0xf]
  %v1099 = vld [vmem:[%s1 + $0xa4c] sm:$0xf]
  %v1100 = vld [vmem:[%s1 + $0xa50] sm:$0xf]
  %v1101 = vld [vmem:[%s1 + $0xa54] sm:$0xf]
  %v1102 = vld [vmem:[%s1 + $0xa58] sm:$0xf]
  %v1103 = vld [vmem:[%s1 + $0xa5c] sm:$0xf]
  %v1104 = vld [vmem:[%s1 + $0xa60] sm:$0xf]
  %v1105 = vld [vmem:[%s1 + $0xa64] sm:$0xf]
  %v1106 = vld [vmem:[%s1 + $0xa68] sm:$0xf]
  %v1107 = vld [vmem:[%s1 + $0xa6c] sm:$0xf]
  %v1108 = vld [vmem:[%s1 + $0xa70] sm:$0xf]
  %v1109 = vld [vmem:[%s1 + $0xa74] sm:$0xf]
  %v1110 = vld [vmem:[%s1 + $0xa78] sm:$0xf]
  %v1111 = vld [vmem:[%s1 + $0xa7c] sm:$0xf]
  %v1112 = vld [vmem:[%s1 + $0xa80] sm:$0xf]
  %v1113 = vld [vmem:[%s1 + $0xa84] sm:$0xf]
  %v1114 = vld [vmem:[%s1 + $0xa88] sm:$0xf]
  %v1115 = vld [vmem:[%s1 + $0xa8c] sm:$0xf]
  %v1116 = vld [vmem:[%s1 + $0xa90] sm:$0xf]
  %v1117 = vld [vmem:[%s1 + $0xa94] sm:$0xf]
  %v1118 = vld [vmem:[%s1 + $0xa98] sm:$0xf]
  %v1119 = vld [vmem:[%s1 + $0xa9c] sm:$0xf]
  %v1120 = vld [vmem:[%s1 + $0xaa0] sm:$0xf]
  %v1121 = vld [vmem:[%s1 + $0xaa4] sm:$0xf]
  %v1122 = vld [vmem:[%s1 + $0xaa8] sm:$0xf]
  %v1123 = vld [vmem:[%s1 + $0xaac] sm:$0xf]
  %v1124 = vld [vmem:[%s1 + $0xab0] sm:$0xf]
  %v1125 = vld [vmem:[%s1 + $0xab4] sm:$0xf]
  %v1126 = vld [vmem:[%s1 + $0xab8] sm:$0xf]
  %v1127 = vld [vmem:[%s1 + $0xabc] sm:$0xf]
  %v1128 = vld [vmem:[%s1 + $0xac0] sm:$0xf]
  %v1129 = vld [vmem:[%s1 + $0xac4] sm:$0xf]
  %v1130 = vld [vmem:[%s1 + $0xac8] sm:$0xf]
  %v1131 = vld [vmem:[%s1 + $0xacc] sm:$0xf]
  %v1132 = vld [vmem:[%s1 + $0xad0] sm:$0xf]
  %v1133 = vld [vmem:[%s1 + $0xad4] sm:$0xf]
  %v1134 = vld [vmem:[%s1 + $0xad8] sm:$0xf]
  %v1135 = vld [vmem:[%s1 + $0xadc] sm:$0xf]
  %v1136 = vld [vmem:[%s1 + $0xae0] sm:$0xf]
  %v1137 = vld [vmem:[%s1 + $0xae4] sm:$0xf]
  %v1138 = vld [vmem:[%s1 + $0xae8] sm:$0xf]
  %v1139 = vld [vmem:[%s1 + $0xaec] sm:$0xf]
  %v1140 = vld [vmem:[%s1 + $0xaf0] sm:$0xf]
  %v1141 = vld [vmem:[%s1 + $0xaf4] sm:$0xf]
  %v1142 = vld [vmem:[%s1 + $0xaf8] sm:$0xf]
  %v1143 = vld [vmem:[%s1 + $0xafc] sm:$0xf]
  %v1144 = vld [vmem:[%s1 + $0xb00] sm:$0xf]
  %v1145 = vld [vmem:[%s1 + $0xb04] sm:$0xf]
  %v1146 = vld [vmem:[%s1 + $0xb08] sm:$0xf]
  %v1147 = vld [vmem:[%s1 + $0xb0c] sm:$0xf]
  %v1148 = vld [vmem:[%s1 + $0xb10] sm:$0xf]
  %v1149 = vld [vmem:[%s1 + $0xb14] sm:$0xf]
  %v1150 = vld [vmem:[%s1 + $0xb18] sm:$0xf]
  %v1151 = vld [vmem:[%s1 + $0xb1c] sm:$0xf]
  %v1152 = vld [vmem:[%s1 + $0xb20] sm:$0xf]
  %v1153 = vld [vmem:[%s1 + $0xb24] sm:$0xf]
  %v1154 = vld [vmem:[%s1 + $0xb28] sm:$0xf]
  %v1155 = vld [vmem:[%s1 + $0xb2c] sm:$0xf]
  %v1156 = vld [vmem:[%s1 + $0xb30] sm:$0xf]
  %v1157 = vld [vmem:[%s1 + $0xb34] sm:$0xf]
  %v1158 = vld [vmem:[%s1 + $0xb38] sm:$0xf]
  %v1159 = vld [vmem:[%s1 + $0xb3c] sm:$0xf]
  %v1160 = vld [vmem:[%s1 + $0xb40] sm:$0xf]
  %v1161 = vld [vmem:[%s1 + $0xb44] sm:$0xf]
  %v1162 = vld [vmem:[%s1 + $0xb48] sm:$0xf]
  %v1163 = vld [vmem:[%s1 + $0xb4c] sm:$0xf]
  %v1164 = vld [vmem:[%s1 + $0xb50] sm:$0xf]
  %v1165 = vld [vmem:[%s1 + $0xb54] sm:$0xf]
  %v1166 = vld [vmem:[%s1 + $0xb58] sm:$0xf]
  %v1167 = vld [vmem:[%s1 + $0xb5c] sm:$0xf]
  %v1168 = vld [vmem:[%s1 + $0xb60] sm:$0xf]
  %v1169 = vld [vmem:[%s1 + $0xb64] sm:$0xf]
  %v1170 = vld [vmem:[%s1 + $0xb68] sm:$0xf]
  %v1171 = vld [vmem:[%s1 + $0xb6c] sm:$0xf]
  %v1172 = vld [vmem:[%s1 + $0xb70] sm:$0xf]
  %v1173 = vld [vmem:[%s1 + $0xb74] sm:$0xf]
  %v1174 = vld [vmem:[%s1 + $0xb78] sm:$0xf]
  %v1175 = vld [vmem:[%s1 + $0xb7c] sm:$0xf]
  %v1176 = vld [vmem:[%s1 + $0xb80] sm:$0xf]
  %v1177 = vld [vmem:[%s1 + $0xb84] sm:$0xf]
  %v1178 = vld [vmem:[%s1 + $0xb88] sm:$0xf]
  %v1179 = vld [vmem:[%s1 + $0xb8c] sm:$0xf]
  %v1180 = vld [vmem:[%s1 + $0xb90] sm:$0xf]
  %v1181 = vld [vmem:[%s1 + $0xb94] sm:$0xf]
  %v1182 = vld [vmem:[%s1 + $0xb98] sm:$0xf]
  %v1183 = vld [vmem:[%s1 + $0xb9c] sm:$0xf]
  %v1184 = vld [vmem:[%s1 + $0xba0] sm:$0xf]
  %v1185 = vld [vmem:[%s1 + $0xba4] sm:$0xf]
  %v1186 = vld [vmem:[%s1 + $0xba8] sm:$0xf]
  %v1187 = vld [vmem:[%s1 + $0xbac] sm:$0xf]
  %v1188 = vld [vmem:[%s1 + $0xbb0] sm:$0xf]
  %v1189 = vld [vmem:[%s1 + $0xbb4] sm:$0xf]
  %v1190 = vld [vmem:[%s1 + $0xbb8] sm:$0xf]
  %v1191 = vld [vmem:[%s1 + $0xbbc] sm:$0xf]
  %v1192 = vld [vmem:[%s1 + $0xbc0] sm:$0xf]
  %v1193 = vld [vmem:[%s1 + $0xbc4] sm:$0xf]
  %v1194 = vld [vmem:[%s1 + $0xbc8] sm:$0xf]
  %v1195 = vld [vmem:[%s1 + $0xbcc] sm:$0xf]
  %v1196 = vld [vmem:[%s1 + $0xbd0] sm:$0xf]
  %v1197 = vld [vmem:[%s1 + $0xbd4] sm:$0xf]
  %v1198 = vld [vmem:[%s1 + $0xbd8] sm:$0xf]
  %v1199 = vld [vmem:[%s1 + $0xbdc] sm:$0xf]
  %v1200 = vld [vmem:[%s1 + $0xbe0] sm:$0xf]
  %v1201 = vld [vmem:[%s1 + $0xbe4] sm:$0xf]
  %v1202 = vld [vmem:[%s1 + $0xbe8] sm:$0xf]
  %v1203 = vld [vmem:[%s1 + $0xbec] sm:$0xf]
  %v1204 = vld [vmem:[%s1 + $0xbf0] sm:$0xf]
  %v1205 = vld [vmem:[%s1 + $0xbf4] sm:$0xf]
  %v1206 = vld [vmem:[%s1 + $0xbf8] sm:$0xf]
  %v1207 = vld [vmem:[%s1 + $0xbfc] sm:$0xf]
  %v1208 = vld [vmem:[%s1 + $0xc00] sm:$0xf]
  %v1209 = vld [vmem:[%s1 + $0xc04] sm:$0xf]
  %v1210 = vld [vmem:[%s1 + $0xc08] sm:$0xf]
  %v1211 = vld [vmem:[%s1 + $0xc0c] sm:$0xf]
  %v1212 = vld [vmem:[%s1 + $0xc10] sm:$0xf]
  %v1213 = vld [vmem:[%s1 + $0xc14] sm:$0xf]
  %v1214 = vld [vmem:[%s1 + $0xc18] sm:$0xf]
  %v1215 = vld [vmem:[%s1 + $0xc1c] sm:$0xf]
  %v1216 = vld [vmem:[%s1 + $0xc20] sm:$0xf]
  %v1217 = vld [vmem:[%s1 + $0xc24] sm:$0xf]
  %v1218 = vld [vmem:[%s1 + $0xc28] sm:$0xf]
  %v1219 = vld [vmem:[%s1 + $0xc2c] sm:$0xf]
  %v1220 = vld [vmem:[%s1 + $0xc30] sm:$0xf]
  %v1221 = vld [vmem:[%s1 + $0xc34] sm:$0xf]
  %v1222 = vld [vmem:[%s1 + $0xc38] sm:$0xf]
  %v1223 = vld [vmem:[%s1 + $0xc3c] sm:$0xf]
  %v1224 = vld [vmem:[%s1 + $0xc40] sm:$0xf]
  %v1225 = vld [vmem:[%s1 + $0xc44] sm:$0xf]
  %v1226 = vld [vmem:[%s1 + $0xc48] sm:$0xf]
  %v1227 = vld [vmem:[%s1 + $0xc4c] sm:$0xf]
  %v1228 = vld [vmem:[%s1 + $0xc50] sm:$0xf]
  %v1229 = vld [vmem:[%s1 + $0xc54] sm:$0xf]
  %v1230 = vld [vmem:[%s1 + $0xc58] sm:$0xf]
  %v1231 = vld [vmem:[%s1 + $0xc5c] sm:$0xf]
  %v1232 = vld [vmem:[%s1 + $0xc60] sm:$0xf]
  %v1233 = vld [vmem:[%s1 + $0xc64] sm:$0xf]
  %v1234 = vld [vmem:[%s1 + $0xc68] sm:$0xf]
  %v1235 = vld [vmem:[%s1 + $0xc6c] sm:$0xf]
  %v1236 = vld [vmem:[%s1 + $0xc70] sm:$0xf]
  %v1237 = vld [vmem:[%s1 + $0xc74] sm:$0xf]
  %v1238 = vld [vmem:[%s1 + $0xc78] sm:$0xf]
  %v1239 = vld [vmem:[%s1 + $0xc7c] sm:$0xf]
  %v1240 = vld [vmem:[%s1 + $0xc80] sm:$0xf]
  %v1241 = vld [vmem:[%s1 + $0xc84] sm:$0xf]
  %v1242 = vld [vmem:[%s1 + $0xc88] sm:$0xf]
  %v1243 = vld [vmem:[%s1 + $0xc8c] sm:$0xf]
  %v1244 = vld [vmem:[%s1 + $0xc90] sm:$0xf]
  %v1245 = vld [vmem:[%s1 + $0xc94] sm:$0xf]
  %v1246 = vld [vmem:[%s1 + $0xc98] sm:$0xf]
  %v1247 = vld [vmem:[%s1 + $0xc9c] sm:$0xf]
  %v1248 = vld [vmem:[%s1 + $0xca0] sm:$0xf]
  %v1249 = vld [vmem:[%s1 + $0xca4] sm:$0xf]
  %v1250 = vld [vmem:[%s1 + $0xca8] sm:$0xf]
  %v1251 = vld [vmem:[%s1 + $0xcac] sm:$0xf]
  %v1252 = vld [vmem:[%s1 + $0xcb0] sm:$0xf]
  %v1253 = vld [vmem:[%s1 + $0xcb4] sm:$0xf]
  %v1254 = vld [vmem:[%s1 + $0xcb8] sm:$0xf]
  %v1255 = vld [vmem:[%s1 + $0xcbc] sm:$0xf]
  %v1256 = vld [vmem:[%s1 + $0xcc0] sm:$0xf]
  %v1257 = vld [vmem:[%s1 + $0xcc4] sm:$0xf]
  %v1258 = vld [vmem:[%s1 + $0xcc8] sm:$0xf]
  %v1259 = vld [vmem:[%s1 + $0xccc] sm:$0xf]
  %v1260 = vld [vmem:[%s1 + $0xcd0] sm:$0xf]
  %v1261 = vld [vmem:[%s1 + $0xcd4] sm:$0xf]
  %v1262 = vld [vmem:[%s1 + $0xcd8] sm:$0xf]
  %v1263 = vld [vmem:[%s1 + $0xcdc] sm:$0xf]
  %v1264 = vld [vmem:[%s1 + $0xce0] sm:$0xf]
  %v1265 = vld [vmem:[%s1 + $0xce4] sm:$0xf]
  %v1266 = vld [vmem:[%s1 + $0xce8] sm:$0xf]
  %v1267 = vld [vmem:[%s1 + $0xcec] sm:$0xf]
  %v1268 = vld [vmem:[%s1 + $0xcf0] sm:$0xf]
  %v1269 = vld [vmem:[%s1 + $0xcf4] sm:$0xf]
  %v1270 = vld [vmem:[%s1 + $0xcf8] sm:$0xf]
  %v1271 = vld [vmem:[%s1 + $0xcfc] sm:$0xf]
  %v1272 = vld [vmem:[%s1 + $0xd00] sm:$0xf]
  %v1273 = vld [vmem:[%s1 + $0xd04] sm:$0xf]
  %v1274 = vld [vmem:[%s1 + $0xd08] sm:$0xf]
  %v1275 = vld [vmem:[%s1 + $0xd0c] sm:$0xf]
  %v1276 = vld [vmem:[%s1 + $0xd10] sm:$0xf]
  %v1277 = vld [vmem:[%s1 + $0xd14] sm:$0xf]
  %v1278 = vld [vmem:[%s1 + $0xd18] sm:$0xf]
  %v1279 = vld [vmem:[%s1 + $0xd1c] sm:$0xf]
  %v1280 = vld [vmem:[%s1 + $0xd20] sm:$0xf]
  %v1281 = vld [vmem:[%s1 + $0xd24] sm:$0xf]
  %v1282 = vld [vmem:[%s1 + $0xd28] sm:$0xf]
  %v1283 = vld [vmem:[%s1 + $0xd2c] sm:$0xf]
  %v1284 = vld [vmem:[%s1 + $0xd30] sm:$0xf]
  %v1285 = vld [vmem:[%s1 + $0xd34] sm:$0xf]
  %v1286 = vld [vmem:[%s1 + $0xd38] sm:$0xf]
  %v1287 = vld [vmem:[%s1 + $0xd3c] sm:$0xf]
  %v1288 = vld [vmem:[%s1 + $0xd40] sm:$0xf]
  %v1289 = vld [vmem:[%s1 + $0xd44] sm:$0xf]
  %v1290 = vld [vmem:[%s1 + $0xd48] sm:$0xf]
  %v1291 = vld [vmem:[%s1 + $0xd4c] sm:$0xf]
  %v1292 = vld [vmem:[%s1 + $0xd50] sm:$0xf]
  %v1293 = vld [vmem:[%s1 + $0xd54] sm:$0xf]
  %v1294 = vld [vmem:[%s1 + $0xd58] sm:$0xf]
  %v1295 = vld [vmem:[%s1 + $0xd5c] sm:$0xf]
  %v1296 = vld [vmem:[%s1 + $0xd60] sm:$0xf]
  %v1297 = vld [vmem:[%s1 + $0xd64] sm:$0xf]
  %v1298 = vld [vmem:[%s1 + $0xd68] sm:$0xf]
  %v1299 = vld [vmem:[%s1 + $0xd6c] sm:$0xf]
  %v1300 = vld [vmem:[%s1 + $0xd70] sm:$0xf]
  %v1301 = vld [vmem:[%s1 + $0xd74] sm:$0xf]
  %v1302 = vld [vmem:[%s1 + $0xd78] sm:$0xf]
  %v1303 = vld [vmem:[%s1 + $0xd7c] sm:$0xf]
  %v1304 = vld [vmem:[%s1 + $0xd80] sm:$0xf]
  %v1305 = vld [vmem:[%s1 + $0xd84] sm:$0xf]
  %v1306 = vld [vmem:[%s1 + $0xd88] sm:$0xf]
  %v1307 = vld [vmem:[%s1 + $0xd8c] sm:$0xf]
  %v1308 = vld [vmem:[%s1 + $0xd90] sm:$0xf]
  %v1309 = vld [vmem:[%s1 + $0xd94] sm:$0xf]
  %v1310 = vld [vmem:[%s1 + $0xd98] sm:$0xf]
  %v1311 = vld [vmem:[%s1 + $0xd9c] sm:$0xf]
  %v1312 = vld [vmem:[%s1 + $0xda0] sm:$0xf]
  %v1313 = vld [vmem:[%s1 + $0xda4] sm:$0xf]
  %v1314 = vld [vmem:[%s1 + $0xda8] sm:$0xf]
  %v1315 = vld [vmem:[%s1 + $0xdac] sm:$0xf]
  %v1316 = vld [vmem:[%s1 + $0xdb0] sm:$0xf]
  %v1317 = vld [vmem:[%s1 + $0xdb4] sm:$0xf]
  %v1318 = vld [vmem:[%s1 + $0xdb8] sm:$0xf]
  %v1319 = vld [vmem:[%s1 + $0xdbc] sm:$0xf]
  %v1320 = vld [vmem:[%s1 + $0xdc0] sm:$0xf]
  %v1321 = vld [vmem:[%s1 + $0xdc4] sm:$0xf]
  %v1322 = vld [vmem:[%s1 + $0xdc8] sm:$0xf]
  %v1323 = vld [vmem:[%s1 + $0xdcc] sm:$0xf]
  %v1324 = vld [vmem:[%s1 + $0xdd0] sm:$0xf]
  %v1325 = vld [vmem:[%s1 + $0xdd4] sm:$0xf]
  %v1326 = vld [vmem:[%s1 + $0xdd8] sm:$0xf]
  %v1327 = vld [vmem:[%s1 + $0xddc] sm:$0xf]
  %v1328 = vld [vmem:[%s1 + $0xde0] sm:$0xf]
  %v1329 = vld [vmem:[%s1 + $0xde4] sm:$0xf]
  %v1330 = vld [vmem:[%s1 + $0xde8] sm:$0xf]
  %v1331 = vld [vmem:[%s1 + $0xdec] sm:$0xf]
  %v1332 = vld [vmem:[%s1 + $0xdf0] sm:$0xf]
  %v1333 = vld [vmem:[%s1 + $0xdf4] sm:$0xf]
  %v1334 = vld [vmem:[%s1 + $0xdf8] sm:$0xf]
  %v1335 = vld [vmem:[%s1 + $0xdfc] sm:$0xf]
  %v1336 = vld [vmem:[%s1 + $0xe00] sm:$0xf]
  %v1337 = vld [vmem:[%s1 + $0xe04] sm:$0xf]
  %v1338 = vld [vmem:[%s1 + $0xe08] sm:$0xf]
  %v1339 = vld [vmem:[%s1 + $0xe0c] sm:$0xf]
  %v1340 = vld [vmem:[%s1 + $0xe10] sm:$0xf]
  %v1341 = vld [vmem:[%s1 + $0xe14] sm:$0xf]
  %v1342 = vld [vmem:[%s1 + $0xe18] sm:$0xf]
  %v1343 = vld [vmem:[%s1 + $0xe1c] sm:$0xf]
  %v1344 = vld [vmem:[%s1 + $0xe20] sm:$0xf]
  %v1345 = vld [vmem:[%s1 + $0xe24] sm:$0xf]
  %v1346 = vld [vmem:[%s1 + $0xe28] sm:$0xf]
  %v1347 = vld [vmem:[%s1 + $0xe2c] sm:$0xf]
  %v1348 = vld [vmem:[%s1 + $0xe30] sm:$0xf]
  %v1349 = vld [vmem:[%s1 + $0xe34] sm:$0xf]
  %v1350 = vld [vmem:[%s1 + $0xe38] sm:$0xf]
  %v1351 = vld [vmem:[%s1 + $0xe3c] sm:$0xf]
  %v1352 = vld [vmem:[%s1 + $0xe40] sm:$0xf]
  %v1353 = vld [vmem:[%s1 + $0xe44] sm:$0xf]
  %v1354 = vld [vmem:[%s1 + $0xe48] sm:$0xf]
  %v1355 = vld [vmem:[%s1 + $0xe4c] sm:$0xf]
  %v1356 = vld [vmem:[%s1 + $0xe50] sm:$0xf]
  %v1357 = vld [vmem:[%s1 + $0xe54] sm:$0xf]
  %v1358 = vld [vmem:[%s1 + $0xe58] sm:$0xf]
  %v1359 = vld [vmem:[%s1 + $0xe5c] sm:$0xf]
  %v1360 = vld [vmem:[%s1 + $0xe60] sm:$0xf]
  %v1361 = vld [vmem:[%s1 + $0xe64] sm:$0xf]
  %v1362 = vld [vmem:[%s1 + $0xe68] sm:$0xf]
  %v1363 = vld [vmem:[%s1 + $0xe6c] sm:$0xf]
  %v1364 = vld [vmem:[%s1 + $0xe70] sm:$0xf]
  %v1365 = vld [vmem:[%s1 + $0xe74] sm:$0xf]
  %v1366 = vld [vmem:[%s1 + $0xe78] sm:$0xf]
  %v1367 = vld [vmem:[%s1 + $0xe7c] sm:$0xf]
  %v1368 = vld [vmem:[%s1 + $0xe80] sm:$0xf]
  %v1369 = vld [vmem:[%s1 + $0xe84] sm:$0xf]
  %v1370 = vld [vmem:[%s1 + $0xe88] sm:$0xf]
  %v1371 = vld [vmem:[%s1 + $0xe8c] sm:$0xf]
  %v1372 = vld [vmem:[%s1 + $0xe90] sm:$0xf]
  %v1373 = vld [vmem:[%s1 + $0xe94] sm:$0xf]
  %v1374 = vld [vmem:[%s1 + $0xe98] sm:$0xf]
  %v1375 = vld [vmem:[%s1 + $0xe9c] sm:$0xf]
  %v1376 = vld [vmem:[%s1 + $0xea0] sm:$0xf]
  %v1377 = vld [vmem:[%s1 + $0xea4] sm:$0xf]
  %v1378 = vld [vmem:[%s1 + $0xea8] sm:$0xf]
  %v1379 = vld [vmem:[%s1 + $0xeac] sm:$0xf]
  %v1380 = vld [vmem:[%s1 + $0xeb0] sm:$0xf]
  %v1381 = vld [vmem:[%s1 + $0xeb4] sm:$0xf]
  %v1382 = vld [vmem:[%s1 + $0xeb8] sm:$0xf]
  %v1383 = vld [vmem:[%s1 + $0xebc] sm:$0xf]
  %v1384 = vld [vmem:[%s1 + $0xec0] sm:$0xf]
  %v1385 = vld [vmem:[%s1 + $0xec4] sm:$0xf]
  %v1386 = vld [vmem:[%s1 + $0xec8] sm:$0xf]
  %v1387 = vld [vmem:[%s1 + $0xecc] sm:$0xf]
  %v1388 = vld [vmem:[%s1 + $0xed0] sm:$0xf]
  %v1389 = vld [vmem:[%s1 + $0xed4] sm:$0xf]
  %v1390 = vld [vmem:[%s1 + $0xed8] sm:$0xf]
  %v1391 = vld [vmem:[%s1 + $0xedc] sm:$0xf]
  %v1392 = vld [vmem:[%s1 + $0xee0] sm:$0xf]
  %v1393 = vld [vmem:[%s1 + $0xee4] sm:$0xf]
  %v1394 = vld [vmem:[%s1 + $0xee8] sm:$0xf]
  %v1395 = vld [vmem:[%s1 + $0xeec] sm:$0xf]
  %v1396 = vld [vmem:[%s1 + $0xef0] sm:$0xf]
  %v1397 = vld [vmem:[%s1 + $0xef4] sm:$0xf]
  %v1398 = vld [vmem:[%s1 + $0xef8] sm:$0xf]
  %v1399 = vld [vmem:[%s1 + $0xefc] sm:$0xf]
  %v1400 = vld [vmem:[%s1 + $0xf00] sm:$0xf]
  %v1401 = vld [vmem:[%s1 + $0xf04] sm:$0xf]
  %v1402 = vld [vmem:[%s1 + $0xf08] sm:$0xf]
  %v1403 = vld [vmem:[%s1 + $0xf0c] sm:$0xf]
  %v1404 = vld [vmem:[%s1 + $0xf10] sm:$0xf]
  %v1405 = vld [vmem:[%s1 + $0xf14] sm:$0xf]
  %v1406 = vld [vmem:[%s1 + $0xf18] sm:$0xf]
  %v1407 = vld [vmem:[%s1 + $0xf1c] sm:$0xf]
  %v1408 = vld [vmem:[%s1 + $0xf20] sm:$0xf]
  %v1409 = vld [vmem:[%s1 + $0xf24] sm:$0xf]
  %v1410 = vld [vmem:[%s1 + $0xf28] sm:$0xf]
  %v1411 = vld [vmem:[%s1 + $0xf2c] sm:$0xf]
  %v1412 = vld [vmem:[%s1 + $0xf30] sm:$0xf]
  %v1413 = vld [vmem:[%s1 + $0xf34] sm:$0xf]
  %v1414 = vld [vmem:[%s1 + $0xf38] sm:$0xf]
  %v1415 = vld [vmem:[%s1 + $0xf3c] sm:$0xf]
  %v1416 = vld [vmem:[%s1 + $0xf40] sm:$0xf]
  %v1417 = vld [vmem:[%s1 + $0xf44] sm:$0xf]
  %v1418 = vld [vmem:[%s1 + $0xf48] sm:$0xf]
  %v1419 = vld [vmem:[%s1 + $0xf4c] sm:$0xf]
  %v1420 = vld [vmem:[%s2] sm:$0x1]
  %v1422 = vlaneseq
  %v1423 = vshrl.u32 %v1422, 7
  %v1424 = vsub.s32 0, %v1423
  %v1425 = vrot.slane %v1420, %v1424
  %v2407 = vunpack.c.l.b16 %v440
  %v2408 = vunpack.c.l.b16 %v441
  %v2409 = vunpack.c.l.b16 %v442
  %v2410 = vunpack.c.l.b16 %v443
  %v2411 = vunpack.c.l.b16 %v444
  %v2412 = vunpack.c.l.b16 %v445
  %v2413 = vunpack.c.l.b16 %v446
  %v2414 = vunpack.c.l.b16 %v447
  %v2415 = vunpack.c.l.b16 %v448
  %v2416 = vunpack.c.l.b16 %v449
  %v2417 = vunpack.c.l.b16 %v450
  %v2418 = vunpack.c.l.b16 %v451
  %v2419 = vunpack.c.l.b16 %v452
  %v2420 = vunpack.c.l.b16 %v453
  %v2421 = vunpack.c.l.b16 %v454
  %v2422 = vunpack.c.l.b16 %v455
  %v2423 = vunpack.c.l.b16 %v456
  %v2424 = vunpack.c.l.b16 %v457
  %v2425 = vunpack.c.l.b16 %v458
  %v2426 = vunpack.c.l.b16 %v459
  %v2427 = vunpack.c.l.b16 %v460
  %v2428 = vunpack.c.l.b16 %v461
  %v2429 = vunpack.c.l.b16 %v462
  %v2430 = vunpack.c.l.b16 %v463
  %v2431 = vunpack.c.l.b16 %v464
  %v2432 = vunpack.c.l.b16 %v465
  %v2433 = vunpack.c.l.b16 %v466
  %v2434 = vunpack.c.l.b16 %v467
  %v2435 = vunpack.c.l.b16 %v468
  %v2436 = vunpack.c.l.b16 %v469
  %v2437 = vunpack.c.l.b16 %v470
  %v2438 = vunpack.c.l.b16 %v471
  %v2439 = vunpack.c.l.b16 %v472
  %v2440 = vunpack.c.l.b16 %v473
  %v2441 = vunpack.c.l.b16 %v474
  %v2442 = vunpack.c.l.b16 %v475
  %v2443 = vunpack.c.l.b16 %v476
  %v2444 = vunpack.c.l.b16 %v477
  %v2445 = vunpack.c.l.b16 %v478
  %v2446 = vunpack.c.l.b16 %v479
  %v2447 = vunpack.c.l.b16 %v480
  %v2448 = vunpack.c.l.b16 %v481
  %v2449 = vunpack.c.l.b16 %v482
  %v2450 = vunpack.c.l.b16 %v483
  %v2451 = vunpack.c.l.b16 %v484
  %v2452 = vunpack.c.l.b16 %v485
  %v2453 = vunpack.c.l.b16 %v486
  %v2454 = vunpack.c.l.b16 %v487
  %v2455 = vunpack.c.l.b16 %v488
  %v2456 = vunpack.c.l.b16 %v489
  %v2457 = vunpack.c.l.b16 %v490
  %v2458 = vunpack.c.l.b16 %v491
  %v2459 = vunpack.c.l.b16 %v492
  %v2460 = vunpack.c.l.b16 %v493
  %v2461 = vunpack.c.l.b16 %v494
  %v2462 = vunpack.c.l.b16 %v495
  %v2463 = vunpack.c.l.b16 %v496
  %v2464 = vunpack.c.l.b16 %v497
  %v2465 = vunpack.c.l.b16 %v498
  %v2466 = vunpack.c.l.b16 %v499
  %v2467 = vunpack.c.l.b16 %v500
  %v2468 = vunpack.c.l.b16 %v501
  %v2469 = vunpack.c.l.b16 %v502
  %v2470 = vunpack.c.l.b16 %v503
  %v2471 = vunpack.c.l.b16 %v504
  %v2472 = vunpack.c.l.b16 %v505
  %v2473 = vunpack.c.l.b16 %v506
  %v2474 = vunpack.c.l.b16 %v507
  %v2475 = vunpack.c.l.b16 %v508
  %v2476 = vunpack.c.l.b16 %v509
  %v2477 = vunpack.c.l.b16 %v510
  %v2478 = vunpack.c.l.b16 %v511
  %v2479 = vunpack.c.l.b16 %v512
  %v2480 = vunpack.c.l.b16 %v513
  %v2481 = vunpack.c.l.b16 %v514
  %v2482 = vunpack.c.l.b16 %v515
  %v2483 = vunpack.c.l.b16 %v516
  %v2484 = vunpack.c.l.b16 %v517
  %v2485 = vunpack.c.l.b16 %v518
  %v2486 = vunpack.c.l.b16 %v519
  %v2487 = vunpack.c.l.b16 %v520
  %v2488 = vunpack.c.l.b16 %v521
  %v2489 = vunpack.c.l.b16 %v522
  %v2490 = vunpack.c.l.b16 %v523
  %v2491 = vunpack.c.l.b16 %v524
  %v2492 = vunpack.c.l.b16 %v525
  %v2493 = vunpack.c.l.b16 %v526
  %v2494 = vunpack.c.l.b16 %v527
  %v2495 = vunpack.c.l.b16 %v528
  %v2496 = vunpack.c.l.b16 %v529
  %v2497 = vunpack.c.l.b16 %v530
  %v2498 = vunpack.c.l.b16 %v531
  %v2499 = vunpack.c.l.b16 %v532
  %v2500 = vunpack.c.l.b16 %v533
  %v2501 = vunpack.c.l.b16 %v534
  %v2502 = vunpack.c.l.b16 %v535
  %v2503 = vunpack.c.l.b16 %v536
  %v2504 = vunpack.c.l.b16 %v537
  %v2505 = vunpack.c.l.b16 %v538
  %v2506 = vunpack.c.l.b16 %v539
  %v2507 = vunpack.c.l.b16 %v540
  %v2508 = vunpack.c.l.b16 %v541
  %v2509 = vunpack.c.l.b16 %v542
  %v2510 = vunpack.c.l.b16 %v543
  %v2511 = vunpack.c.l.b16 %v544
  %v2512 = vunpack.c.l.b16 %v545
  %v2513 = vunpack.c.l.b16 %v546
  %v2514 = vunpack.c.l.b16 %v547
  %v2515 = vunpack.c.l.b16 %v548
  %v2516 = vunpack.c.l.b16 %v549
  %v2517 = vunpack.c.l.b16 %v550
  %v2518 = vunpack.c.l.b16 %v551
  %v2519 = vunpack.c.l.b16 %v552
  %v2520 = vunpack.c.l.b16 %v553
  %v2521 = vunpack.c.l.b16 %v554
  %v2522 = vunpack.c.l.b16 %v555
  %v2523 = vunpack.c.l.b16 %v556
  %v2524 = vunpack.c.l.b16 %v557
  %v2525 = vunpack.c.l.b16 %v558
  %v2526 = vunpack.c.l.b16 %v559
  %v2527 = vunpack.c.l.b16 %v560
  %v2528 = vunpack.c.l.b16 %v561
  %v2529 = vunpack.c.l.b16 %v562
  %v2530 = vunpack.c.l.b16 %v563
  %v2531 = vunpack.c.l.b16 %v564
  %v2532 = vunpack.c.l.b16 %v565
  %v2533 = vunpack.c.l.b16 %v566
  %v2534 = vunpack.c.l.b16 %v567
  %v2535 = vunpack.c.l.b16 %v568
  %v2536 = vunpack.c.l.b16 %v569
  %v2537 = vunpack.c.l.b16 %v570
  %v2538 = vunpack.c.l.b16 %v571
  %v2539 = vunpack.c.l.b16 %v572
  %v2540 = vunpack.c.l.b16 %v573
  %v2541 = vunpack.c.l.b16 %v574
  %v2542 = vunpack.c.l.b16 %v575
  %v2543 = vunpack.c.l.b16 %v576
  %v2544 = vunpack.c.l.b16 %v577
  %v2545 = vunpack.c.l.b16 %v578
  %v2546 = vunpack.c.l.b16 %v579
  %v2547 = vunpack.c.l.b16 %v580
  %v2548 = vunpack.c.l.b16 %v581
  %v2549 = vunpack.c.l.b16 %v582
  %v2550 = vunpack.c.l.b16 %v583
  %v2551 = vunpack.c.l.b16 %v584
  %v2552 = vunpack.c.l.b16 %v585
  %v2553 = vunpack.c.l.b16 %v586
  %v2554 = vunpack.c.l.b16 %v587
  %v2555 = vunpack.c.l.b16 %v588
  %v2556 = vunpack.c.l.b16 %v589
  %v2557 = vunpack.c.l.b16 %v590
  %v2558 = vunpack.c.l.b16 %v591
  %v2559 = vunpack.c.l.b16 %v592
  %v2560 = vunpack.c.l.b16 %v593
  %v2561 = vunpack.c.l.b16 %v594
  %v2562 = vunpack.c.l.b16 %v595
  %v2563 = vunpack.c.l.b16 %v596
  %v2564 = vunpack.c.l.b16 %v597
  %v2565 = vunpack.c.l.b16 %v598
  %v2566 = vunpack.c.l.b16 %v599
  %v2567 = vunpack.c.l.b16 %v600
  %v2568 = vunpack.c.l.b16 %v601
  %v2569 = vunpack.c.l.b16 %v602
  %v2570 = vunpack.c.l.b16 %v603
  %v2571 = vunpack.c.l.b16 %v604
  %v2572 = vunpack.c.l.b16 %v605
  %v2573 = vunpack.c.l.b16 %v606
  %v2574 = vunpack.c.l.b16 %v607
  %v2575 = vunpack.c.l.b16 %v608
  %v2576 = vunpack.c.l.b16 %v609
  %v2577 = vunpack.c.l.b16 %v610
  %v2578 = vunpack.c.l.b16 %v611
  %v2579 = vunpack.c.l.b16 %v612
  %v2580 = vunpack.c.l.b16 %v613
  %v2581 = vunpack.c.l.b16 %v614
  %v2582 = vunpack.c.l.b16 %v615
  %v2583 = vunpack.c.l.b16 %v616
  %v2584 = vunpack.c.l.b16 %v617
  %v2585 = vunpack.c.l.b16 %v618
  %v2586 = vunpack.c.l.b16 %v619
  %v2587 = vunpack.c.l.b16 %v620
  %v2588 = vunpack.c.l.b16 %v621
  %v2589 = vunpack.c.l.b16 %v622
  %v2590 = vunpack.c.l.b16 %v623
  %v2591 = vunpack.c.l.b16 %v624
  %v2592 = vunpack.c.l.b16 %v625
  %v2593 = vunpack.c.l.b16 %v626
  %v2594 = vunpack.c.l.b16 %v627
  %v2595 = vunpack.c.l.b16 %v628
  %v2596 = vunpack.c.l.b16 %v629
  %v2597 = vunpack.c.l.b16 %v630
  %v2598 = vunpack.c.l.b16 %v631
  %v2599 = vunpack.c.l.b16 %v632
  %v2600 = vunpack.c.l.b16 %v633
  %v2601 = vunpack.c.l.b16 %v634
  %v2602 = vunpack.c.l.b16 %v635
  %v2603 = vunpack.c.l.b16 %v636
  %v2604 = vunpack.c.l.b16 %v637
  %v2605 = vunpack.c.l.b16 %v638
  %v2606 = vunpack.c.l.b16 %v639
  %v2607 = vunpack.c.l.b16 %v640
  %v2608 = vunpack.c.l.b16 %v641
  %v2609 = vunpack.c.l.b16 %v642
  %v2610 = vunpack.c.l.b16 %v643
  %v2611 = vunpack.c.l.b16 %v644
  %v2612 = vunpack.c.l.b16 %v645
  %v2613 = vunpack.c.l.b16 %v646
  %v2614 = vunpack.c.l.b16 %v647
  %v2615 = vunpack.c.l.b16 %v648
  %v2616 = vunpack.c.l.b16 %v649
  %v2617 = vunpack.c.l.b16 %v650
  %v2618 = vunpack.c.l.b16 %v651
  %v2619 = vunpack.c.l.b16 %v652
  %v2620 = vunpack.c.l.b16 %v653
  %v2621 = vunpack.c.l.b16 %v654
  %v2622 = vunpack.c.l.b16 %v655
  %v2623 = vunpack.c.l.b16 %v656
  %v2624 = vunpack.c.l.b16 %v657
  %v2625 = vunpack.c.l.b16 %v658
  %v2626 = vunpack.c.l.b16 %v659
  %v2627 = vunpack.c.l.b16 %v660
  %v2628 = vunpack.c.l.b16 %v661
  %v2629 = vunpack.c.l.b16 %v662
  %v2630 = vunpack.c.l.b16 %v663
  %v2631 = vunpack.c.l.b16 %v664
  %v2632 = vunpack.c.l.b16 %v665
  %v2633 = vunpack.c.l.b16 %v666
  %v2634 = vunpack.c.l.b16 %v667
  %v2635 = vunpack.c.l.b16 %v668
  %v2636 = vunpack.c.l.b16 %v669
  %v2637 = vunpack.c.l.b16 %v670
  %v2638 = vunpack.c.l.b16 %v671
  %v2639 = vunpack.c.l.b16 %v672
  %v2640 = vunpack.c.l.b16 %v673
  %v2641 = vunpack.c.l.b16 %v674
  %v2642 = vunpack.c.l.b16 %v675
  %v2643 = vunpack.c.l.b16 %v676
  %v2644 = vunpack.c.l.b16 %v677
  %v2645 = vunpack.c.l.b16 %v678
  %v2646 = vunpack.c.l.b16 %v679
  %v2647 = vunpack.c.l.b16 %v680
  %v2648 = vunpack.c.l.b16 %v681
  %v2649 = vunpack.c.l.b16 %v682
  %v2650 = vunpack.c.l.b16 %v683
  %v2651 = vunpack.c.l.b16 %v684
  %v2652 = vunpack.c.l.b16 %v685
  %v2653 = vunpack.c.l.b16 %v686
  %v2654 = vunpack.c.l.b16 %v687
  %v2655 = vunpack.c.l.b16 %v688
  %v2656 = vunpack.c.l.b16 %v689
  %v2657 = vunpack.c.l.b16 %v690
  %v2658 = vunpack.c.l.b16 %v691
  %v2659 = vunpack.c.l.b16 %v692
  %v2660 = vunpack.c.l.b16 %v693
  %v2661 = vunpack.c.l.b16 %v694
  %v2662 = vunpack.c.l.b16 %v695
  %v2663 = vunpack.c.l.b16 %v696
  %v2664 = vunpack.c.l.b16 %v697
  %v2665 = vunpack.c.l.b16 %v698
  %v2666 = vunpack.c.l.b16 %v699
  %v2667 = vunpack.c.l.b16 %v700
  %v2668 = vunpack.c.l.b16 %v701
  %v2669 = vunpack.c.l.b16 %v702
  %v2670 = vunpack.c.l.b16 %v703
  %v2671 = vunpack.c.l.b16 %v704
  %v2672 = vunpack.c.l.b16 %v705
  %v2673 = vunpack.c.l.b16 %v706
  %v2674 = vunpack.c.l.b16 %v707
  %v2675 = vunpack.c.l.b16 %v708
  %v2676 = vunpack.c.l.b16 %v709
  %v2677 = vunpack.c.l.b16 %v710
  %v2678 = vunpack.c.l.b16 %v711
  %v2679 = vunpack.c.l.b16 %v712
  %v2680 = vunpack.c.l.b16 %v713
  %v2681 = vunpack.c.l.b16 %v714
  %v2682 = vunpack.c.l.b16 %v715
  %v2683 = vunpack.c.l.b16 %v716
  %v2684 = vunpack.c.l.b16 %v717
  %v2685 = vunpack.c.l.b16 %v718
  %v2686 = vunpack.c.l.b16 %v719
  %v2687 = vunpack.c.l.b16 %v720
  %v2688 = vunpack.c.l.b16 %v721
  %v2689 = vunpack.c.l.b16 %v722
  %v2690 = vunpack.c.l.b16 %v723
  %v2691 = vunpack.c.l.b16 %v724
  %v2692 = vunpack.c.l.b16 %v725
  %v2693 = vunpack.c.l.b16 %v726
  %v2694 = vunpack.c.l.b16 %v727
  %v2695 = vunpack.c.l.b16 %v728
  %v2696 = vunpack.c.l.b16 %v729
  %v2697 = vunpack.c.l.b16 %v730
  %v2698 = vunpack.c.l.b16 %v731
  %v2699 = vunpack.c.l.b16 %v732
  %v2700 = vunpack.c.l.b16 %v733
  %v2701 = vunpack.c.l.b16 %v734
  %v2702 = vunpack.c.l.b16 %v735
  %v2703 = vunpack.c.l.b16 %v736
  %v2704 = vunpack.c.l.b16 %v737
  %v2705 = vunpack.c.l.b16 %v738
  %v2706 = vunpack.c.l.b16 %v739
  %v2707 = vunpack.c.l.b16 %v740
  %v2708 = vunpack.c.l.b16 %v741
  %v2709 = vunpack.c.l.b16 %v742
  %v2710 = vunpack.c.l.b16 %v743
  %v2711 = vunpack.c.l.b16 %v744
  %v2712 = vunpack.c.l.b16 %v745
  %v2713 = vunpack.c.l.b16 %v746
  %v2714 = vunpack.c.l.b16 %v747
  %v2715 = vunpack.c.l.b16 %v748
  %v2716 = vunpack.c.l.b16 %v749
  %v2717 = vunpack.c.l.b16 %v750
  %v2718 = vunpack.c.l.b16 %v751
  %v2719 = vunpack.c.l.b16 %v752
  %v2720 = vunpack.c.l.b16 %v753
  %v2721 = vunpack.c.l.b16 %v754
  %v2722 = vunpack.c.l.b16 %v755
  %v2723 = vunpack.c.l.b16 %v756
  %v2724 = vunpack.c.l.b16 %v757
  %v2725 = vunpack.c.l.b16 %v758
  %v2726 = vunpack.c.l.b16 %v759
  %v2727 = vunpack.c.l.b16 %v760
  %v2728 = vunpack.c.l.b16 %v761
  %v2729 = vunpack.c.l.b16 %v762
  %v2730 = vunpack.c.l.b16 %v763
  %v2731 = vunpack.c.l.b16 %v764
  %v2732 = vunpack.c.l.b16 %v765
  %v2733 = vunpack.c.l.b16 %v766
  %v2734 = vunpack.c.l.b16 %v767
  %v2735 = vunpack.c.l.b16 %v768
  %v2736 = vunpack.c.l.b16 %v769
  %v2737 = vunpack.c.l.b16 %v770
  %v2738 = vunpack.c.l.b16 %v771
  %v2739 = vunpack.c.l.b16 %v772
  %v2740 = vunpack.c.l.b16 %v773
  %v2741 = vunpack.c.l.b16 %v774
  %v2742 = vunpack.c.l.b16 %v775
  %v2743 = vunpack.c.l.b16 %v776
  %v2744 = vunpack.c.l.b16 %v777
  %v2745 = vunpack.c.l.b16 %v778
  %v2746 = vunpack.c.l.b16 %v779
  %v2747 = vunpack.c.l.b16 %v780
  %v2748 = vunpack.c.l.b16 %v781
  %v2749 = vunpack.c.l.b16 %v782
  %v2750 = vunpack.c.l.b16 %v783
  %v2751 = vunpack.c.l.b16 %v784
  %v2752 = vunpack.c.l.b16 %v785
  %v2753 = vunpack.c.l.b16 %v786
  %v2754 = vunpack.c.l.b16 %v787
  %v2755 = vunpack.c.l.b16 %v788
  %v2756 = vunpack.c.l.b16 %v789
  %v2757 = vunpack.c.l.b16 %v790
  %v2758 = vunpack.c.l.b16 %v791
  %v2759 = vunpack.c.l.b16 %v792
  %v2760 = vunpack.c.l.b16 %v793
  %v2761 = vunpack.c.l.b16 %v794
  %v2762 = vunpack.c.l.b16 %v795
  %v2763 = vunpack.c.l.b16 %v796
  %v2764 = vunpack.c.l.b16 %v797
  %v2765 = vunpack.c.l.b16 %v798
  %v2766 = vunpack.c.l.b16 %v799
  %v2767 = vunpack.c.l.b16 %v800
  %v2768 = vunpack.c.l.b16 %v801
  %v2769 = vunpack.c.l.b16 %v802
  %v2770 = vunpack.c.l.b16 %v803
  %v2771 = vunpack.c.l.b16 %v804
  %v2772 = vunpack.c.l.b16 %v805
  %v2773 = vunpack.c.l.b16 %v806
  %v2774 = vunpack.c.l.b16 %v807
  %v2775 = vunpack.c.l.b16 %v808
  %v2776 = vunpack.c.l.b16 %v809
  %v2777 = vunpack.c.l.b16 %v810
  %v2778 = vunpack.c.l.b16 %v811
  %v2779 = vunpack.c.l.b16 %v812
  %v2780 = vunpack.c.l.b16 %v813
  %v2781 = vunpack.c.l.b16 %v814
  %v2782 = vunpack.c.l.b16 %v815
  %v2783 = vunpack.c.l.b16 %v816
  %v2784 = vunpack.c.l.b16 %v817
  %v2785 = vunpack.c.l.b16 %v818
  %v2786 = vunpack.c.l.b16 %v819
  %v2787 = vunpack.c.l.b16 %v820
  %v2788 = vunpack.c.l.b16 %v821
  %v2789 = vunpack.c.l.b16 %v822
  %v2790 = vunpack.c.l.b16 %v823
  %v2791 = vunpack.c.l.b16 %v824
  %v2792 = vunpack.c.l.b16 %v825
  %v2793 = vunpack.c.l.b16 %v826
  %v2794 = vunpack.c.l.b16 %v827
  %v2795 = vunpack.c.l.b16 %v828
  %v2796 = vunpack.c.l.b16 %v829
  %v2797 = vunpack.c.l.b16 %v830
  %v2798 = vunpack.c.l.b16 %v831
  %v2799 = vunpack.c.l.b16 %v832
  %v2800 = vunpack.c.l.b16 %v833
  %v2801 = vunpack.c.l.b16 %v834
  %v2802 = vunpack.c.l.b16 %v835
  %v2803 = vunpack.c.l.b16 %v836
  %v2804 = vunpack.c.l.b16 %v837
  %v2805 = vunpack.c.l.b16 %v838
  %v2806 = vunpack.c.l.b16 %v839
  %v2807 = vunpack.c.l.b16 %v840
  %v2808 = vunpack.c.l.b16 %v841
  %v2809 = vunpack.c.l.b16 %v842
  %v2810 = vunpack.c.l.b16 %v843
  %v2811 = vunpack.c.l.b16 %v844
  %v2812 = vunpack.c.l.b16 %v845
  %v2813 = vunpack.c.l.b16 %v846
  %v2814 = vunpack.c.l.b16 %v847
  %v2815 = vunpack.c.l.b16 %v848
  %v2816 = vunpack.c.l.b16 %v849
  %v2817 = vunpack.c.l.b16 %v850
  %v2818 = vunpack.c.l.b16 %v851
  %v2819 = vunpack.c.l.b16 %v852
  %v2820 = vunpack.c.l.b16 %v853
  %v2821 = vunpack.c.l.b16 %v854
  %v2822 = vunpack.c.l.b16 %v855
  %v2823 = vunpack.c.l.b16 %v856
  %v2824 = vunpack.c.l.b16 %v857
  %v2825 = vunpack.c.l.b16 %v858
  %v2826 = vunpack.c.l.b16 %v859
  %v2827 = vunpack.c.l.b16 %v860
  %v2828 = vunpack.c.l.b16 %v861
  %v2829 = vunpack.c.l.b16 %v862
  %v2830 = vunpack.c.l.b16 %v863
  %v2831 = vunpack.c.l.b16 %v864
  %v2832 = vunpack.c.l.b16 %v865
  %v2833 = vunpack.c.l.b16 %v866
  %v2834 = vunpack.c.l.b16 %v867
  %v2835 = vunpack.c.l.b16 %v868
  %v2836 = vunpack.c.l.b16 %v869
  %v2837 = vunpack.c.l.b16 %v870
  %v2838 = vunpack.c.l.b16 %v871
  %v2839 = vunpack.c.l.b16 %v872
  %v2840 = vunpack.c.l.b16 %v873
  %v2841 = vunpack.c.l.b16 %v874
  %v2842 = vunpack.c.l.b16 %v875
  %v2843 = vunpack.c.l.b16 %v876
  %v2844 = vunpack.c.l.b16 %v877
  %v2845 = vunpack.c.l.b16 %v878
  %v2846 = vunpack.c.l.b16 %v879
  %v2847 = vunpack.c.l.b16 %v880
  %v2848 = vunpack.c.l.b16 %v881
  %v2849 = vunpack.c.l.b16 %v882
  %v2850 = vunpack.c.l.b16 %v883
  %v2851 = vunpack.c.l.b16 %v884
  %v2852 = vunpack.c.l.b16 %v885
  %v2853 = vunpack.c.l.b16 %v886
  %v2854 = vunpack.c.l.b16 %v887
  %v2855 = vunpack.c.l.b16 %v888
  %v2856 = vunpack.c.l.b16 %v889
  %v2857 = vunpack.c.l.b16 %v890
  %v2858 = vunpack.c.l.b16 %v891
  %v2859 = vunpack.c.l.b16 %v892
  %v2860 = vunpack.c.l.b16 %v893
  %v2861 = vunpack.c.l.b16 %v894
  %v2862 = vunpack.c.l.b16 %v895
  %v2863 = vunpack.c.l.b16 %v896
  %v2864 = vunpack.c.l.b16 %v897
  %v2865 = vunpack.c.l.b16 %v898
  %v2866 = vunpack.c.l.b16 %v899
  %v2867 = vunpack.c.l.b16 %v900
  %v2868 = vunpack.c.l.b16 %v901
  %v2869 = vunpack.c.l.b16 %v902
  %v2870 = vunpack.c.l.b16 %v903
  %v2871 = vunpack.c.l.b16 %v904
  %v2872 = vunpack.c.l.b16 %v905
  %v2873 = vunpack.c.l.b16 %v906
  %v2874 = vunpack.c.l.b16 %v907
  %v2875 = vunpack.c.l.b16 %v908
  %v2876 = vunpack.c.l.b16 %v909
  %v2877 = vunpack.c.l.b16 %v910
  %v2878 = vunpack.c.l.b16 %v911
  %v2879 = vunpack.c.l.b16 %v912
  %v2880 = vunpack.c.l.b16 %v913
  %v2881 = vunpack.c.l.b16 %v914
  %v2882 = vunpack.c.l.b16 %v915
  %v2883 = vunpack.c.l.b16 %v916
  %v2884 = vunpack.c.l.b16 %v917
  %v2885 = vunpack.c.l.b16 %v918
  %v2886 = vunpack.c.l.b16 %v919
  %v2887 = vunpack.c.l.b16 %v920
  %v2888 = vunpack.c.l.b16 %v921
  %v2889 = vunpack.c.l.b16 %v922
  %v2890 = vunpack.c.l.b16 %v923
  %v2891 = vunpack.c.l.b16 %v924
  %v2892 = vunpack.c.l.b16 %v925
  %v2893 = vunpack.c.l.b16 %v926
  %v2894 = vunpack.c.l.b16 %v927
  %v2895 = vunpack.c.l.b16 %v928
  %v2896 = vunpack.c.l.b16 %v929
  %v2897 = vunpack.c.l.b16 %v930
  %v2898 = vunpack.c.l.b16 %v931
  %v2899 = vunpack.c.l.b16 %v932
  %v2900 = vunpack.c.l.b16 %v933
  %v2901 = vunpack.c.l.b16 %v934
  %v2902 = vunpack.c.l.b16 %v935
  %v2903 = vunpack.c.l.b16 %v936
  %v2904 = vunpack.c.l.b16 %v937
  %v2905 = vunpack.c.l.b16 %v938
  %v2906 = vunpack.c.l.b16 %v939
  %v2907 = vunpack.c.l.b16 %v940
  %v2908 = vunpack.c.l.b16 %v941
  %v2909 = vunpack.c.l.b16 %v942
  %v2910 = vunpack.c.l.b16 %v943
  %v2911 = vunpack.c.l.b16 %v944
  %v2912 = vunpack.c.l.b16 %v945
  %v2913 = vunpack.c.l.b16 %v946
  %v2914 = vunpack.c.l.b16 %v947
  %v2915 = vunpack.c.l.b16 %v948
  %v2916 = vunpack.c.l.b16 %v949
  %v2917 = vunpack.c.l.b16 %v950
  %v2918 = vunpack.c.l.b16 %v951
  %v2919 = vunpack.c.l.b16 %v952
  %v2920 = vunpack.c.l.b16 %v953
  %v2921 = vunpack.c.l.b16 %v954
  %v2922 = vunpack.c.l.b16 %v955
  %v2923 = vunpack.c.l.b16 %v956
  %v2924 = vunpack.c.l.b16 %v957
  %v2925 = vunpack.c.l.b16 %v958
  %v2926 = vunpack.c.l.b16 %v959
  %v2927 = vunpack.c.l.b16 %v960
  %v2928 = vunpack.c.l.b16 %v961
  %v2929 = vunpack.c.l.b16 %v962
  %v2930 = vunpack.c.l.b16 %v963
  %v2931 = vunpack.c.l.b16 %v964
  %v2932 = vunpack.c.l.b16 %v965
  %v2933 = vunpack.c.l.b16 %v966
  %v2934 = vunpack.c.l.b16 %v967
  %v2935 = vunpack.c.l.b16 %v968
  %v2936 = vunpack.c.l.b16 %v969
  %v2937 = vunpack.c.l.b16 %v970
  %v2938 = vunpack.c.l.b16 %v971
  %v2939 = vunpack.c.l.b16 %v972
  %v2940 = vunpack.c.l.b16 %v973
  %v2941 = vunpack.c.l.b16 %v974
  %v2942 = vunpack.c.l.b16 %v975
  %v2943 = vunpack.c.l.b16 %v976
  %v2944 = vunpack.c.l.b16 %v977
  %v2945 = vunpack.c.l.b16 %v978
  %v2946 = vunpack.c.l.b16 %v979
  %v2947 = vunpack.c.l.b16 %v980
  %v2948 = vunpack.c.l.b16 %v981
  %v2949 = vunpack.c.l.b16 %v982
  %v2950 = vunpack.c.l.b16 %v983
  %v2951 = vunpack.c.l.b16 %v984
  %v2952 = vunpack.c.l.b16 %v985
  %v2953 = vunpack.c.l.b16 %v986
  %v2954 = vunpack.c.l.b16 %v987
  %v2955 = vunpack.c.l.b16 %v988
  %v2956 = vunpack.c.l.b16 %v989
  %v2957 = vunpack.c.l.b16 %v990
  %v2958 = vunpack.c.l.b16 %v991
  %v2959 = vunpack.c.l.b16 %v992
  %v2960 = vunpack.c.l.b16 %v993
  %v2961 = vunpack.c.l.b16 %v994
  %v2962 = vunpack.c.l.b16 %v995
  %v2963 = vunpack.c.l.b16 %v996
  %v2964 = vunpack.c.l.b16 %v997
  %v2965 = vunpack.c.l.b16 %v998
  %v2966 = vunpack.c.l.b16 %v999
  %v2967 = vunpack.c.l.b16 %v1000
  %v2968 = vunpack.c.l.b16 %v1001
  %v2969 = vunpack.c.l.b16 %v1002
  %v2970 = vunpack.c.l.b16 %v1003
  %v2971 = vunpack.c.l.b16 %v1004
  %v2972 = vunpack.c.l.b16 %v1005
  %v2973 = vunpack.c.l.b16 %v1006
  %v2974 = vunpack.c.l.b16 %v1007
  %v2975 = vunpack.c.l.b16 %v1008
  %v2976 = vunpack.c.l.b16 %v1009
  %v2977 = vunpack.c.l.b16 %v1010
  %v2978 = vunpack.c.l.b16 %v1011
  %v2979 = vunpack.c.l.b16 %v1012
  %v2980 = vunpack.c.l.b16 %v1013
  %v2981 = vunpack.c.l.b16 %v1014
  %v2982 = vunpack.c.l.b16 %v1015
  %v2983 = vunpack.c.l.b16 %v1016
  %v2984 = vunpack.c.l.b16 %v1017
  %v2985 = vunpack.c.l.b16 %v1018
  %v2986 = vunpack.c.l.b16 %v1019
  %v2987 = vunpack.c.l.b16 %v1020
  %v2988 = vunpack.c.l.b16 %v1021
  %v2989 = vunpack.c.l.b16 %v1022
  %v2990 = vunpack.c.l.b16 %v1023
  %v2991 = vunpack.c.l.b16 %v1024
  %v2992 = vunpack.c.l.b16 %v1025
  %v2993 = vunpack.c.l.b16 %v1026
  %v2994 = vunpack.c.l.b16 %v1027
  %v2995 = vunpack.c.l.b16 %v1028
  %v2996 = vunpack.c.l.b16 %v1029
  %v2997 = vunpack.c.l.b16 %v1030
  %v2998 = vunpack.c.l.b16 %v1031
  %v2999 = vunpack.c.l.b16 %v1032
  %v3000 = vunpack.c.l.b16 %v1033
  %v3001 = vunpack.c.l.b16 %v1034
  %v3002 = vunpack.c.l.b16 %v1035
  %v3003 = vunpack.c.l.b16 %v1036
  %v3004 = vunpack.c.l.b16 %v1037
  %v3005 = vunpack.c.l.b16 %v1038
  %v3006 = vunpack.c.l.b16 %v1039
  %v3007 = vunpack.c.l.b16 %v1040
  %v3008 = vunpack.c.l.b16 %v1041
  %v3009 = vunpack.c.l.b16 %v1042
  %v3010 = vunpack.c.l.b16 %v1043
  %v3011 = vunpack.c.l.b16 %v1044
  %v3012 = vunpack.c.l.b16 %v1045
  %v3013 = vunpack.c.l.b16 %v1046
  %v3014 = vunpack.c.l.b16 %v1047
  %v3015 = vunpack.c.l.b16 %v1048
  %v3016 = vunpack.c.l.b16 %v1049
  %v3017 = vunpack.c.l.b16 %v1050
  %v3018 = vunpack.c.l.b16 %v1051
  %v3019 = vunpack.c.l.b16 %v1052
  %v3020 = vunpack.c.l.b16 %v1053
  %v3021 = vunpack.c.l.b16 %v1054
  %v3022 = vunpack.c.l.b16 %v1055
  %v3023 = vunpack.c.l.b16 %v1056
  %v3024 = vunpack.c.l.b16 %v1057
  %v3025 = vunpack.c.l.b16 %v1058
  %v3026 = vunpack.c.l.b16 %v1059
  %v3027 = vunpack.c.l.b16 %v1060
  %v3028 = vunpack.c.l.b16 %v1061
  %v3029 = vunpack.c.l.b16 %v1062
  %v3030 = vunpack.c.l.b16 %v1063
  %v3031 = vunpack.c.l.b16 %v1064
  %v3032 = vunpack.c.l.b16 %v1065
  %v3033 = vunpack.c.l.b16 %v1066
  %v3034 = vunpack.c.l.b16 %v1067
  %v3035 = vunpack.c.l.b16 %v1068
  %v3036 = vunpack.c.l.b16 %v1069
  %v3037 = vunpack.c.l.b16 %v1070
  %v3038 = vunpack.c.l.b16 %v1071
  %v3039 = vunpack.c.l.b16 %v1072
  %v3040 = vunpack.c.l.b16 %v1073
  %v3041 = vunpack.c.l.b16 %v1074
  %v3042 = vunpack.c.l.b16 %v1075
  %v3043 = vunpack.c.l.b16 %v1076
  %v3044 = vunpack.c.l.b16 %v1077
  %v3045 = vunpack.c.l.b16 %v1078
  %v3046 = vunpack.c.l.b16 %v1079
  %v3047 = vunpack.c.l.b16 %v1080
  %v3048 = vunpack.c.l.b16 %v1081
  %v3049 = vunpack.c.l.b16 %v1082
  %v3050 = vunpack.c.l.b16 %v1083
  %v3051 = vunpack.c.l.b16 %v1084
  %v3052 = vunpack.c.l.b16 %v1085
  %v3053 = vunpack.c.l.b16 %v1086
  %v3054 = vunpack.c.l.b16 %v1087
  %v3055 = vunpack.c.l.b16 %v1088
  %v3056 = vunpack.c.l.b16 %v1089
  %v3057 = vunpack.c.l.b16 %v1090
  %v3058 = vunpack.c.l.b16 %v1091
  %v3059 = vunpack.c.l.b16 %v1092
  %v3060 = vunpack.c.l.b16 %v1093
  %v3061 = vunpack.c.l.b16 %v1094
  %v3062 = vunpack.c.l.b16 %v1095
  %v3063 = vunpack.c.l.b16 %v1096
  %v3064 = vunpack.c.l.b16 %v1097
  %v3065 = vunpack.c.l.b16 %v1098
  %v3066 = vunpack.c.l.b16 %v1099
  %v3067 = vunpack.c.l.b16 %v1100
  %v3068 = vunpack.c.l.b16 %v1101
  %v3069 = vunpack.c.l.b16 %v1102
  %v3070 = vunpack.c.l.b16 %v1103
  %v3071 = vunpack.c.l.b16 %v1104
  %v3072 = vunpack.c.l.b16 %v1105
  %v3073 = vunpack.c.l.b16 %v1106
  %v3074 = vunpack.c.l.b16 %v1107
  %v3075 = vunpack.c.l.b16 %v1108
  %v3076 = vunpack.c.l.b16 %v1109
  %v3077 = vunpack.c.l.b16 %v1110
  %v3078 = vunpack.c.l.b16 %v1111
  %v3079 = vunpack.c.l.b16 %v1112
  %v3080 = vunpack.c.l.b16 %v1113
  %v3081 = vunpack.c.l.b16 %v1114
  %v3082 = vunpack.c.l.b16 %v1115
  %v3083 = vunpack.c.l.b16 %v1116
  %v3084 = vunpack.c.l.b16 %v1117
  %v3085 = vunpack.c.l.b16 %v1118
  %v3086 = vunpack.c.l.b16 %v1119
  %v3087 = vunpack.c.l.b16 %v1120
  %v3088 = vunpack.c.l.b16 %v1121
  %v3089 = vunpack.c.l.b16 %v1122
  %v3090 = vunpack.c.l.b16 %v1123
  %v3091 = vunpack.c.l.b16 %v1124
  %v3092 = vunpack.c.l.b16 %v1125
  %v3093 = vunpack.c.l.b16 %v1126
  %v3094 = vunpack.c.l.b16 %v1127
  %v3095 = vunpack.c.l.b16 %v1128
  %v3096 = vunpack.c.l.b16 %v1129
  %v3097 = vunpack.c.l.b16 %v1130
  %v3098 = vunpack.c.l.b16 %v1131
  %v3099 = vunpack.c.l.b16 %v1132
  %v3100 = vunpack.c.l.b16 %v1133
  %v3101 = vunpack.c.l.b16 %v1134
  %v3102 = vunpack.c.l.b16 %v1135
  %v3103 = vunpack.c.l.b16 %v1136
  %v3104 = vunpack.c.l.b16 %v1137
  %v3105 = vunpack.c.l.b16 %v1138
  %v3106 = vunpack.c.l.b16 %v1139
  %v3107 = vunpack.c.l.b16 %v1140
  %v3108 = vunpack.c.l.b16 %v1141
  %v3109 = vunpack.c.l.b16 %v1142
  %v3110 = vunpack.c.l.b16 %v1143
  %v3111 = vunpack.c.l.b16 %v1144
  %v3112 = vunpack.c.l.b16 %v1145
  %v3113 = vunpack.c.l.b16 %v1146
  %v3114 = vunpack.c.l.b16 %v1147
  %v3115 = vunpack.c.l.b16 %v1148
  %v3116 = vunpack.c.l.b16 %v1149
  %v3117 = vunpack.c.l.b16 %v1150
  %v3118 = vunpack.c.l.b16 %v1151
  %v3119 = vunpack.c.l.b16 %v1152
  %v3120 = vunpack.c.l.b16 %v1153
  %v3121 = vunpack.c.l.b16 %v1154
  %v3122 = vunpack.c.l.b16 %v1155
  %v3123 = vunpack.c.l.b16 %v1156
  %v3124 = vunpack.c.l.b16 %v1157
  %v3125 = vunpack.c.l.b16 %v1158
  %v3126 = vunpack.c.l.b16 %v1159
  %v3127 = vunpack.c.l.b16 %v1160
  %v3128 = vunpack.c.l.b16 %v1161
  %v3129 = vunpack.c.l.b16 %v1162
  %v3130 = vunpack.c.l.b16 %v1163
  %v3131 = vunpack.c.l.b16 %v1164
  %v3132 = vunpack.c.l.b16 %v1165
  %v3133 = vunpack.c.l.b16 %v1166
  %v3134 = vunpack.c.l.b16 %v1167
  %v3135 = vunpack.c.l.b16 %v1168
  %v3136 = vunpack.c.l.b16 %v1169
  %v3137 = vunpack.c.l.b16 %v1170
  %v3138 = vunpack.c.l.b16 %v1171
  %v3139 = vunpack.c.l.b16 %v1172
  %v3140 = vunpack.c.l.b16 %v1173
  %v3141 = vunpack.c.l.b16 %v1174
  %v3142 = vunpack.c.l.b16 %v1175
  %v3143 = vunpack.c.l.b16 %v1176
  %v3144 = vunpack.c.l.b16 %v1177
  %v3145 = vunpack.c.l.b16 %v1178
  %v3146 = vunpack.c.l.b16 %v1179
  %v3147 = vunpack.c.l.b16 %v1180
  %v3148 = vunpack.c.l.b16 %v1181
  %v3149 = vunpack.c.l.b16 %v1182
  %v3150 = vunpack.c.l.b16 %v1183
  %v3151 = vunpack.c.l.b16 %v1184
  %v3152 = vunpack.c.l.b16 %v1185
  %v3153 = vunpack.c.l.b16 %v1186
  %v3154 = vunpack.c.l.b16 %v1187
  %v3155 = vunpack.c.l.b16 %v1188
  %v3156 = vunpack.c.l.b16 %v1189
  %v3157 = vunpack.c.l.b16 %v1190
  %v3158 = vunpack.c.l.b16 %v1191
  %v3159 = vunpack.c.l.b16 %v1192
  %v3160 = vunpack.c.l.b16 %v1193
  %v3161 = vunpack.c.l.b16 %v1194
  %v3162 = vunpack.c.l.b16 %v1195
  %v3163 = vunpack.c.l.b16 %v1196
  %v3164 = vunpack.c.l.b16 %v1197
  %v3165 = vunpack.c.l.b16 %v1198
  %v3166 = vunpack.c.l.b16 %v1199
  %v3167 = vunpack.c.l.b16 %v1200
  %v3168 = vunpack.c.l.b16 %v1201
  %v3169 = vunpack.c.l.b16 %v1202
  %v3170 = vunpack.c.l.b16 %v1203
  %v3171 = vunpack.c.l.b16 %v1204
  %v3172 = vunpack.c.l.b16 %v1205
  %v3173 = vunpack.c.l.b16 %v1206
  %v3174 = vunpack.c.l.b16 %v1207
  %v3175 = vunpack.c.l.b16 %v1208
  %v3176 = vunpack.c.l.b16 %v1209
  %v3177 = vunpack.c.l.b16 %v1210
  %v3178 = vunpack.c.l.b16 %v1211
  %v3179 = vunpack.c.l.b16 %v1212
  %v3180 = vunpack.c.l.b16 %v1213
  %v3181 = vunpack.c.l.b16 %v1214
  %v3182 = vunpack.c.l.b16 %v1215
  %v3183 = vunpack.c.l.b16 %v1216
  %v3184 = vunpack.c.l.b16 %v1217
  %v3185 = vunpack.c.l.b16 %v1218
  %v3186 = vunpack.c.l.b16 %v1219
  %v3187 = vunpack.c.l.b16 %v1220
  %v3188 = vunpack.c.l.b16 %v1221
  %v3189 = vunpack.c.l.b16 %v1222
  %v3190 = vunpack.c.l.b16 %v1223
  %v3191 = vunpack.c.l.b16 %v1224
  %v3192 = vunpack.c.l.b16 %v1225
  %v3193 = vunpack.c.l.b16 %v1226
  %v3194 = vunpack.c.l.b16 %v1227
  %v3195 = vunpack.c.l.b16 %v1228
  %v3196 = vunpack.c.l.b16 %v1229
  %v3197 = vunpack.c.l.b16 %v1230
  %v3198 = vunpack.c.l.b16 %v1231
  %v3199 = vunpack.c.l.b16 %v1232
  %v3200 = vunpack.c.l.b16 %v1233
  %v3201 = vunpack.c.l.b16 %v1234
  %v3202 = vunpack.c.l.b16 %v1235
  %v3203 = vunpack.c.l.b16 %v1236
  %v3204 = vunpack.c.l.b16 %v1237
  %v3205 = vunpack.c.l.b16 %v1238
  %v3206 = vunpack.c.l.b16 %v1239
  %v3207 = vunpack.c.l.b16 %v1240
  %v3208 = vunpack.c.l.b16 %v1241
  %v3209 = vunpack.c.l.b16 %v1242
  %v3210 = vunpack.c.l.b16 %v1243
  %v3211 = vunpack.c.l.b16 %v1244
  %v3212 = vunpack.c.l.b16 %v1245
  %v3213 = vunpack.c.l.b16 %v1246
  %v3214 = vunpack.c.l.b16 %v1247
  %v3215 = vunpack.c.l.b16 %v1248
  %v3216 = vunpack.c.l.b16 %v1249
  %v3217 = vunpack.c.l.b16 %v1250
  %v3218 = vunpack.c.l.b16 %v1251
  %v3219 = vunpack.c.l.b16 %v1252
  %v3220 = vunpack.c.l.b16 %v1253
  %v3221 = vunpack.c.l.b16 %v1254
  %v3222 = vunpack.c.l.b16 %v1255
  %v3223 = vunpack.c.l.b16 %v1256
  %v3224 = vunpack.c.l.b16 %v1257
  %v3225 = vunpack.c.l.b16 %v1258
  %v3226 = vunpack.c.l.b16 %v1259
  %v3227 = vunpack.c.l.b16 %v1260
  %v3228 = vunpack.c.l.b16 %v1261
  %v3229 = vunpack.c.l.b16 %v1262
  %v3230 = vunpack.c.l.b16 %v1263
  %v3231 = vunpack.c.l.b16 %v1264
  %v3232 = vunpack.c.l.b16 %v1265
  %v3233 = vunpack.c.l.b16 %v1266
  %v3234 = vunpack.c.l.b16 %v1267
  %v3235 = vunpack.c.l.b16 %v1268
  %v3236 = vunpack.c.l.b16 %v1269
  %v3237 = vunpack.c.l.b16 %v1270
  %v3238 = vunpack.c.l.b16 %v1271
  %v3239 = vunpack.c.l.b16 %v1272
  %v3240 = vunpack.c.l.b16 %v1273
  %v3241 = vunpack.c.l.b16 %v1274
  %v3242 = vunpack.c.l.b16 %v1275
  %v3243 = vunpack.c.l.b16 %v1276
  %v3244 = vunpack.c.l.b16 %v1277
  %v3245 = vunpack.c.l.b16 %v1278
  %v3246 = vunpack.c.l.b16 %v1279
  %v3247 = vunpack.c.l.b16 %v1280
  %v3248 = vunpack.c.l.b16 %v1281
  %v3249 = vunpack.c.l.b16 %v1282
  %v3250 = vunpack.c.l.b16 %v1283
  %v3251 = vunpack.c.l.b16 %v1284
  %v3252 = vunpack.c.l.b16 %v1285
  %v3253 = vunpack.c.l.b16 %v1286
  %v3254 = vunpack.c.l.b16 %v1287
  %v3255 = vunpack.c.l.b16 %v1288
  %v3256 = vunpack.c.l.b16 %v1289
  %v3257 = vunpack.c.l.b16 %v1290
  %v3258 = vunpack.c.l.b16 %v1291
  %v3259 = vunpack.c.l.b16 %v1292
  %v3260 = vunpack.c.l.b16 %v1293
  %v3261 = vunpack.c.l.b16 %v1294
  %v3262 = vunpack.c.l.b16 %v1295
  %v3263 = vunpack.c.l.b16 %v1296
  %v3264 = vunpack.c.l.b16 %v1297
  %v3265 = vunpack.c.l.b16 %v1298
  %v3266 = vunpack.c.l.b16 %v1299
  %v3267 = vunpack.c.l.b16 %v1300
  %v3268 = vunpack.c.l.b16 %v1301
  %v3269 = vunpack.c.l.b16 %v1302
  %v3270 = vunpack.c.l.b16 %v1303
  %v3271 = vunpack.c.l.b16 %v1304
  %v3272 = vunpack.c.l.b16 %v1305
  %v3273 = vunpack.c.l.b16 %v1306
  %v3274 = vunpack.c.l.b16 %v1307
  %v3275 = vunpack.c.l.b16 %v1308
  %v3276 = vunpack.c.l.b16 %v1309
  %v3277 = vunpack.c.l.b16 %v1310
  %v3278 = vunpack.c.l.b16 %v1311
  %v3279 = vunpack.c.l.b16 %v1312
  %v3280 = vunpack.c.l.b16 %v1313
  %v3281 = vunpack.c.l.b16 %v1314
  %v3282 = vunpack.c.l.b16 %v1315
  %v3283 = vunpack.c.l.b16 %v1316
  %v3284 = vunpack.c.l.b16 %v1317
  %v3285 = vunpack.c.l.b16 %v1318
  %v3286 = vunpack.c.l.b16 %v1319
  %v3287 = vunpack.c.l.b16 %v1320
  %v3288 = vunpack.c.l.b16 %v1321
  %v3289 = vunpack.c.l.b16 %v1322
  %v3290 = vunpack.c.l.b16 %v1323
  %v3291 = vunpack.c.l.b16 %v1324
  %v3292 = vunpack.c.l.b16 %v1325
  %v3293 = vunpack.c.l.b16 %v1326
  %v3294 = vunpack.c.l.b16 %v1327
  %v3295 = vunpack.c.l.b16 %v1328
  %v3296 = vunpack.c.l.b16 %v1329
  %v3297 = vunpack.c.l.b16 %v1330
  %v3298 = vunpack.c.l.b16 %v1331
  %v3299 = vunpack.c.l.b16 %v1332
  %v3300 = vunpack.c.l.b16 %v1333
  %v3301 = vunpack.c.l.b16 %v1334
  %v3302 = vunpack.c.l.b16 %v1335
  %v3303 = vunpack.c.l.b16 %v1336
  %v3304 = vunpack.c.l.b16 %v1337
  %v3305 = vunpack.c.l.b16 %v1338
  %v3306 = vunpack.c.l.b16 %v1339
  %v3307 = vunpack.c.l.b16 %v1340
  %v3308 = vunpack.c.l.b16 %v1341
  %v3309 = vunpack.c.l.b16 %v1342
  %v3310 = vunpack.c.l.b16 %v1343
  %v3311 = vunpack.c.l.b16 %v1344
  %v3312 = vunpack.c.l.b16 %v1345
  %v3313 = vunpack.c.l.b16 %v1346
  %v3314 = vunpack.c.l.b16 %v1347
  %v3315 = vunpack.c.l.b16 %v1348
  %v3316 = vunpack.c.l.b16 %v1349
  %v3317 = vunpack.c.l.b16 %v1350
  %v3318 = vunpack.c.l.b16 %v1351
  %v3319 = vunpack.c.l.b16 %v1352
  %v3320 = vunpack.c.l.b16 %v1353
  %v3321 = vunpack.c.l.b16 %v1354
  %v3322 = vunpack.c.l.b16 %v1355
  %v3323 = vunpack.c.l.b16 %v1356
  %v3324 = vunpack.c.l.b16 %v1357
  %v3325 = vunpack.c.l.b16 %v1358
  %v3326 = vunpack.c.l.b16 %v1359
  %v3327 = vunpack.c.l.b16 %v1360
  %v3328 = vunpack.c.l.b16 %v1361
  %v3329 = vunpack.c.l.b16 %v1362
  %v3330 = vunpack.c.l.b16 %v1363
  %v3331 = vunpack.c.l.b16 %v1364
  %v3332 = vunpack.c.l.b16 %v1365
  %v3333 = vunpack.c.l.b16 %v1366
  %v3334 = vunpack.c.l.b16 %v1367
  %v3335 = vunpack.c.l.b16 %v1368
  %v3336 = vunpack.c.l.b16 %v1369
  %v3337 = vunpack.c.l.b16 %v1370
  %v3338 = vunpack.c.l.b16 %v1371
  %v3339 = vunpack.c.l.b16 %v1372
  %v3340 = vunpack.c.l.b16 %v1373
  %v3341 = vunpack.c.l.b16 %v1374
  %v3342 = vunpack.c.l.b16 %v1375
  %v3343 = vunpack.c.l.b16 %v1376
  %v3344 = vunpack.c.l.b16 %v1377
  %v3345 = vunpack.c.l.b16 %v1378
  %v3346 = vunpack.c.l.b16 %v1379
  %v3347 = vunpack.c.l.b16 %v1380
  %v3348 = vunpack.c.l.b16 %v1381
  %v3349 = vunpack.c.l.b16 %v1382
  %v3350 = vunpack.c.l.b16 %v1383
  %v3351 = vunpack.c.l.b16 %v1384
  %v3352 = vunpack.c.l.b16 %v1385
  %v3353 = vunpack.c.l.b16 %v1386
  %v3354 = vunpack.c.l.b16 %v1387
  %v3355 = vunpack.c.l.b16 %v1388
  %v3356 = vunpack.c.l.b16 %v1389
  %v3357 = vunpack.c.l.b16 %v1390
  %v3358 = vunpack.c.l.b16 %v1391
  %v3359 = vunpack.c.l.b16 %v1392
  %v3360 = vunpack.c.l.b16 %v1393
  %v3361 = vunpack.c.l.b16 %v1394
  %v3362 = vunpack.c.l.b16 %v1395
  %v3363 = vunpack.c.l.b16 %v1396
  %v3364 = vunpack.c.l.b16 %v1397
  %v3365 = vunpack.c.l.b16 %v1398
  %v3366 = vunpack.c.l.b16 %v1399
  %v3367 = vunpack.c.l.b16 %v1400
  %v3368 = vunpack.c.l.b16 %v1401
  %v3369 = vunpack.c.l.b16 %v1402
  %v3370 = vunpack.c.l.b16 %v1403
  %v3371 = vunpack.c.l.b16 %v1404
  %v3372 = vunpack.c.l.b16 %v1405
  %v3373 = vunpack.c.l.b16 %v1406
  %v3374 = vunpack.c.l.b16 %v1407
  %v3375 = vunpack.c.l.b16 %v1408
  %v3376 = vunpack.c.l.b16 %v1409
  %v3377 = vunpack.c.l.b16 %v1410
  %v3378 = vunpack.c.l.b16 %v1411
  %v3379 = vunpack.c.l.b16 %v1412
  %v3380 = vunpack.c.l.b16 %v1413
  %v3381 = vunpack.c.l.b16 %v1414
  %v3382 = vunpack.c.l.b16 %v1415
  %v3383 = vunpack.c.l.b16 %v1416
  %v3384 = vunpack.c.l.b16 %v1417
  %v3385 = vunpack.c.l.b16 %v1418
  %v3386 = vunpack.c.l.b16 %v1419
  %v3387 = vpack.c.b16 %v2408, %v2407
  %v3388 = vpack.c.b16 %v2410, %v2409
  %v3389 = vpack.c.b16 %v2412, %v2411
  %v3390 = vpack.c.b16 %v2414, %v2413
  %v3391 = vpack.c.b16 %v2416, %v2415
  %v3392 = vpack.c.b16 %v2418, %v2417
  %v3393 = vpack.c.b16 %v2420, %v2419
  %v3394 = vpack.c.b16 %v2422, %v2421
  %v3395 = vpack.c.b16 %v2424, %v2423
  %v3396 = vpack.c.b16 %v2426, %v2425
  %v3397 = vpack.c.b16 %v2428, %v2427
  %v3398 = vpack.c.b16 %v2430, %v2429
  %v3399 = vpack.c.b16 %v2432, %v2431
  %v3400 = vpack.c.b16 %v2434, %v2433
  %v3401 = vpack.c.b16 %v2436, %v2435
  %v3402 = vpack.c.b16 %v2438, %v2437
  %v3403 = vpack.c.b16 %v2440, %v2439
  %v3404 = vpack.c.b16 %v2442, %v2441
  %v3405 = vpack.c.b16 %v2444, %v2443
  %v3406 = vpack.c.b16 %v2446, %v2445
  %v3407 = vpack.c.b16 %v2448, %v2447
  %v3408 = vpack.c.b16 %v2450, %v2449
  %v3409 = vpack.c.b16 %v2452, %v2451
  %v3410 = vpack.c.b16 %v2454, %v2453
  %v3411 = vpack.c.b16 %v2456, %v2455
  %v3412 = vpack.c.b16 %v2458, %v2457
  %v3413 = vpack.c.b16 %v2460, %v2459
  %v3414 = vpack.c.b16 %v2462, %v2461
  %v3415 = vpack.c.b16 %v2464, %v2463
  %v3416 = vpack.c.b16 %v2466, %v2465
  %v3417 = vpack.c.b16 %v2468, %v2467
  %v3418 = vpack.c.b16 %v2470, %v2469
  %v3419 = vpack.c.b16 %v2472, %v2471
  %v3420 = vpack.c.b16 %v2474, %v2473
  %v3421 = vpack.c.b16 %v2476, %v2475
  %v3422 = vpack.c.b16 %v2478, %v2477
  %v3423 = vpack.c.b16 %v2480, %v2479
  %v3424 = vpack.c.b16 %v2482, %v2481
  %v3425 = vpack.c.b16 %v2484, %v2483
  %v3426 = vpack.c.b16 %v2486, %v2485
  %v3427 = vpack.c.b16 %v2488, %v2487
  %v3428 = vpack.c.b16 %v2490, %v2489
  %v3429 = vpack.c.b16 %v2492, %v2491
  %v3430 = vpack.c.b16 %v2494, %v2493
  %v3431 = vpack.c.b16 %v2496, %v2495
  %v3432 = vpack.c.b16 %v2498, %v2497
  %v3433 = vpack.c.b16 %v2500, %v2499
  %v3434 = vpack.c.b16 %v2502, %v2501
  %v3435 = vpack.c.b16 %v2504, %v2503
  %v3436 = vpack.c.b16 %v2506, %v2505
  %v3437 = vpack.c.b16 %v2508, %v2507
  %v3438 = vpack.c.b16 %v2510, %v2509
  %v3439 = vpack.c.b16 %v2512, %v2511
  %v3440 = vpack.c.b16 %v2514, %v2513
  %v3441 = vpack.c.b16 %v2516, %v2515
  %v3442 = vpack.c.b16 %v2518, %v2517
  %v3443 = vpack.c.b16 %v2520, %v2519
  %v3444 = vpack.c.b16 %v2522, %v2521
  %v3445 = vpack.c.b16 %v2524, %v2523
  %v3446 = vpack.c.b16 %v2526, %v2525
  %v3447 = vpack.c.b16 %v2528, %v2527
  %v3448 = vpack.c.b16 %v2530, %v2529
  %v3449 = vpack.c.b16 %v2532, %v2531
  %v3450 = vpack.c.b16 %v2534, %v2533
  %v3451 = vpack.c.b16 %v2536, %v2535
  %v3452 = vpack.c.b16 %v2538, %v2537
  %v3453 = vpack.c.b16 %v2540, %v2539
  %v3454 = vpack.c.b16 %v2542, %v2541
  %v3455 = vpack.c.b16 %v2544, %v2543
  %v3456 = vpack.c.b16 %v2546, %v2545
  %v3457 = vpack.c.b16 %v2548, %v2547
  %v3458 = vpack.c.b16 %v2550, %v2549
  %v3459 = vpack.c.b16 %v2552, %v2551
  %v3460 = vpack.c.b16 %v2554, %v2553
  %v3461 = vpack.c.b16 %v2556, %v2555
  %v3462 = vpack.c.b16 %v2558, %v2557
  %v3463 = vpack.c.b16 %v2560, %v2559
  %v3464 = vpack.c.b16 %v2562, %v2561
  %v3465 = vpack.c.b16 %v2564, %v2563
  %v3466 = vpack.c.b16 %v2566, %v2565
  %v3467 = vpack.c.b16 %v2568, %v2567
  %v3468 = vpack.c.b16 %v2570, %v2569
  %v3469 = vpack.c.b16 %v2572, %v2571
  %v3470 = vpack.c.b16 %v2574, %v2573
  %v3471 = vpack.c.b16 %v2576, %v2575
  %v3472 = vpack.c.b16 %v2578, %v2577
  %v3473 = vpack.c.b16 %v2580, %v2579
  %v3474 = vpack.c.b16 %v2582, %v2581
  %v3475 = vpack.c.b16 %v2584, %v2583
  %v3476 = vpack.c.b16 %v2586, %v2585
  %v3477 = vpack.c.b16 %v2588, %v2587
  %v3478 = vpack.c.b16 %v2590, %v2589
  %v3479 = vpack.c.b16 %v2592, %v2591
  %v3480 = vpack.c.b16 %v2594, %v2593
  %v3481 = vpack.c.b16 %v2596, %v2595
  %v3482 = vpack.c.b16 %v2598, %v2597
  %v3483 = vpack.c.b16 %v2600, %v2599
  %v3484 = vpack.c.b16 %v2602, %v2601
  %v3485 = vpack.c.b16 %v2604, %v2603
  %v3486 = vpack.c.b16 %v2606, %v2605
  %v3487 = vpack.c.b16 %v2608, %v2607
  %v3488 = vpack.c.b16 %v2610, %v2609
  %v3489 = vpack.c.b16 %v2612, %v2611
  %v3490 = vpack.c.b16 %v2614, %v2613
  %v3491 = vpack.c.b16 %v2616, %v2615
  %v3492 = vpack.c.b16 %v2618, %v2617
  %v3493 = vpack.c.b16 %v2620, %v2619
  %v3494 = vpack.c.b16 %v2622, %v2621
  %v3495 = vpack.c.b16 %v2624, %v2623
  %v3496 = vpack.c.b16 %v2626, %v2625
  %v3497 = vpack.c.b16 %v2628, %v2627
  %v3498 = vpack.c.b16 %v2630, %v2629
  %v3499 = vpack.c.b16 %v2632, %v2631
  %v3500 = vpack.c.b16 %v2634, %v2633
  %v3501 = vpack.c.b16 %v2636, %v2635
  %v3502 = vpack.c.b16 %v2638, %v2637
  %v3503 = vpack.c.b16 %v2640, %v2639
  %v3504 = vpack.c.b16 %v2642, %v2641
  %v3505 = vpack.c.b16 %v2644, %v2643
  %v3506 = vpack.c.b16 %v2646, %v2645
  %v3507 = vpack.c.b16 %v2648, %v2647
  %v3508 = vpack.c.b16 %v2650, %v2649
  %v3509 = vpack.c.b16 %v2652, %v2651
  %v3510 = vpack.c.b16 %v2654, %v2653
  %v3511 = vpack.c.b16 %v2656, %v2655
  %v3512 = vpack.c.b16 %v2658, %v2657
  %v3513 = vpack.c.b16 %v2660, %v2659
  %v3514 = vpack.c.b16 %v2662, %v2661
  %v3515 = vpack.c.b16 %v2664, %v2663
  %v3516 = vpack.c.b16 %v2666, %v2665
  %v3517 = vpack.c.b16 %v2668, %v2667
  %v3518 = vpack.c.b16 %v2670, %v2669
  %v3519 = vpack.c.b16 %v2672, %v2671
  %v3520 = vpack.c.b16 %v2674, %v2673
  %v3521 = vpack.c.b16 %v2676, %v2675
  %v3522 = vpack.c.b16 %v2678, %v2677
  %v3523 = vpack.c.b16 %v2680, %v2679
  %v3524 = vpack.c.b16 %v2682, %v2681
  %v3525 = vpack.c.b16 %v2684, %v2683
  %v3526 = vpack.c.b16 %v2686, %v2685
  %v3527 = vpack.c.b16 %v2688, %v2687
  %v3528 = vpack.c.b16 %v2690, %v2689
  %v3529 = vpack.c.b16 %v2692, %v2691
  %v3530 = vpack.c.b16 %v2694, %v2693
  %v3531 = vpack.c.b16 %v2696, %v2695
  %v3532 = vpack.c.b16 %v2698, %v2697
  %v3533 = vpack.c.b16 %v2700, %v2699
  %v3534 = vpack.c.b16 %v2702, %v2701
  %v3535 = vpack.c.b16 %v2704, %v2703
  %v3536 = vpack.c.b16 %v2706, %v2705
  %v3537 = vpack.c.b16 %v2708, %v2707
  %v3538 = vpack.c.b16 %v2710, %v2709
  %v3539 = vpack.c.b16 %v2712, %v2711
  %v3540 = vpack.c.b16 %v2714, %v2713
  %v3541 = vpack.c.b16 %v2716, %v2715
  %v3542 = vpack.c.b16 %v2718, %v2717
  %v3543 = vpack.c.b16 %v2720, %v2719
  %v3544 = vpack.c.b16 %v2722, %v2721
  %v3545 = vpack.c.b16 %v2724, %v2723
  %v3546 = vpack.c.b16 %v2726, %v2725
  %v3547 = vpack.c.b16 %v2728, %v2727
  %v3548 = vpack.c.b16 %v2730, %v2729
  %v3549 = vpack.c.b16 %v2732, %v2731
  %v3550 = vpack.c.b16 %v2734, %v2733
  %v3551 = vpack.c.b16 %v2736, %v2735
  %v3552 = vpack.c.b16 %v2738, %v2737
  %v3553 = vpack.c.b16 %v2740, %v2739
  %v3554 = vpack.c.b16 %v2742, %v2741
  %v3555 = vpack.c.b16 %v2744, %v2743
  %v3556 = vpack.c.b16 %v2746, %v2745
  %v3557 = vpack.c.b16 %v2748, %v2747
  %v3558 = vpack.c.b16 %v2750, %v2749
  %v3559 = vpack.c.b16 %v2752, %v2751
  %v3560 = vpack.c.b16 %v2754, %v2753
  %v3561 = vpack.c.b16 %v2756, %v2755
  %v3562 = vpack.c.b16 %v2758, %v2757
  %v3563 = vpack.c.b16 %v2760, %v2759
  %v3564 = vpack.c.b16 %v2762, %v2761
  %v3565 = vpack.c.b16 %v2764, %v2763
  %v3566 = vpack.c.b16 %v2766, %v2765
  %v3567 = vpack.c.b16 %v2768, %v2767
  %v3568 = vpack.c.b16 %v2770, %v2769
  %v3569 = vpack.c.b16 %v2772, %v2771
  %v3570 = vpack.c.b16 %v2774, %v2773
  %v3571 = vpack.c.b16 %v2776, %v2775
  %v3572 = vpack.c.b16 %v2778, %v2777
  %v3573 = vpack.c.b16 %v2780, %v2779
  %v3574 = vpack.c.b16 %v2782, %v2781
  %v3575 = vpack.c.b16 %v2784, %v2783
  %v3576 = vpack.c.b16 %v2786, %v2785
  %v3577 = vpack.c.b16 %v2788, %v2787
  %v3578 = vpack.c.b16 %v2790, %v2789
  %v3579 = vpack.c.b16 %v2792, %v2791
  %v3580 = vpack.c.b16 %v2794, %v2793
  %v3581 = vpack.c.b16 %v2796, %v2795
  %v3582 = vpack.c.b16 %v2798, %v2797
  %v3583 = vpack.c.b16 %v2800, %v2799
  %v3584 = vpack.c.b16 %v2802, %v2801
  %v3585 = vpack.c.b16 %v2804, %v2803
  %v3586 = vpack.c.b16 %v2806, %v2805
  %v3587 = vpack.c.b16 %v2808, %v2807
  %v3588 = vpack.c.b16 %v2810, %v2809
  %v3589 = vpack.c.b16 %v2812, %v2811
  %v3590 = vpack.c.b16 %v2814, %v2813
  %v3591 = vpack.c.b16 %v2816, %v2815
  %v3592 = vpack.c.b16 %v2818, %v2817
  %v3593 = vpack.c.b16 %v2820, %v2819
  %v3594 = vpack.c.b16 %v2822, %v2821
  %v3595 = vpack.c.b16 %v2824, %v2823
  %v3596 = vpack.c.b16 %v2826, %v2825
  %v3597 = vpack.c.b16 %v2828, %v2827
  %v3598 = vpack.c.b16 %v2830, %v2829
  %v3599 = vpack.c.b16 %v2832, %v2831
  %v3600 = vpack.c.b16 %v2834, %v2833
  %v3601 = vpack.c.b16 %v2836, %v2835
  %v3602 = vpack.c.b16 %v2838, %v2837
  %v3603 = vpack.c.b16 %v2840, %v2839
  %v3604 = vpack.c.b16 %v2842, %v2841
  %v3605 = vpack.c.b16 %v2844, %v2843
  %v3606 = vpack.c.b16 %v2846, %v2845
  %v3607 = vpack.c.b16 %v2848, %v2847
  %v3608 = vpack.c.b16 %v2850, %v2849
  %v3609 = vpack.c.b16 %v2852, %v2851
  %v3610 = vpack.c.b16 %v2854, %v2853
  %v3611 = vpack.c.b16 %v2856, %v2855
  %v3612 = vpack.c.b16 %v2858, %v2857
  %v3613 = vpack.c.b16 %v2860, %v2859
  %v3614 = vpack.c.b16 %v2862, %v2861
  %v3615 = vpack.c.b16 %v2864, %v2863
  %v3616 = vpack.c.b16 %v2866, %v2865
  %v3617 = vpack.c.b16 %v2868, %v2867
  %v3618 = vpack.c.b16 %v2870, %v2869
  %v3619 = vpack.c.b16 %v2872, %v2871
  %v3620 = vpack.c.b16 %v2874, %v2873
  %v3621 = vpack.c.b16 %v2876, %v2875
  %v3622 = vpack.c.b16 %v2878, %v2877
  %v3623 = vpack.c.b16 %v2880, %v2879
  %v3624 = vpack.c.b16 %v2882, %v2881
  %v3625 = vpack.c.b16 %v2884, %v2883
  %v3626 = vpack.c.b16 %v2886, %v2885
  %v3627 = vpack.c.b16 %v2888, %v2887
  %v3628 = vpack.c.b16 %v2890, %v2889
  %v3629 = vpack.c.b16 %v2892, %v2891
  %v3630 = vpack.c.b16 %v2894, %v2893
  %v3631 = vpack.c.b16 %v2896, %v2895
  %v3632 = vpack.c.b16 %v2898, %v2897
  %v3633 = vpack.c.b16 %v2900, %v2899
  %v3634 = vpack.c.b16 %v2902, %v2901
  %v3635 = vpack.c.b16 %v2904, %v2903
  %v3636 = vpack.c.b16 %v2906, %v2905
  %v3637 = vpack.c.b16 %v2908, %v2907
  %v3638 = vpack.c.b16 %v2910, %v2909
  %v3639 = vpack.c.b16 %v2912, %v2911
  %v3640 = vpack.c.b16 %v2914, %v2913
  %v3641 = vpack.c.b16 %v2916, %v2915
  %v3642 = vpack.c.b16 %v2918, %v2917
  %v3643 = vpack.c.b16 %v2920, %v2919
  %v3644 = vpack.c.b16 %v2922, %v2921
  %v3645 = vpack.c.b16 %v2924, %v2923
  %v3646 = vpack.c.b16 %v2926, %v2925
  %v3647 = vpack.c.b16 %v2928, %v2927
  %v3648 = vpack.c.b16 %v2930, %v2929
  %v3649 = vpack.c.b16 %v2932, %v2931
  %v3650 = vpack.c.b16 %v2934, %v2933
  %v3651 = vpack.c.b16 %v2936, %v2935
  %v3652 = vpack.c.b16 %v2938, %v2937
  %v3653 = vpack.c.b16 %v2940, %v2939
  %v3654 = vpack.c.b16 %v2942, %v2941
  %v3655 = vpack.c.b16 %v2944, %v2943
  %v3656 = vpack.c.b16 %v2946, %v2945
  %v3657 = vpack.c.b16 %v2948, %v2947
  %v3658 = vpack.c.b16 %v2950, %v2949
  %v3659 = vpack.c.b16 %v2952, %v2951
  %v3660 = vpack.c.b16 %v2954, %v2953
  %v3661 = vpack.c.b16 %v2956, %v2955
  %v3662 = vpack.c.b16 %v2958, %v2957
  %v3663 = vpack.c.b16 %v2960, %v2959
  %v3664 = vpack.c.b16 %v2962, %v2961
  %v3665 = vpack.c.b16 %v2964, %v2963
  %v3666 = vpack.c.b16 %v2966, %v2965
  %v3667 = vpack.c.b16 %v2968, %v2967
  %v3668 = vpack.c.b16 %v2970, %v2969
  %v3669 = vpack.c.b16 %v2972, %v2971
  %v3670 = vpack.c.b16 %v2974, %v2973
  %v3671 = vpack.c.b16 %v2976, %v2975
  %v3672 = vpack.c.b16 %v2978, %v2977
  %v3673 = vpack.c.b16 %v2980, %v2979
  %v3674 = vpack.c.b16 %v2982, %v2981
  %v3675 = vpack.c.b16 %v2984, %v2983
  %v3676 = vpack.c.b16 %v2986, %v2985
  %v3677 = vpack.c.b16 %v2988, %v2987
  %v3678 = vpack.c.b16 %v2990, %v2989
  %v3679 = vpack.c.b16 %v2992, %v2991
  %v3680 = vpack.c.b16 %v2994, %v2993
  %v3681 = vpack.c.b16 %v2996, %v2995
  %v3682 = vpack.c.b16 %v2998, %v2997
  %v3683 = vpack.c.b16 %v3000, %v2999
  %v3684 = vpack.c.b16 %v3002, %v3001
  %v3685 = vpack.c.b16 %v3004, %v3003
  %v3686 = vpack.c.b16 %v3006, %v3005
  %v3687 = vpack.c.b16 %v3008, %v3007
  %v3688 = vpack.c.b16 %v3010, %v3009
  %v3689 = vpack.c.b16 %v3012, %v3011
  %v3690 = vpack.c.b16 %v3014, %v3013
  %v3691 = vpack.c.b16 %v3016, %v3015
  %v3692 = vpack.c.b16 %v3018, %v3017
  %v3693 = vpack.c.b16 %v3020, %v3019
  %v3694 = vpack.c.b16 %v3022, %v3021
  %v3695 = vpack.c.b16 %v3024, %v3023
  %v3696 = vpack.c.b16 %v3026, %v3025
  %v3697 = vpack.c.b16 %v3028, %v3027
  %v3698 = vpack.c.b16 %v3030, %v3029
  %v3699 = vpack.c.b16 %v3032, %v3031
  %v3700 = vpack.c.b16 %v3034, %v3033
  %v3701 = vpack.c.b16 %v3036, %v3035
  %v3702 = vpack.c.b16 %v3038, %v3037
  %v3703 = vpack.c.b16 %v3040, %v3039
  %v3704 = vpack.c.b16 %v3042, %v3041
  %v3705 = vpack.c.b16 %v3044, %v3043
  %v3706 = vpack.c.b16 %v3046, %v3045
  %v3707 = vpack.c.b16 %v3048, %v3047
  %v3708 = vpack.c.b16 %v3050, %v3049
  %v3709 = vpack.c.b16 %v3052, %v3051
  %v3710 = vpack.c.b16 %v3054, %v3053
  %v3711 = vpack.c.b16 %v3056, %v3055
  %v3712 = vpack.c.b16 %v3058, %v3057
  %v3713 = vpack.c.b16 %v3060, %v3059
  %v3714 = vpack.c.b16 %v3062, %v3061
  %v3715 = vpack.c.b16 %v3064, %v3063
  %v3716 = vpack.c.b16 %v3066, %v3065
  %v3717 = vpack.c.b16 %v3068, %v3067
  %v3718 = vpack.c.b16 %v3070, %v3069
  %v3719 = vpack.c.b16 %v3072, %v3071
  %v3720 = vpack.c.b16 %v3074, %v3073
  %v3721 = vpack.c.b16 %v3076, %v3075
  %v3722 = vpack.c.b16 %v3078, %v3077
  %v3723 = vpack.c.b16 %v3080, %v3079
  %v3724 = vpack.c.b16 %v3082, %v3081
  %v3725 = vpack.c.b16 %v3084, %v3083
  %v3726 = vpack.c.b16 %v3086, %v3085
  %v3727 = vpack.c.b16 %v3088, %v3087
  %v3728 = vpack.c.b16 %v3090, %v3089
  %v3729 = vpack.c.b16 %v3092, %v3091
  %v3730 = vpack.c.b16 %v3094, %v3093
  %v3731 = vpack.c.b16 %v3096, %v3095
  %v3732 = vpack.c.b16 %v3098, %v3097
  %v3733 = vpack.c.b16 %v3100, %v3099
  %v3734 = vpack.c.b16 %v3102, %v3101
  %v3735 = vpack.c.b16 %v3104, %v3103
  %v3736 = vpack.c.b16 %v3106, %v3105
  %v3737 = vpack.c.b16 %v3108, %v3107
  %v3738 = vpack.c.b16 %v3110, %v3109
  %v3739 = vpack.c.b16 %v3112, %v3111
  %v3740 = vpack.c.b16 %v3114, %v3113
  %v3741 = vpack.c.b16 %v3116, %v3115
  %v3742 = vpack.c.b16 %v3118, %v3117
  %v3743 = vpack.c.b16 %v3120, %v3119
  %v3744 = vpack.c.b16 %v3122, %v3121
  %v3745 = vpack.c.b16 %v3124, %v3123
  %v3746 = vpack.c.b16 %v3126, %v3125
  %v3747 = vpack.c.b16 %v3128, %v3127
  %v3748 = vpack.c.b16 %v3130, %v3129
  %v3749 = vpack.c.b16 %v3132, %v3131
  %v3750 = vpack.c.b16 %v3134, %v3133
  %v3751 = vpack.c.b16 %v3136, %v3135
  %v3752 = vpack.c.b16 %v3138, %v3137
  %v3753 = vpack.c.b16 %v3140, %v3139
  %v3754 = vpack.c.b16 %v3142, %v3141
  %v3755 = vpack.c.b16 %v3144, %v3143
  %v3756 = vpack.c.b16 %v3146, %v3145
  %v3757 = vpack.c.b16 %v3148, %v3147
  %v3758 = vpack.c.b16 %v3150, %v3149
  %v3759 = vpack.c.b16 %v3152, %v3151
  %v3760 = vpack.c.b16 %v3154, %v3153
  %v3761 = vpack.c.b16 %v3156, %v3155
  %v3762 = vpack.c.b16 %v3158, %v3157
  %v3763 = vpack.c.b16 %v3160, %v3159
  %v3764 = vpack.c.b16 %v3162, %v3161
  %v3765 = vpack.c.b16 %v3164, %v3163
  %v3766 = vpack.c.b16 %v3166, %v3165
  %v3767 = vpack.c.b16 %v3168, %v3167
  %v3768 = vpack.c.b16 %v3170, %v3169
  %v3769 = vpack.c.b16 %v3172, %v3171
  %v3770 = vpack.c.b16 %v3174, %v3173
  %v3771 = vpack.c.b16 %v3176, %v3175
  %v3772 = vpack.c.b16 %v3178, %v3177
  %v3773 = vpack.c.b16 %v3180, %v3179
  %v3774 = vpack.c.b16 %v3182, %v3181
  %v3775 = vpack.c.b16 %v3184, %v3183
  %v3776 = vpack.c.b16 %v3186, %v3185
  %v3777 = vpack.c.b16 %v3188, %v3187
  %v3778 = vpack.c.b16 %v3190, %v3189
  %v3779 = vpack.c.b16 %v3192, %v3191
  %v3780 = vpack.c.b16 %v3194, %v3193
  %v3781 = vpack.c.b16 %v3196, %v3195
  %v3782 = vpack.c.b16 %v3198, %v3197
  %v3783 = vpack.c.b16 %v3200, %v3199
  %v3784 = vpack.c.b16 %v3202, %v3201
  %v3785 = vpack.c.b16 %v3204, %v3203
  %v3786 = vpack.c.b16 %v3206, %v3205
  %v3787 = vpack.c.b16 %v3208, %v3207
  %v3788 = vpack.c.b16 %v3210, %v3209
  %v3789 = vpack.c.b16 %v3212, %v3211
  %v3790 = vpack.c.b16 %v3214, %v3213
  %v3791 = vpack.c.b16 %v3216, %v3215
  %v3792 = vpack.c.b16 %v3218, %v3217
  %v3793 = vpack.c.b16 %v3220, %v3219
  %v3794 = vpack.c.b16 %v3222, %v3221
  %v3795 = vpack.c.b16 %v3224, %v3223
  %v3796 = vpack.c.b16 %v3226, %v3225
  %v3797 = vpack.c.b16 %v3228, %v3227
  %v3798 = vpack.c.b16 %v3230, %v3229
  %v3799 = vpack.c.b16 %v3232, %v3231
  %v3800 = vpack.c.b16 %v3234, %v3233
  %v3801 = vpack.c.b16 %v3236, %v3235
  %v3802 = vpack.c.b16 %v3238, %v3237
  %v3803 = vpack.c.b16 %v3240, %v3239
  %v3804 = vpack.c.b16 %v3242, %v3241
  %v3805 = vpack.c.b16 %v3244, %v3243
  %v3806 = vpack.c.b16 %v3246, %v3245
  %v3807 = vpack.c.b16 %v3248, %v3247
  %v3808 = vpack.c.b16 %v3250, %v3249
  %v3809 = vpack.c.b16 %v3252, %v3251
  %v3810 = vpack.c.b16 %v3254, %v3253
  %v3811 = vpack.c.b16 %v3256, %v3255
  %v3812 = vpack.c.b16 %v3258, %v3257
  %v3813 = vpack.c.b16 %v3260, %v3259
  %v3814 = vpack.c.b16 %v3262, %v3261
  %v3815 = vpack.c.b16 %v3264, %v3263
  %v3816 = vpack.c.b16 %v3266, %v3265
  %v3817 = vpack.c.b16 %v3268, %v3267
  %v3818 = vpack.c.b16 %v3270, %v3269
  %v3819 = vpack.c.b16 %v3272, %v3271
  %v3820 = vpack.c.b16 %v3274, %v3273
  %v3821 = vpack.c.b16 %v3276, %v3275
  %v3822 = vpack.c.b16 %v3278, %v3277
  %v3823 = vpack.c.b16 %v3280, %v3279
  %v3824 = vpack.c.b16 %v3282, %v3281
  %v3825 = vpack.c.b16 %v3284, %v3283
  %v3826 = vpack.c.b16 %v3286, %v3285
  %v3827 = vpack.c.b16 %v3288, %v3287
  %v3828 = vpack.c.b16 %v3290, %v3289
  %v3829 = vpack.c.b16 %v3292, %v3291
  %v3830 = vpack.c.b16 %v3294, %v3293
  %v3831 = vpack.c.b16 %v3296, %v3295
  %v3832 = vpack.c.b16 %v3298, %v3297
  %v3833 = vpack.c.b16 %v3300, %v3299
  %v3834 = vpack.c.b16 %v3302, %v3301
  %v3835 = vpack.c.b16 %v3304, %v3303
  %v3836 = vpack.c.b16 %v3306, %v3305
  %v3837 = vpack.c.b16 %v3308, %v3307
  %v3838 = vpack.c.b16 %v3310, %v3309
  %v3839 = vpack.c.b16 %v3312, %v3311
  %v3840 = vpack.c.b16 %v3314, %v3313
  %v3841 = vpack.c.b16 %v3316, %v3315
  %v3842 = vpack.c.b16 %v3318, %v3317
  %v3843 = vpack.c.b16 %v3320, %v3319
  %v3844 = vpack.c.b16 %v3322, %v3321
  %v3845 = vpack.c.b16 %v3324, %v3323
  %v3846 = vpack.c.b16 %v3326, %v3325
  %v3847 = vpack.c.b16 %v3328, %v3327
  %v3848 = vpack.c.b16 %v3330, %v3329
  %v3849 = vpack.c.b16 %v3332, %v3331
  %v3850 = vpack.c.b16 %v3334, %v3333
  %v3851 = vpack.c.b16 %v3336, %v3335
  %v3852 = vpack.c.b16 %v3338, %v3337
  %v3853 = vpack.c.b16 %v3340, %v3339
  %v3854 = vpack.c.b16 %v3342, %v3341
  %v3855 = vpack.c.b16 %v3344, %v3343
  %v3856 = vpack.c.b16 %v3346, %v3345
  %v3857 = vpack.c.b16 %v3348, %v3347
  %v3858 = vpack.c.b16 %v3350, %v3349
  %v3859 = vpack.c.b16 %v3352, %v3351
  %v3860 = vpack.c.b16 %v3354, %v3353
  %v3861 = vpack.c.b16 %v3356, %v3355
  %v3862 = vpack.c.b16 %v3358, %v3357
  %v3863 = vpack.c.b16 %v3360, %v3359
  %v3864 = vpack.c.b16 %v3362, %v3361
  %v3865 = vpack.c.b16 %v3364, %v3363
  %v3866 = vpack.c.b16 %v3366, %v3365
  %v3867 = vpack.c.b16 %v3368, %v3367
  %v3868 = vpack.c.b16 %v3370, %v3369
  %v3869 = vpack.c.b16 %v3372, %v3371
  %v3870 = vpack.c.b16 %v3374, %v3373
  %v3871 = vpack.c.b16 %v3376, %v3375
  %v3872 = vpack.c.b16 %v3378, %v3377
  %v3873 = vpack.c.b16 %v3380, %v3379
  %v3874 = vpack.c.b16 %v3382, %v3381
  %v3875 = vpack.c.b16 %v3384, %v3383
  %v3876 = vpack.c.b16 %v3386, %v3385
  %vm4367 = vcmask 261120
  %v4369 = vsel %vm4367, %v439, 0
  %4371 = vmatprep.subr.bf16.mxu0 0
  %4372 = vmatpush1.bf16.msra.mxu0 %v3387
  %4373 = vmatprep.subr.bf16.mxu0 0
  %4374 = vmatpush1.bf16.msra.mxu0 %v3388
  %4375 = vmatprep.subr.bf16.mxu0 0
  %4376 = vmatpush1.bf16.msra.mxu0 %v3389
  %4377 = vmatprep.subr.bf16.mxu0 0
  %4378 = vmatpush1.bf16.msra.mxu0 %v3390
  %4379 = vmatprep.subr.bf16.mxu0 0
  %4380 = vmatpush1.bf16.msra.mxu0 %v3391
  %4381 = vmatprep.subr.bf16.mxu0 0
  %4382 = vmatpush1.bf16.msra.mxu0 %v3392
  %4383 = vmatprep.subr.bf16.mxu0 0
  %4384 = vmatpush1.bf16.msra.mxu0 %v3393
  %4385 = vmatprep.subr.bf16.mxu0 0
  %4386 = vmatpush1.bf16.msra.mxu0 %v3394
  %4387 = vmatprep.subr.bf16.mxu0 0
  %4388 = vmatpush1.bf16.msra.mxu0 %v3395
  %4389 = vmatprep.subr.bf16.mxu0 0
  %4390 = vmatpush1.bf16.msra.mxu0 %v3396
  %4391 = vmatprep.subr.bf16.mxu0 0
  %4392 = vmatpush1.bf16.msra.mxu0 %v3397
  %4393 = vmatprep.subr.bf16.mxu0 0
  %4394 = vmatpush1.bf16.msra.mxu0 %v3398
  %4395 = vmatprep.subr.bf16.mxu0 0
  %4396 = vmatpush1.bf16.msra.mxu0 %v3399
  %4397 = vmatprep.subr.bf16.mxu0 0
  %4398 = vmatpush1.bf16.msra.mxu0 %v3400
  %4399 = vmatprep.subr.bf16.mxu0 0
  %4400 = vmatpush1.bf16.msra.mxu0 %v3401
  %4401 = vmatprep.subr.bf16.mxu0 0
  %4402 = vmatpush1.bf16.msra.mxu0 %v3402
  %4403 = vmatprep.mubr.bf16.mxu0 %v379
  %4404 = vmatmul.mubr.bf16.gmra.mrb[0].mxu0 %v378
  %v4405 = vpop.f32.mrb[0].mxu0
  %v4406 = vadd.f32 %v1425, %v4405
  %v4407 = vpop.f32.mrb[0].mxu0
  %v4408 = vpop.f32.mrb[0].mxu0
  %v4409 = vpop.f32.mrb[0].mxu0
  %4410 = vdwg.mxu0
  %4411 = vmatprep.subr.bf16.mxu0 0
  %4412 = vmatpush1.bf16.msra.mxu0 %v3403
  %4413 = vmatprep.subr.bf16.mxu0 0
  %4414 = vmatpush1.bf16.msra.mxu0 %v3404
  %4415 = vmatprep.subr.bf16.mxu0 0
  %4416 = vmatpush1.bf16.msra.mxu0 %v3405
  %4417 = vmatprep.subr.bf16.mxu0 0
  %4418 = vmatpush1.bf16.msra.mxu0 %v3406
  %4419 = vmatprep.subr.bf16.mxu0 0
  %4420 = vmatpush1.bf16.msra.mxu0 %v3407
  %4421 = vmatprep.subr.bf16.mxu0 0
  %4422 = vmatpush1.bf16.msra.mxu0 %v3408
  %4423 = vmatprep.subr.bf16.mxu0 0
  %4424 = vmatpush1.bf16.msra.mxu0 %v3409
  %4425 = vmatprep.subr.bf16.mxu0 0
  %4426 = vmatpush1.bf16.msra.mxu0 %v3410
  %4427 = vmatprep.subr.bf16.mxu0 0
  %4428 = vmatpush1.bf16.msra.mxu0 %v3411
  %4429 = vmatprep.subr.bf16.mxu0 0
  %4430 = vmatpush1.bf16.msra.mxu0 %v3412
  %4431 = vmatprep.subr.bf16.mxu0 0
  %4432 = vmatpush1.bf16.msra.mxu0 %v3413
  %4433 = vmatprep.subr.bf16.mxu0 0
  %4434 = vmatpush1.bf16.msra.mxu0 %v3414
  %4435 = vmatprep.subr.bf16.mxu0 0
  %4436 = vmatpush1.bf16.msra.mxu0 %v3415
  %4437 = vmatprep.subr.bf16.mxu0 0
  %4438 = vmatpush1.bf16.msra.mxu0 %v3416
  %4439 = vmatprep.subr.bf16.mxu0 0
  %4440 = vmatpush1.bf16.msra.mxu0 %v3417
  %4441 = vmatprep.subr.bf16.mxu0 0
  %4442 = vmatpush1.bf16.msra.mxu0 %v3418
  %4443 = vmatprep.mubr.bf16.mxu0 %v381
  %4444 = vmatmul.mubr.bf16.gmra.mrb[0].mxu0 %v380
  %v4445 = vpop.f32.mrb[0].mxu0
  %v4446 = vadd.f32 %v4406, %v4445
  %v4447 = vpop.f32.mrb[0].mxu0
  %v4448 = vpop.f32.mrb[0].mxu0
  %v4449 = vpop.f32.mrb[0].mxu0
  %4450 = vdwg.mxu0
  %4451 = vmatprep.subr.bf16.mxu0 0
  %4452 = vmatpush1.bf16.msra.mxu0 %v3419
  %4453 = vmatprep.subr.bf16.mxu0 0
  %4454 = vmatpush1.bf16.msra.mxu0 %v3420
  %4455 = vmatprep.subr.bf16.mxu0 0
  %4456 = vmatpush1.bf16.msra.mxu0 %v3421
  %4457 = vmatprep.subr.bf16.mxu0 0
  %4458 = vmatpush1.bf16.msra.mxu0 %v3422
  %4459 = vmatprep.subr.bf16.mxu0 0
  %4460 = vmatpush1.bf16.msra.mxu0 %v3423
  %4461 = vmatprep.subr.bf16.mxu0 0
  %4462 = vmatpush1.bf16.msra.mxu0 %v3424
  %4463 = vmatprep.subr.bf16.mxu0 0
  %4464 = vmatpush1.bf16.msra.mxu0 %v3425
  %4465 = vmatprep.subr.bf16.mxu0 0
  %4466 = vmatpush1.bf16.msra.mxu0 %v3426
  %4467 = vmatprep.subr.bf16.mxu0 0
  %4468 = vmatpush1.bf16.msra.mxu0 %v3427
  %4469 = vmatprep.subr.bf16.mxu0 0
  %4470 = vmatpush1.bf16.msra.mxu0 %v3428
  %4471 = vmatprep.subr.bf16.mxu0 0
  %4472 = vmatpush1.bf16.msra.mxu0 %v3429
  %4473 = vmatprep.subr.bf16.mxu0 0
  %4474 = vmatpush1.bf16.msra.mxu0 %v3430
  %4475 = vmatprep.subr.bf16.mxu0 0
  %4476 = vmatpush1.bf16.msra.mxu0 %v3431
  %4477 = vmatprep.subr.bf16.mxu0 0
  %4478 = vmatpush1.bf16.msra.mxu0 %v3432
  %4479 = vmatprep.subr.bf16.mxu0 0
  %4480 = vmatpush1.bf16.msra.mxu0 %v3433
  %4481 = vmatprep.subr.bf16.mxu0 0
  %4482 = vmatpush1.bf16.msra.mxu0 %v3434
  %4483 = vmatprep.mubr.bf16.mxu0 %v383
  %4484 = vmatmul.mubr.bf16.gmra.mrb[0].mxu0 %v382
  %v4485 = vpop.f32.mrb[0].mxu0
  %v4486 = vadd.f32 %v4446, %v4485
  %v4487 = vpop.f32.mrb[0].mxu0
  %v4488 = vpop.f32.mrb[0].mxu0
  %v4489 = vpop.f32.mrb[0].mxu0
  %4490 = vdwg.mxu0
  %4491 = vmatprep.subr.bf16.mxu0 0
  %4492 = vmatpush1.bf16.msra.mxu0 %v3435
  %4493 = vmatprep.subr.bf16.mxu0 0
  %4494 = vmatpush1.bf16.msra.mxu0 %v3436
  %4495 = vmatprep.subr.bf16.mxu0 0
  %4496 = vmatpush1.bf16.msra.mxu0 %v3437
  %4497 = vmatprep.subr.bf16.mxu0 0
  %4498 = vmatpush1.bf16.msra.mxu0 %v3438
  %4499 = vmatprep.subr.bf16.mxu0 0
  %4500 = vmatpush1.bf16.msra.mxu0 %v3439
  %4501 = vmatprep.subr.bf16.mxu0 0
  %4502 = vmatpush1.bf16.msra.mxu0 %v3440
  %4503 = vmatprep.subr.bf16.mxu0 0
  %4504 = vmatpush1.bf16.msra.mxu0 %v3441
  %4505 = vmatprep.subr.bf16.mxu0 0
  %4506 = vmatpush1.bf16.msra.mxu0 %v3442
  %4507 = vmatprep.subr.bf16.mxu0 0
  %4508 = vmatpush1.bf16.msra.mxu0 %v3443
  %4509 = vmatprep.subr.bf16.mxu0 0
  %4510 = vmatpush1.bf16.msra.mxu0 %v3444
  %4511 = vmatprep.subr.bf16.mxu0 0
  %4512 = vmatpush1.bf16.msra.mxu0 %v3445
  %4513 = vmatprep.subr.bf16.mxu0 0
  %4514 = vmatpush1.bf16.msra.mxu0 %v3446
  %4515 = vmatprep.subr.bf16.mxu0 0
  %4516 = vmatpush1.bf16.msra.mxu0 %v3447
  %4517 = vmatprep.subr.bf16.mxu0 0
  %4518 = vmatpush1.bf16.msra.mxu0 %v3448
  %4519 = vmatprep.subr.bf16.mxu0 0
  %4520 = vmatpush1.bf16.msra.mxu0 %v3449
  %4521 = vmatprep.subr.bf16.mxu0 0
  %4522 = vmatpush1.bf16.msra.mxu0 %v3450
  %4523 = vmatprep.mubr.bf16.mxu0 %v385
  %4524 = vmatmul.mubr.bf16.gmra.mrb[0].mxu0 %v384
  %v4525 = vpop.f32.mrb[0].mxu0
  %v4526 = vadd.f32 %v4486, %v4525
  %v4527 = vpop.f32.mrb[0].mxu0
  %v4528 = vpop.f32.mrb[0].mxu0
  %v4529 = vpop.f32.mrb[0].mxu0
  %4530 = vdwg.mxu0
  %4531 = vmatprep.subr.bf16.mxu0 0
  %4532 = vmatpush1.bf16.msra.mxu0 %v3451
  %4533 = vmatprep.subr.bf16.mxu0 0
  %4534 = vmatpush1.bf16.msra.mxu0 %v3452
  %4535 = vmatprep.subr.bf16.mxu0 0
  %4536 = vmatpush1.bf16.msra.mxu0 %v3453
  %4537 = vmatprep.subr.bf16.mxu0 0
  %4538 = vmatpush1.bf16.msra.mxu0 %v3454
  %4539 = vmatprep.subr.bf16.mxu0 0
  %4540 = vmatpush1.bf16.msra.mxu0 %v3455
  %4541 = vmatprep.subr.bf16.mxu0 0
  %4542 = vmatpush1.bf16.msra.mxu0 %v3456
  %4543 = vmatprep.subr.bf16.mxu0 0
  %4544 = vmatpush1.bf16.msra.mxu0 %v3457
  %4545 = vmatprep.subr.bf16.mxu0 0
  %4546 = vmatpush1.bf16.msra.mxu0 %v3458
  %4547 = vmatprep.subr.bf16.mxu0 0
  %4548 = vmatpush1.bf16.msra.mxu0 %v3459
  %4549 = vmatprep.subr.bf16.mxu0 0
  %4550 = vmatpush1.bf16.msra.mxu0 %v3460
  %4551 = vmatprep.subr.bf16.mxu0 0
  %4552 = vmatpush1.bf16.msra.mxu0 %v3461
  %4553 = vmatprep.subr.bf16.mxu0 0
  %4554 = vmatpush1.bf16.msra.mxu0 %v3462
  %4555 = vmatprep.subr.bf16.mxu0 0
  %4556 = vmatpush1.bf16.msra.mxu0 %v3463
  %4557 = vmatprep.subr.bf16.mxu0 0
  %4558 = vmatpush1.bf16.msra.mxu0 %v3464
  %4559 = vmatprep.subr.bf16.mxu0 0
  %4560 = vmatpush1.bf16.msra.mxu0 %v3465
  %4561 = vmatprep.subr.bf16.mxu0 0
  %4562 = vmatpush1.bf16.msra.mxu0 %v3466
  %4563 = vmatprep.mubr.bf16.mxu0 %v387
  %4564 = vmatmul.mubr.bf16.gmra.mrb[0].mxu0 %v386
  %v4565 = vpop.f32.mrb[0].mxu0
  %v4566 = vadd.f32 %v4526, %v4565
  %v4567 = vpop.f32.mrb[0].mxu0
  %v4568 = vpop.f32.mrb[0].mxu0
  %v4569 = vpop.f32.mrb[0].mxu0
  %4570 = vdwg.mxu0
  %4571 = vmatprep.subr.bf16.mxu0 0
  %4572 = vmatpush1.bf16.msra.mxu0 %v3467
  %4573 = vmatprep.subr.bf16.mxu0 0
  %4574 = vmatpush1.bf16.msra.mxu0 %v3468
  %4575 = vmatprep.subr.bf16.mxu0 0
  %4576 = vmatpush1.bf16.msra.mxu0 %v3469
  %4577 = vmatprep.subr.bf16.mxu0 0
  %4578 = vmatpush1.bf16.msra.mxu0 %v3470
  %4579 = vmatprep.subr.bf16.mxu0 0
  %4580 = vmatpush1.bf16.msra.mxu0 %v3471
  %4581 = vmatprep.subr.bf16.mxu0 0
  %4582 = vmatpush1.bf16.msra.mxu0 %v3472
  %4583 = vmatprep.subr.bf16.mxu0 0
  %4584 = vmatpush1.bf16.msra.mxu0 %v3473
  %4585 = vmatprep.subr.bf16.mxu0 0
  %4586 = vmatpush1.bf16.msra.mxu0 %v3474
  %4587 = vmatprep.subr.bf16.mxu0 0
  %4588 = vmatpush1.bf16.msra.mxu0 %v3475
  %4589 = vmatprep.subr.bf16.mxu0 0
  %4590 = vmatpush1.bf16.msra.mxu0 %v3476
  %4591 = vmatprep.subr.bf16.mxu0 0
  %4592 = vmatpush1.bf16.msra.mxu0 %v3477
  %4593 = vmatprep.subr.bf16.mxu0 0
  %4594 = vmatpush1.bf16.msra.mxu0 %v3478
  %4595 = vmatprep.subr.bf16.mxu0 0
  %4596 = vmatpush1.bf16.msra.mxu0 %v3479
  %4597 = vmatprep.subr.bf16.mxu0 0
  %4598 = vmatpush1.bf16.msra.mxu0 %v3480
  %4599 = vmatprep.subr.bf16.mxu0 0
  %4600 = vmatpush1.bf16.msra.mxu0 %v3481
  %4601 = vmatprep.subr.bf16.mxu0 0
  %4602 = vmatpush1.bf16.msra.mxu0 %v3482
  %4603 = vmatprep.mubr.bf16.mxu0 %v389
  %4604 = vmatmul.mubr.bf16.gmra.mrb[0].mxu0 %v388
  %v4605 = vpop.f32.mrb[0].mxu0
  %v4606 = vadd.f32 %v4566, %v4605
  %v4607 = vpop.f32.mrb[0].mxu0
  %v4608 = vpop.f32.mrb[0].mxu0
  %v4609 = vpop.f32.mrb[0].mxu0
  %4610 = vdwg.mxu0
  %4611 = vmatprep.subr.bf16.mxu0 0
  %4612 = vmatpush1.bf16.msra.mxu0 %v3483
  %4613 = vmatprep.subr.bf16.mxu0 0
  %4614 = vmatpush1.bf16.msra.mxu0 %v3484
  %4615 = vmatprep.subr.bf16.mxu0 0
  %4616 = vmatpush1.bf16.msra.mxu0 %v3485
  %4617 = vmatprep.subr.bf16.mxu0 0
  %4618 = vmatpush1.bf16.msra.mxu0 %v3486
  %4619 = vmatprep.subr.bf16.mxu0 0
  %4620 = vmatpush1.bf16.msra.mxu0 %v3487
  %4621 = vmatprep.subr.bf16.mxu0 0
  %4622 = vmatpush1.bf16.msra.mxu0 %v3488
  %4623 = vmatprep.subr.bf16.mxu0 0
  %4624 = vmatpush1.bf16.msra.mxu0 %v3489
  %4625 = vmatprep.subr.bf16.mxu0 0
  %4626 = vmatpush1.bf16.msra.mxu0 %v3490
  %4627 = vmatprep.subr.bf16.mxu0 0
  %4628 = vmatpush1.bf16.msra.mxu0 %v3491
  %4629 = vmatprep.subr.bf16.mxu0 0
  %4630 = vmatpush1.bf16.msra.mxu0 %v3492
  %4631 = vmatprep.subr.bf16.mxu0 0
  %4632 = vmatpush1.bf16.msra.mxu0 %v3493
  %4633 = vmatprep.subr.bf16.mxu0 0
  %4634 = vmatpush1.bf16.msra.mxu0 %v3494
  %4635 = vmatprep.subr.bf16.mxu0 0
  %4636 = vmatpush1.bf16.msra.mxu0 %v3495
  %4637 = vmatprep.subr.bf16.mxu0 0
  %4638 = vmatpush1.bf16.msra.mxu0 %v3496
  %4639 = vmatprep.subr.bf16.mxu0 0
  %4640 = vmatpush1.bf16.msra.mxu0 %v3497
  %4641 = vmatprep.subr.bf16.mxu0 0
  %4642 = vmatpush1.bf16.msra.mxu0 %v3498
  %4643 = vmatprep.mubr.bf16.mxu0 %v391
  %4644 = vmatmul.mubr.bf16.gmra.mrb[0].mxu0 %v390
  %v4645 = vpop.f32.mrb[0].mxu0
  %v4646 = vadd.f32 %v4606, %v4645
  %v4647 = vpop.f32.mrb[0].mxu0
  %v4648 = vpop.f32.mrb[0].mxu0
  %v4649 = vpop.f32.mrb[0].mxu0
  %4650 = vdwg.mxu0
  %4651 = vmatprep.subr.bf16.mxu0 0
  %4652 = vmatpush1.bf16.msra.mxu0 %v3499
  %4653 = vmatprep.subr.bf16.mxu0 0
  %4654 = vmatpush1.bf16.msra.mxu0 %v3500
  %4655 = vmatprep.subr.bf16.mxu0 0
  %4656 = vmatpush1.bf16.msra.mxu0 %v3501
  %4657 = vmatprep.subr.bf16.mxu0 0
  %4658 = vmatpush1.bf16.msra.mxu0 %v3502
  %4659 = vmatprep.subr.bf16.mxu0 0
  %4660 = vmatpush1.bf16.msra.mxu0 %v3503
  %4661 = vmatprep.subr.bf16.mxu0 0
  %4662 = vmatpush1.bf16.msra.mxu0 %v3504
  %4663 = vmatprep.subr.bf16.mxu0 0
  %4664 = vmatpush1.bf16.msra.mxu0 %v3505
  %4665 = vmatprep.subr.bf16.mxu0 0
  %4666 = vmatpush1.bf16.msra.mxu0 %v3506
  %4667 = vmatprep.subr.bf16.mxu0 0
  %4668 = vmatpush1.bf16.msra.mxu0 %v3507
  %4669 = vmatprep.subr.bf16.mxu0 0
  %4670 = vmatpush1.bf16.msra.mxu0 %v3508
  %4671 = vmatprep.subr.bf16.mxu0 0
  %4672 = vmatpush1.bf16.msra.mxu0 %v3509
  %4673 = vmatprep.subr.bf16.mxu0 0
  %4674 = vmatpush1.bf16.msra.mxu0 %v3510
  %4675 = vmatprep.subr.bf16.mxu0 0
  %4676 = vmatpush1.bf16.msra.mxu0 %v3511
  %4677 = vmatprep.subr.bf16.mxu0 0
  %4678 = vmatpush1.bf16.msra.mxu0 %v3512
  %4679 = vmatprep.subr.bf16.mxu0 0
  %4680 = vmatpush1.bf16.msra.mxu0 %v3513
  %4681 = vmatprep.subr.bf16.mxu0 0
  %4682 = vmatpush1.bf16.msra.mxu0 %v3514
  %4683 = vmatprep.mubr.bf16.mxu0 %v393
  %4684 = vmatmul.mubr.bf16.gmra.mrb[0].mxu0 %v392
  %v4685 = vpop.f32.mrb[0].mxu0
  %v4686 = vadd.f32 %v4646, %v4685
  %v4687 = vpop.f32.mrb[0].mxu0
  %v4688 = vpop.f32.mrb[0].mxu0
  %v4689 = vpop.f32.mrb[0].mxu0
  %4690 = vdwg.mxu0
  %4691 = vmatprep.subr.bf16.mxu0 0
  %4692 = vmatpush1.bf16.msra.mxu0 %v3515
  %4693 = vmatprep.subr.bf16.mxu0 0
  %4694 = vmatpush1.bf16.msra.mxu0 %v3516
  %4695 = vmatprep.subr.bf16.mxu0 0
  %4696 = vmatpush1.bf16.msra.mxu0 %v3517
  %4697 = vmatprep.subr.bf16.mxu0 0
  %4698 = vmatpush1.bf16.msra.mxu0 %v3518
  %4699 = vmatprep.subr.bf16.mxu0 0
  %4700 = vmatpush1.bf16.msra.mxu0 %v3519
  %4701 = vmatprep.subr.bf16.mxu0 0
  %4702 = vmatpush1.bf16.msra.mxu0 %v3520
  %4703 = vmatprep.subr.bf16.mxu0 0
  %4704 = vmatpush1.bf16.msra.mxu0 %v3521
  %4705 = vmatprep.subr.bf16.mxu0 0
  %4706 = vmatpush1.bf16.msra.mxu0 %v3522
  %4707 = vmatprep.subr.bf16.mxu0 0
  %4708 = vmatpush1.bf16.msra.mxu0 %v3523
  %4709 = vmatprep.subr.bf16.mxu0 0
  %4710 = vmatpush1.bf16.msra.mxu0 %v3524
  %4711 = vmatprep.subr.bf16.mxu0 0
  %4712 = vmatpush1.bf16.msra.mxu0 %v3525
  %4713 = vmatprep.subr.bf16.mxu0 0
  %4714 = vmatpush1.bf16.msra.mxu0 %v3526
  %4715 = vmatprep.subr.bf16.mxu0 0
  %4716 = vmatpush1.bf16.msra.mxu0 %v3527
  %4717 = vmatprep.subr.bf16.mxu0 0
  %4718 = vmatpush1.bf16.msra.mxu0 %v3528
  %4719 = vmatprep.subr.bf16.mxu0 0
  %4720 = vmatpush1.bf16.msra.mxu0 %v3529
  %4721 = vmatprep.subr.bf16.mxu0 0
  %4722 = vmatpush1.bf16.msra.mxu0 %v3530
  %4723 = vmatprep.mubr.bf16.mxu0 %v395
  %4724 = vmatmul.mubr.bf16.gmra.mrb[0].mxu0 %v394
  %v4725 = vpop.f32.mrb[0].mxu0
  %v4726 = vadd.f32 %v4686, %v4725
  %v4727 = vpop.f32.mrb[0].mxu0
  %v4728 = vpop.f32.mrb[0].mxu0
  %v4729 = vpop.f32.mrb[0].mxu0
  %4730 = vdwg.mxu0
  %4731 = vmatprep.subr.bf16.mxu0 0
  %4732 = vmatpush1.bf16.msra.mxu0 %v3531
  %4733 = vmatprep.subr.bf16.mxu0 0
  %4734 = vmatpush1.bf16.msra.mxu0 %v3532
  %4735 = vmatprep.subr.bf16.mxu0 0
  %4736 = vmatpush1.bf16.msra.mxu0 %v3533
  %4737 = vmatprep.subr.bf16.mxu0 0
  %4738 = vmatpush1.bf16.msra.mxu0 %v3534
  %4739 = vmatprep.subr.bf16.mxu0 0
  %4740 = vmatpush1.bf16.msra.mxu0 %v3535
  %4741 = vmatprep.subr.bf16.mxu0 0
  %4742 = vmatpush1.bf16.msra.mxu0 %v3536
  %4743 = vmatprep.subr.bf16.mxu0 0
  %4744 = vmatpush1.bf16.msra.mxu0 %v3537
  %4745 = vmatprep.subr.bf16.mxu0 0
  %4746 = vmatpush1.bf16.msra.mxu0 %v3538
  %4747 = vmatprep.subr.bf16.mxu0 0
  %4748 = vmatpush1.bf16.msra.mxu0 %v3539
  %4749 = vmatprep.subr.bf16.mxu0 0
  %4750 = vmatpush1.bf16.msra.mxu0 %v3540
  %4751 = vmatprep.subr.bf16.mxu0 0
  %4752 = vmatpush1.bf16.msra.mxu0 %v3541
  %4753 = vmatprep.subr.bf16.mxu0 0
  %4754 = vmatpush1.bf16.msra.mxu0 %v3542
  %4755 = vmatprep.subr.bf16.mxu0 0
  %4756 = vmatpush1.bf16.msra.mxu0 %v3543
  %4757 = vmatprep.subr.bf16.mxu0 0
  %4758 = vmatpush1.bf16.msra.mxu0 %v3544
  %4759 = vmatprep.subr.bf16.mxu0 0
  %4760 = vmatpush1.bf16.msra.mxu0 %v3545
  %4761 = vmatprep.subr.bf16.mxu0 0
  %4762 = vmatpush1.bf16.msra.mxu0 %v3546
  %4763 = vmatprep.mubr.bf16.mxu0 %v397
  %4764 = vmatmul.mubr.bf16.gmra.mrb[0].mxu0 %v396
  %v4765 = vpop.f32.mrb[0].mxu0
  %v4766 = vadd.f32 %v4726, %v4765
  %v4767 = vpop.f32.mrb[0].mxu0
  %v4768 = vpop.f32.mrb[0].mxu0
  %v4769 = vpop.f32.mrb[0].mxu0
  %4770 = vdwg.mxu0
  %4771 = vmatprep.subr.bf16.mxu0 0
  %4772 = vmatpush1.bf16.msra.mxu0 %v3547
  %4773 = vmatprep.subr.bf16.mxu0 0
  %4774 = vmatpush1.bf16.msra.mxu0 %v3548
  %4775 = vmatprep.subr.bf16.mxu0 0
  %4776 = vmatpush1.bf16.msra.mxu0 %v3549
  %4777 = vmatprep.subr.bf16.mxu0 0
  %4778 = vmatpush1.bf16.msra.mxu0 %v3550
  %4779 = vmatprep.subr.bf16.mxu0 0
  %4780 = vmatpush1.bf16.msra.mxu0 %v3551
  %4781 = vmatprep.subr.bf16.mxu0 0
  %4782 = vmatpush1.bf16.msra.mxu0 %v3552
  %4783 = vmatprep.subr.bf16.mxu0 0
  %4784 = vmatpush1.bf16.msra.mxu0 %v3553
  %4785 = vmatprep.subr.bf16.mxu0 0
  %4786 = vmatpush1.bf16.msra.mxu0 %v3554
  %4787 = vmatprep.subr.bf16.mxu0 0
  %4788 = vmatpush1.bf16.msra.mxu0 %v3555
  %4789 = vmatprep.subr.bf16.mxu0 0
  %4790 = vmatpush1.bf16.msra.mxu0 %v3556
  %4791 = vmatprep.subr.bf16.mxu0 0
  %4792 = vmatpush1.bf16.msra.mxu0 %v3557
  %4793 = vmatprep.subr.bf16.mxu0 0
  %4794 = vmatpush1.bf16.msra.mxu0 %v3558
  %4795 = vmatprep.subr.bf16.mxu0 0
  %4796 = vmatpush1.bf16.msra.mxu0 %v3559
  %4797 = vmatprep.subr.bf16.mxu0 0
  %4798 = vmatpush1.bf16.msra.mxu0 %v3560
  %4799 = vmatprep.subr.bf16.mxu0 0
  %4800 = vmatpush1.bf16.msra.mxu0 %v3561
  %4801 = vmatprep.subr.bf16.mxu0 0
  %4802 = vmatpush1.bf16.msra.mxu0 %v3562
  %4803 = vmatprep.mubr.bf16.mxu0 %v399
  %4804 = vmatmul.mubr.bf16.gmra.mrb[0].mxu0 %v398
  %v4805 = vpop.f32.mrb[0].mxu0
  %v4806 = vadd.f32 %v4766, %v4805
  %v4807 = vpop.f32.mrb[0].mxu0
  %v4808 = vpop.f32.mrb[0].mxu0
  %v4809 = vpop.f32.mrb[0].mxu0
  %4810 = vdwg.mxu0
  %4811 = vmatprep.subr.bf16.mxu0 0
  %4812 = vmatpush1.bf16.msra.mxu0 %v3563
  %4813 = vmatprep.subr.bf16.mxu0 0
  %4814 = vmatpush1.bf16.msra.mxu0 %v3564
  %4815 = vmatprep.subr.bf16.mxu0 0
  %4816 = vmatpush1.bf16.msra.mxu0 %v3565
  %4817 = vmatprep.subr.bf16.mxu0 0
  %4818 = vmatpush1.bf16.msra.mxu0 %v3566
  %4819 = vmatprep.subr.bf16.mxu0 0
  %4820 = vmatpush1.bf16.msra.mxu0 %v3567
  %4821 = vmatprep.subr.bf16.mxu0 0
  %4822 = vmatpush1.bf16.msra.mxu0 %v3568
  %4823 = vmatprep.subr.bf16.mxu0 0
  %4824 = vmatpush1.bf16.msra.mxu0 %v3569
  %4825 = vmatprep.subr.bf16.mxu0 0
  %4826 = vmatpush1.bf16.msra.mxu0 %v3570
  %4827 = vmatprep.subr.bf16.mxu0 0
  %4828 = vmatpush1.bf16.msra.mxu0 %v3571
  %4829 = vmatprep.subr.bf16.mxu0 0
  %4830 = vmatpush1.bf16.msra.mxu0 %v3572
  %4831 = vmatprep.subr.bf16.mxu0 0
  %4832 = vmatpush1.bf16.msra.mxu0 %v3573
  %4833 = vmatprep.subr.bf16.mxu0 0
  %4834 = vmatpush1.bf16.msra.mxu0 %v3574
  %4835 = vmatprep.subr.bf16.mxu0 0
  %4836 = vmatpush1.bf16.msra.mxu0 %v3575
  %4837 = vmatprep.subr.bf16.mxu0 0
  %4838 = vmatpush1.bf16.msra.mxu0 %v3576
  %4839 = vmatprep.subr.bf16.mxu0 0
  %4840 = vmatpush1.bf16.msra.mxu0 %v3577
  %4841 = vmatprep.subr.bf16.mxu0 0
  %4842 = vmatpush1.bf16.msra.mxu0 %v3578
  %4843 = vmatprep.mubr.bf16.mxu0 %v401
  %4844 = vmatmul.mubr.bf16.gmra.mrb[0].mxu0 %v400
  %v4845 = vpop.f32.mrb[0].mxu0
  %v4846 = vadd.f32 %v4806, %v4845
  %v4847 = vpop.f32.mrb[0].mxu0
  %v4848 = vpop.f32.mrb[0].mxu0
  %v4849 = vpop.f32.mrb[0].mxu0
  %4850 = vdwg.mxu0
  %4851 = vmatprep.subr.bf16.mxu0 0
  %4852 = vmatpush1.bf16.msra.mxu0 %v3579
  %4853 = vmatprep.subr.bf16.mxu0 0
  %4854 = vmatpush1.bf16.msra.mxu0 %v3580
  %4855 = vmatprep.subr.bf16.mxu0 0
  %4856 = vmatpush1.bf16.msra.mxu0 %v3581
  %4857 = vmatprep.subr.bf16.mxu0 0
  %4858 = vmatpush1.bf16.msra.mxu0 %v3582
  %4859 = vmatprep.subr.bf16.mxu0 0
  %4860 = vmatpush1.bf16.msra.mxu0 %v3583
  %4861 = vmatprep.subr.bf16.mxu0 0
  %4862 = vmatpush1.bf16.msra.mxu0 %v3584
  %4863 = vmatprep.subr.bf16.mxu0 0
  %4864 = vmatpush1.bf16.msra.mxu0 %v3585
  %4865 = vmatprep.subr.bf16.mxu0 0
  %4866 = vmatpush1.bf16.msra.mxu0 %v3586
  %4867 = vmatprep.subr.bf16.mxu0 0
  %4868 = vmatpush1.bf16.msra.mxu0 %v3587
  %4869 = vmatprep.subr.bf16.mxu0 0
  %4870 = vmatpush1.bf16.msra.mxu0 %v3588
  %4871 = vmatprep.subr.bf16.mxu0 0
  %4872 = vmatpush1.bf16.msra.mxu0 %v3589
  %4873 = vmatprep.subr.bf16.mxu0 0
  %4874 = vmatpush1.bf16.msra.mxu0 %v3590
  %4875 = vmatprep.subr.bf16.mxu0 0
  %4876 = vmatpush1.bf16.msra.mxu0 %v3591
  %4877 = vmatprep.subr.bf16.mxu0 0
  %4878 = vmatpush1.bf16.msra.mxu0 %v3592
  %4879 = vmatprep.subr.bf16.mxu0 0
  %4880 = vmatpush1.bf16.msra.mxu0 %v3593
  %4881 = vmatprep.subr.bf16.mxu0 0
  %4882 = vmatpush1.bf16.msra.mxu0 %v3594
  %4883 = vmatprep.mubr.bf16.mxu0 %v403
  %4884 = vmatmul.mubr.bf16.gmra.mrb[0].mxu0 %v402
  %v4885 = vpop.f32.mrb[0].mxu0
  %v4886 = vadd.f32 %v4846, %v4885
  %v4887 = vpop.f32.mrb[0].mxu0
  %v4888 = vpop.f32.mrb[0].mxu0
  %v4889 = vpop.f32.mrb[0].mxu0
  %4890 = vdwg.mxu0
  %4891 = vmatprep.subr.bf16.mxu0 0
  %4892 = vmatpush1.bf16.msra.mxu0 %v3595
  %4893 = vmatprep.subr.bf16.mxu0 0
  %4894 = vmatpush1.bf16.msra.mxu0 %v3596
  %4895 = vmatprep.subr.bf16.mxu0 0
  %4896 = vmatpush1.bf16.msra.mxu0 %v3597
  %4897 = vmatprep.subr.bf16.mxu0 0
  %4898 = vmatpush1.bf16.msra.mxu0 %v3598
  %4899 = vmatprep.subr.bf16.mxu0 0
  %4900 = vmatpush1.bf16.msra.mxu0 %v3599
  %4901 = vmatprep.subr.bf16.mxu0 0
  %4902 = vmatpush1.bf16.msra.mxu0 %v3600
  %4903 = vmatprep.subr.bf16.mxu0 0
  %4904 = vmatpush1.bf16.msra.mxu0 %v3601
  %4905 = vmatprep.subr.bf16.mxu0 0
  %4906 = vmatpush1.bf16.msra.mxu0 %v3602
  %4907 = vmatprep.subr.bf16.mxu0 0
  %4908 = vmatpush1.bf16.msra.mxu0 %v3603
  %4909 = vmatprep.subr.bf16.mxu0 0
  %4910 = vmatpush1.bf16.msra.mxu0 %v3604
  %4911 = vmatprep.subr.bf16.mxu0 0
  %4912 = vmatpush1.bf16.msra.mxu0 %v3605
  %4913 = vmatprep.subr.bf16.mxu0 0
  %4914 = vmatpush1.bf16.msra.mxu0 %v3606
  %4915 = vmatprep.subr.bf16.mxu0 0
  %4916 = vmatpush1.bf16.msra.mxu0 %v3607
  %4917 = vmatprep.subr.bf16.mxu0 0
  %4918 = vmatpush1.bf16.msra.mxu0 %v3608
  %4919 = vmatprep.subr.bf16.mxu0 0
  %4920 = vmatpush1.bf16.msra.mxu0 %v3609
  %4921 = vmatprep.subr.bf16.mxu0 0
  %4922 = vmatpush1.bf16.msra.mxu0 %v3610
  %4923 = vmatprep.mubr.bf16.mxu0 %v405
  %4924 = vmatmul.mubr.bf16.gmra.mrb[0].mxu0 %v404
  %v4925 = vpop.f32.mrb[0].mxu0
  %v4926 = vadd.f32 %v4886, %v4925
  %v4927 = vpop.f32.mrb[0].mxu0
  %v4928 = vpop.f32.mrb[0].mxu0
  %v4929 = vpop.f32.mrb[0].mxu0
  %4930 = vdwg.mxu0
  %4931 = vmatprep.subr.bf16.mxu0 0
  %4932 = vmatpush1.bf16.msra.mxu0 %v3611
  %4933 = vmatprep.subr.bf16.mxu0 0
  %4934 = vmatpush1.bf16.msra.mxu0 %v3612
  %4935 = vmatprep.subr.bf16.mxu0 0
  %4936 = vmatpush1.bf16.msra.mxu0 %v3613
  %4937 = vmatprep.subr.bf16.mxu0 0
  %4938 = vmatpush1.bf16.msra.mxu0 %v3614
  %4939 = vmatprep.subr.bf16.mxu0 0
  %4940 = vmatpush1.bf16.msra.mxu0 %v3615
  %4941 = vmatprep.subr.bf16.mxu0 0
  %4942 = vmatpush1.bf16.msra.mxu0 %v3616
  %4943 = vmatprep.subr.bf16.mxu0 0
  %4944 = vmatpush1.bf16.msra.mxu0 %v3617
  %4945 = vmatprep.subr.bf16.mxu0 0
  %4946 = vmatpush1.bf16.msra.mxu0 %v3618
  %4947 = vmatprep.subr.bf16.mxu0 0
  %4948 = vmatpush1.bf16.msra.mxu0 %v3619
  %4949 = vmatprep.subr.bf16.mxu0 0
  %4950 = vmatpush1.bf16.msra.mxu0 %v3620
  %4951 = vmatprep.subr.bf16.mxu0 0
  %4952 = vmatpush1.bf16.msra.mxu0 %v3621
  %4953 = vmatprep.subr.bf16.mxu0 0
  %4954 = vmatpush1.bf16.msra.mxu0 %v3622
  %4955 = vmatprep.subr.bf16.mxu0 0
  %4956 = vmatpush1.bf16.msra.mxu0 %v3623
  %4957 = vmatprep.subr.bf16.mxu0 0
  %4958 = vmatpush1.bf16.msra.mxu0 %v3624
  %4959 = vmatprep.subr.bf16.mxu0 0
  %4960 = vmatpush1.bf16.msra.mxu0 %v3625
  %4961 = vmatprep.subr.bf16.mxu0 0
  %4962 = vmatpush1.bf16.msra.mxu0 %v3626
  %4963 = vmatprep.mubr.bf16.mxu0 %v407
  %4964 = vmatmul.mubr.bf16.gmra.mrb[0].mxu0 %v406
  %v4965 = vpop.f32.mrb[0].mxu0
  %v4966 = vadd.f32 %v4926, %v4965
  %v4967 = vpop.f32.mrb[0].mxu0
  %v4968 = vpop.f32.mrb[0].mxu0
  %v4969 = vpop.f32.mrb[0].mxu0
  %4970 = vdwg.mxu0
  %4971 = vmatprep.subr.bf16.mxu0 0
  %4972 = vmatpush1.bf16.msra.mxu0 %v3627
  %4973 = vmatprep.subr.bf16.mxu0 0
  %4974 = vmatpush1.bf16.msra.mxu0 %v3628
  %4975 = vmatprep.subr.bf16.mxu0 0
  %4976 = vmatpush1.bf16.msra.mxu0 %v3629
  %4977 = vmatprep.subr.bf16.mxu0 0
  %4978 = vmatpush1.bf16.msra.mxu0 %v3630
  %4979 = vmatprep.subr.bf16.mxu0 0
  %4980 = vmatpush1.bf16.msra.mxu0 %v3631
  %4981 = vmatprep.subr.bf16.mxu0 0
  %4982 = vmatpush1.bf16.msra.mxu0 %v3632
  %4983 = vmatprep.subr.bf16.mxu0 0
  %4984 = vmatpush1.bf16.msra.mxu0 %v3633
  %4985 = vmatprep.subr.bf16.mxu0 0
  %4986 = vmatpush1.bf16.msra.mxu0 %v3634
  %4987 = vmatprep.subr.bf16.mxu0 0
  %4988 = vmatpush1.bf16.msra.mxu0 %v3635
  %4989 = vmatprep.subr.bf16.mxu0 0
  %4990 = vmatpush1.bf16.msra.mxu0 %v3636
  %4991 = vmatprep.subr.bf16.mxu0 0
  %4992 = vmatpush1.bf16.msra.mxu0 %v3637
  %4993 = vmatprep.subr.bf16.mxu0 0
  %4994 = vmatpush1.bf16.msra.mxu0 %v3638
  %4995 = vmatprep.subr.bf16.mxu0 0
  %4996 = vmatpush1.bf16.msra.mxu0 %v3639
  %4997 = vmatprep.subr.bf16.mxu0 0
  %4998 = vmatpush1.bf16.msra.mxu0 %v3640
  %4999 = vmatprep.subr.bf16.mxu0 0
  %5000 = vmatpush1.bf16.msra.mxu0 %v3641
  %5001 = vmatprep.subr.bf16.mxu0 0
  %5002 = vmatpush1.bf16.msra.mxu0 %v3642
  %5003 = vmatprep.mubr.bf16.mxu0 %v409
  %5004 = vmatmul.mubr.bf16.gmra.mrb[0].mxu0 %v408
  %v5005 = vpop.f32.mrb[0].mxu0
  %v5006 = vadd.f32 %v4966, %v5005
  %v5007 = vpop.f32.mrb[0].mxu0
  %v5008 = vpop.f32.mrb[0].mxu0
  %v5009 = vpop.f32.mrb[0].mxu0
  %5010 = vdwg.mxu0
  %5011 = vmatprep.subr.bf16.mxu0 0
  %5012 = vmatpush1.bf16.msra.mxu0 %v3643
  %5013 = vmatprep.subr.bf16.mxu0 0
  %5014 = vmatpush1.bf16.msra.mxu0 %v3644
  %5015 = vmatprep.subr.bf16.mxu0 0
  %5016 = vmatpush1.bf16.msra.mxu0 %v3645
  %5017 = vmatprep.subr.bf16.mxu0 0
  %5018 = vmatpush1.bf16.msra.mxu0 %v3646
  %5019 = vmatprep.subr.bf16.mxu0 0
  %5020 = vmatpush1.bf16.msra.mxu0 %v3647
  %5021 = vmatprep.subr.bf16.mxu0 0
  %5022 = vmatpush1.bf16.msra.mxu0 %v3648
  %5023 = vmatprep.subr.bf16.mxu0 0
  %5024 = vmatpush1.bf16.msra.mxu0 %v3649
  %5025 = vmatprep.subr.bf16.mxu0 0
  %5026 = vmatpush1.bf16.msra.mxu0 %v3650
  %5027 = vmatprep.subr.bf16.mxu0 0
  %5028 = vmatpush1.bf16.msra.mxu0 %v3651
  %5029 = vmatprep.subr.bf16.mxu0 0
  %5030 = vmatpush1.bf16.msra.mxu0 %v3652
  %5031 = vmatprep.subr.bf16.mxu0 0
  %5032 = vmatpush1.bf16.msra.mxu0 %v3653
  %5033 = vmatprep.subr.bf16.mxu0 0
  %5034 = vmatpush1.bf16.msra.mxu0 %v3654
  %5035 = vmatprep.subr.bf16.mxu0 0
  %5036 = vmatpush1.bf16.msra.mxu0 %v3655
  %5037 = vmatprep.subr.bf16.mxu0 0
  %5038 = vmatpush1.bf16.msra.mxu0 %v3656
  %5039 = vmatprep.subr.bf16.mxu0 0
  %5040 = vmatpush1.bf16.msra.mxu0 %v3657
  %5041 = vmatprep.subr.bf16.mxu0 0
  %5042 = vmatpush1.bf16.msra.mxu0 %v3658
  %5043 = vmatprep.mubr.bf16.mxu0 %v411
  %5044 = vmatmul.mubr.bf16.gmra.mrb[0].mxu0 %v410
  %v5045 = vpop.f32.mrb[0].mxu0
  %v5046 = vadd.f32 %v5006, %v5045
  %v5047 = vpop.f32.mrb[0].mxu0
  %v5048 = vpop.f32.mrb[0].mxu0
  %v5049 = vpop.f32.mrb[0].mxu0
  %5050 = vdwg.mxu0
  %5051 = vmatprep.subr.bf16.mxu0 0
  %5052 = vmatpush1.bf16.msra.mxu0 %v3659
  %5053 = vmatprep.subr.bf16.mxu0 0
  %5054 = vmatpush1.bf16.msra.mxu0 %v3660
  %5055 = vmatprep.subr.bf16.mxu0 0
  %5056 = vmatpush1.bf16.msra.mxu0 %v3661
  %5057 = vmatprep.subr.bf16.mxu0 0
  %5058 = vmatpush1.bf16.msra.mxu0 %v3662
  %5059 = vmatprep.subr.bf16.mxu0 0
  %5060 = vmatpush1.bf16.msra.mxu0 %v3663
  %5061 = vmatprep.subr.bf16.mxu0 0
  %5062 = vmatpush1.bf16.msra.mxu0 %v3664
  %5063 = vmatprep.subr.bf16.mxu0 0
  %5064 = vmatpush1.bf16.msra.mxu0 %v3665
  %5065 = vmatprep.subr.bf16.mxu0 0
  %5066 = vmatpush1.bf16.msra.mxu0 %v3666
  %5067 = vmatprep.subr.bf16.mxu0 0
  %5068 = vmatpush1.bf16.msra.mxu0 %v3667
  %5069 = vmatprep.subr.bf16.mxu0 0
  %5070 = vmatpush1.bf16.msra.mxu0 %v3668
  %5071 = vmatprep.subr.bf16.mxu0 0
  %5072 = vmatpush1.bf16.msra.mxu0 %v3669
  %5073 = vmatprep.subr.bf16.mxu0 0
  %5074 = vmatpush1.bf16.msra.mxu0 %v3670
  %5075 = vmatprep.subr.bf16.mxu0 0
  %5076 = vmatpush1.bf16.msra.mxu0 %v3671
  %5077 = vmatprep.subr.bf16.mxu0 0
  %5078 = vmatpush1.bf16.msra.mxu0 %v3672
  %5079 = vmatprep.subr.bf16.mxu0 0
  %5080 = vmatpush1.bf16.msra.mxu0 %v3673
  %5081 = vmatprep.subr.bf16.mxu0 0
  %5082 = vmatpush1.bf16.msra.mxu0 %v3674
  %5083 = vmatprep.mubr.bf16.mxu0 %v413
  %5084 = vmatmul.mubr.bf16.gmra.mrb[0].mxu0 %v412
  %v5085 = vpop.f32.mrb[0].mxu0
  %v5086 = vadd.f32 %v5046, %v5085
  %v5087 = vpop.f32.mrb[0].mxu0
  %v5088 = vpop.f32.mrb[0].mxu0
  %v5089 = vpop.f32.mrb[0].mxu0
  %5090 = vdwg.mxu0
  %5091 = vmatprep.subr.bf16.mxu0 0
  %5092 = vmatpush1.bf16.msra.mxu0 %v3675
  %5093 = vmatprep.subr.bf16.mxu0 0
  %5094 = vmatpush1.bf16.msra.mxu0 %v3676
  %5095 = vmatprep.subr.bf16.mxu0 0
  %5096 = vmatpush1.bf16.msra.mxu0 %v3677
  %5097 = vmatprep.subr.bf16.mxu0 0
  %5098 = vmatpush1.bf16.msra.mxu0 %v3678
  %5099 = vmatprep.subr.bf16.mxu0 0
  %5100 = vmatpush1.bf16.msra.mxu0 %v3679
  %5101 = vmatprep.subr.bf16.mxu0 0
  %5102 = vmatpush1.bf16.msra.mxu0 %v3680
  %5103 = vmatprep.subr.bf16.mxu0 0
  %5104 = vmatpush1.bf16.msra.mxu0 %v3681
  %5105 = vmatprep.subr.bf16.mxu0 0
  %5106 = vmatpush1.bf16.msra.mxu0 %v3682
  %5107 = vmatprep.subr.bf16.mxu0 0
  %5108 = vmatpush1.bf16.msra.mxu0 %v3683
  %5109 = vmatprep.subr.bf16.mxu0 0
  %5110 = vmatpush1.bf16.msra.mxu0 %v3684
  %5111 = vmatprep.subr.bf16.mxu0 0
  %5112 = vmatpush1.bf16.msra.mxu0 %v3685
  %5113 = vmatprep.subr.bf16.mxu0 0
  %5114 = vmatpush1.bf16.msra.mxu0 %v3686
  %5115 = vmatprep.subr.bf16.mxu0 0
  %5116 = vmatpush1.bf16.msra.mxu0 %v3687
  %5117 = vmatprep.subr.bf16.mxu0 0
  %5118 = vmatpush1.bf16.msra.mxu0 %v3688
  %5119 = vmatprep.subr.bf16.mxu0 0
  %5120 = vmatpush1.bf16.msra.mxu0 %v3689
  %5121 = vmatprep.subr.bf16.mxu0 0
  %5122 = vmatpush1.bf16.msra.mxu0 %v3690
  %5123 = vmatprep.mubr.bf16.mxu0 %v415
  %5124 = vmatmul.mubr.bf16.gmra.mrb[0].mxu0 %v414
  %v5125 = vpop.f32.mrb[0].mxu0
  %v5126 = vadd.f32 %v5086, %v5125
  %v5127 = vpop.f32.mrb[0].mxu0
  %v5128 = vpop.f32.mrb[0].mxu0
  %v5129 = vpop.f32.mrb[0].mxu0
  %5130 = vdwg.mxu0
  %5131 = vmatprep.subr.bf16.mxu0 0
  %5132 = vmatpush1.bf16.msra.mxu0 %v3691
  %5133 = vmatprep.subr.bf16.mxu0 0
  %5134 = vmatpush1.bf16.msra.mxu0 %v3692
  %5135 = vmatprep.subr.bf16.mxu0 0
  %5136 = vmatpush1.bf16.msra.mxu0 %v3693
  %5137 = vmatprep.subr.bf16.mxu0 0
  %5138 = vmatpush1.bf16.msra.mxu0 %v3694
  %5139 = vmatprep.subr.bf16.mxu0 0
  %5140 = vmatpush1.bf16.msra.mxu0 %v3695
  %5141 = vmatprep.subr.bf16.mxu0 0
  %5142 = vmatpush1.bf16.msra.mxu0 %v3696
  %5143 = vmatprep.subr.bf16.mxu0 0
  %5144 = vmatpush1.bf16.msra.mxu0 %v3697
  %5145 = vmatprep.subr.bf16.mxu0 0
  %5146 = vmatpush1.bf16.msra.mxu0 %v3698
  %5147 = vmatprep.subr.bf16.mxu0 0
  %5148 = vmatpush1.bf16.msra.mxu0 %v3699
  %5149 = vmatprep.subr.bf16.mxu0 0
  %5150 = vmatpush1.bf16.msra.mxu0 %v3700
  %5151 = vmatprep.subr.bf16.mxu0 0
  %5152 = vmatpush1.bf16.msra.mxu0 %v3701
  %5153 = vmatprep.subr.bf16.mxu0 0
  %5154 = vmatpush1.bf16.msra.mxu0 %v3702
  %5155 = vmatprep.subr.bf16.mxu0 0
  %5156 = vmatpush1.bf16.msra.mxu0 %v3703
  %5157 = vmatprep.subr.bf16.mxu0 0
  %5158 = vmatpush1.bf16.msra.mxu0 %v3704
  %5159 = vmatprep.subr.bf16.mxu0 0
  %5160 = vmatpush1.bf16.msra.mxu0 %v3705
  %5161 = vmatprep.subr.bf16.mxu0 0
  %5162 = vmatpush1.bf16.msra.mxu0 %v3706
  %5163 = vmatprep.mubr.bf16.mxu0 %v417
  %5164 = vmatmul.mubr.bf16.gmra.mrb[0].mxu0 %v416
  %v5165 = vpop.f32.mrb[0].mxu0
  %v5166 = vadd.f32 %v5126, %v5165
  %v5167 = vpop.f32.mrb[0].mxu0
  %v5168 = vpop.f32.mrb[0].mxu0
  %v5169 = vpop.f32.mrb[0].mxu0
  %5170 = vdwg.mxu0
  %5171 = vmatprep.subr.bf16.mxu0 0
  %5172 = vmatpush1.bf16.msra.mxu0 %v3707
  %5173 = vmatprep.subr.bf16.mxu0 0
  %5174 = vmatpush1.bf16.msra.mxu0 %v3708
  %5175 = vmatprep.subr.bf16.mxu0 0
  %5176 = vmatpush1.bf16.msra.mxu0 %v3709
  %5177 = vmatprep.subr.bf16.mxu0 0
  %5178 = vmatpush1.bf16.msra.mxu0 %v3710
  %5179 = vmatprep.subr.bf16.mxu0 0
  %5180 = vmatpush1.bf16.msra.mxu0 %v3711
  %5181 = vmatprep.subr.bf16.mxu0 0
  %5182 = vmatpush1.bf16.msra.mxu0 %v3712
  %5183 = vmatprep.subr.bf16.mxu0 0
  %5184 = vmatpush1.bf16.msra.mxu0 %v3713
  %5185 = vmatprep.subr.bf16.mxu0 0
  %5186 = vmatpush1.bf16.msra.mxu0 %v3714
  %5187 = vmatprep.subr.bf16.mxu0 0
  %5188 = vmatpush1.bf16.msra.mxu0 %v3715
  %5189 = vmatprep.subr.bf16.mxu0 0
  %5190 = vmatpush1.bf16.msra.mxu0 %v3716
  %5191 = vmatprep.subr.bf16.mxu0 0
  %5192 = vmatpush1.bf16.msra.mxu0 %v3717
  %5193 = vmatprep.subr.bf16.mxu0 0
  %5194 = vmatpush1.bf16.msra.mxu0 %v3718
  %5195 = vmatprep.subr.bf16.mxu0 0
  %5196 = vmatpush1.bf16.msra.mxu0 %v3719
  %5197 = vmatprep.subr.bf16.mxu0 0
  %5198 = vmatpush1.bf16.msra.mxu0 %v3720
  %5199 = vmatprep.subr.bf16.mxu0 0
  %5200 = vmatpush1.bf16.msra.mxu0 %v3721
  %5201 = vmatprep.subr.bf16.mxu0 0
  %5202 = vmatpush1.bf16.msra.mxu0 %v3722
  %5203 = vmatprep.mubr.bf16.mxu0 %v419
  %5204 = vmatmul.mubr.bf16.gmra.mrb[0].mxu0 %v418
  %v5205 = vpop.f32.mrb[0].mxu0
  %v5206 = vadd.f32 %v5166, %v5205
  %v5207 = vpop.f32.mrb[0].mxu0
  %v5208 = vpop.f32.mrb[0].mxu0
  %v5209 = vpop.f32.mrb[0].mxu0
  %5210 = vdwg.mxu0
  %5211 = vmatprep.subr.bf16.mxu0 0
  %5212 = vmatpush1.bf16.msra.mxu0 %v3723
  %5213 = vmatprep.subr.bf16.mxu0 0
  %5214 = vmatpush1.bf16.msra.mxu0 %v3724
  %5215 = vmatprep.subr.bf16.mxu0 0
  %5216 = vmatpush1.bf16.msra.mxu0 %v3725
  %5217 = vmatprep.subr.bf16.mxu0 0
  %5218 = vmatpush1.bf16.msra.mxu0 %v3726
  %5219 = vmatprep.subr.bf16.mxu0 0
  %5220 = vmatpush1.bf16.msra.mxu0 %v3727
  %5221 = vmatprep.subr.bf16.mxu0 0
  %5222 = vmatpush1.bf16.msra.mxu0 %v3728
  %5223 = vmatprep.subr.bf16.mxu0 0
  %5224 = vmatpush1.bf16.msra.mxu0 %v3729
  %5225 = vmatprep.subr.bf16.mxu0 0
  %5226 = vmatpush1.bf16.msra.mxu0 %v3730
  %5227 = vmatprep.subr.bf16.mxu0 0
  %5228 = vmatpush1.bf16.msra.mxu0 %v3731
  %5229 = vmatprep.subr.bf16.mxu0 0
  %5230 = vmatpush1.bf16.msra.mxu0 %v3732
  %5231 = vmatprep.subr.bf16.mxu0 0
  %5232 = vmatpush1.bf16.msra.mxu0 %v3733
  %5233 = vmatprep.subr.bf16.mxu0 0
  %5234 = vmatpush1.bf16.msra.mxu0 %v3734
  %5235 = vmatprep.subr.bf16.mxu0 0
  %5236 = vmatpush1.bf16.msra.mxu0 %v3735
  %5237 = vmatprep.subr.bf16.mxu0 0
  %5238 = vmatpush1.bf16.msra.mxu0 %v3736
  %5239 = vmatprep.subr.bf16.mxu0 0
  %5240 = vmatpush1.bf16.msra.mxu0 %v3737
  %5241 = vmatprep.subr.bf16.mxu0 0
  %5242 = vmatpush1.bf16.msra.mxu0 %v3738
  %5243 = vmatprep.mubr.bf16.mxu0 %v421
  %5244 = vmatmul.mubr.bf16.gmra.mrb[0].mxu0 %v420
  %v5245 = vpop.f32.mrb[0].mxu0
  %v5246 = vadd.f32 %v5206, %v5245
  %v5247 = vpop.f32.mrb[0].mxu0
  %v5248 = vpop.f32.mrb[0].mxu0
  %v5249 = vpop.f32.mrb[0].mxu0
  %5250 = vdwg.mxu0
  %5251 = vmatprep.subr.bf16.mxu0 0
  %5252 = vmatpush1.bf16.msra.mxu0 %v3739
  %5253 = vmatprep.subr.bf16.mxu0 0
  %5254 = vmatpush1.bf16.msra.mxu0 %v3740
  %5255 = vmatprep.subr.bf16.mxu0 0
  %5256 = vmatpush1.bf16.msra.mxu0 %v3741
  %5257 = vmatprep.subr.bf16.mxu0 0
  %5258 = vmatpush1.bf16.msra.mxu0 %v3742
  %5259 = vmatprep.subr.bf16.mxu0 0
  %5260 = vmatpush1.bf16.msra.mxu0 %v3743
  %5261 = vmatprep.subr.bf16.mxu0 0
  %5262 = vmatpush1.bf16.msra.mxu0 %v3744
  %5263 = vmatprep.subr.bf16.mxu0 0
  %5264 = vmatpush1.bf16.msra.mxu0 %v3745
  %5265 = vmatprep.subr.bf16.mxu0 0
  %5266 = vmatpush1.bf16.msra.mxu0 %v3746
  %5267 = vmatprep.subr.bf16.mxu0 0
  %5268 = vmatpush1.bf16.msra.mxu0 %v3747
  %5269 = vmatprep.subr.bf16.mxu0 0
  %5270 = vmatpush1.bf16.msra.mxu0 %v3748
  %5271 = vmatprep.subr.bf16.mxu0 0
  %5272 = vmatpush1.bf16.msra.mxu0 %v3749
  %5273 = vmatprep.subr.bf16.mxu0 0
  %5274 = vmatpush1.bf16.msra.mxu0 %v3750
  %5275 = vmatprep.subr.bf16.mxu0 0
  %5276 = vmatpush1.bf16.msra.mxu0 %v3751
  %5277 = vmatprep.subr.bf16.mxu0 0
  %5278 = vmatpush1.bf16.msra.mxu0 %v3752
  %5279 = vmatprep.subr.bf16.mxu0 0
  %5280 = vmatpush1.bf16.msra.mxu0 %v3753
  %5281 = vmatprep.subr.bf16.mxu0 0
  %5282 = vmatpush1.bf16.msra.mxu0 %v3754
  %5283 = vmatprep.mubr.bf16.mxu0 %v423
  %5284 = vmatmul.mubr.bf16.gmra.mrb[0].mxu0 %v422
  %v5285 = vpop.f32.mrb[0].mxu0
  %v5286 = vadd.f32 %v5246, %v5285
  %v5287 = vpop.f32.mrb[0].mxu0
  %v5288 = vpop.f32.mrb[0].mxu0
  %v5289 = vpop.f32.mrb[0].mxu0
  %5290 = vdwg.mxu0
  %5291 = vmatprep.subr.bf16.mxu0 0
  %5292 = vmatpush1.bf16.msra.mxu0 %v3755
  %5293 = vmatprep.subr.bf16.mxu0 0
  %5294 = vmatpush1.bf16.msra.mxu0 %v3756
  %5295 = vmatprep.subr.bf16.mxu0 0
  %5296 = vmatpush1.bf16.msra.mxu0 %v3757
  %5297 = vmatprep.subr.bf16.mxu0 0
  %5298 = vmatpush1.bf16.msra.mxu0 %v3758
  %5299 = vmatprep.subr.bf16.mxu0 0
  %5300 = vmatpush1.bf16.msra.mxu0 %v3759
  %5301 = vmatprep.subr.bf16.mxu0 0
  %5302 = vmatpush1.bf16.msra.mxu0 %v3760
  %5303 = vmatprep.subr.bf16.mxu0 0
  %5304 = vmatpush1.bf16.msra.mxu0 %v3761
  %5305 = vmatprep.subr.bf16.mxu0 0
  %5306 = vmatpush1.bf16.msra.mxu0 %v3762
  %5307 = vmatprep.subr.bf16.mxu0 0
  %5308 = vmatpush1.bf16.msra.mxu0 %v3763
  %5309 = vmatprep.subr.bf16.mxu0 0
  %5310 = vmatpush1.bf16.msra.mxu0 %v3764
  %5311 = vmatprep.subr.bf16.mxu0 0
  %5312 = vmatpush1.bf16.msra.mxu0 %v3765
  %5313 = vmatprep.subr.bf16.mxu0 0
  %5314 = vmatpush1.bf16.msra.mxu0 %v3766
  %5315 = vmatprep.subr.bf16.mxu0 0
  %5316 = vmatpush1.bf16.msra.mxu0 %v3767
  %5317 = vmatprep.subr.bf16.mxu0 0
  %5318 = vmatpush1.bf16.msra.mxu0 %v3768
  %5319 = vmatprep.subr.bf16.mxu0 0
  %5320 = vmatpush1.bf16.msra.mxu0 %v3769
  %5321 = vmatprep.subr.bf16.mxu0 0
  %5322 = vmatpush1.bf16.msra.mxu0 %v3770
  %5323 = vmatprep.mubr.bf16.mxu0 %v425
  %5324 = vmatmul.mubr.bf16.gmra.mrb[0].mxu0 %v424
  %v5325 = vpop.f32.mrb[0].mxu0
  %v5326 = vadd.f32 %v5286, %v5325
  %v5327 = vpop.f32.mrb[0].mxu0
  %v5328 = vpop.f32.mrb[0].mxu0
  %v5329 = vpop.f32.mrb[0].mxu0
  %5330 = vdwg.mxu0
  %5331 = vmatprep.subr.bf16.mxu0 0
  %5332 = vmatpush1.bf16.msra.mxu0 %v3771
  %5333 = vmatprep.subr.bf16.mxu0 0
  %5334 = vmatpush1.bf16.msra.mxu0 %v3772
  %5335 = vmatprep.subr.bf16.mxu0 0
  %5336 = vmatpush1.bf16.msra.mxu0 %v3773
  %5337 = vmatprep.subr.bf16.mxu0 0
  %5338 = vmatpush1.bf16.msra.mxu0 %v3774
  %5339 = vmatprep.subr.bf16.mxu0 0
  %5340 = vmatpush1.bf16.msra.mxu0 %v3775
  %5341 = vmatprep.subr.bf16.mxu0 0
  %5342 = vmatpush1.bf16.msra.mxu0 %v3776
  %5343 = vmatprep.subr.bf16.mxu0 0
  %5344 = vmatpush1.bf16.msra.mxu0 %v3777
  %5345 = vmatprep.subr.bf16.mxu0 0
  %5346 = vmatpush1.bf16.msra.mxu0 %v3778
  %5347 = vmatprep.subr.bf16.mxu0 0
  %5348 = vmatpush1.bf16.msra.mxu0 %v3779
  %5349 = vmatprep.subr.bf16.mxu0 0
  %5350 = vmatpush1.bf16.msra.mxu0 %v3780
  %5351 = vmatprep.subr.bf16.mxu0 0
  %5352 = vmatpush1.bf16.msra.mxu0 %v3781
  %5353 = vmatprep.subr.bf16.mxu0 0
  %5354 = vmatpush1.bf16.msra.mxu0 %v3782
  %5355 = vmatprep.subr.bf16.mxu0 0
  %5356 = vmatpush1.bf16.msra.mxu0 %v3783
  %5357 = vmatprep.subr.bf16.mxu0 0
  %5358 = vmatpush1.bf16.msra.mxu0 %v3784
  %5359 = vmatprep.subr.bf16.mxu0 0
  %5360 = vmatpush1.bf16.msra.mxu0 %v3785
  %5361 = vmatprep.subr.bf16.mxu0 0
  %5362 = vmatpush1.bf16.msra.mxu0 %v3786
  %5363 = vmatprep.mubr.bf16.mxu0 %v427
  %5364 = vmatmul.mubr.bf16.gmra.mrb[0].mxu0 %v426
  %v5365 = vpop.f32.mrb[0].mxu0
  %v5366 = vadd.f32 %v5326, %v5365
  %v5367 = vpop.f32.mrb[0].mxu0
  %v5368 = vpop.f32.mrb[0].mxu0
  %v5369 = vpop.f32.mrb[0].mxu0
  %5370 = vdwg.mxu0
  %5371 = vmatprep.subr.bf16.mxu0 0
  %5372 = vmatpush1.bf16.msra.mxu0 %v3787
  %5373 = vmatprep.subr.bf16.mxu0 0
  %5374 = vmatpush1.bf16.msra.mxu0 %v3788
  %5375 = vmatprep.subr.bf16.mxu0 0
  %5376 = vmatpush1.bf16.msra.mxu0 %v3789
  %5377 = vmatprep.subr.bf16.mxu0 0
  %5378 = vmatpush1.bf16.msra.mxu0 %v3790
  %5379 = vmatprep.subr.bf16.mxu0 0
  %5380 = vmatpush1.bf16.msra.mxu0 %v3791
  %5381 = vmatprep.subr.bf16.mxu0 0
  %5382 = vmatpush1.bf16.msra.mxu0 %v3792
  %5383 = vmatprep.subr.bf16.mxu0 0
  %5384 = vmatpush1.bf16.msra.mxu0 %v3793
  %5385 = vmatprep.subr.bf16.mxu0 0
  %5386 = vmatpush1.bf16.msra.mxu0 %v3794
  %5387 = vmatprep.subr.bf16.mxu0 0
  %5388 = vmatpush1.bf16.msra.mxu0 %v3795
  %5389 = vmatprep.subr.bf16.mxu0 0
  %5390 = vmatpush1.bf16.msra.mxu0 %v3796
  %5391 = vmatprep.subr.bf16.mxu0 0
  %5392 = vmatpush1.bf16.msra.mxu0 %v3797
  %5393 = vmatprep.subr.bf16.mxu0 0
  %5394 = vmatpush1.bf16.msra.mxu0 %v3798
  %5395 = vmatprep.subr.bf16.mxu0 0
  %5396 = vmatpush1.bf16.msra.mxu0 %v3799
  %5397 = vmatprep.subr.bf16.mxu0 0
  %5398 = vmatpush1.bf16.msra.mxu0 %v3800
  %5399 = vmatprep.subr.bf16.mxu0 0
  %5400 = vmatpush1.bf16.msra.mxu0 %v3801
  %5401 = vmatprep.subr.bf16.mxu0 0
  %5402 = vmatpush1.bf16.msra.mxu0 %v3802
  %5403 = vmatprep.mubr.bf16.mxu0 %v429
  %5404 = vmatmul.mubr.bf16.gmra.mrb[0].mxu0 %v428
  %v5405 = vpop.f32.mrb[0].mxu0
  %v5406 = vadd.f32 %v5366, %v5405
  %v5407 = vpop.f32.mrb[0].mxu0
  %v5408 = vpop.f32.mrb[0].mxu0
  %v5409 = vpop.f32.mrb[0].mxu0
  %5410 = vdwg.mxu0
  %5411 = vmatprep.subr.bf16.mxu0 0
  %5412 = vmatpush1.bf16.msra.mxu0 %v3803
  %5413 = vmatprep.subr.bf16.mxu0 0
  %5414 = vmatpush1.bf16.msra.mxu0 %v3804
  %5415 = vmatprep.subr.bf16.mxu0 0
  %5416 = vmatpush1.bf16.msra.mxu0 %v3805
  %5417 = vmatprep.subr.bf16.mxu0 0
  %5418 = vmatpush1.bf16.msra.mxu0 %v3806
  %5419 = vmatprep.subr.bf16.mxu0 0
  %5420 = vmatpush1.bf16.msra.mxu0 %v3807
  %5421 = vmatprep.subr.bf16.mxu0 0
  %5422 = vmatpush1.bf16.msra.mxu0 %v3808
  %5423 = vmatprep.subr.bf16.mxu0 0
  %5424 = vmatpush1.bf16.msra.mxu0 %v3809
  %5425 = vmatprep.subr.bf16.mxu0 0
  %5426 = vmatpush1.bf16.msra.mxu0 %v3810
  %5427 = vmatprep.subr.bf16.mxu0 0
  %5428 = vmatpush1.bf16.msra.mxu0 %v3811
  %5429 = vmatprep.subr.bf16.mxu0 0
  %5430 = vmatpush1.bf16.msra.mxu0 %v3812
  %5431 = vmatprep.subr.bf16.mxu0 0
  %5432 = vmatpush1.bf16.msra.mxu0 %v3813
  %5433 = vmatprep.subr.bf16.mxu0 0
  %5434 = vmatpush1.bf16.msra.mxu0 %v3814
  %5435 = vmatprep.subr.bf16.mxu0 0
  %5436 = vmatpush1.bf16.msra.mxu0 %v3815
  %5437 = vmatprep.subr.bf16.mxu0 0
  %5438 = vmatpush1.bf16.msra.mxu0 %v3816
  %5439 = vmatprep.subr.bf16.mxu0 0
  %5440 = vmatpush1.bf16.msra.mxu0 %v3817
  %5441 = vmatprep.subr.bf16.mxu0 0
  %5442 = vmatpush1.bf16.msra.mxu0 %v3818
  %5443 = vmatprep.mubr.bf16.mxu0 %v431
  %5444 = vmatmul.mubr.bf16.gmra.mrb[0].mxu0 %v430
  %v5445 = vpop.f32.mrb[0].mxu0
  %v5446 = vadd.f32 %v5406, %v5445
  %v5447 = vpop.f32.mrb[0].mxu0
  %v5448 = vpop.f32.mrb[0].mxu0
  %v5449 = vpop.f32.mrb[0].mxu0
  %5450 = vdwg.mxu0
  %5451 = vmatprep.subr.bf16.mxu0 0
  %5452 = vmatpush1.bf16.msra.mxu0 %v3819
  %5453 = vmatprep.subr.bf16.mxu0 0
  %5454 = vmatpush1.bf16.msra.mxu0 %v3820
  %5455 = vmatprep.subr.bf16.mxu0 0
  %5456 = vmatpush1.bf16.msra.mxu0 %v3821
  %5457 = vmatprep.subr.bf16.mxu0 0
  %5458 = vmatpush1.bf16.msra.mxu0 %v3822
  %5459 = vmatprep.subr.bf16.mxu0 0
  %5460 = vmatpush1.bf16.msra.mxu0 %v3823
  %5461 = vmatprep.subr.bf16.mxu0 0
  %5462 = vmatpush1.bf16.msra.mxu0 %v3824
  %5463 = vmatprep.subr.bf16.mxu0 0
  %5464 = vmatpush1.bf16.msra.mxu0 %v3825
  %5465 = vmatprep.subr.bf16.mxu0 0
  %5466 = vmatpush1.bf16.msra.mxu0 %v3826
  %5467 = vmatprep.subr.bf16.mxu0 0
  %5468 = vmatpush1.bf16.msra.mxu0 %v3827
  %5469 = vmatprep.subr.bf16.mxu0 0
  %5470 = vmatpush1.bf16.msra.mxu0 %v3828
  %5471 = vmatprep.subr.bf16.mxu0 0
  %5472 = vmatpush1.bf16.msra.mxu0 %v3829
  %5473 = vmatprep.subr.bf16.mxu0 0
  %5474 = vmatpush1.bf16.msra.mxu0 %v3830
  %5475 = vmatprep.subr.bf16.mxu0 0
  %5476 = vmatpush1.bf16.msra.mxu0 %v3831
  %5477 = vmatprep.subr.bf16.mxu0 0
  %5478 = vmatpush1.bf16.msra.mxu0 %v3832
  %5479 = vmatprep.subr.bf16.mxu0 0
  %5480 = vmatpush1.bf16.msra.mxu0 %v3833
  %5481 = vmatprep.subr.bf16.mxu0 0
  %5482 = vmatpush1.bf16.msra.mxu0 %v3834
  %5483 = vmatprep.mubr.bf16.mxu0 %v433
  %5484 = vmatmul.mubr.bf16.gmra.mrb[0].mxu0 %v432
  %v5485 = vpop.f32.mrb[0].mxu0
  %v5486 = vadd.f32 %v5446, %v5485
  %v5487 = vpop.f32.mrb[0].mxu0
  %v5488 = vpop.f32.mrb[0].mxu0
  %v5489 = vpop.f32.mrb[0].mxu0
  %5490 = vdwg.mxu0
  %5491 = vmatprep.subr.bf16.mxu0 0
  %5492 = vmatpush1.bf16.msra.mxu0 %v3835
  %5493 = vmatprep.subr.bf16.mxu0 0
  %5494 = vmatpush1.bf16.msra.mxu0 %v3836
  %5495 = vmatprep.subr.bf16.mxu0 0
  %5496 = vmatpush1.bf16.msra.mxu0 %v3837
  %5497 = vmatprep.subr.bf16.mxu0 0
  %5498 = vmatpush1.bf16.msra.mxu0 %v3838
  %5499 = vmatprep.subr.bf16.mxu0 0
  %5500 = vmatpush1.bf16.msra.mxu0 %v3839
  %5501 = vmatprep.subr.bf16.mxu0 0
  %5502 = vmatpush1.bf16.msra.mxu0 %v3840
  %5503 = vmatprep.subr.bf16.mxu0 0
  %5504 = vmatpush1.bf16.msra.mxu0 %v3841
  %5505 = vmatprep.subr.bf16.mxu0 0
  %5506 = vmatpush1.bf16.msra.mxu0 %v3842
  %5507 = vmatprep.subr.bf16.mxu0 0
  %5508 = vmatpush1.bf16.msra.mxu0 %v3843
  %5509 = vmatprep.subr.bf16.mxu0 0
  %5510 = vmatpush1.bf16.msra.mxu0 %v3844
  %5511 = vmatprep.subr.bf16.mxu0 0
  %5512 = vmatpush1.bf16.msra.mxu0 %v3845
  %5513 = vmatprep.subr.bf16.mxu0 0
  %5514 = vmatpush1.bf16.msra.mxu0 %v3846
  %5515 = vmatprep.subr.bf16.mxu0 0
  %5516 = vmatpush1.bf16.msra.mxu0 %v3847
  %5517 = vmatprep.subr.bf16.mxu0 0
  %5518 = vmatpush1.bf16.msra.mxu0 %v3848
  %5519 = vmatprep.subr.bf16.mxu0 0
  %5520 = vmatpush1.bf16.msra.mxu0 %v3849
  %5521 = vmatprep.subr.bf16.mxu0 0
  %5522 = vmatpush1.bf16.msra.mxu0 %v3850
  %5523 = vmatprep.mubr.bf16.mxu0 %v435
  %5524 = vmatmul.mubr.bf16.gmra.mrb[0].mxu0 %v434
  %v5525 = vpop.f32.mrb[0].mxu0
  %v5526 = vadd.f32 %v5486, %v5525
  %v5527 = vpop.f32.mrb[0].mxu0
  %v5528 = vpop.f32.mrb[0].mxu0
  %v5529 = vpop.f32.mrb[0].mxu0
  %5530 = vdwg.mxu0
  %5531 = vmatprep.subr.bf16.mxu0 0
  %5532 = vmatpush1.bf16.msra.mxu0 %v3851
  %5533 = vmatprep.subr.bf16.mxu0 0
  %5534 = vmatpush1.bf16.msra.mxu0 %v3852
  %5535 = vmatprep.subr.bf16.mxu0 0
  %5536 = vmatpush1.bf16.msra.mxu0 %v3853
  %5537 = vmatprep.subr.bf16.mxu0 0
  %5538 = vmatpush1.bf16.msra.mxu0 %v3854
  %5539 = vmatprep.subr.bf16.mxu0 0
  %5540 = vmatpush1.bf16.msra.mxu0 %v3855
  %5541 = vmatprep.subr.bf16.mxu0 0
  %5542 = vmatpush1.bf16.msra.mxu0 %v3856
  %5543 = vmatprep.subr.bf16.mxu0 0
  %5544 = vmatpush1.bf16.msra.mxu0 %v3857
  %5545 = vmatprep.subr.bf16.mxu0 0
  %5546 = vmatpush1.bf16.msra.mxu0 %v3858
  %5547 = vmatprep.subr.bf16.mxu0 0
  %5548 = vmatpush1.bf16.msra.mxu0 %v3859
  %5549 = vmatprep.subr.bf16.mxu0 0
  %5550 = vmatpush1.bf16.msra.mxu0 %v3860
  %5551 = vmatprep.subr.bf16.mxu0 0
  %5552 = vmatpush1.bf16.msra.mxu0 %v3861
  %5553 = vmatprep.subr.bf16.mxu0 0
  %5554 = vmatpush1.bf16.msra.mxu0 %v3862
  %5555 = vmatprep.subr.bf16.mxu0 0
  %5556 = vmatpush1.bf16.msra.mxu0 %v3863
  %5557 = vmatprep.subr.bf16.mxu0 0
  %5558 = vmatpush1.bf16.msra.mxu0 %v3864
  %5559 = vmatprep.subr.bf16.mxu0 0
  %5560 = vmatpush1.bf16.msra.mxu0 %v3865
  %5561 = vmatprep.subr.bf16.mxu0 0
  %5562 = vmatpush1.bf16.msra.mxu0 %v3866
  %5563 = vmatprep.mubr.bf16.mxu0 %v437
  %5564 = vmatmul.mubr.bf16.gmra.mrb[0].mxu0 %v436
  %v5565 = vpop.f32.mrb[0].mxu0
  %v5566 = vadd.f32 %v5526, %v5565
  %v5567 = vpop.f32.mrb[0].mxu0
  %v5568 = vpop.f32.mrb[0].mxu0
  %v5569 = vpop.f32.mrb[0].mxu0
  %5570 = vdwg.mxu0
  %5571 = vmatprep.subr.bf16.mxu0 0
  %5572 = vmatpush1.bf16.msra.mxu0 %v3867
  %5573 = vmatprep.subr.bf16.mxu0 0
  %5574 = vmatpush1.bf16.msra.mxu0 %v3868
  %5575 = vmatprep.subr.bf16.mxu0 0
  %5576 = vmatpush1.bf16.msra.mxu0 %v3869
  %5577 = vmatprep.subr.bf16.mxu0 0
  %5578 = vmatpush1.bf16.msra.mxu0 %v3870
  %5579 = vmatprep.subr.bf16.mxu0 0
  %5580 = vmatpush1.bf16.msra.mxu0 %v3871
  %5581 = vmatprep.subr.bf16.mxu0 0
  %5582 = vmatpush1.bf16.msra.mxu0 %v3872
  %5583 = vmatprep.subr.bf16.mxu0 0
  %5584 = vmatpush1.bf16.msra.mxu0 %v3873
  %5585 = vmatprep.subr.bf16.mxu0 0
  %5586 = vmatpush1.bf16.msra.mxu0 %v3874
  %5587 = vmatprep.subr.bf16.mxu0 0
  %5588 = vmatpush1.bf16.msra.mxu0 %v3875
  %5589 = vmatprep.subr.bf16.mxu0 0
  %5590 = vmatpush1.bf16.msra.mxu0 %v3876
  %5591 = vmatprep.subr.bf16.mxu0 0
  %5592 = vmatpush1.bf16.msra.mxu0 0
  %5593 = vmatprep.subr.bf16.mxu0 0
  %5594 = vmatpush1.bf16.msra.mxu0 0
  %5595 = vmatprep.subr.bf16.mxu0 0
  %5596 = vmatpush1.bf16.msra.mxu0 0
  %5597 = vmatprep.subr.bf16.mxu0 0
  %5598 = vmatpush1.bf16.msra.mxu0 0
  %5599 = vmatprep.subr.bf16.mxu0 0
  %5600 = vmatpush1.bf16.msra.mxu0 0
  %5601 = vmatprep.subr.bf16.mxu0 0
  %5602 = vmatpush1.bf16.msra.mxu0 0
  %5603 = vmatprep.mubr.bf16.mxu0 %v4369
  %5604 = vmatmul.mubr.bf16.gmra.mrb[0].mxu0 %v438
  %v5605 = vpop.f32.mrb[0].mxu0
  %v5606 = vadd.f32 %v5566, %v5605
  %v5607 = vpop.f32.mrb[0].mxu0
  %v5608 = vpop.f32.mrb[0].mxu0
  %v5609 = vpop.f32.mrb[0].mxu0
  %5610 = vdwg.mxu0
  %v5611 = vmax.f32 %v5606, 0.0
  %v5612 = vld [vmem:[%s3] sm:$0xff]
  %v5613 = vld [vmem:[%s3 + $0x8] sm:$0xff]
  %v5614 = vld [vmem:[%s3 + $0x10] sm:$0xff]
  %v5615 = vld [vmem:[%s3 + $0x18] sm:$0xff]
  %v5616 = vld [vmem:[%s3 + $0x20] sm:$0xff]
  %v5617 = vld [vmem:[%s3 + $0x28] sm:$0xff]
  %v5618 = vld [vmem:[%s3 + $0x30] sm:$0xff]
  %v5619 = vld [vmem:[%s3 + $0x38] sm:$0xff]
  %v5620 = vld [vmem:[%s3 + $0x40] sm:$0xff]
  %v5621 = vld [vmem:[%s3 + $0x48] sm:$0xff]
  %v5622 = vld [vmem:[%s3 + $0x50] sm:$0xff]
  %v5623 = vld [vmem:[%s3 + $0x58] sm:$0xff]
  %v5624 = vld [vmem:[%s3 + $0x60] sm:$0xf]
  %v5625 = vld [vmem:[%s4] sm:$0x1]
  %v5627 = vlaneseq
  %v5628 = vshrl.u32 %v5627, 7
  %v5629 = vsub.s32 0, %v5628
  %v5630 = vrot.slane %v5625, %v5629
  %vm5632 = vcmask 818176
  %v5634 = vsel %vm5632, %v5611, 0
  %vm5636 = vcmask 1043456
  %v5638 = vsel %vm5636, %v5624, 0
  %5640 = vmatprep.subr.mxu0 0.0
  %5641 = vmatpush1.msra.mxu0 %v5612
  %5642 = vmatprep.subr.mxu0 0.0
  %5643 = vmatpush1.msra.mxu0 %v5613
  %5644 = vmatprep.subr.mxu0 0.0
  %5645 = vmatpush1.msra.mxu0 %v5614
  %5646 = vmatprep.subr.mxu0 0.0
  %5647 = vmatpush1.msra.mxu0 %v5615
  %5648 = vmatprep.subr.mxu0 0.0
  %5649 = vmatpush1.msra.mxu0 %v5616
  %5650 = vmatprep.subr.mxu0 0.0
  %5651 = vmatpush1.msra.mxu0 %v5617
  %5652 = vmatprep.subr.mxu0 0.0
  %5653 = vmatpush1.msra.mxu0 %v5618
  %5654 = vmatprep.subr.mxu0 0.0
  %5655 = vmatpush1.msra.mxu0 %v5619
  %5656 = vmatprep.subr.mxu0 0.0
  %5657 = vmatpush1.msra.mxu0 %v5620
  %5658 = vmatprep.subr.mxu0 0.0
  %5659 = vmatpush1.msra.mxu0 %v5621
  %5660 = vmatprep.subr.mxu0 0.0
  %5661 = vmatpush1.msra.mxu0 %v5622
  %5662 = vmatprep.subr.mxu0 0.0
  %5663 = vmatpush1.msra.mxu0 %v5623
  %5664 = vmatprep.subr.mxu0 0.0
  %5665 = vmatpush1.msra.mxu0 %v5638
  %5666 = vmatprep.subr.mxu0 0.0
  %5667 = vmatpush1.msra.mxu0 0.0
  %5668 = vmatprep.subr.mxu0 0.0
  %5669 = vmatpush1.msra.mxu0 0.0
  %5670 = vmatprep.subr.mxu0 0.0
  %5671 = vmatpush1.msra.mxu0 0.0
  %5672 = vmatprep.subr.mxu0 0.0
  %5673 = vmatpush1.msra.mxu0 0.0
  %5674 = vmatprep.subr.mxu0 0.0
  %5675 = vmatpush1.msra.mxu0 0.0
  %5676 = vmatprep.subr.mxu0 0.0
  %5677 = vmatpush1.msra.mxu0 0.0
  %5678 = vmatprep.subr.mxu0 0.0
  %5679 = vmatpush1.msra.mxu0 0.0
  %5680 = vmatprep.subr.mxu0 0.0
  %5681 = vmatpush1.msra.mxu0 0.0
  %5682 = vmatprep.subr.mxu0 0.0
  %5683 = vmatpush1.msra.mxu0 0.0
  %5684 = vmatprep.subr.mxu0 0.0
  %5685 = vmatpush1.msra.mxu0 0.0
  %5686 = vmatprep.subr.mxu0 0.0
  %5687 = vmatpush1.msra.mxu0 0.0
  %5688 = vmatprep.subr.mxu0 0.0
  %5689 = vmatpush1.msra.mxu0 0.0
  %5690 = vmatprep.subr.mxu0 0.0
  %5691 = vmatpush1.msra.mxu0 0.0
  %5692 = vmatprep.subr.mxu0 0.0
  %5693 = vmatpush1.msra.mxu0 0.0
  %5694 = vmatprep.subr.mxu0 0.0
  %5695 = vmatpush1.msra.mxu0 0.0
  %5696 = vmatprep.subr.mxu0 0.0
  %5697 = vmatpush1.msra.mxu0 0.0
  %5698 = vmatprep.subr.mxu0 0.0
  %5699 = vmatpush1.msra.mxu0 0.0
  %5700 = vmatprep.subr.mxu0 0.0
  %5701 = vmatpush1.msra.mxu0 0.0
  %5702 = vmatprep.subr.mxu0 0.0
  %5703 = vmatpush1.msra.mxu0 0.0
  %5704 = vmatprep.mubr.f32.mxu0 0.0
  %5705 = vmatmul.mubr.f32.gmra.mrb[0].mxu0 %v5634
  %v5706 = vpop.f32.mrb[0].mxu0
  %v5707 = vadd.f32 %v5630, %v5706
  %v5708 = vpop.f32.mrb[0].mxu0
  %5709 = vdwg.mxu0
  %v5710 = vlaneseq
  %v5711 = vand.u32 %v5710, 127
  %v5712 = vtanh.pop %v5707
  %vm5713 = vcmp.gt.f32.partialorder %v5707, 20.0
  %v5714 = vmin.f32 %v5707, 20.0
  %v5715 = vmul.f32 %v5714, 1.442695
  %v5716 = vpow.pop %v5715
  %v5717 = vadd.f32 %v5716, 1.0
  %v5718 = vlog2.pop %v5717
  %v5719 = vmul.f32 %v5718, 0.6931472
  %v5720 = vmul.f32 -0.5, %v5716
  %v5721 = vadd.f32 %v5720, 1.0
  %v5722 = vmul.f32 %v5721, %v5716
  %v5723 = vand.u32 2147483647, %v5716
  %vm5724 = vcmp.lt.f32.partialorder %v5723, 0.0004427343
  %v5725 = vsel %vm5724, %v5722, %v5719
  %v5726 = vsel %vm5713, %v5707, %v5725
  %vm5727 = vcmp.lt.s32.totalorder %v5711, 3
  %vm5728 = vcmp.lt.s32.totalorder %v5711, 6
  %v5729 = vsel %vm5728, %v5726, %v5707
  %v5730 = vsel %vm5727, %v5712, %v5729
  %5731 = vst [vmem:[%s5] sm:$0x3] %v5730
  // Predicated region
  $region22: #{model_forward.5} parent=0 // pred_check
    _
  $region23: #{model_forward.5} parent=0 // pred_check_branch
    %5733 = sbr.rel (0) target = $region25
  $region24: #{model_forward.5} parent=0 // pred_region
    _
  $region25: #{model_forward.5} parent=0 // pred_fallthru
    _
  // Predicated region
  $region26: #{model_forward.5} parent=0 // pred_check
    _
  $region27: #{model_forward.5} parent=0 // pred_check_branch
    %5735 = sbr.rel (0) target = $region29
  $region28: #{model_forward.5} parent=0 // pred_region
    _
  $region29: #{model_forward.5} parent=0 // pred_fallthru
    _

</llo_original>
